<compile_context>
chip_gen: v5e
topology: v5e:2x2
jax: 0.10.0
libtpu: 0.0.40
codegen_flags: <defaults>
</compile_context>

<pallas_src>
import math
from functools import partial

import jax
import jax.numpy as jnp
from jax.experimental import pallas as pl
from jax.experimental.pallas import tpu as pltpu

NUM_GROUPS = 32
GN_EPS = 1e-6   # CodeFormer/VQGAN `normalize()` = GroupNorm(32, C, eps=1e-6, affine=True)


# ------------------------------ fused kernel --------------------------------

def _fuse_sft_kernel(enc_ref, dec_ref, w_ref,
                     g1_ref, b1_ref, agg1_ref,
                     w1_ref, cb1_ref,
                     g2_ref, b2_ref, agg2_ref,
                     w2sk_ref, cb2sk_ref,
                     wst1_ref, bst1_ref,
                     wsc2_ref, bsc2_ref,
                     wsh2_ref, bsh2_ref,
                     o_ref,
                     pad_ref, patch_ref,
                     *, H, W, Cin, Cout, eps):
    HW = H * W
    C2 = 2 * Cin
    cpg1 = C2 // NUM_GROUPS          # channels per group for norm1 (2*in_ch channels)
    cpg2 = Cout // NUM_GROUPS        # channels per group for norm2
    Cpad = pad_ref.shape[-1]

    # "same"-padding halo: zero ONLY the 1-px border each grid step.  The interior is
    # fully rewritten before every read; per-step border zeroing (rather than a
    # program_id==0 gate) stays correct under megacore sharding.
    zrow = jnp.zeros((1, W + 2, Cpad), pad_ref.dtype)
    pad_ref[0:1, :, :] = zrow
    pad_ref[H + 1:H + 2, :, :] = zrow
    zcol = jnp.zeros((H + 2, 1, Cpad), pad_ref.dtype)
    pad_ref[:, 0:1, :] = zcol
    pad_ref[:, W + 1:W + 2, :] = zcol

    def gn_swish(vs, gammas, betas, cpg, agg_ref):
        """Two-pass GroupNorm(32, eps, affine) + swish, all math f32.  `vs` are
        channel-slices of one tensor, each containing whole groups, so stats are
        per-slice; their per-channel sums are batched into ONE (len(vs), C) matmul
        per pass instead of several M=1 f32 MXU pushes."""
        inv_n = 1.0 / float(HW * cpg)

        def group_sum(rows):
            if cpg == 1:             # one channel per group: sums are already per-group
                return rows
            return jnp.dot(rows, agg_ref[...], preferred_element_type=jnp.float32)

        s = jnp.concatenate([jnp.sum(v, axis=0, keepdims=True) for v in vs], axis=0)
        mean = group_sum(s) * inv_n
        cen = [v - mean[i:i + 1] for i, v in enumerate(vs)]
        ss = jnp.concatenate([jnp.sum(c * c, axis=0, keepdims=True) for c in cen], axis=0)
        var = group_sum(ss) * inv_n
        outs = []
        for i, c in enumerate(cen):
            y = c * jax.lax.rsqrt(var[i:i + 1] + eps) * gammas[i] + betas[i]
            outs.append(y * jax.nn.sigmoid(y))                   # swish
        return outs

    def halo_store(v, C, c0):
        """Place a (HW, C) activation into the halo interior at channel offset c0."""
        pad_ref[1:H + 1, 1:W + 1, c0:c0 + C] = v.reshape(H, W, C)

    def build_patches(C, c0):
        """im2col of halo channels [c0, c0+C) into the bf16 patch scratch."""
        for ky in range(3):
            for kx in range(3):
                t = ky * 3 + kx
                patch_ref[:, t * C:(t + 1) * C] = (
                    pad_ref[ky:ky + H, kx:kx + W, c0:c0 + C]
                    .reshape(HW, C).astype(jnp.bfloat16))
        # TODO(synk): bf16 halo + 3-D patch (one reshape per conv) halves patch-build
        # bytes/casts; pending a bundle check of packed-sublane slice lowering.

    def conv_matmul(K, w_r, b_r):
        """One MXU matmul over the first K patch columns (bf16 operands, f32 acc)."""
        return jnp.dot(patch_ref[:, :K], w_r[...],
                       preferred_element_type=jnp.float32) + b_r[...]

    enc2 = enc_ref[0].reshape(HW, Cin)                           # f32
    dec2 = dec_ref[0].reshape(HW, Cin)

    # ---- encode_enc = ResBlock(2*in_ch, out_ch) on x = cat([enc, dec], channel) ----
    # GroupNorm groups are cpg1 consecutive channels and never straddle the enc/dec
    # halves (asserted in the wrapper), so norm1 is evaluated per half (no concat).
    g1 = g1_ref[...]
    b1 = b1_ref[...]
    h_enc, h_dec = gn_swish([enc2, dec2],
                            [g1[:, :Cin], g1[:, Cin:]],
                            [b1[:, :Cin], b1[:, Cin:]],
                            cpg1, agg1_ref)
    halo_store(h_enc, Cin, 0)
    halo_store(h_dec, Cin, Cin)
    build_patches(C2, 0)
    h = conv_matmul(9 * C2, w1_ref, cb1_ref)                     # (HW, Cout)

    (h,) = gn_swish([h], [g2_ref[...]], [b2_ref[...]], cpg2, agg2_ref)
    halo_store(h, Cout, 0)
    build_patches(Cout, 0)
    # 1x1 skip conv folded into conv2's contraction: x's two halves become extra K
    # columns (weights stacked under conv2's, biases pre-summed) -> one MXU contraction
    # instead of three and no per-step f32 skip-weight cast.
    patch_ref[:, 9 * Cout:9 * Cout + Cin] = enc2.astype(jnp.bfloat16)
    patch_ref[:, 9 * Cout + Cin:9 * Cout + C2] = dec2.astype(jnp.bfloat16)
    enc_out = conv_matmul(9 * Cout + C2, w2sk_ref, cb2sk_ref)    # (HW, Cout)

    # ---- scale / shift heads: shared first conv (merged [s|t]); SECOND convs kept
    # separate -> two K=9*Cout matmuls instead of one block-diagonal K=18*Cout matmul
    # whose off-diagonal halves were structural zeros. ----
    halo_store(enc_out, Cout, 0)
    build_patches(Cout, 0)
    st = conv_matmul(9 * Cout, wst1_ref, bst1_ref)               # (HW, 2*Cout) = [s | t]
    st = jnp.where(st >= 0.0, st, 0.2 * st)                      # LeakyReLU(0.2), f32
    halo_store(st, 2 * Cout, 0)
    build_patches(Cout, 0)                                       # taps of s
    scale = conv_matmul(9 * Cout, wsc2_ref, bsc2_ref)
    build_patches(Cout, Cout)                                    # taps of t
    shift = conv_matmul(9 * Cout, wsh2_ref, bsh2_ref)

    # ---- SFT residual fusion: out = dec + w * (dec * scale + shift) ----
    w_fuse = w_ref[0, 0]                                         # runtime scalar (SMEM)
    out2 = dec2 + w_fuse * (dec2 * scale + shift)
    # TODO(synk): Cout=32 (<128 lanes) makes this a masked store; a lane-dense
    # (N, H, W*Cout) out_shape would remove it but needs an in-kernel cross-lane reshape.
    o_ref[...] = out2.reshape(1, H, W, Cout)


# --------------------------- parameters & packing ---------------------------

def init_params(key, in_ch, out_ch):
    ks = jax.random.split(key, 11)

    def conv_init(k, kh, kw, cin, cout):
        k1, k2 = jax.random.split(k)
        bound = 1.0 / math.sqrt(kh * kw * cin)
        w = jax.random.uniform(k1, (kh, kw, cin, cout), jnp.float32, -bound, bound)
        b = jax.random.uniform(k2, (cout,), jnp.float32, -bound, bound)
        return w, b

    p = {}
    # ResBlock(2*in_ch, out_ch)  (GroupNorm params randomized a bit to exercise affine)
    p['norm1_gamma'] = 1.0 + 0.1 * jax.random.normal(ks[7], (2 * in_ch,), jnp.float32)
    p['norm1_beta'] = 0.1 * jax.random.normal(ks[8], (2 * in_ch,), jnp.float32)
    p['conv1_w'], p['conv1_b'] = conv_init(ks[0], 3, 3, 2 * in_ch, out_ch)
    p['norm2_gamma'] = 1.0 + 0.1 * jax.random.normal(ks[9], (out_ch,), jnp.float32)
    p['norm2_beta'] = 0.1 * jax.random.normal(ks[10], (out_ch,), jnp.float32)
    p['conv2_w'], p['conv2_b'] = conv_init(ks[1], 3, 3, out_ch, out_ch)
    p['conv_out_w'], p['conv_out_b'] = conv_init(ks[2], 1, 1, 2 * in_ch, out_ch)
    # scale / shift branches
    p['scale1_w'], p['scale1_b'] = conv_init(ks[3], 3, 3, in_ch, out_ch)
    p['scale2_w'], p['scale2_b'] = conv_init(ks[4], 3, 3, out_ch, out_ch)
    p['shift1_w'], p['shift1_b'] = conv_init(ks[5], 3, 3, in_ch, out_ch)
    p['shift2_w'], p['shift2_b'] = conv_init(ks[6], 3, 3, out_ch, out_ch)
    return p


def prepare_params(p, in_ch, out_ch):
    """One-time packing: im2col-flattened bf16 conv weights, skip folded into conv2,
    merged first-head conv, SEPARATE second-head convs, and per-norm GroupNorm
    group-indicator matrices (norm1 and norm2 have different channels-per-group)."""
    C2 = 2 * in_ch
    cpg1 = C2 // NUM_GROUPS
    cpg2 = out_ch // NUM_GROUPS
    gid1 = jnp.arange(in_ch) // cpg1          # within-half grouping for norm1
    gid2 = jnp.arange(out_ch) // cpg2         # grouping for norm2
    f = {
        'g1': p['norm1_gamma'].reshape(1, C2),
        'b1': p['norm1_beta'].reshape(1, C2),
        'agg1': (gid1[:, None] == gid1[None, :]).astype(jnp.float32),   # (in_ch, in_ch)
        'w1': p['conv1_w'].reshape(9 * C2, out_ch).astype(jnp.bfloat16),
        'cb1': p['conv1_b'].reshape(1, out_ch),
        'g2': p['norm2_gamma'].reshape(1, out_ch),
        'b2': p['norm2_beta'].reshape(1, out_ch),
        'agg2': (gid2[:, None] == gid2[None, :]).astype(jnp.float32),   # (out_ch, out_ch)
        # conv2 with the 1x1 skip conv folded in as extra K rows; biases folded too.
        'w2sk': jnp.concatenate([p['conv2_w'].reshape(9 * out_ch, out_ch),
                                 p['conv_out_w'].reshape(C2, out_ch)],
                                axis=0).astype(jnp.bfloat16),
        'cb2sk': (p['conv2_b'] + p['conv_out_b']).reshape(1, out_ch),
        # merged first head conv: one conv3x3 producing [s | t]
        'wst1': jnp.concatenate([p['scale1_w'], p['shift1_w']],
                                axis=-1).reshape(9 * in_ch, 2 * out_ch).astype(jnp.bfloat16),
        'bst1': jnp.concatenate([p['scale1_b'], p['shift1_b']]).reshape(1, 2 * out_ch),
        # second head convs kept separate (no block-diagonal zero padding -> half the MACs)
        'wsc2': p['scale2_w'].reshape(9 * out_ch, out_ch).astype(jnp.bfloat16),
        'bsc2': p['scale2_b'].reshape(1, out_ch),
        'wsh2': p['shift2_w'].reshape(9 * out_ch, out_ch).astype(jnp.bfloat16),
        'bsh2': p['shift2_b'].reshape(1, out_ch),
    }
    return f


_WEIGHT_KEYS = ['g1', 'b1', 'agg1', 'w1', 'cb1', 'g2', 'b2', 'agg2',
                'w2sk', 'cb2sk', 'wst1', 'bst1', 'wsc2', 'bsc2', 'wsh2', 'bsh2']


# --------------------------------- wrapper ----------------------------------

def fuse_sft_block(packed, enc_feat, dec_feat, w=1.0, mask=None):
    if mask is not None:
        # TODO(synk): optional mask multiply on scale/shift is not fused into the kernel.
        raise NotImplementedError("mask is not supported by the fused kernel")
    N, H, W_, Cin = enc_feat.shape
    assert dec_feat.shape == enc_feat.shape
    Cout = packed['cb2sk'].shape[-1]
    C2 = 2 * Cin
    assert Cin == Cout, "Fuse_sft_block requires in_ch == out_ch"
    assert C2 % NUM_GROUPS == 0 and Cout % NUM_GROUPS == 0
    cpg1 = C2 // NUM_GROUPS
    assert Cin % cpg1 == 0                 # groups never straddle the enc/dec halves
    Cpad = max(C2, 2 * Cout)               # halo channel width ([x] or [s|t])
    Kmax = 9 * C2                          # widest im2col (conv1); >= 9*Cout + C2 too

    wf = jnp.full((1, 1), w, dtype=jnp.float32)    # runtime scalar -> SMEM, no recompile

    def const_spec(a):
        nd = a.ndim
        return pl.BlockSpec(a.shape, lambda *_: (0,) * nd)

    kern = partial(_fuse_sft_kernel, H=H, W=W_, Cin=Cin, Cout=Cout, eps=GN_EPS)

    # VMEM budget: scratch + double-buffered I/O blocks + resident weights, capped at
    # 48 MiB (below v7x's 64 MiB physical VMEM; v5e/v6e have 128 MiB).
    scratch_bytes = (H + 2) * (W_ + 2) * Cpad * 4 + H * W_ * Kmax * 2
    io_bytes = 2 * (2 * H * W_ * Cin * 4 + H * W_ * Cout * 4)
    w_bytes = 2 * sum(int(packed[k].size) * packed[k].dtype.itemsize for k in _WEIGHT_KEYS)
    vmem_limit = int(min(max(2 * (scratch_bytes + io_bytes + w_bytes), 16 << 20), 48 << 20))

    in_specs = [
        pl.BlockSpec((1, H, W_, Cin), lambda n: (n, 0, 0, 0)),   # enc_feat
        pl.BlockSpec((1, H, W_, Cin), lambda n: (n, 0, 0, 0)),   # dec_feat
        pl.BlockSpec(memory_space=pltpu.MemorySpace.SMEM),       # w (1,1) scalar
    ] + [const_spec(packed[k]) for k in _WEIGHT_KEYS]

    return pl.pallas_call(
        kern,
        out_shape=jax.ShapeDtypeStruct((N, H, W_, Cout), jnp.float32),
        grid=(N,),
        in_specs=in_specs,
        out_specs=pl.BlockSpec((1, H, W_, Cout), lambda n: (n, 0, 0, 0)),
        scratch_shapes=[
            pltpu.VMEM((H + 2, W_ + 2, Cpad), jnp.float32),      # zero-border conv halo
            pltpu.VMEM((H * W_, Kmax), jnp.bfloat16),            # im2col patch matrix
        ],
        compiler_params=pltpu.CompilerParams(
            dimension_semantics=("parallel",),
            vmem_limit_bytes=vmem_limit),
    )(enc_feat, dec_feat, wf, *[packed[k] for k in _WEIGHT_KEYS])


# ------------------------------ JAX reference --------------------------------

def _ref_conv(x, w, b, pad):
    y = jax.lax.conv_general_dilated(x, w, (1, 1), [(pad, pad), (pad, pad)],
                                     dimension_numbers=('NHWC', 'HWIO', 'NHWC'))
    return y + b


def _ref_gn_swish(x, gamma, beta, G=NUM_GROUPS, eps=GN_EPS):
    N, H, W_, C = x.shape
    xg = x.reshape(N, H, W_, G, C // G)
    mean = xg.mean(axis=(1, 2, 4), keepdims=True)
    var = xg.var(axis=(1, 2, 4), keepdims=True)
    xn = ((xg - mean) * jax.lax.rsqrt(var + eps)).reshape(N, H, W_, C)
    y = xn * gamma + beta
    return y * jax.nn.sigmoid(y)


def ref_forward(params, enc_feat, dec_feat, w=1.0):
    x = jnp.concatenate([enc_feat, dec_feat], axis=-1)
    h = _ref_gn_swish(x, params['norm1_gamma'], params['norm1_beta'])
    h = _ref_conv(h, params['conv1_w'], params['conv1_b'], 1)
    h = _ref_gn_swish(h, params['norm2_gamma'], params['norm2_beta'])
    h = _ref_conv(h, params['conv2_w'], params['conv2_b'], 1)
    enc = h + _ref_conv(x, params['conv_out_w'], params['conv_out_b'], 0)
    leaky = lambda v: jnp.where(v >= 0, v, 0.2 * v)
    scale = _ref_conv(leaky(_ref_conv(enc, params['scale1_w'], params['scale1_b'], 1)),
                      params['scale2_w'], params['scale2_b'], 1)
    shift = _ref_conv(leaky(_ref_conv(enc, params['shift1_w'], params['shift1_b'], 1)),
                      params['shift2_w'], params['shift2_b'], 1)
    return dec_feat + w * (dec_feat * scale + shift)


# ----------------------------------- main ------------------------------------

if __name__ == "__main__":
    # GroupNorm(32) requires channel counts divisible by 32; the module requires
    # in_ch == out_ch (the scale/shift heads consume the encode_enc output).
    in_ch = out_ch = 32
    N, H, W_ = 2, 8, 8

    key = jax.random.PRNGKey(0)
    kp, ke, kd = jax.random.split(key, 3)
    params = init_params(kp, in_ch, out_ch)
    packed = prepare_params(params, in_ch, out_ch)           # one-time packing
    enc_feat = jax.random.normal(ke, (N, H, W_, in_ch), jnp.float32)  # NHWC of torch (2,32,8,8)
    dec_feat = jax.random.normal(kd, (N, H, W_, in_ch), jnp.float32)

    out = jax.block_until_ready(fuse_sft_block(packed, enc_feat, dec_feat, w=1.0))
    ref = ref_forward(params, enc_feat, dec_feat, w=1.0)

    assert out.shape == (N, H, W_, out_ch)
    max_err = float(jnp.max(jnp.abs(out - ref)))
    # bf16 MXU operands (f32 accumulation) vs the pure-f32 reference -> relaxed tolerance.
    assert max_err < 2e-2, f"max abs error too large: {max_err}"
    print("KERNEL_OK")
</pallas_src>

<mosaic_0001>
module attributes {stable_mosaic.version = 11 : i64} {
  func.func @_fuse_sft_kernel(%arg0: i32, %arg1: memref<1x8x8x32xf32, #tpu.memory_space<vmem>>, %arg2: memref<1x8x8x32xf32, #tpu.memory_space<vmem>>, %arg3: memref<1x1xf32, #tpu.memory_space<smem>>, %arg4: memref<1x64xf32, #tpu.memory_space<vmem>>, %arg5: memref<1x64xf32, #tpu.memory_space<vmem>>, %arg6: memref<32x32xf32, #tpu.memory_space<vmem>>, %arg7: memref<576x32xbf16, #tpu.memory_space<vmem>>, %arg8: memref<1x32xf32, #tpu.memory_space<vmem>>, %arg9: memref<1x32xf32, #tpu.memory_space<vmem>>, %arg10: memref<1x32xf32, #tpu.memory_space<vmem>>, %arg11: memref<32x32xf32, #tpu.memory_space<vmem>>, %arg12: memref<352x32xbf16, #tpu.memory_space<vmem>>, %arg13: memref<1x32xf32, #tpu.memory_space<vmem>>, %arg14: memref<288x64xbf16, #tpu.memory_space<vmem>>, %arg15: memref<1x64xf32, #tpu.memory_space<vmem>>, %arg16: memref<288x32xbf16, #tpu.memory_space<vmem>>, %arg17: memref<1x32xf32, #tpu.memory_space<vmem>>, %arg18: memref<288x32xbf16, #tpu.memory_space<vmem>>, %arg19: memref<1x32xf32, #tpu.memory_space<vmem>>, %arg20: memref<1x8x8x32xf32, #tpu.memory_space<vmem>>, %arg21: memref<10x10x64xf32, #tpu.memory_space<vmem>>, %arg22: memref<64x576xbf16, #tpu.memory_space<vmem>>) attributes {dimension_semantics = [#tpu.dimension_semantics<parallel>], iteration_bounds = array<i64: 2>, scalar_prefetch = 0 : i64, scratch_operands = 2 : i64, tpu.core_type = #tpu.core_type<tc>, window_params = [{transform_indices = @transform_0, window_bounds = array<i64: 1, 8, 8, 32>}, {transform_indices = @transform_1, window_bounds = array<i64: 1, 8, 8, 32>}, {transform_indices = @transform_2, window_bounds = array<i64: 1, 1>}, {pipeline_mode = #tpu.pipeline_mode<synchronous>, transform_indices = @transform_3, window_bounds = array<i64: 1, 64>}, {pipeline_mode = #tpu.pipeline_mode<synchronous>, transform_indices = @transform_4, window_bounds = array<i64: 1, 64>}, {pipeline_mode = #tpu.pipeline_mode<synchronous>, transform_indices = @transform_5, window_bounds = array<i64: 32, 32>}, {pipeline_mode = #tpu.pipeline_mode<synchronous>, transform_indices = @transform_6, window_bounds = array<i64: 576, 32>}, {pipeline_mode = #tpu.pipeline_mode<synchronous>, transform_indices = @transform_7, window_bounds = array<i64: 1, 32>}, {pipeline_mode = #tpu.pipeline_mode<synchronous>, transform_indices = @transform_8, window_bounds = array<i64: 1, 32>}, {pipeline_mode = #tpu.pipeline_mode<synchronous>, transform_indices = @transform_9, window_bounds = array<i64: 1, 32>}, {pipeline_mode = #tpu.pipeline_mode<synchronous>, transform_indices = @transform_10, window_bounds = array<i64: 32, 32>}, {pipeline_mode = #tpu.pipeline_mode<synchronous>, transform_indices = @transform_11, window_bounds = array<i64: 352, 32>}, {pipeline_mode = #tpu.pipeline_mode<synchronous>, transform_indices = @transform_12, window_bounds = array<i64: 1, 32>}, {pipeline_mode = #tpu.pipeline_mode<synchronous>, transform_indices = @transform_13, window_bounds = array<i64: 288, 64>}, {pipeline_mode = #tpu.pipeline_mode<synchronous>, transform_indices = @transform_14, window_bounds = array<i64: 1, 64>}, {pipeline_mode = #tpu.pipeline_mode<synchronous>, transform_indices = @transform_15, window_bounds = array<i64: 288, 32>}, {pipeline_mode = #tpu.pipeline_mode<synchronous>, transform_indices = @transform_16, window_bounds = array<i64: 1, 32>}, {pipeline_mode = #tpu.pipeline_mode<synchronous>, transform_indices = @transform_17, window_bounds = array<i64: 288, 32>}, {pipeline_mode = #tpu.pipeline_mode<synchronous>, transform_indices = @transform_18, window_bounds = array<i64: 1, 32>}, {transform_indices = @transform_19, window_bounds = array<i64: 1, 8, 8, 32>}]} {
    %cst = arith.constant 0.000000e+00 : f32
    %0 = vector.broadcast %cst : f32 to vector<1x10x64xf32>
    %c0 = arith.constant 0 : index
    %c0_0 = arith.constant 0 : index
    %c0_1 = arith.constant 0 : index
    %1 = vector.load %arg21[%c0, %c0_0, %c0_1] : memref<10x10x64xf32, #tpu.memory_space<vmem>>, vector<1x10x64xf32>
    tpu.vector_store %arg21[%c0, %c0_0, %c0_1], %0 {strides = array<i32>} : memref<10x10x64xf32, #tpu.memory_space<vmem>>, vector<1x10x64xf32>,
    %c9 = arith.constant 9 : index
    %c0_2 = arith.constant 0 : index
    %c0_3 = arith.constant 0 : index
    %2 = vector.load %arg21[%c9, %c0_2, %c0_3] : memref<10x10x64xf32, #tpu.memory_space<vmem>>, vector<1x10x64xf32>
    tpu.vector_store %arg21[%c9, %c0_2, %c0_3], %0 {strides = array<i32>} : memref<10x10x64xf32, #tpu.memory_space<vmem>>, vector<1x10x64xf32>,
    %cst_4 = arith.constant 0.000000e+00 : f32
    %3 = vector.broadcast %cst_4 : f32 to vector<10x1x64xf32>
    %c0_5 = arith.constant 0 : index
    %c0_6 = arith.constant 0 : index
    %c0_7 = arith.constant 0 : index
    %4 = vector.load %arg21[%c0_5, %c0_6, %c0_7] : memref<10x10x64xf32, #tpu.memory_space<vmem>>, vector<10x1x64xf32>
    tpu.vector_store %arg21[%c0_5, %c0_6, %c0_7], %3 {strides = array<i32>} : memref<10x10x64xf32, #tpu.memory_space<vmem>>, vector<10x1x64xf32>,
    %c0_8 = arith.constant 0 : index
    %c9_9 = arith.constant 9 : index
    %c0_10 = arith.constant 0 : index
    %5 = vector.load %arg21[%c0_8, %c9_9, %c0_10] : memref<10x10x64xf32, #tpu.memory_space<vmem>>, vector<10x1x64xf32>
    tpu.vector_store %arg21[%c0_8, %c9_9, %c0_10], %3 {strides = array<i32>} : memref<10x10x64xf32, #tpu.memory_space<vmem>>, vector<10x1x64xf32>,
    %c0_11 = arith.constant 0 : index
    %c0_12 = arith.constant 0 : index
    %c0_13 = arith.constant 0 : index
    %c0_14 = arith.constant 0 : index
    %6 = vector.load %arg1[%c0_11, %c0_12, %c0_13, %c0_14] : memref<1x8x8x32xf32, #tpu.memory_space<vmem>>, vector<1x8x8x32xf32>
    %7 = vector.shape_cast %6 : vector<1x8x8x32xf32> to vector<8x8x32xf32>
    %8 = vector.shape_cast %7 : vector<8x8x32xf32> to vector<64x32xf32>
    %c0_15 = arith.constant 0 : index
    %c0_16 = arith.constant 0 : index
    %c0_17 = arith.constant 0 : index
    %c0_18 = arith.constant 0 : index
    %9 = vector.load %arg2[%c0_15, %c0_16, %c0_17, %c0_18] : memref<1x8x8x32xf32, #tpu.memory_space<vmem>>, vector<1x8x8x32xf32>
    %10 = vector.shape_cast %9 : vector<1x8x8x32xf32> to vector<8x8x32xf32>
    %11 = vector.shape_cast %10 : vector<8x8x32xf32> to vector<64x32xf32>
    %c0_19 = arith.constant 0 : index
    %c0_20 = arith.constant 0 : index
    %12 = vector.load %arg4[%c0_19, %c0_20] : memref<1x64xf32, #tpu.memory_space<vmem>>, vector<1x64xf32>
    %c0_21 = arith.constant 0 : index
    %c0_22 = arith.constant 0 : index
    %13 = vector.load %arg5[%c0_21, %c0_22] : memref<1x64xf32, #tpu.memory_space<vmem>>, vector<1x64xf32>
    %14 = vector.extract_strided_slice %12 {offsets = [0, 0], sizes = [1, 32], strides = [1, 1]} : vector<1x64xf32> to vector<1x32xf32>
    %15 = vector.extract_strided_slice %12 {offsets = [0, 32], sizes = [1, 32], strides = [1, 1]} : vector<1x64xf32> to vector<1x32xf32>
    %16 = vector.extract_strided_slice %13 {offsets = [0, 0], sizes = [1, 32], strides = [1, 1]} : vector<1x64xf32> to vector<1x32xf32>
    %17 = vector.extract_strided_slice %13 {offsets = [0, 32], sizes = [1, 32], strides = [1, 1]} : vector<1x64xf32> to vector<1x32xf32>
    %cst_23 = arith.constant dense<0.000000e+00> : vector<32xf32>
    %18 = vector.multi_reduction <add>, %8, %cst_23 [0] : vector<64x32xf32> to vector<32xf32>
    %19 = vector.shape_cast %18 : vector<32xf32> to vector<1x32xf32>
    %cst_24 = arith.constant dense<0.000000e+00> : vector<32xf32>
    %20 = vector.multi_reduction <add>, %11, %cst_24 [0] : vector<64x32xf32> to vector<32xf32>
    %21 = vector.shape_cast %20 : vector<32xf32> to vector<1x32xf32>
    %22 = tpu.concatenate %19, %21 in 0 : vector<1x32xf32>, vector<1x32xf32> -> vector<2x32xf32>
    %c0_25 = arith.constant 0 : index
    %c0_26 = arith.constant 0 : index
    %23 = vector.load %arg6[%c0_25, %c0_26] : memref<32x32xf32, #tpu.memory_space<vmem>>, vector<32x32xf32>
    %cst_27 = arith.constant dense<0.000000e+00> : vector<2x32xf32>
    %24 = tpu.matmul %22, %23, %cst_27 {dimension_numbers = #tpu.dot_dimension_numbers<[1], [0], [0], [1], [0, 0, 1, 1], [], []>} : vector<2x32xf32>, vector<32x32xf32>, vector<2x32xf32> -> vector<2x32xf32>
    %cst_28 = arith.constant 7.812500e-03 : f32
    %25 = vector.broadcast %cst_28 : f32 to vector<2x32xf32>
    %26 = arith.mulf %24, %25 : vector<2x32xf32>
    %27 = vector.extract_strided_slice %26 {offsets = [0, 0], sizes = [1, 32], strides = [1, 1]} : vector<2x32xf32> to vector<1x32xf32>
    %28 = vector.broadcast %27 : vector<1x32xf32> to vector<64x32xf32>
    %29 = arith.subf %8, %28 : vector<64x32xf32>
    %30 = vector.extract_strided_slice %26 {offsets = [1, 0], sizes = [1, 32], strides = [1, 1]} : vector<2x32xf32> to vector<1x32xf32>
    %31 = vector.broadcast %30 : vector<1x32xf32> to vector<64x32xf32>
    %32 = arith.subf %11, %31 : vector<64x32xf32>
    %33 = arith.mulf %29, %29 : vector<64x32xf32>
    %cst_29 = arith.constant dense<0.000000e+00> : vector<32xf32>
    %34 = vector.multi_reduction <add>, %33, %cst_29 [0] : vector<64x32xf32> to vector<32xf32>
    %35 = vector.shape_cast %34 : vector<32xf32> to vector<1x32xf32>
    %36 = arith.mulf %32, %32 : vector<64x32xf32>
    %cst_30 = arith.constant dense<0.000000e+00> : vector<32xf32>
    %37 = vector.multi_reduction <add>, %36, %cst_30 [0] : vector<64x32xf32> to vector<32xf32>
    %38 = vector.shape_cast %37 : vector<32xf32> to vector<1x32xf32>
    %39 = tpu.concatenate %35, %38 in 0 : vector<1x32xf32>, vector<1x32xf32> -> vector<2x32xf32>
    %c0_31 = arith.constant 0 : index
    %c0_32 = arith.constant 0 : index
    %40 = vector.load %arg6[%c0_31, %c0_32] : memref<32x32xf32, #tpu.memory_space<vmem>>, vector<32x32xf32>
    %cst_33 = arith.constant dense<0.000000e+00> : vector<2x32xf32>
    %41 = tpu.matmul %39, %40, %cst_33 {dimension_numbers = #tpu.dot_dimension_numbers<[1], [0], [0], [1], [0, 0, 1, 1], [], []>} : vector<2x32xf32>, vector<32x32xf32>, vector<2x32xf32> -> vector<2x32xf32>
    %cst_34 = arith.constant 7.812500e-03 : f32
    %42 = vector.broadcast %cst_34 : f32 to vector<2x32xf32>
    %43 = arith.mulf %41, %42 : vector<2x32xf32>
    %44 = vector.extract_strided_slice %43 {offsets = [0, 0], sizes = [1, 32], strides = [1, 1]} : vector<2x32xf32> to vector<1x32xf32>
    %cst_35 = arith.constant 9.99999997E-7 : f32
    %45 = vector.broadcast %cst_35 : f32 to vector<1x32xf32>
    %46 = arith.addf %44, %45 : vector<1x32xf32>
    %47 = math.rsqrt %46 : vector<1x32xf32>
    %48 = vector.broadcast %47 : vector<1x32xf32> to vector<64x32xf32>
    %49 = arith.mulf %29, %48 : vector<64x32xf32>
    %50 = vector.broadcast %14 : vector<1x32xf32> to vector<64x32xf32>
    %51 = arith.mulf %49, %50 : vector<64x32xf32>
    %52 = vector.broadcast %16 : vector<1x32xf32> to vector<64x32xf32>
    %53 = arith.addf %51, %52 : vector<64x32xf32>
    %54 = arith.negf %53 : vector<64x32xf32>
    %55 = math.exp %54 : vector<64x32xf32>
    %cst_36 = arith.constant 1.000000e+00 : f32
    %56 = vector.broadcast %cst_36 : f32 to vector<64x32xf32>
    %57 = arith.addf %56, %55 : vector<64x32xf32>
    %58 = arith.divf %56, %57 : vector<64x32xf32>
    %59 = arith.mulf %53, %58 : vector<64x32xf32>
    %60 = vector.extract_strided_slice %43 {offsets = [1, 0], sizes = [1, 32], strides = [1, 1]} : vector<2x32xf32> to vector<1x32xf32>
    %cst_37 = arith.constant 9.99999997E-7 : f32
    %61 = vector.broadcast %cst_37 : f32 to vector<1x32xf32>
    %62 = arith.addf %60, %61 : vector<1x32xf32>
    %63 = math.rsqrt %62 : vector<1x32xf32>
    %64 = vector.broadcast %63 : vector<1x32xf32> to vector<64x32xf32>
    %65 = arith.mulf %32, %64 : vector<64x32xf32>
    %66 = vector.broadcast %15 : vector<1x32xf32> to vector<64x32xf32>
    %67 = arith.mulf %65, %66 : vector<64x32xf32>
    %68 = vector.broadcast %17 : vector<1x32xf32> to vector<64x32xf32>
    %69 = arith.addf %67, %68 : vector<64x32xf32>
    %70 = arith.negf %69 : vector<64x32xf32>
    %71 = math.exp %70 : vector<64x32xf32>
    %cst_38 = arith.constant 1.000000e+00 : f32
    %72 = vector.broadcast %cst_38 : f32 to vector<64x32xf32>
    %73 = arith.addf %72, %71 : vector<64x32xf32>
    %74 = arith.divf %72, %73 : vector<64x32xf32>
    %75 = arith.mulf %69, %74 : vector<64x32xf32>
    %76 = vector.shape_cast %59 : vector<64x32xf32> to vector<8x8x32xf32>
    %c1 = arith.constant 1 : index
    %c1_39 = arith.constant 1 : index
    %c0_40 = arith.constant 0 : index
    %77 = vector.load %arg21[%c1, %c1_39, %c0_40] : memref<10x10x64xf32, #tpu.memory_space<vmem>>, vector<8x8x32xf32>
    tpu.vector_store %arg21[%c1, %c1_39, %c0_40], %76 {strides = array<i32>} : memref<10x10x64xf32, #tpu.memory_space<vmem>>, vector<8x8x32xf32>,
    %78 = vector.shape_cast %75 : vector<64x32xf32> to vector<8x8x32xf32>
    %c1_41 = arith.constant 1 : index
    %c1_42 = arith.constant 1 : index
    %c32 = arith.constant 32 : index
    %79 = vector.load %arg21[%c1_41, %c1_42, %c32] : memref<10x10x64xf32, #tpu.memory_space<vmem>>, vector<8x8x32xf32>
    tpu.vector_store %arg21[%c1_41, %c1_42, %c32], %78 {strides = array<i32>} : memref<10x10x64xf32, #tpu.memory_space<vmem>>, vector<8x8x32xf32>,
    %c0_43 = arith.constant 0 : index
    %c0_44 = arith.constant 0 : index
    %c0_45 = arith.constant 0 : index
    %80 = vector.load %arg21[%c0_43, %c0_44, %c0_45] : memref<10x10x64xf32, #tpu.memory_space<vmem>>, vector<8x8x64xf32>
    %81 = vector.shape_cast %80 : vector<8x8x64xf32> to vector<64x64xf32>
    %82 = arith.truncf %81 : vector<64x64xf32> to vector<64x64xbf16>
    %c0_46 = arith.constant 0 : index
    %c0_47 = arith.constant 0 : index
    %83 = vector.load %arg22[%c0_46, %c0_47] : memref<64x576xbf16, #tpu.memory_space<vmem>>, vector<64x64xbf16>
    tpu.vector_store %arg22[%c0_46, %c0_47], %82 {strides = array<i32>} : memref<64x576xbf16, #tpu.memory_space<vmem>>, vector<64x64xbf16>,
    %c0_48 = arith.constant 0 : index
    %c1_49 = arith.constant 1 : index
    %c0_50 = arith.constant 0 : index
    %84 = vector.load %arg21[%c0_48, %c1_49, %c0_50] : memref<10x10x64xf32, #tpu.memory_space<vmem>>, vector<8x8x64xf32>
    %85 = vector.shape_cast %84 : vector<8x8x64xf32> to vector<64x64xf32>
    %86 = arith.truncf %85 : vector<64x64xf32> to vector<64x64xbf16>
    %c0_51 = arith.constant 0 : index
    %c64 = arith.constant 64 : index
    %87 = vector.load %arg22[%c0_51, %c64] : memref<64x576xbf16, #tpu.memory_space<vmem>>, vector<64x64xbf16>
    tpu.vector_store %arg22[%c0_51, %c64], %86 {strides = array<i32>} : memref<64x576xbf16, #tpu.memory_space<vmem>>, vector<64x64xbf16>,
    %c0_52 = arith.constant 0 : index
    %c2 = arith.constant 2 : index
    %c0_53 = arith.constant 0 : index
    %88 = vector.load %arg21[%c0_52, %c2, %c0_53] : memref<10x10x64xf32, #tpu.memory_space<vmem>>, vector<8x8x64xf32>
    %89 = vector.shape_cast %88 : vector<8x8x64xf32> to vector<64x64xf32>
    %90 = arith.truncf %89 : vector<64x64xf32> to vector<64x64xbf16>
    %c0_54 = arith.constant 0 : index
    %c128 = arith.constant 128 : index
    %91 = vector.load %arg22[%c0_54, %c128] : memref<64x576xbf16, #tpu.memory_space<vmem>>, vector<64x64xbf16>
    tpu.vector_store %arg22[%c0_54, %c128], %90 {strides = array<i32>} : memref<64x576xbf16, #tpu.memory_space<vmem>>, vector<64x64xbf16>,
    %c1_55 = arith.constant 1 : index
    %c0_56 = arith.constant 0 : index
    %c0_57 = arith.constant 0 : index
    %92 = vector.load %arg21[%c1_55, %c0_56, %c0_57] : memref<10x10x64xf32, #tpu.memory_space<vmem>>, vector<8x8x64xf32>
    %93 = vector.shape_cast %92 : vector<8x8x64xf32> to vector<64x64xf32>
    %94 = arith.truncf %93 : vector<64x64xf32> to vector<64x64xbf16>
    %c0_58 = arith.constant 0 : index
    %c192 = arith.constant 192 : index
    %95 = vector.load %arg22[%c0_58, %c192] : memref<64x576xbf16, #tpu.memory_space<vmem>>, vector<64x64xbf16>
    tpu.vector_store %arg22[%c0_58, %c192], %94 {strides = array<i32>} : memref<64x576xbf16, #tpu.memory_space<vmem>>, vector<64x64xbf16>,
    %c1_59 = arith.constant 1 : index
    %c1_60 = arith.constant 1 : index
    %c0_61 = arith.constant 0 : index
    %96 = vector.load %arg21[%c1_59, %c1_60, %c0_61] : memref<10x10x64xf32, #tpu.memory_space<vmem>>, vector<8x8x64xf32>
    %97 = vector.shape_cast %96 : vector<8x8x64xf32> to vector<64x64xf32>
    %98 = arith.truncf %97 : vector<64x64xf32> to vector<64x64xbf16>
    %c0_62 = arith.constant 0 : index
    %c256 = arith.constant 256 : index
    %99 = vector.load %arg22[%c0_62, %c256] : memref<64x576xbf16, #tpu.memory_space<vmem>>, vector<64x64xbf16>
    tpu.vector_store %arg22[%c0_62, %c256], %98 {strides = array<i32>} : memref<64x576xbf16, #tpu.memory_space<vmem>>, vector<64x64xbf16>,
    %c1_63 = arith.constant 1 : index
    %c2_64 = arith.constant 2 : index
    %c0_65 = arith.constant 0 : index
    %100 = vector.load %arg21[%c1_63, %c2_64, %c0_65] : memref<10x10x64xf32, #tpu.memory_space<vmem>>, vector<8x8x64xf32>
    %101 = vector.shape_cast %100 : vector<8x8x64xf32> to vector<64x64xf32>
    %102 = arith.truncf %101 : vector<64x64xf32> to vector<64x64xbf16>
    %c0_66 = arith.constant 0 : index
    %c320 = arith.constant 320 : index
    %103 = vector.load %arg22[%c0_66, %c320] : memref<64x576xbf16, #tpu.memory_space<vmem>>, vector<64x64xbf16>
    tpu.vector_store %arg22[%c0_66, %c320], %102 {strides = array<i32>} : memref<64x576xbf16, #tpu.memory_space<vmem>>, vector<64x64xbf16>,
    %c2_67 = arith.constant 2 : index
    %c0_68 = arith.constant 0 : index
    %c0_69 = arith.constant 0 : index
    %104 = vector.load %arg21[%c2_67, %c0_68, %c0_69] : memref<10x10x64xf32, #tpu.memory_space<vmem>>, vector<8x8x64xf32>
    %105 = vector.shape_cast %104 : vector<8x8x64xf32> to vector<64x64xf32>
    %106 = arith.truncf %105 : vector<64x64xf32> to vector<64x64xbf16>
    %c0_70 = arith.constant 0 : index
    %c384 = arith.constant 384 : index
    %107 = vector.load %arg22[%c0_70, %c384] : memref<64x576xbf16, #tpu.memory_space<vmem>>, vector<64x64xbf16>
    tpu.vector_store %arg22[%c0_70, %c384], %106 {strides = array<i32>} : memref<64x576xbf16, #tpu.memory_space<vmem>>, vector<64x64xbf16>,
    %c2_71 = arith.constant 2 : index
    %c1_72 = arith.constant 1 : index
    %c0_73 = arith.constant 0 : index
    %108 = vector.load %arg21[%c2_71, %c1_72, %c0_73] : memref<10x10x64xf32, #tpu.memory_space<vmem>>, vector<8x8x64xf32>
    %109 = vector.shape_cast %108 : vector<8x8x64xf32> to vector<64x64xf32>
    %110 = arith.truncf %109 : vector<64x64xf32> to vector<64x64xbf16>
    %c0_74 = arith.constant 0 : index
    %c448 = arith.constant 448 : index
    %111 = vector.load %arg22[%c0_74, %c448] : memref<64x576xbf16, #tpu.memory_space<vmem>>, vector<64x64xbf16>
    tpu.vector_store %arg22[%c0_74, %c448], %110 {strides = array<i32>} : memref<64x576xbf16, #tpu.memory_space<vmem>>, vector<64x64xbf16>,
    %c2_75 = arith.constant 2 : index
    %c2_76 = arith.constant 2 : index
    %c0_77 = arith.constant 0 : index
    %112 = vector.load %arg21[%c2_75, %c2_76, %c0_77] : memref<10x10x64xf32, #tpu.memory_space<vmem>>, vector<8x8x64xf32>
    %113 = vector.shape_cast %112 : vector<8x8x64xf32> to vector<64x64xf32>
    %114 = arith.truncf %113 : vector<64x64xf32> to vector<64x64xbf16>
    %c0_78 = arith.constant 0 : index
    %c512 = arith.constant 512 : index
    %115 = vector.load %arg22[%c0_78, %c512] : memref<64x576xbf16, #tpu.memory_space<vmem>>, vector<64x64xbf16>
    tpu.vector_store %arg22[%c0_78, %c512], %114 {strides = array<i32>} : memref<64x576xbf16, #tpu.memory_space<vmem>>, vector<64x64xbf16>,
    %c0_79 = arith.constant 0 : index
    %c0_80 = arith.constant 0 : index
    %116 = vector.load %arg22[%c0_79, %c0_80] : memref<64x576xbf16, #tpu.memory_space<vmem>>, vector<64x576xbf16>
    %c0_81 = arith.constant 0 : index
    %c0_82 = arith.constant 0 : index
    %117 = vector.load %arg7[%c0_81, %c0_82] : memref<576x32xbf16, #tpu.memory_space<vmem>>, vector<576x32xbf16>
    %cst_83 = arith.constant dense<0.000000e+00> : vector<64x32xf32>
    %118 = tpu.matmul %116, %117, %cst_83 {dimension_numbers = #tpu.dot_dimension_numbers<[1], [0], [0], [1], [0, 0, 1, 1], [], []>} : vector<64x576xbf16>, vector<576x32xbf16>, vector<64x32xf32> -> vector<64x32xf32>
    %c0_84 = arith.constant 0 : index
    %c0_85 = arith.constant 0 : index
    %119 = vector.load %arg8[%c0_84, %c0_85] : memref<1x32xf32, #tpu.memory_space<vmem>>, vector<1x32xf32>
    %120 = vector.broadcast %119 : vector<1x32xf32> to vector<64x32xf32>
    %121 = arith.addf %118, %120 : vector<64x32xf32>
    %c0_86 = arith.constant 0 : index
    %c0_87 = arith.constant 0 : index
    %122 = vector.load %arg9[%c0_86, %c0_87] : memref<1x32xf32, #tpu.memory_space<vmem>>, vector<1x32xf32>
    %c0_88 = arith.constant 0 : index
    %c0_89 = arith.constant 0 : index
    %123 = vector.load %arg10[%c0_88, %c0_89] : memref<1x32xf32, #tpu.memory_space<vmem>>, vector<1x32xf32>
    %cst_90 = arith.constant dense<0.000000e+00> : vector<32xf32>
    %124 = vector.multi_reduction <add>, %121, %cst_90 [0] : vector<64x32xf32> to vector<32xf32>
    %125 = vector.shape_cast %124 : vector<32xf32> to vector<1x32xf32>
    %cst_91 = arith.constant 1.562500e-02 : f32
    %126 = vector.broadcast %cst_91 : f32 to vector<1x32xf32>
    %127 = arith.mulf %125, %126 : vector<1x32xf32>
    %128 = vector.broadcast %127 : vector<1x32xf32> to vector<64x32xf32>
    %129 = arith.subf %121, %128 : vector<64x32xf32>
    %130 = arith.mulf %129, %129 : vector<64x32xf32>
    %cst_92 = arith.constant dense<0.000000e+00> : vector<32xf32>
    %131 = vector.multi_reduction <add>, %130, %cst_92 [0] : vector<64x32xf32> to vector<32xf32>
    %132 = vector.shape_cast %131 : vector<32xf32> to vector<1x32xf32>
    %cst_93 = arith.constant 1.562500e-02 : f32
    %133 = vector.broadcast %cst_93 : f32 to vector<1x32xf32>
    %134 = arith.mulf %132, %133 : vector<1x32xf32>
    %cst_94 = arith.constant 9.99999997E-7 : f32
    %135 = vector.broadcast %cst_94 : f32 to vector<1x32xf32>
    %136 = arith.addf %134, %135 : vector<1x32xf32>
    %137 = math.rsqrt %136 : vector<1x32xf32>
    %138 = vector.broadcast %137 : vector<1x32xf32> to vector<64x32xf32>
    %139 = arith.mulf %129, %138 : vector<64x32xf32>
    %140 = vector.broadcast %122 : vector<1x32xf32> to vector<64x32xf32>
    %141 = arith.mulf %139, %140 : vector<64x32xf32>
    %142 = vector.broadcast %123 : vector<1x32xf32> to vector<64x32xf32>
    %143 = arith.addf %141, %142 : vector<64x32xf32>
    %144 = arith.negf %143 : vector<64x32xf32>
    %145 = math.exp %144 : vector<64x32xf32>
    %cst_95 = arith.constant 1.000000e+00 : f32
    %146 = vector.broadcast %cst_95 : f32 to vector<64x32xf32>
    %147 = arith.addf %146, %145 : vector<64x32xf32>
    %148 = arith.divf %146, %147 : vector<64x32xf32>
    %149 = arith.mulf %143, %148 : vector<64x32xf32>
    %150 = vector.shape_cast %149 : vector<64x32xf32> to vector<8x8x32xf32>
    %c1_96 = arith.constant 1 : index
    %c1_97 = arith.constant 1 : index
    %c0_98 = arith.constant 0 : index
    %151 = vector.load %arg21[%c1_96, %c1_97, %c0_98] : memref<10x10x64xf32, #tpu.memory_space<vmem>>, vector<8x8x32xf32>
    tpu.vector_store %arg21[%c1_96, %c1_97, %c0_98], %150 {strides = array<i32>} : memref<10x10x64xf32, #tpu.memory_space<vmem>>, vector<8x8x32xf32>,
    %c0_99 = arith.constant 0 : index
    %c0_100 = arith.constant 0 : index
    %c0_101 = arith.constant 0 : index
    %152 = vector.load %arg21[%c0_99, %c0_100, %c0_101] : memref<10x10x64xf32, #tpu.memory_space<vmem>>, vector<8x8x32xf32>
    %153 = vector.shape_cast %152 : vector<8x8x32xf32> to vector<64x32xf32>
    %154 = arith.truncf %153 : vector<64x32xf32> to vector<64x32xbf16>
    %c0_102 = arith.constant 0 : index
    %c0_103 = arith.constant 0 : index
    %155 = vector.load %arg22[%c0_102, %c0_103] : memref<64x576xbf16, #tpu.memory_space<vmem>>, vector<64x32xbf16>
    tpu.vector_store %arg22[%c0_102, %c0_103], %154 {strides = array<i32>} : memref<64x576xbf16, #tpu.memory_space<vmem>>, vector<64x32xbf16>,
    %c0_104 = arith.constant 0 : index
    %c1_105 = arith.constant 1 : index
    %c0_106 = arith.constant 0 : index
    %156 = vector.load %arg21[%c0_104, %c1_105, %c0_106] : memref<10x10x64xf32, #tpu.memory_space<vmem>>, vector<8x8x32xf32>
    %157 = vector.shape_cast %156 : vector<8x8x32xf32> to vector<64x32xf32>
    %158 = arith.truncf %157 : vector<64x32xf32> to vector<64x32xbf16>
    %c0_107 = arith.constant 0 : index
    %c32_108 = arith.constant 32 : index
    %159 = vector.load %arg22[%c0_107, %c32_108] : memref<64x576xbf16, #tpu.memory_space<vmem>>, vector<64x32xbf16>
    tpu.vector_store %arg22[%c0_107, %c32_108], %158 {strides = array<i32>} : memref<64x576xbf16, #tpu.memory_space<vmem>>, vector<64x32xbf16>,
    %c0_109 = arith.constant 0 : index
    %c2_110 = arith.constant 2 : index
    %c0_111 = arith.constant 0 : index
    %160 = vector.load %arg21[%c0_109, %c2_110, %c0_111] : memref<10x10x64xf32, #tpu.memory_space<vmem>>, vector<8x8x32xf32>
    %161 = vector.shape_cast %160 : vector<8x8x32xf32> to vector<64x32xf32>
    %162 = arith.truncf %161 : vector<64x32xf32> to vector<64x32xbf16>
    %c0_112 = arith.constant 0 : index
    %c64_113 = arith.constant 64 : index
    %163 = vector.load %arg22[%c0_112, %c64_113] : memref<64x576xbf16, #tpu.memory_space<vmem>>, vector<64x32xbf16>
    tpu.vector_store %arg22[%c0_112, %c64_113], %162 {strides = array<i32>} : memref<64x576xbf16, #tpu.memory_space<vmem>>, vector<64x32xbf16>,
    %c1_114 = arith.constant 1 : index
    %c0_115 = arith.constant 0 : index
    %c0_116 = arith.constant 0 : index
    %164 = vector.load %arg21[%c1_114, %c0_115, %c0_116] : memref<10x10x64xf32, #tpu.memory_space<vmem>>, vector<8x8x32xf32>
    %165 = vector.shape_cast %164 : vector<8x8x32xf32> to vector<64x32xf32>
    %166 = arith.truncf %165 : vector<64x32xf32> to vector<64x32xbf16>
    %c0_117 = arith.constant 0 : index
    %c96 = arith.constant 96 : index
    %167 = vector.load %arg22[%c0_117, %c96] : memref<64x576xbf16, #tpu.memory_space<vmem>>, vector<64x32xbf16>
    tpu.vector_store %arg22[%c0_117, %c96], %166 {strides = array<i32>} : memref<64x576xbf16, #tpu.memory_space<vmem>>, vector<64x32xbf16>,
    %c1_118 = arith.constant 1 : index
    %c1_119 = arith.constant 1 : index
    %c0_120 = arith.constant 0 : index
    %168 = vector.load %arg21[%c1_118, %c1_119, %c0_120] : memref<10x10x64xf32, #tpu.memory_space<vmem>>, vector<8x8x32xf32>
    %169 = vector.shape_cast %168 : vector<8x8x32xf32> to vector<64x32xf32>
    %170 = arith.truncf %169 : vector<64x32xf32> to vector<64x32xbf16>
    %c0_121 = arith.constant 0 : index
    %c128_122 = arith.constant 128 : index
    %171 = vector.load %arg22[%c0_121, %c128_122] : memref<64x576xbf16, #tpu.memory_space<vmem>>, vector<64x32xbf16>
    tpu.vector_store %arg22[%c0_121, %c128_122], %170 {strides = array<i32>} : memref<64x576xbf16, #tpu.memory_space<vmem>>, vector<64x32xbf16>,
    %c1_123 = arith.constant 1 : index
    %c2_124 = arith.constant 2 : index
    %c0_125 = arith.constant 0 : index
    %172 = vector.load %arg21[%c1_123, %c2_124, %c0_125] : memref<10x10x64xf32, #tpu.memory_space<vmem>>, vector<8x8x32xf32>
    %173 = vector.shape_cast %172 : vector<8x8x32xf32> to vector<64x32xf32>
    %174 = arith.truncf %173 : vector<64x32xf32> to vector<64x32xbf16>
    %c0_126 = arith.constant 0 : index
    %c160 = arith.constant 160 : index
    %175 = vector.load %arg22[%c0_126, %c160] : memref<64x576xbf16, #tpu.memory_space<vmem>>, vector<64x32xbf16>
    tpu.vector_store %arg22[%c0_126, %c160], %174 {strides = array<i32>} : memref<64x576xbf16, #tpu.memory_space<vmem>>, vector<64x32xbf16>,
    %c2_127 = arith.constant 2 : index
    %c0_128 = arith.constant 0 : index
    %c0_129 = arith.constant 0 : index
    %176 = vector.load %arg21[%c2_127, %c0_128, %c0_129] : memref<10x10x64xf32, #tpu.memory_space<vmem>>, vector<8x8x32xf32>
    %177 = vector.shape_cast %176 : vector<8x8x32xf32> to vector<64x32xf32>
    %178 = arith.truncf %177 : vector<64x32xf32> to vector<64x32xbf16>
    %c0_130 = arith.constant 0 : index
    %c192_131 = arith.constant 192 : index
    %179 = vector.load %arg22[%c0_130, %c192_131] : memref<64x576xbf16, #tpu.memory_space<vmem>>, vector<64x32xbf16>
    tpu.vector_store %arg22[%c0_130, %c192_131], %178 {strides = array<i32>} : memref<64x576xbf16, #tpu.memory_space<vmem>>, vector<64x32xbf16>,
    %c2_132 = arith.constant 2 : index
    %c1_133 = arith.constant 1 : index
    %c0_134 = arith.constant 0 : index
    %180 = vector.load %arg21[%c2_132, %c1_133, %c0_134] : memref<10x10x64xf32, #tpu.memory_space<vmem>>, vector<8x8x32xf32>
    %181 = vector.shape_cast %180 : vector<8x8x32xf32> to vector<64x32xf32>
    %182 = arith.truncf %181 : vector<64x32xf32> to vector<64x32xbf16>
    %c0_135 = arith.constant 0 : index
    %c224 = arith.constant 224 : index
    %183 = vector.load %arg22[%c0_135, %c224] : memref<64x576xbf16, #tpu.memory_space<vmem>>, vector<64x32xbf16>
    tpu.vector_store %arg22[%c0_135, %c224], %182 {strides = array<i32>} : memref<64x576xbf16, #tpu.memory_space<vmem>>, vector<64x32xbf16>,
    %c2_136 = arith.constant 2 : index
    %c2_137 = arith.constant 2 : index
    %c0_138 = arith.constant 0 : index
    %184 = vector.load %arg21[%c2_136, %c2_137, %c0_138] : memref<10x10x64xf32, #tpu.memory_space<vmem>>, vector<8x8x32xf32>
    %185 = vector.shape_cast %184 : vector<8x8x32xf32> to vector<64x32xf32>
    %186 = arith.truncf %185 : vector<64x32xf32> to vector<64x32xbf16>
    %c0_139 = arith.constant 0 : index
    %c256_140 = arith.constant 256 : index
    %187 = vector.load %arg22[%c0_139, %c256_140] : memref<64x576xbf16, #tpu.memory_space<vmem>>, vector<64x32xbf16>
    tpu.vector_store %arg22[%c0_139, %c256_140], %186 {strides = array<i32>} : memref<64x576xbf16, #tpu.memory_space<vmem>>, vector<64x32xbf16>,
    %188 = arith.truncf %8 : vector<64x32xf32> to vector<64x32xbf16>
    %c0_141 = arith.constant 0 : index
    %c288 = arith.constant 288 : index
    %189 = vector.load %arg22[%c0_141, %c288] : memref<64x576xbf16, #tpu.memory_space<vmem>>, vector<64x32xbf16>
    tpu.vector_store %arg22[%c0_141, %c288], %188 {strides = array<i32>} : memref<64x576xbf16, #tpu.memory_space<vmem>>, vector<64x32xbf16>,
    %190 = arith.truncf %11 : vector<64x32xf32> to vector<64x32xbf16>
    %c0_142 = arith.constant 0 : index
    %c320_143 = arith.constant 320 : index
    %191 = vector.load %arg22[%c0_142, %c320_143] : memref<64x576xbf16, #tpu.memory_space<vmem>>, vector<64x32xbf16>
    tpu.vector_store %arg22[%c0_142, %c320_143], %190 {strides = array<i32>} : memref<64x576xbf16, #tpu.memory_space<vmem>>, vector<64x32xbf16>,
    %c0_144 = arith.constant 0 : index
    %c0_145 = arith.constant 0 : index
    %192 = vector.load %arg22[%c0_144, %c0_145] : memref<64x576xbf16, #tpu.memory_space<vmem>>, vector<64x352xbf16>
    %c0_146 = arith.constant 0 : index
    %c0_147 = arith.constant 0 : index
    %193 = vector.load %arg12[%c0_146, %c0_147] : memref<352x32xbf16, #tpu.memory_space<vmem>>, vector<352x32xbf16>
    %cst_148 = arith.constant dense<0.000000e+00> : vector<64x32xf32>
    %194 = tpu.matmul %192, %193, %cst_148 {dimension_numbers = #tpu.dot_dimension_numbers<[1], [0], [0], [1], [0, 0, 1, 1], [], []>} : vector<64x352xbf16>, vector<352x32xbf16>, vector<64x32xf32> -> vector<64x32xf32>
    %c0_149 = arith.constant 0 : index
    %c0_150 = arith.constant 0 : index
    %195 = vector.load %arg13[%c0_149, %c0_150] : memref<1x32xf32, #tpu.memory_space<vmem>>, vector<1x32xf32>
    %196 = vector.broadcast %195 : vector<1x32xf32> to vector<64x32xf32>
    %197 = arith.addf %194, %196 : vector<64x32xf32>
    %198 = vector.shape_cast %197 : vector<64x32xf32> to vector<8x8x32xf32>
    %c1_151 = arith.constant 1 : index
    %c1_152 = arith.constant 1 : index
    %c0_153 = arith.constant 0 : index
    %199 = vector.load %arg21[%c1_151, %c1_152, %c0_153] : memref<10x10x64xf32, #tpu.memory_space<vmem>>, vector<8x8x32xf32>
    tpu.vector_store %arg21[%c1_151, %c1_152, %c0_153], %198 {strides = array<i32>} : memref<10x10x64xf32, #tpu.memory_space<vmem>>, vector<8x8x32xf32>,
    %c0_154 = arith.constant 0 : index
    %c0_155 = arith.constant 0 : index
    %c0_156 = arith.constant 0 : index
    %200 = vector.load %arg21[%c0_154, %c0_155, %c0_156] : memref<10x10x64xf32, #tpu.memory_space<vmem>>, vector<8x8x32xf32>
    %201 = vector.shape_cast %200 : vector<8x8x32xf32> to vector<64x32xf32>
    %202 = arith.truncf %201 : vector<64x32xf32> to vector<64x32xbf16>
    %c0_157 = arith.constant 0 : index
    %c0_158 = arith.constant 0 : index
    %203 = vector.load %arg22[%c0_157, %c0_158] : memref<64x576xbf16, #tpu.memory_space<vmem>>, vector<64x32xbf16>
    tpu.vector_store %arg22[%c0_157, %c0_158], %202 {strides = array<i32>} : memref<64x576xbf16, #tpu.memory_space<vmem>>, vector<64x32xbf16>,
    %c0_159 = arith.constant 0 : index
    %c1_160 = arith.constant 1 : index
    %c0_161 = arith.constant 0 : index
    %204 = vector.load %arg21[%c0_159, %c1_160, %c0_161] : memref<10x10x64xf32, #tpu.memory_space<vmem>>, vector<8x8x32xf32>
    %205 = vector.shape_cast %204 : vector<8x8x32xf32> to vector<64x32xf32>
    %206 = arith.truncf %205 : vector<64x32xf32> to vector<64x32xbf16>
    %c0_162 = arith.constant 0 : index
    %c32_163 = arith.constant 32 : index
    %207 = vector.load %arg22[%c0_162, %c32_163] : memref<64x576xbf16, #tpu.memory_space<vmem>>, vector<64x32xbf16>
    tpu.vector_store %arg22[%c0_162, %c32_163], %206 {strides = array<i32>} : memref<64x576xbf16, #tpu.memory_space<vmem>>, vector<64x32xbf16>,
    %c0_164 = arith.constant 0 : index
    %c2_165 = arith.constant 2 : index
    %c0_166 = arith.constant 0 : index
    %208 = vector.load %arg21[%c0_164, %c2_165, %c0_166] : memref<10x10x64xf32, #tpu.memory_space<vmem>>, vector<8x8x32xf32>
    %209 = vector.shape_cast %208 : vector<8x8x32xf32> to vector<64x32xf32>
    %210 = arith.truncf %209 : vector<64x32xf32> to vector<64x32xbf16>
    %c0_167 = arith.constant 0 : index
    %c64_168 = arith.constant 64 : index
    %211 = vector.load %arg22[%c0_167, %c64_168] : memref<64x576xbf16, #tpu.memory_space<vmem>>, vector<64x32xbf16>
    tpu.vector_store %arg22[%c0_167, %c64_168], %210 {strides = array<i32>} : memref<64x576xbf16, #tpu.memory_space<vmem>>, vector<64x32xbf16>,
    %c1_169 = arith.constant 1 : index
    %c0_170 = arith.constant 0 : index
    %c0_171 = arith.constant 0 : index
    %212 = vector.load %arg21[%c1_169, %c0_170, %c0_171] : memref<10x10x64xf32, #tpu.memory_space<vmem>>, vector<8x8x32xf32>
    %213 = vector.shape_cast %212 : vector<8x8x32xf32> to vector<64x32xf32>
    %214 = arith.truncf %213 : vector<64x32xf32> to vector<64x32xbf16>
    %c0_172 = arith.constant 0 : index
    %c96_173 = arith.constant 96 : index
    %215 = vector.load %arg22[%c0_172, %c96_173] : memref<64x576xbf16, #tpu.memory_space<vmem>>, vector<64x32xbf16>
    tpu.vector_store %arg22[%c0_172, %c96_173], %214 {strides = array<i32>} : memref<64x576xbf16, #tpu.memory_space<vmem>>, vector<64x32xbf16>,
    %c1_174 = arith.constant 1 : index
    %c1_175 = arith.constant 1 : index
    %c0_176 = arith.constant 0 : index
    %216 = vector.load %arg21[%c1_174, %c1_175, %c0_176] : memref<10x10x64xf32, #tpu.memory_space<vmem>>, vector<8x8x32xf32>
    %217 = vector.shape_cast %216 : vector<8x8x32xf32> to vector<64x32xf32>
    %218 = arith.truncf %217 : vector<64x32xf32> to vector<64x32xbf16>
    %c0_177 = arith.constant 0 : index
    %c128_178 = arith.constant 128 : index
    %219 = vector.load %arg22[%c0_177, %c128_178] : memref<64x576xbf16, #tpu.memory_space<vmem>>, vector<64x32xbf16>
    tpu.vector_store %arg22[%c0_177, %c128_178], %218 {strides = array<i32>} : memref<64x576xbf16, #tpu.memory_space<vmem>>, vector<64x32xbf16>,
    %c1_179 = arith.constant 1 : index
    %c2_180 = arith.constant 2 : index
    %c0_181 = arith.constant 0 : index
    %220 = vector.load %arg21[%c1_179, %c2_180, %c0_181] : memref<10x10x64xf32, #tpu.memory_space<vmem>>, vector<8x8x32xf32>
    %221 = vector.shape_cast %220 : vector<8x8x32xf32> to vector<64x32xf32>
    %222 = arith.truncf %221 : vector<64x32xf32> to vector<64x32xbf16>
    %c0_182 = arith.constant 0 : index
    %c160_183 = arith.constant 160 : index
    %223 = vector.load %arg22[%c0_182, %c160_183] : memref<64x576xbf16, #tpu.memory_space<vmem>>, vector<64x32xbf16>
    tpu.vector_store %arg22[%c0_182, %c160_183], %222 {strides = array<i32>} : memref<64x576xbf16, #tpu.memory_space<vmem>>, vector<64x32xbf16>,
    %c2_184 = arith.constant 2 : index
    %c0_185 = arith.constant 0 : index
    %c0_186 = arith.constant 0 : index
    %224 = vector.load %arg21[%c2_184, %c0_185, %c0_186] : memref<10x10x64xf32, #tpu.memory_space<vmem>>, vector<8x8x32xf32>
    %225 = vector.shape_cast %224 : vector<8x8x32xf32> to vector<64x32xf32>
    %226 = arith.truncf %225 : vector<64x32xf32> to vector<64x32xbf16>
    %c0_187 = arith.constant 0 : index
    %c192_188 = arith.constant 192 : index
    %227 = vector.load %arg22[%c0_187, %c192_188] : memref<64x576xbf16, #tpu.memory_space<vmem>>, vector<64x32xbf16>
    tpu.vector_store %arg22[%c0_187, %c192_188], %226 {strides = array<i32>} : memref<64x576xbf16, #tpu.memory_space<vmem>>, vector<64x32xbf16>,
    %c2_189 = arith.constant 2 : index
    %c1_190 = arith.constant 1 : index
    %c0_191 = arith.constant 0 : index
    %228 = vector.load %arg21[%c2_189, %c1_190, %c0_191] : memref<10x10x64xf32, #tpu.memory_space<vmem>>, vector<8x8x32xf32>
    %229 = vector.shape_cast %228 : vector<8x8x32xf32> to vector<64x32xf32>
    %230 = arith.truncf %229 : vector<64x32xf32> to vector<64x32xbf16>
    %c0_192 = arith.constant 0 : index
    %c224_193 = arith.constant 224 : index
    %231 = vector.load %arg22[%c0_192, %c224_193] : memref<64x576xbf16, #tpu.memory_space<vmem>>, vector<64x32xbf16>
    tpu.vector_store %arg22[%c0_192, %c224_193], %230 {strides = array<i32>} : memref<64x576xbf16, #tpu.memory_space<vmem>>, vector<64x32xbf16>,
    %c2_194 = arith.constant 2 : index
    %c2_195 = arith.constant 2 : index
    %c0_196 = arith.constant 0 : index
    %232 = vector.load %arg21[%c2_194, %c2_195, %c0_196] : memref<10x10x64xf32, #tpu.memory_space<vmem>>, vector<8x8x32xf32>
    %233 = vector.shape_cast %232 : vector<8x8x32xf32> to vector<64x32xf32>
    %234 = arith.truncf %233 : vector<64x32xf32> to vector<64x32xbf16>
    %c0_197 = arith.constant 0 : index
    %c256_198 = arith.constant 256 : index
    %235 = vector.load %arg22[%c0_197, %c256_198] : memref<64x576xbf16, #tpu.memory_space<vmem>>, vector<64x32xbf16>
    tpu.vector_store %arg22[%c0_197, %c256_198], %234 {strides = array<i32>} : memref<64x576xbf16, #tpu.memory_space<vmem>>, vector<64x32xbf16>,
    %c0_199 = arith.constant 0 : index
    %c0_200 = arith.constant 0 : index
    %236 = vector.load %arg22[%c0_199, %c0_200] : memref<64x576xbf16, #tpu.memory_space<vmem>>, vector<64x288xbf16>
    %c0_201 = arith.constant 0 : index
    %c0_202 = arith.constant 0 : index
    %237 = vector.load %arg14[%c0_201, %c0_202] : memref<288x64xbf16, #tpu.memory_space<vmem>>, vector<288x64xbf16>
    %cst_203 = arith.constant dense<0.000000e+00> : vector<64x64xf32>
    %238 = tpu.matmul %236, %237, %cst_203 {dimension_numbers = #tpu.dot_dimension_numbers<[1], [0], [0], [1], [0, 0, 1, 1], [], []>} : vector<64x288xbf16>, vector<288x64xbf16>, vector<64x64xf32> -> vector<64x64xf32>
    %c0_204 = arith.constant 0 : index
    %c0_205 = arith.constant 0 : index
    %239 = vector.load %arg15[%c0_204, %c0_205] : memref<1x64xf32, #tpu.memory_space<vmem>>, vector<1x64xf32>
    %240 = vector.broadcast %239 : vector<1x64xf32> to vector<64x64xf32>
    %241 = arith.addf %238, %240 : vector<64x64xf32>
    %cst_206 = arith.constant 0.000000e+00 : f32
    %242 = vector.broadcast %cst_206 : f32 to vector<64x64xf32>
    %243 = arith.cmpf oge, %241, %242 : vector<64x64xf32>
    %cst_207 = arith.constant 2.000000e-01 : f32
    %244 = vector.broadcast %cst_207 : f32 to vector<64x64xf32>
    %245 = arith.mulf %244, %241 : vector<64x64xf32>
    %246 = arith.select %243, %241, %245 : vector<64x64xi1>, vector<64x64xf32>
    %247 = vector.shape_cast %246 : vector<64x64xf32> to vector<8x8x64xf32>
    %c1_208 = arith.constant 1 : index
    %c1_209 = arith.constant 1 : index
    %c0_210 = arith.constant 0 : index
    %248 = vector.load %arg21[%c1_208, %c1_209, %c0_210] : memref<10x10x64xf32, #tpu.memory_space<vmem>>, vector<8x8x64xf32>
    tpu.vector_store %arg21[%c1_208, %c1_209, %c0_210], %247 {strides = array<i32>} : memref<10x10x64xf32, #tpu.memory_space<vmem>>, vector<8x8x64xf32>,
    %c0_211 = arith.constant 0 : index
    %c0_212 = arith.constant 0 : index
    %c0_213 = arith.constant 0 : index
    %249 = vector.load %arg21[%c0_211, %c0_212, %c0_213] : memref<10x10x64xf32, #tpu.memory_space<vmem>>, vector<8x8x32xf32>
    %250 = vector.shape_cast %249 : vector<8x8x32xf32> to vector<64x32xf32>
    %251 = arith.truncf %250 : vector<64x32xf32> to vector<64x32xbf16>
    %c0_214 = arith.constant 0 : index
    %c0_215 = arith.constant 0 : index
    %252 = vector.load %arg22[%c0_214, %c0_215] : memref<64x576xbf16, #tpu.memory_space<vmem>>, vector<64x32xbf16>
    tpu.vector_store %arg22[%c0_214, %c0_215], %251 {strides = array<i32>} : memref<64x576xbf16, #tpu.memory_space<vmem>>, vector<64x32xbf16>,
    %c0_216 = arith.constant 0 : index
    %c1_217 = arith.constant 1 : index
    %c0_218 = arith.constant 0 : index
    %253 = vector.load %arg21[%c0_216, %c1_217, %c0_218] : memref<10x10x64xf32, #tpu.memory_space<vmem>>, vector<8x8x32xf32>
    %254 = vector.shape_cast %253 : vector<8x8x32xf32> to vector<64x32xf32>
    %255 = arith.truncf %254 : vector<64x32xf32> to vector<64x32xbf16>
    %c0_219 = arith.constant 0 : index
    %c32_220 = arith.constant 32 : index
    %256 = vector.load %arg22[%c0_219, %c32_220] : memref<64x576xbf16, #tpu.memory_space<vmem>>, vector<64x32xbf16>
    tpu.vector_store %arg22[%c0_219, %c32_220], %255 {strides = array<i32>} : memref<64x576xbf16, #tpu.memory_space<vmem>>, vector<64x32xbf16>,
    %c0_221 = arith.constant 0 : index
    %c2_222 = arith.constant 2 : index
    %c0_223 = arith.constant 0 : index
    %257 = vector.load %arg21[%c0_221, %c2_222, %c0_223] : memref<10x10x64xf32, #tpu.memory_space<vmem>>, vector<8x8x32xf32>
    %258 = vector.shape_cast %257 : vector<8x8x32xf32> to vector<64x32xf32>
    %259 = arith.truncf %258 : vector<64x32xf32> to vector<64x32xbf16>
    %c0_224 = arith.constant 0 : index
    %c64_225 = arith.constant 64 : index
    %260 = vector.load %arg22[%c0_224, %c64_225] : memref<64x576xbf16, #tpu.memory_space<vmem>>, vector<64x32xbf16>
    tpu.vector_store %arg22[%c0_224, %c64_225], %259 {strides = array<i32>} : memref<64x576xbf16, #tpu.memory_space<vmem>>, vector<64x32xbf16>,
    %c1_226 = arith.constant 1 : index
    %c0_227 = arith.constant 0 : index
    %c0_228 = arith.constant 0 : index
    %261 = vector.load %arg21[%c1_226, %c0_227, %c0_228] : memref<10x10x64xf32, #tpu.memory_space<vmem>>, vector<8x8x32xf32>
    %262 = vector.shape_cast %261 : vector<8x8x32xf32> to vector<64x32xf32>
    %263 = arith.truncf %262 : vector<64x32xf32> to vector<64x32xbf16>
    %c0_229 = arith.constant 0 : index
    %c96_230 = arith.constant 96 : index
    %264 = vector.load %arg22[%c0_229, %c96_230] : memref<64x576xbf16, #tpu.memory_space<vmem>>, vector<64x32xbf16>
    tpu.vector_store %arg22[%c0_229, %c96_230], %263 {strides = array<i32>} : memref<64x576xbf16, #tpu.memory_space<vmem>>, vector<64x32xbf16>,
    %c1_231 = arith.constant 1 : index
    %c1_232 = arith.constant 1 : index
    %c0_233 = arith.constant 0 : index
    %265 = vector.load %arg21[%c1_231, %c1_232, %c0_233] : memref<10x10x64xf32, #tpu.memory_space<vmem>>, vector<8x8x32xf32>
    %266 = vector.shape_cast %265 : vector<8x8x32xf32> to vector<64x32xf32>
    %267 = arith.truncf %266 : vector<64x32xf32> to vector<64x32xbf16>
    %c0_234 = arith.constant 0 : index
    %c128_235 = arith.constant 128 : index
    %268 = vector.load %arg22[%c0_234, %c128_235] : memref<64x576xbf16, #tpu.memory_space<vmem>>, vector<64x32xbf16>
    tpu.vector_store %arg22[%c0_234, %c128_235], %267 {strides = array<i32>} : memref<64x576xbf16, #tpu.memory_space<vmem>>, vector<64x32xbf16>,
    %c1_236 = arith.constant 1 : index
    %c2_237 = arith.constant 2 : index
    %c0_238 = arith.constant 0 : index
    %269 = vector.load %arg21[%c1_236, %c2_237, %c0_238] : memref<10x10x64xf32, #tpu.memory_space<vmem>>, vector<8x8x32xf32>
    %270 = vector.shape_cast %269 : vector<8x8x32xf32> to vector<64x32xf32>
    %271 = arith.truncf %270 : vector<64x32xf32> to vector<64x32xbf16>
    %c0_239 = arith.constant 0 : index
    %c160_240 = arith.constant 160 : index
    %272 = vector.load %arg22[%c0_239, %c160_240] : memref<64x576xbf16, #tpu.memory_space<vmem>>, vector<64x32xbf16>
    tpu.vector_store %arg22[%c0_239, %c160_240], %271 {strides = array<i32>} : memref<64x576xbf16, #tpu.memory_space<vmem>>, vector<64x32xbf16>,
    %c2_241 = arith.constant 2 : index
    %c0_242 = arith.constant 0 : index
    %c0_243 = arith.constant 0 : index
    %273 = vector.load %arg21[%c2_241, %c0_242, %c0_243] : memref<10x10x64xf32, #tpu.memory_space<vmem>>, vector<8x8x32xf32>
    %274 = vector.shape_cast %273 : vector<8x8x32xf32> to vector<64x32xf32>
    %275 = arith.truncf %274 : vector<64x32xf32> to vector<64x32xbf16>
    %c0_244 = arith.constant 0 : index
    %c192_245 = arith.constant 192 : index
    %276 = vector.load %arg22[%c0_244, %c192_245] : memref<64x576xbf16, #tpu.memory_space<vmem>>, vector<64x32xbf16>
    tpu.vector_store %arg22[%c0_244, %c192_245], %275 {strides = array<i32>} : memref<64x576xbf16, #tpu.memory_space<vmem>>, vector<64x32xbf16>,
    %c2_246 = arith.constant 2 : index
    %c1_247 = arith.constant 1 : index
    %c0_248 = arith.constant 0 : index
    %277 = vector.load %arg21[%c2_246, %c1_247, %c0_248] : memref<10x10x64xf32, #tpu.memory_space<vmem>>, vector<8x8x32xf32>
    %278 = vector.shape_cast %277 : vector<8x8x32xf32> to vector<64x32xf32>
    %279 = arith.truncf %278 : vector<64x32xf32> to vector<64x32xbf16>
    %c0_249 = arith.constant 0 : index
    %c224_250 = arith.constant 224 : index
    %280 = vector.load %arg22[%c0_249, %c224_250] : memref<64x576xbf16, #tpu.memory_space<vmem>>, vector<64x32xbf16>
    tpu.vector_store %arg22[%c0_249, %c224_250], %279 {strides = array<i32>} : memref<64x576xbf16, #tpu.memory_space<vmem>>, vector<64x32xbf16>,
    %c2_251 = arith.constant 2 : index
    %c2_252 = arith.constant 2 : index
    %c0_253 = arith.constant 0 : index
    %281 = vector.load %arg21[%c2_251, %c2_252, %c0_253] : memref<10x10x64xf32, #tpu.memory_space<vmem>>, vector<8x8x32xf32>
    %282 = vector.shape_cast %281 : vector<8x8x32xf32> to vector<64x32xf32>
    %283 = arith.truncf %282 : vector<64x32xf32> to vector<64x32xbf16>
    %c0_254 = arith.constant 0 : index
    %c256_255 = arith.constant 256 : index
    %284 = vector.load %arg22[%c0_254, %c256_255] : memref<64x576xbf16, #tpu.memory_space<vmem>>, vector<64x32xbf16>
    tpu.vector_store %arg22[%c0_254, %c256_255], %283 {strides = array<i32>} : memref<64x576xbf16, #tpu.memory_space<vmem>>, vector<64x32xbf16>,
    %c0_256 = arith.constant 0 : index
    %c0_257 = arith.constant 0 : index
    %285 = vector.load %arg22[%c0_256, %c0_257] : memref<64x576xbf16, #tpu.memory_space<vmem>>, vector<64x288xbf16>
    %c0_258 = arith.constant 0 : index
    %c0_259 = arith.constant 0 : index
    %286 = vector.load %arg16[%c0_258, %c0_259] : memref<288x32xbf16, #tpu.memory_space<vmem>>, vector<288x32xbf16>
    %cst_260 = arith.constant dense<0.000000e+00> : vector<64x32xf32>
    %287 = tpu.matmul %285, %286, %cst_260 {dimension_numbers = #tpu.dot_dimension_numbers<[1], [0], [0], [1], [0, 0, 1, 1], [], []>} : vector<64x288xbf16>, vector<288x32xbf16>, vector<64x32xf32> -> vector<64x32xf32>
    %c0_261 = arith.constant 0 : index
    %c0_262 = arith.constant 0 : index
    %288 = vector.load %arg17[%c0_261, %c0_262] : memref<1x32xf32, #tpu.memory_space<vmem>>, vector<1x32xf32>
    %289 = vector.broadcast %288 : vector<1x32xf32> to vector<64x32xf32>
    %290 = arith.addf %287, %289 : vector<64x32xf32>
    %c0_263 = arith.constant 0 : index
    %c0_264 = arith.constant 0 : index
    %c32_265 = arith.constant 32 : index
    %291 = vector.load %arg21[%c0_263, %c0_264, %c32_265] : memref<10x10x64xf32, #tpu.memory_space<vmem>>, vector<8x8x32xf32>
    %292 = vector.shape_cast %291 : vector<8x8x32xf32> to vector<64x32xf32>
    %293 = arith.truncf %292 : vector<64x32xf32> to vector<64x32xbf16>
    %c0_266 = arith.constant 0 : index
    %c0_267 = arith.constant 0 : index
    %294 = vector.load %arg22[%c0_266, %c0_267] : memref<64x576xbf16, #tpu.memory_space<vmem>>, vector<64x32xbf16>
    tpu.vector_store %arg22[%c0_266, %c0_267], %293 {strides = array<i32>} : memref<64x576xbf16, #tpu.memory_space<vmem>>, vector<64x32xbf16>,
    %c0_268 = arith.constant 0 : index
    %c1_269 = arith.constant 1 : index
    %c32_270 = arith.constant 32 : index
    %295 = vector.load %arg21[%c0_268, %c1_269, %c32_270] : memref<10x10x64xf32, #tpu.memory_space<vmem>>, vector<8x8x32xf32>
    %296 = vector.shape_cast %295 : vector<8x8x32xf32> to vector<64x32xf32>
    %297 = arith.truncf %296 : vector<64x32xf32> to vector<64x32xbf16>
    %c0_271 = arith.constant 0 : index
    %c32_272 = arith.constant 32 : index
    %298 = vector.load %arg22[%c0_271, %c32_272] : memref<64x576xbf16, #tpu.memory_space<vmem>>, vector<64x32xbf16>
    tpu.vector_store %arg22[%c0_271, %c32_272], %297 {strides = array<i32>} : memref<64x576xbf16, #tpu.memory_space<vmem>>, vector<64x32xbf16>,
    %c0_273 = arith.constant 0 : index
    %c2_274 = arith.constant 2 : index
    %c32_275 = arith.constant 32 : index
    %299 = vector.load %arg21[%c0_273, %c2_274, %c32_275] : memref<10x10x64xf32, #tpu.memory_space<vmem>>, vector<8x8x32xf32>
    %300 = vector.shape_cast %299 : vector<8x8x32xf32> to vector<64x32xf32>
    %301 = arith.truncf %300 : vector<64x32xf32> to vector<64x32xbf16>
    %c0_276 = arith.constant 0 : index
    %c64_277 = arith.constant 64 : index
    %302 = vector.load %arg22[%c0_276, %c64_277] : memref<64x576xbf16, #tpu.memory_space<vmem>>, vector<64x32xbf16>
    tpu.vector_store %arg22[%c0_276, %c64_277], %301 {strides = array<i32>} : memref<64x576xbf16, #tpu.memory_space<vmem>>, vector<64x32xbf16>,
    %c1_278 = arith.constant 1 : index
    %c0_279 = arith.constant 0 : index
    %c32_280 = arith.constant 32 : index
    %303 = vector.load %arg21[%c1_278, %c0_279, %c32_280] : memref<10x10x64xf32, #tpu.memory_space<vmem>>, vector<8x8x32xf32>
    %304 = vector.shape_cast %303 : vector<8x8x32xf32> to vector<64x32xf32>
    %305 = arith.truncf %304 : vector<64x32xf32> to vector<64x32xbf16>
    %c0_281 = arith.constant 0 : index
    %c96_282 = arith.constant 96 : index
    %306 = vector.load %arg22[%c0_281, %c96_282] : memref<64x576xbf16, #tpu.memory_space<vmem>>, vector<64x32xbf16>
    tpu.vector_store %arg22[%c0_281, %c96_282], %305 {strides = array<i32>} : memref<64x576xbf16, #tpu.memory_space<vmem>>, vector<64x32xbf16>,
    %c1_283 = arith.constant 1 : index
    %c1_284 = arith.constant 1 : index
    %c32_285 = arith.constant 32 : index
    %307 = vector.load %arg21[%c1_283, %c1_284, %c32_285] : memref<10x10x64xf32, #tpu.memory_space<vmem>>, vector<8x8x32xf32>
    %308 = vector.shape_cast %307 : vector<8x8x32xf32> to vector<64x32xf32>
    %309 = arith.truncf %308 : vector<64x32xf32> to vector<64x32xbf16>
    %c0_286 = arith.constant 0 : index
    %c128_287 = arith.constant 128 : index
    %310 = vector.load %arg22[%c0_286, %c128_287] : memref<64x576xbf16, #tpu.memory_space<vmem>>, vector<64x32xbf16>
    tpu.vector_store %arg22[%c0_286, %c128_287], %309 {strides = array<i32>} : memref<64x576xbf16, #tpu.memory_space<vmem>>, vector<64x32xbf16>,
    %c1_288 = arith.constant 1 : index
    %c2_289 = arith.constant 2 : index
    %c32_290 = arith.constant 32 : index
    %311 = vector.load %arg21[%c1_288, %c2_289, %c32_290] : memref<10x10x64xf32, #tpu.memory_space<vmem>>, vector<8x8x32xf32>
    %312 = vector.shape_cast %311 : vector<8x8x32xf32> to vector<64x32xf32>
    %313 = arith.truncf %312 : vector<64x32xf32> to vector<64x32xbf16>
    %c0_291 = arith.constant 0 : index
    %c160_292 = arith.constant 160 : index
    %314 = vector.load %arg22[%c0_291, %c160_292] : memref<64x576xbf16, #tpu.memory_space<vmem>>, vector<64x32xbf16>
    tpu.vector_store %arg22[%c0_291, %c160_292], %313 {strides = array<i32>} : memref<64x576xbf16, #tpu.memory_space<vmem>>, vector<64x32xbf16>,
    %c2_293 = arith.constant 2 : index
    %c0_294 = arith.constant 0 : index
    %c32_295 = arith.constant 32 : index
    %315 = vector.load %arg21[%c2_293, %c0_294, %c32_295] : memref<10x10x64xf32, #tpu.memory_space<vmem>>, vector<8x8x32xf32>
    %316 = vector.shape_cast %315 : vector<8x8x32xf32> to vector<64x32xf32>
    %317 = arith.truncf %316 : vector<64x32xf32> to vector<64x32xbf16>
    %c0_296 = arith.constant 0 : index
    %c192_297 = arith.constant 192 : index
    %318 = vector.load %arg22[%c0_296, %c192_297] : memref<64x576xbf16, #tpu.memory_space<vmem>>, vector<64x32xbf16>
    tpu.vector_store %arg22[%c0_296, %c192_297], %317 {strides = array<i32>} : memref<64x576xbf16, #tpu.memory_space<vmem>>, vector<64x32xbf16>,
    %c2_298 = arith.constant 2 : index
    %c1_299 = arith.constant 1 : index
    %c32_300 = arith.constant 32 : index
    %319 = vector.load %arg21[%c2_298, %c1_299, %c32_300] : memref<10x10x64xf32, #tpu.memory_space<vmem>>, vector<8x8x32xf32>
    %320 = vector.shape_cast %319 : vector<8x8x32xf32> to vector<64x32xf32>
    %321 = arith.truncf %320 : vector<64x32xf32> to vector<64x32xbf16>
    %c0_301 = arith.constant 0 : index
    %c224_302 = arith.constant 224 : index
    %322 = vector.load %arg22[%c0_301, %c224_302] : memref<64x576xbf16, #tpu.memory_space<vmem>>, vector<64x32xbf16>
    tpu.vector_store %arg22[%c0_301, %c224_302], %321 {strides = array<i32>} : memref<64x576xbf16, #tpu.memory_space<vmem>>, vector<64x32xbf16>,
    %c2_303 = arith.constant 2 : index
    %c2_304 = arith.constant 2 : index
    %c32_305 = arith.constant 32 : index
    %323 = vector.load %arg21[%c2_303, %c2_304, %c32_305] : memref<10x10x64xf32, #tpu.memory_space<vmem>>, vector<8x8x32xf32>
    %324 = vector.shape_cast %323 : vector<8x8x32xf32> to vector<64x32xf32>
    %325 = arith.truncf %324 : vector<64x32xf32> to vector<64x32xbf16>
    %c0_306 = arith.constant 0 : index
    %c256_307 = arith.constant 256 : index
    %326 = vector.load %arg22[%c0_306, %c256_307] : memref<64x576xbf16, #tpu.memory_space<vmem>>, vector<64x32xbf16>
    tpu.vector_store %arg22[%c0_306, %c256_307], %325 {strides = array<i32>} : memref<64x576xbf16, #tpu.memory_space<vmem>>, vector<64x32xbf16>,
    %c0_308 = arith.constant 0 : index
    %c0_309 = arith.constant 0 : index
    %327 = vector.load %arg22[%c0_308, %c0_309] : memref<64x576xbf16, #tpu.memory_space<vmem>>, vector<64x288xbf16>
    %c0_310 = arith.constant 0 : index
    %c0_311 = arith.constant 0 : index
    %328 = vector.load %arg18[%c0_310, %c0_311] : memref<288x32xbf16, #tpu.memory_space<vmem>>, vector<288x32xbf16>
    %cst_312 = arith.constant dense<0.000000e+00> : vector<64x32xf32>
    %329 = tpu.matmul %327, %328, %cst_312 {dimension_numbers = #tpu.dot_dimension_numbers<[1], [0], [0], [1], [0, 0, 1, 1], [], []>} : vector<64x288xbf16>, vector<288x32xbf16>, vector<64x32xf32> -> vector<64x32xf32>
    %c0_313 = arith.constant 0 : index
    %c0_314 = arith.constant 0 : index
    %330 = vector.load %arg19[%c0_313, %c0_314] : memref<1x32xf32, #tpu.memory_space<vmem>>, vector<1x32xf32>
    %331 = vector.broadcast %330 : vector<1x32xf32> to vector<64x32xf32>
    %332 = arith.addf %329, %331 : vector<64x32xf32>
    %c0_315 = arith.constant 0 : index
    %c0_316 = arith.constant 0 : index
    %333 = memref.load %arg3[%c0_315, %c0_316] : memref<1x1xf32, #tpu.memory_space<smem>>
    %334 = arith.mulf %11, %290 : vector<64x32xf32>
    %335 = arith.addf %334, %332 : vector<64x32xf32>
    %336 = vector.broadcast %333 : f32 to vector<64x32xf32>
    %337 = arith.mulf %336, %335 : vector<64x32xf32>
    %338 = arith.addf %11, %337 : vector<64x32xf32>
    %339 = vector.shape_cast %338 : vector<64x32xf32> to vector<1x8x8x32xf32>
    %c0_317 = arith.constant 0 : index
    %c0_318 = arith.constant 0 : index
    %c0_319 = arith.constant 0 : index
    %c0_320 = arith.constant 0 : index
    %340 = vector.load %arg20[%c0_317, %c0_318, %c0_319, %c0_320] : memref<1x8x8x32xf32, #tpu.memory_space<vmem>>, vector<1x8x8x32xf32>
    tpu.vector_store %arg20[%c0_317, %c0_318, %c0_319, %c0_320], %339 {strides = array<i32>} : memref<1x8x8x32xf32, #tpu.memory_space<vmem>>, vector<1x8x8x32xf32>,
    return
  }
  func.func @transform_0(%arg0: i32) -> (i32, i32, i32, i32) {
    %c0_i32 = arith.constant 0 : i32
    %c0_i32_0 = arith.constant 0 : i32
    %c0_i32_1 = arith.constant 0 : i32
    %c0_i32_2 = arith.constant 0 : i32
    return %arg0, %c0_i32, %c0_i32_0, %c0_i32_1 : i32, i32, i32, i32
  }
  func.func @transform_1(%arg0: i32) -> (i32, i32, i32, i32) {
    %c0_i32 = arith.constant 0 : i32
    %c0_i32_0 = arith.constant 0 : i32
    %c0_i32_1 = arith.constant 0 : i32
    %c0_i32_2 = arith.constant 0 : i32
    return %arg0, %c0_i32, %c0_i32_0, %c0_i32_1 : i32, i32, i32, i32
  }
  func.func @transform_2(%arg0: i32) -> (i32, i32) {
    %c0_i32 = arith.constant 0 : i32
    %c0_i32_0 = arith.constant 0 : i32
    %c0_i32_1 = arith.constant 0 : i32
    return %c0_i32, %c0_i32_0 : i32, i32
  }
  func.func @transform_3(%arg0: i32) -> (i32, i32) {
    %c0_i32 = arith.constant 0 : i32
    %c0_i32_0 = arith.constant 0 : i32
    %c0_i32_1 = arith.constant 0 : i32
    return %c0_i32, %c0_i32_0 : i32, i32
  }
  func.func @transform_4(%arg0: i32) -> (i32, i32) {
    %c0_i32 = arith.constant 0 : i32
    %c0_i32_0 = arith.constant 0 : i32
    %c0_i32_1 = arith.constant 0 : i32
    return %c0_i32, %c0_i32_0 : i32, i32
  }
  func.func @transform_5(%arg0: i32) -> (i32, i32) {
    %c0_i32 = arith.constant 0 : i32
    %c0_i32_0 = arith.constant 0 : i32
    %c0_i32_1 = arith.constant 0 : i32
    return %c0_i32, %c0_i32_0 : i32, i32
  }
  func.func @transform_6(%arg0: i32) -> (i32, i32) {
    %c0_i32 = arith.constant 0 : i32
    %c0_i32_0 = arith.constant 0 : i32
    %c0_i32_1 = arith.constant 0 : i32
    return %c0_i32, %c0_i32_0 : i32, i32
  }
  func.func @transform_7(%arg0: i32) -> (i32, i32) {
    %c0_i32 = arith.constant 0 : i32
    %c0_i32_0 = arith.constant 0 : i32
    %c0_i32_1 = arith.constant 0 : i32
    return %c0_i32, %c0_i32_0 : i32, i32
  }
  func.func @transform_8(%arg0: i32) -> (i32, i32) {
    %c0_i32 = arith.constant 0 : i32
    %c0_i32_0 = arith.constant 0 : i32
    %c0_i32_1 = arith.constant 0 : i32
    return %c0_i32, %c0_i32_0 : i32, i32
  }
  func.func @transform_9(%arg0: i32) -> (i32, i32) {
    %c0_i32 = arith.constant 0 : i32
    %c0_i32_0 = arith.constant 0 : i32
    %c0_i32_1 = arith.constant 0 : i32
    return %c0_i32, %c0_i32_0 : i32, i32
  }
  func.func @transform_10(%arg0: i32) -> (i32, i32) {
    %c0_i32 = arith.constant 0 : i32
    %c0_i32_0 = arith.constant 0 : i32
    %c0_i32_1 = arith.constant 0 : i32
    return %c0_i32, %c0_i32_0 : i32, i32
  }
  func.func @transform_11(%arg0: i32) -> (i32, i32) {
    %c0_i32 = arith.constant 0 : i32
    %c0_i32_0 = arith.constant 0 : i32
    %c0_i32_1 = arith.constant 0 : i32
    return %c0_i32, %c0_i32_0 : i32, i32
  }
  func.func @transform_12(%arg0: i32) -> (i32, i32) {
    %c0_i32 = arith.constant 0 : i32
    %c0_i32_0 = arith.constant 0 : i32
    %c0_i32_1 = arith.constant 0 : i32
    return %c0_i32, %c0_i32_0 : i32, i32
  }
  func.func @transform_13(%arg0: i32) -> (i32, i32) {
    %c0_i32 = arith.constant 0 : i32
    %c0_i32_0 = arith.constant 0 : i32
    %c0_i32_1 = arith.constant 0 : i32
    return %c0_i32, %c0_i32_0 : i32, i32
  }
  func.func @transform_14(%arg0: i32) -> (i32, i32) {
    %c0_i32 = arith.constant 0 : i32
    %c0_i32_0 = arith.constant 0 : i32
    %c0_i32_1 = arith.constant 0 : i32
    return %c0_i32, %c0_i32_0 : i32, i32
  }
  func.func @transform_15(%arg0: i32) -> (i32, i32) {
    %c0_i32 = arith.constant 0 : i32
    %c0_i32_0 = arith.constant 0 : i32
    %c0_i32_1 = arith.constant 0 : i32
    return %c0_i32, %c0_i32_0 : i32, i32
  }
  func.func @transform_16(%arg0: i32) -> (i32, i32) {
    %c0_i32 = arith.constant 0 : i32
    %c0_i32_0 = arith.constant 0 : i32
    %c0_i32_1 = arith.constant 0 : i32
    return %c0_i32, %c0_i32_0 : i32, i32
  }
  func.func @transform_17(%arg0: i32) -> (i32, i32) {
    %c0_i32 = arith.constant 0 : i32
    %c0_i32_0 = arith.constant 0 : i32
    %c0_i32_1 = arith.constant 0 : i32
    return %c0_i32, %c0_i32_0 : i32, i32
  }
  func.func @transform_18(%arg0: i32) -> (i32, i32) {
    %c0_i32 = arith.constant 0 : i32
    %c0_i32_0 = arith.constant 0 : i32
    %c0_i32_1 = arith.constant 0 : i32
    return %c0_i32, %c0_i32_0 : i32, i32
  }
  func.func @transform_19(%arg0: i32) -> (i32, i32, i32, i32) {
    %c0_i32 = arith.constant 0 : i32
    %c0_i32_0 = arith.constant 0 : i32
    %c0_i32_1 = arith.constant 0 : i32
    %c0_i32_2 = arith.constant 0 : i32
    return %arg0, %c0_i32, %c0_i32_0, %c0_i32_1 : i32, i32, i32, i32
  }
}

</mosaic_0001>

<llo_original>
// kernel: tpu_custom_call.1
$region0: #{tpu_custom_call.1}
  #allocation0 [shape = 'u32[]', space=smem, size = 0x4, offset = 0x4, fixed_abs, tag = 'smem constant byte address 0x4 - core index']
  #allocation1 [shape = 'u32[72,128]{1,0:T(1,128)}', space=vmem, size = 0x9000, scoped, tag = 'internal scratch']
  #allocation2 [shape = 'f32[10,10,64]{2,1,0:T(8,128)}', space=vmem, size = 0x14000, scoped, tag = 'scratch operand']
  #allocation3 [shape = 'bf16[64,576]{1,0:T(8,128)(2,1)}', space=vmem, size = 0x14000, scoped, tag = 'scratch operand']
  #allocation4 [shape = 'f32[1,1]{1,0:T(1,128)S(6)}', space=smem, size = 0x200, scoped, tag = 'scoped memory for tpu_custom_call.1']
  %s0 = inlined_call_operand.vmem [shape: f32[2,8,8,32], index: 0, kind: input, shape index: {}]
  %s1 = inlined_call_operand.vmem [shape: f32[2,8,8,32], index: 1, kind: input, shape index: {}]
  %s2 = inlined_call_operand.<no memory space> [shape: f32[1,1], index: 2, kind: input, shape index: {}]
  %s3 = inlined_call_operand.vmem [shape: f32[1,64], index: 3, kind: input, shape index: {}]
  %s4 = inlined_call_operand.vmem [shape: f32[1,64], index: 4, kind: input, shape index: {}]
  %s5 = inlined_call_operand.vmem [shape: f32[32,32], index: 5, kind: input, shape index: {}]
  %s6 = inlined_call_operand.vmem [shape: bf16[576,32], index: 6, kind: input, shape index: {}]
  %s7 = inlined_call_operand.vmem [shape: f32[1,32], index: 7, kind: input, shape index: {}]
  %s8 = inlined_call_operand.vmem [shape: f32[1,32], index: 8, kind: input, shape index: {}]
  %s9 = inlined_call_operand.vmem [shape: f32[1,32], index: 9, kind: input, shape index: {}]
  %s10 = inlined_call_operand.vmem [shape: f32[32,32], index: 10, kind: input, shape index: {}]
  %s11 = inlined_call_operand.vmem [shape: bf16[352,32], index: 11, kind: input, shape index: {}]
  %s12 = inlined_call_operand.vmem [shape: f32[1,32], index: 12, kind: input, shape index: {}]
  %s13 = inlined_call_operand.vmem [shape: bf16[288,64], index: 13, kind: input, shape index: {}]
  %s14 = inlined_call_operand.vmem [shape: f32[1,64], index: 14, kind: input, shape index: {}]
  %s15 = inlined_call_operand.vmem [shape: bf16[288,32], index: 15, kind: input, shape index: {}]
  %s16 = inlined_call_operand.vmem [shape: f32[1,32], index: 16, kind: input, shape index: {}]
  %s17 = inlined_call_operand.vmem [shape: bf16[288,32], index: 17, kind: input, shape index: {}]
  %s18 = inlined_call_operand.vmem [shape: f32[1,32], index: 18, kind: input, shape index: {}]
  %s19 = inlined_call_operand.hbm [shape: f32[2,8,8,32], index: 19, kind: output, shape index: {}]
  %s20 = sld [smem:[#allocation0]]
  $region109: #{tpu_custom_call.1} parent=0
    _
  %s22 = ssub.s32 1, %s20
  %s23 = scalar_select 0, %s22, %s20
  %24 = sst [smem:[#allocation4]] %s2
  $region1: #{tpu_custom_call.1} parent=0
    #allocation5 [shape = 'u8[65536]{0}', space=vmem, size = 0x10000, scoped, tag = 'output window, operand 0']
    #allocation6 [shape = 's32[2]{0}', space=sflag, size = 0x8, scoped, tag = 'scoped memory for tpu_custom_call.1']
    %25 = vsyncpa [#allocation6], 0
    %s26 = scalar_lea.sflag [#allocation6], 1
    %27 = vsyncpa %s26, 0
    loop: start=0, step=1, limit=4
    $region2: #{tpu_custom_call.1} parent=1 // loop_pre_header
      _
    $region3: #{tpu_custom_call.1} parent=1 // loop_header
      %s29 = sphi 0, %s33
      %p30 = scmp.ge.s32.totalorder %s29, 4
      %s39 = sphi 0, %s41
      %s42 = sphi 0, %s39
      %s43 = sphi 0, %s42
      %s59 = sphi 0, %s43
      %s65 = sphi 0, %s67
      %s68 = sphi 0, %s65
      %s69 = sphi 0, %s68
      %s85 = sphi 0, %s69
      %s89 = sphi 0, %s89
      %s91 = sphi 0, %s89
      %s92 = sphi 0, %s91
      %s106 = sphi 0, %s92
      %s110 = sphi 0, %s110
      %s112 = sphi 0, %s110
      %s113 = sphi 0, %s112
      %s127 = sphi 0, %s113
      %s131 = sphi 0, %s131
      %s133 = sphi 0, %s131
      %s134 = sphi 0, %s133
      %s148 = sphi 0, %s134
      %s152 = sphi 0, %s152
      %s154 = sphi 0, %s152
      %s155 = sphi 0, %s154
      %s169 = sphi 0, %s155
      %s173 = sphi 0, %s173
      %s175 = sphi 0, %s173
      %s176 = sphi 0, %s175
      %s190 = sphi 0, %s176
      %s194 = sphi 0, %s194
      %s196 = sphi 0, %s194
      %s197 = sphi 0, %s196
      %s211 = sphi 0, %s197
      %s215 = sphi 0, %s215
      %s217 = sphi 0, %s215
      %s218 = sphi 0, %s217
      %s232 = sphi 0, %s218
      %s236 = sphi 0, %s236
      %s238 = sphi 0, %s236
      %s239 = sphi 0, %s238
      %s253 = sphi 0, %s239
      %s257 = sphi 0, %s257
      %s259 = sphi 0, %s257
      %s260 = sphi 0, %s259
      %s274 = sphi 0, %s260
      %s278 = sphi 0, %s278
      %s280 = sphi 0, %s278
      %s281 = sphi 0, %s280
      %s295 = sphi 0, %s281
      %s299 = sphi 0, %s299
      %s301 = sphi 0, %s299
      %s302 = sphi 0, %s301
      %s316 = sphi 0, %s302
      %s320 = sphi 0, %s320
      %s322 = sphi 0, %s320
      %s323 = sphi 0, %s322
      %s337 = sphi 0, %s323
      %s341 = sphi 0, %s341
      %s343 = sphi 0, %s341
      %s344 = sphi 0, %s343
      %s358 = sphi 0, %s344
      %s362 = sphi 0, %s362
      %s364 = sphi 0, %s362
      %s365 = sphi 0, %s364
      %s379 = sphi 0, %s365
      %s383 = sphi 0, %s383
      %s385 = sphi 0, %s383
      %s386 = sphi 0, %s385
      %s400 = sphi 0, %s386
      %s404 = sphi 0, %s404
      %s406 = sphi 0, %s404
      %s407 = sphi 0, %s406
      %s421 = sphi 0, %s407
      %s425 = sphi 0, %s425
      %s427 = sphi 0, %s425
      %s428 = sphi 0, %s427
      %s442 = sphi 0, %s428
      %s448 = sphi 0, %s450
      %s451 = sphi 0, %s448
      %s452 = sphi 0, %s451
      %s468 = sphi 0, %s452
    $region4: #{tpu_custom_call.1} parent=1 // loop_header_branch
      %32 = sbr.rel (%p30) target = $region8
    $region5: #{tpu_custom_call.1} parent=1 // loop_body
      %s34 = ssub.s32 %s29, 1
      %s35 = ssub.s32 %s29, 2
      %s36 = sadd.s32 %s29, 1
      %s37 = ssub.s32 %s29, %s36
      %p38 = scmp.eq.s32.totalorder %s37, 0
      %s40 = sadd.s32 %s39, 1
      %s41 = scalar_select %p38, %s39, %s40
      %p44 = pneg %p38
      %p45 = scmp.eq.s32.totalorder %s29, 1
      %p46 = por %p44, %p45
      %p47 = scmp.ne.s32.totalorder %s39, %s42
      %p48 = scmp.eq.s32.totalorder %s29, 0
      %p49 = por %p47, %p48
      %p50 = scmp.ne.s32.totalorder %s39, %s42
      %p51 = scmp.eq.s32.totalorder %s34, 1
      %p52 = por %p50, %p51
      %p53 = scmp.ne.s32.totalorder %s42, %s43
      %p54 = scmp.eq.s32.totalorder %s34, 0
      %p55 = por %p53, %p54
      %p56 = scmp.ne.s32.totalorder %s42, %s43
      %p57 = scmp.eq.s32.totalorder %s35, 1
      %p58 = por %p56, %p57
      %p60 = scmp.ne.s32.totalorder %s43, %s59
      %p61 = scmp.eq.s32.totalorder %s35, 0
      %p62 = por %p60, %p61
      %s63 = ssub.s32 %s29, %s36
      %p64 = scmp.eq.s32.totalorder %s63, 0
      %s66 = sadd.s32 %s65, 1
      %s67 = scalar_select %p64, %s65, %s66
      %p70 = pneg %p64
      %p71 = scmp.eq.s32.totalorder %s29, 1
      %p72 = por %p70, %p71
      %p73 = scmp.ne.s32.totalorder %s65, %s68
      %p74 = scmp.eq.s32.totalorder %s29, 0
      %p75 = por %p73, %p74
      %p76 = scmp.ne.s32.totalorder %s65, %s68
      %p77 = scmp.eq.s32.totalorder %s34, 1
      %p78 = por %p76, %p77
      %p79 = scmp.ne.s32.totalorder %s68, %s69
      %p80 = scmp.eq.s32.totalorder %s34, 0
      %p81 = por %p79, %p80
      %p82 = scmp.ne.s32.totalorder %s68, %s69
      %p83 = scmp.eq.s32.totalorder %s35, 1
      %p84 = por %p82, %p83
      %p86 = scmp.ne.s32.totalorder %s69, %s85
      %p87 = scmp.eq.s32.totalorder %s35, 0
      %p88 = por %p86, %p87
      %s90 = sadd.s32 %s89, 1
      %p93 = scmp.eq.s32.totalorder %s29, 1
      %p94 = scmp.ne.s32.totalorder %s89, %s91
      %p95 = scmp.eq.s32.totalorder %s29, 0
      %p96 = por %p94, %p95
      %p97 = scmp.ne.s32.totalorder %s89, %s91
      %p98 = scmp.eq.s32.totalorder %s34, 1
      %p99 = por %p97, %p98
      %p100 = scmp.ne.s32.totalorder %s91, %s92
      %p101 = scmp.eq.s32.totalorder %s34, 0
      %p102 = por %p100, %p101
      %p103 = scmp.ne.s32.totalorder %s91, %s92
      %p104 = scmp.eq.s32.totalorder %s35, 1
      %p105 = por %p103, %p104
      %p107 = scmp.ne.s32.totalorder %s92, %s106
      %p108 = scmp.eq.s32.totalorder %s35, 0
      %p109 = por %p107, %p108
      %s111 = sadd.s32 %s110, 1
      %p114 = scmp.eq.s32.totalorder %s29, 1
      %p115 = scmp.ne.s32.totalorder %s110, %s112
      %p116 = scmp.eq.s32.totalorder %s29, 0
      %p117 = por %p115, %p116
      %p118 = scmp.ne.s32.totalorder %s110, %s112
      %p119 = scmp.eq.s32.totalorder %s34, 1
      %p120 = por %p118, %p119
      %p121 = scmp.ne.s32.totalorder %s112, %s113
      %p122 = scmp.eq.s32.totalorder %s34, 0
      %p123 = por %p121, %p122
      %p124 = scmp.ne.s32.totalorder %s112, %s113
      %p125 = scmp.eq.s32.totalorder %s35, 1
      %p126 = por %p124, %p125
      %p128 = scmp.ne.s32.totalorder %s113, %s127
      %p129 = scmp.eq.s32.totalorder %s35, 0
      %p130 = por %p128, %p129
      %s132 = sadd.s32 %s131, 1
      %p135 = scmp.eq.s32.totalorder %s29, 1
      %p136 = scmp.ne.s32.totalorder %s131, %s133
      %p137 = scmp.eq.s32.totalorder %s29, 0
      %p138 = por %p136, %p137
      %p139 = scmp.ne.s32.totalorder %s131, %s133
      %p140 = scmp.eq.s32.totalorder %s34, 1
      %p141 = por %p139, %p140
      %p142 = scmp.ne.s32.totalorder %s133, %s134
      %p143 = scmp.eq.s32.totalorder %s34, 0
      %p144 = por %p142, %p143
      %p145 = scmp.ne.s32.totalorder %s133, %s134
      %p146 = scmp.eq.s32.totalorder %s35, 1
      %p147 = por %p145, %p146
      %p149 = scmp.ne.s32.totalorder %s134, %s148
      %p150 = scmp.eq.s32.totalorder %s35, 0
      %p151 = por %p149, %p150
      %s153 = sadd.s32 %s152, 1
      %p156 = scmp.eq.s32.totalorder %s29, 1
      %p157 = scmp.ne.s32.totalorder %s152, %s154
      %p158 = scmp.eq.s32.totalorder %s29, 0
      %p159 = por %p157, %p158
      %p160 = scmp.ne.s32.totalorder %s152, %s154
      %p161 = scmp.eq.s32.totalorder %s34, 1
      %p162 = por %p160, %p161
      %p163 = scmp.ne.s32.totalorder %s154, %s155
      %p164 = scmp.eq.s32.totalorder %s34, 0
      %p165 = por %p163, %p164
      %p166 = scmp.ne.s32.totalorder %s154, %s155
      %p167 = scmp.eq.s32.totalorder %s35, 1
      %p168 = por %p166, %p167
      %p170 = scmp.ne.s32.totalorder %s155, %s169
      %p171 = scmp.eq.s32.totalorder %s35, 0
      %p172 = por %p170, %p171
      %s174 = sadd.s32 %s173, 1
      %p177 = scmp.eq.s32.totalorder %s29, 1
      %p178 = scmp.ne.s32.totalorder %s173, %s175
      %p179 = scmp.eq.s32.totalorder %s29, 0
      %p180 = por %p178, %p179
      %p181 = scmp.ne.s32.totalorder %s173, %s175
      %p182 = scmp.eq.s32.totalorder %s34, 1
      %p183 = por %p181, %p182
      %p184 = scmp.ne.s32.totalorder %s175, %s176
      %p185 = scmp.eq.s32.totalorder %s34, 0
      %p186 = por %p184, %p185
      %p187 = scmp.ne.s32.totalorder %s175, %s176
      %p188 = scmp.eq.s32.totalorder %s35, 1
      %p189 = por %p187, %p188
      %p191 = scmp.ne.s32.totalorder %s176, %s190
      %p192 = scmp.eq.s32.totalorder %s35, 0
      %p193 = por %p191, %p192
      %s195 = sadd.s32 %s194, 1
      %p198 = scmp.eq.s32.totalorder %s29, 1
      %p199 = scmp.ne.s32.totalorder %s194, %s196
      %p200 = scmp.eq.s32.totalorder %s29, 0
      %p201 = por %p199, %p200
      %p202 = scmp.ne.s32.totalorder %s194, %s196
      %p203 = scmp.eq.s32.totalorder %s34, 1
      %p204 = por %p202, %p203
      %p205 = scmp.ne.s32.totalorder %s196, %s197
      %p206 = scmp.eq.s32.totalorder %s34, 0
      %p207 = por %p205, %p206
      %p208 = scmp.ne.s32.totalorder %s196, %s197
      %p209 = scmp.eq.s32.totalorder %s35, 1
      %p210 = por %p208, %p209
      %p212 = scmp.ne.s32.totalorder %s197, %s211
      %p213 = scmp.eq.s32.totalorder %s35, 0
      %p214 = por %p212, %p213
      %s216 = sadd.s32 %s215, 1
      %p219 = scmp.eq.s32.totalorder %s29, 1
      %p220 = scmp.ne.s32.totalorder %s215, %s217
      %p221 = scmp.eq.s32.totalorder %s29, 0
      %p222 = por %p220, %p221
      %p223 = scmp.ne.s32.totalorder %s215, %s217
      %p224 = scmp.eq.s32.totalorder %s34, 1
      %p225 = por %p223, %p224
      %p226 = scmp.ne.s32.totalorder %s217, %s218
      %p227 = scmp.eq.s32.totalorder %s34, 0
      %p228 = por %p226, %p227
      %p229 = scmp.ne.s32.totalorder %s217, %s218
      %p230 = scmp.eq.s32.totalorder %s35, 1
      %p231 = por %p229, %p230
      %p233 = scmp.ne.s32.totalorder %s218, %s232
      %p234 = scmp.eq.s32.totalorder %s35, 0
      %p235 = por %p233, %p234
      %s237 = sadd.s32 %s236, 1
      %p240 = scmp.eq.s32.totalorder %s29, 1
      %p241 = scmp.ne.s32.totalorder %s236, %s238
      %p242 = scmp.eq.s32.totalorder %s29, 0
      %p243 = por %p241, %p242
      %p244 = scmp.ne.s32.totalorder %s236, %s238
      %p245 = scmp.eq.s32.totalorder %s34, 1
      %p246 = por %p244, %p245
      %p247 = scmp.ne.s32.totalorder %s238, %s239
      %p248 = scmp.eq.s32.totalorder %s34, 0
      %p249 = por %p247, %p248
      %p250 = scmp.ne.s32.totalorder %s238, %s239
      %p251 = scmp.eq.s32.totalorder %s35, 1
      %p252 = por %p250, %p251
      %p254 = scmp.ne.s32.totalorder %s239, %s253
      %p255 = scmp.eq.s32.totalorder %s35, 0
      %p256 = por %p254, %p255
      %s258 = sadd.s32 %s257, 1
      %p261 = scmp.eq.s32.totalorder %s29, 1
      %p262 = scmp.ne.s32.totalorder %s257, %s259
      %p263 = scmp.eq.s32.totalorder %s29, 0
      %p264 = por %p262, %p263
      %p265 = scmp.ne.s32.totalorder %s257, %s259
      %p266 = scmp.eq.s32.totalorder %s34, 1
      %p267 = por %p265, %p266
      %p268 = scmp.ne.s32.totalorder %s259, %s260
      %p269 = scmp.eq.s32.totalorder %s34, 0
      %p270 = por %p268, %p269
      %p271 = scmp.ne.s32.totalorder %s259, %s260
      %p272 = scmp.eq.s32.totalorder %s35, 1
      %p273 = por %p271, %p272
      %p275 = scmp.ne.s32.totalorder %s260, %s274
      %p276 = scmp.eq.s32.totalorder %s35, 0
      %p277 = por %p275, %p276
      %s279 = sadd.s32 %s278, 1
      %p282 = scmp.eq.s32.totalorder %s29, 1
      %p283 = scmp.ne.s32.totalorder %s278, %s280
      %p284 = scmp.eq.s32.totalorder %s29, 0
      %p285 = por %p283, %p284
      %p286 = scmp.ne.s32.totalorder %s278, %s280
      %p287 = scmp.eq.s32.totalorder %s34, 1
      %p288 = por %p286, %p287
      %p289 = scmp.ne.s32.totalorder %s280, %s281
      %p290 = scmp.eq.s32.totalorder %s34, 0
      %p291 = por %p289, %p290
      %p292 = scmp.ne.s32.totalorder %s280, %s281
      %p293 = scmp.eq.s32.totalorder %s35, 1
      %p294 = por %p292, %p293
      %p296 = scmp.ne.s32.totalorder %s281, %s295
      %p297 = scmp.eq.s32.totalorder %s35, 0
      %p298 = por %p296, %p297
      %s300 = sadd.s32 %s299, 1
      %p303 = scmp.eq.s32.totalorder %s29, 1
      %p304 = scmp.ne.s32.totalorder %s299, %s301
      %p305 = scmp.eq.s32.totalorder %s29, 0
      %p306 = por %p304, %p305
      %p307 = scmp.ne.s32.totalorder %s299, %s301
      %p308 = scmp.eq.s32.totalorder %s34, 1
      %p309 = por %p307, %p308
      %p310 = scmp.ne.s32.totalorder %s301, %s302
      %p311 = scmp.eq.s32.totalorder %s34, 0
      %p312 = por %p310, %p311
      %p313 = scmp.ne.s32.totalorder %s301, %s302
      %p314 = scmp.eq.s32.totalorder %s35, 1
      %p315 = por %p313, %p314
      %p317 = scmp.ne.s32.totalorder %s302, %s316
      %p318 = scmp.eq.s32.totalorder %s35, 0
      %p319 = por %p317, %p318
      %s321 = sadd.s32 %s320, 1
      %p324 = scmp.eq.s32.totalorder %s29, 1
      %p325 = scmp.ne.s32.totalorder %s320, %s322
      %p326 = scmp.eq.s32.totalorder %s29, 0
      %p327 = por %p325, %p326
      %p328 = scmp.ne.s32.totalorder %s320, %s322
      %p329 = scmp.eq.s32.totalorder %s34, 1
      %p330 = por %p328, %p329
      %p331 = scmp.ne.s32.totalorder %s322, %s323
      %p332 = scmp.eq.s32.totalorder %s34, 0
      %p333 = por %p331, %p332
      %p334 = scmp.ne.s32.totalorder %s322, %s323
      %p335 = scmp.eq.s32.totalorder %s35, 1
      %p336 = por %p334, %p335
      %p338 = scmp.ne.s32.totalorder %s323, %s337
      %p339 = scmp.eq.s32.totalorder %s35, 0
      %p340 = por %p338, %p339
      %s342 = sadd.s32 %s341, 1
      %p345 = scmp.eq.s32.totalorder %s29, 1
      %p346 = scmp.ne.s32.totalorder %s341, %s343
      %p347 = scmp.eq.s32.totalorder %s29, 0
      %p348 = por %p346, %p347
      %p349 = scmp.ne.s32.totalorder %s341, %s343
      %p350 = scmp.eq.s32.totalorder %s34, 1
      %p351 = por %p349, %p350
      %p352 = scmp.ne.s32.totalorder %s343, %s344
      %p353 = scmp.eq.s32.totalorder %s34, 0
      %p354 = por %p352, %p353
      %p355 = scmp.ne.s32.totalorder %s343, %s344
      %p356 = scmp.eq.s32.totalorder %s35, 1
      %p357 = por %p355, %p356
      %p359 = scmp.ne.s32.totalorder %s344, %s358
      %p360 = scmp.eq.s32.totalorder %s35, 0
      %p361 = por %p359, %p360
      %s363 = sadd.s32 %s362, 1
      %p366 = scmp.eq.s32.totalorder %s29, 1
      %p367 = scmp.ne.s32.totalorder %s362, %s364
      %p368 = scmp.eq.s32.totalorder %s29, 0
      %p369 = por %p367, %p368
      %p370 = scmp.ne.s32.totalorder %s362, %s364
      %p371 = scmp.eq.s32.totalorder %s34, 1
      %p372 = por %p370, %p371
      %p373 = scmp.ne.s32.totalorder %s364, %s365
      %p374 = scmp.eq.s32.totalorder %s34, 0
      %p375 = por %p373, %p374
      %p376 = scmp.ne.s32.totalorder %s364, %s365
      %p377 = scmp.eq.s32.totalorder %s35, 1
      %p378 = por %p376, %p377
      %p380 = scmp.ne.s32.totalorder %s365, %s379
      %p381 = scmp.eq.s32.totalorder %s35, 0
      %p382 = por %p380, %p381
      %s384 = sadd.s32 %s383, 1
      %p387 = scmp.eq.s32.totalorder %s29, 1
      %p388 = scmp.ne.s32.totalorder %s383, %s385
      %p389 = scmp.eq.s32.totalorder %s29, 0
      %p390 = por %p388, %p389
      %p391 = scmp.ne.s32.totalorder %s383, %s385
      %p392 = scmp.eq.s32.totalorder %s34, 1
      %p393 = por %p391, %p392
      %p394 = scmp.ne.s32.totalorder %s385, %s386
      %p395 = scmp.eq.s32.totalorder %s34, 0
      %p396 = por %p394, %p395
      %p397 = scmp.ne.s32.totalorder %s385, %s386
      %p398 = scmp.eq.s32.totalorder %s35, 1
      %p399 = por %p397, %p398
      %p401 = scmp.ne.s32.totalorder %s386, %s400
      %p402 = scmp.eq.s32.totalorder %s35, 0
      %p403 = por %p401, %p402
      %s405 = sadd.s32 %s404, 1
      %p408 = scmp.eq.s32.totalorder %s29, 1
      %p409 = scmp.ne.s32.totalorder %s404, %s406
      %p410 = scmp.eq.s32.totalorder %s29, 0
      %p411 = por %p409, %p410
      %p412 = scmp.ne.s32.totalorder %s404, %s406
      %p413 = scmp.eq.s32.totalorder %s34, 1
      %p414 = por %p412, %p413
      %p415 = scmp.ne.s32.totalorder %s406, %s407
      %p416 = scmp.eq.s32.totalorder %s34, 0
      %p417 = por %p415, %p416
      %p418 = scmp.ne.s32.totalorder %s406, %s407
      %p419 = scmp.eq.s32.totalorder %s35, 1
      %p420 = por %p418, %p419
      %p422 = scmp.ne.s32.totalorder %s407, %s421
      %p423 = scmp.eq.s32.totalorder %s35, 0
      %p424 = por %p422, %p423
      %s426 = sadd.s32 %s425, 1
      %p429 = scmp.eq.s32.totalorder %s29, 1
      %p430 = scmp.ne.s32.totalorder %s425, %s427
      %p431 = scmp.eq.s32.totalorder %s29, 0
      %p432 = por %p430, %p431
      %p433 = scmp.ne.s32.totalorder %s425, %s427
      %p434 = scmp.eq.s32.totalorder %s34, 1
      %p435 = por %p433, %p434
      %p436 = scmp.ne.s32.totalorder %s427, %s428
      %p437 = scmp.eq.s32.totalorder %s34, 0
      %p438 = por %p436, %p437
      %p439 = scmp.ne.s32.totalorder %s427, %s428
      %p440 = scmp.eq.s32.totalorder %s35, 1
      %p441 = por %p439, %p440
      %p443 = scmp.ne.s32.totalorder %s428, %s442
      %p444 = scmp.eq.s32.totalorder %s35, 0
      %p445 = por %p443, %p444
      %s446 = ssub.s32 %s29, %s36
      %p447 = scmp.eq.s32.totalorder %s446, 0
      %s449 = sadd.s32 %s448, 1
      %s450 = scalar_select %p447, %s448, %s449
      %p453 = pneg %p447
      %p454 = scmp.eq.s32.totalorder %s29, 1
      %p455 = por %p453, %p454
      %p456 = scmp.ne.s32.totalorder %s448, %s451
      %p457 = scmp.eq.s32.totalorder %s29, 0
      %p458 = por %p456, %p457
      %p459 = scmp.ne.s32.totalorder %s448, %s451
      %p460 = scmp.eq.s32.totalorder %s34, 1
      %p461 = por %p459, %p460
      %p462 = scmp.ne.s32.totalorder %s451, %s452
      %p463 = scmp.eq.s32.totalorder %s34, 0
      %p464 = por %p462, %p463
      %p465 = scmp.ne.s32.totalorder %s451, %s452
      %p466 = scmp.eq.s32.totalorder %s35, 1
      %p467 = por %p465, %p466
      %p469 = scmp.ne.s32.totalorder %s452, %s468
      %p470 = scmp.eq.s32.totalorder %s35, 0
      %p471 = por %p469, %p470
      %p472 = scmp.le.s32.totalorder 1, %s29
      %p473 = scmp.lt.s32.totalorder %s29, 3
      %p474 = pnand %p472, %p473
      %p475 = pneg %p474
      // Predicated region
      $region9: #{tpu_custom_call.1} parent=5 // pred_check
        _
      $region10: #{tpu_custom_call.1} parent=5 // pred_check_branch
        %477 = sbr.rel (%p474) target = $region12
      $region11: #{tpu_custom_call.1} parent=5 // pred_region
        %s478 = ssub.s32 %s29, 1
        // Predicated region
        $region13: #{tpu_custom_call.1} parent=11 // pred_check
          %p479 = pneg %p102
        $region14: #{tpu_custom_call.1} parent=11 // pred_check_branch
          %481 = sbr.rel (%p479) target = $region16
        $region15: #{tpu_custom_call.1} parent=11 // pred_region
          _
        $region16: #{tpu_custom_call.1} parent=11 // pred_fallthru
          _
        // Predicated region
        $region17: #{tpu_custom_call.1} parent=11 // pred_check
          %p482 = pneg %p123
        $region18: #{tpu_custom_call.1} parent=11 // pred_check_branch
          %484 = sbr.rel (%p482) target = $region20
        $region19: #{tpu_custom_call.1} parent=11 // pred_region
          _
        $region20: #{tpu_custom_call.1} parent=11 // pred_fallthru
          _
        // Predicated region
        $region21: #{tpu_custom_call.1} parent=11 // pred_check
          %p485 = pneg %p144
        $region22: #{tpu_custom_call.1} parent=11 // pred_check_branch
          %487 = sbr.rel (%p485) target = $region24
        $region23: #{tpu_custom_call.1} parent=11 // pred_region
          _
        $region24: #{tpu_custom_call.1} parent=11 // pred_fallthru
          _
        // Predicated region
        $region25: #{tpu_custom_call.1} parent=11 // pred_check
          %p488 = pneg %p165
        $region26: #{tpu_custom_call.1} parent=11 // pred_check_branch
          %490 = sbr.rel (%p488) target = $region28
        $region27: #{tpu_custom_call.1} parent=11 // pred_region
          _
        $region28: #{tpu_custom_call.1} parent=11 // pred_fallthru
          _
        // Predicated region
        $region29: #{tpu_custom_call.1} parent=11 // pred_check
          %p491 = pneg %p186
        $region30: #{tpu_custom_call.1} parent=11 // pred_check_branch
          %493 = sbr.rel (%p491) target = $region32
        $region31: #{tpu_custom_call.1} parent=11 // pred_region
          _
        $region32: #{tpu_custom_call.1} parent=11 // pred_fallthru
          _
        // Predicated region
        $region33: #{tpu_custom_call.1} parent=11 // pred_check
          %p494 = pneg %p207
        $region34: #{tpu_custom_call.1} parent=11 // pred_check_branch
          %496 = sbr.rel (%p494) target = $region36
        $region35: #{tpu_custom_call.1} parent=11 // pred_region
          _
        $region36: #{tpu_custom_call.1} parent=11 // pred_fallthru
          _
        // Predicated region
        $region37: #{tpu_custom_call.1} parent=11 // pred_check
          %p497 = pneg %p228
        $region38: #{tpu_custom_call.1} parent=11 // pred_check_branch
          %499 = sbr.rel (%p497) target = $region40
        $region39: #{tpu_custom_call.1} parent=11 // pred_region
          _
        $region40: #{tpu_custom_call.1} parent=11 // pred_fallthru
          _
        // Predicated region
        $region41: #{tpu_custom_call.1} parent=11 // pred_check
          %p500 = pneg %p249
        $region42: #{tpu_custom_call.1} parent=11 // pred_check_branch
          %502 = sbr.rel (%p500) target = $region44
        $region43: #{tpu_custom_call.1} parent=11 // pred_region
          _
        $region44: #{tpu_custom_call.1} parent=11 // pred_fallthru
          _
        // Predicated region
        $region45: #{tpu_custom_call.1} parent=11 // pred_check
          %p503 = pneg %p270
        $region46: #{tpu_custom_call.1} parent=11 // pred_check_branch
          %505 = sbr.rel (%p503) target = $region48
        $region47: #{tpu_custom_call.1} parent=11 // pred_region
          _
        $region48: #{tpu_custom_call.1} parent=11 // pred_fallthru
          _
        // Predicated region
        $region49: #{tpu_custom_call.1} parent=11 // pred_check
          %p506 = pneg %p291
        $region50: #{tpu_custom_call.1} parent=11 // pred_check_branch
          %508 = sbr.rel (%p506) target = $region52
        $region51: #{tpu_custom_call.1} parent=11 // pred_region
          _
        $region52: #{tpu_custom_call.1} parent=11 // pred_fallthru
          _
        // Predicated region
        $region53: #{tpu_custom_call.1} parent=11 // pred_check
          %p509 = pneg %p312
        $region54: #{tpu_custom_call.1} parent=11 // pred_check_branch
          %511 = sbr.rel (%p509) target = $region56
        $region55: #{tpu_custom_call.1} parent=11 // pred_region
          _
        $region56: #{tpu_custom_call.1} parent=11 // pred_fallthru
          _
        // Predicated region
        $region57: #{tpu_custom_call.1} parent=11 // pred_check
          %p512 = pneg %p333
        $region58: #{tpu_custom_call.1} parent=11 // pred_check_branch
          %514 = sbr.rel (%p512) target = $region60
        $region59: #{tpu_custom_call.1} parent=11 // pred_region
          _
        $region60: #{tpu_custom_call.1} parent=11 // pred_fallthru
          _
        // Predicated region
        $region61: #{tpu_custom_call.1} parent=11 // pred_check
          %p515 = pneg %p354
        $region62: #{tpu_custom_call.1} parent=11 // pred_check_branch
          %517 = sbr.rel (%p515) target = $region64
        $region63: #{tpu_custom_call.1} parent=11 // pred_region
          _
        $region64: #{tpu_custom_call.1} parent=11 // pred_fallthru
          _
        // Predicated region
        $region65: #{tpu_custom_call.1} parent=11 // pred_check
          %p518 = pneg %p375
        $region66: #{tpu_custom_call.1} parent=11 // pred_check_branch
          %520 = sbr.rel (%p518) target = $region68
        $region67: #{tpu_custom_call.1} parent=11 // pred_region
          _
        $region68: #{tpu_custom_call.1} parent=11 // pred_fallthru
          _
        // Predicated region
        $region69: #{tpu_custom_call.1} parent=11 // pred_check
          %p521 = pneg %p396
        $region70: #{tpu_custom_call.1} parent=11 // pred_check_branch
          %523 = sbr.rel (%p521) target = $region72
        $region71: #{tpu_custom_call.1} parent=11 // pred_region
          _
        $region72: #{tpu_custom_call.1} parent=11 // pred_fallthru
          _
        // Predicated region
        $region73: #{tpu_custom_call.1} parent=11 // pred_check
          %p524 = pneg %p417
        $region74: #{tpu_custom_call.1} parent=11 // pred_check_branch
          %526 = sbr.rel (%p524) target = $region76
        $region75: #{tpu_custom_call.1} parent=11 // pred_region
          _
        $region76: #{tpu_custom_call.1} parent=11 // pred_fallthru
          _
        // Predicated region
        $region77: #{tpu_custom_call.1} parent=11 // pred_check
          %p527 = pneg %p438
        $region78: #{tpu_custom_call.1} parent=11 // pred_check_branch
          %529 = sbr.rel (%p527) target = $region80
        $region79: #{tpu_custom_call.1} parent=11 // pred_region
          _
        $region80: #{tpu_custom_call.1} parent=11 // pred_fallthru
          _
      $region12: #{tpu_custom_call.1} parent=5 // pred_fallthru
        _
      %p530 = scmp.lt.s32.totalorder %s29, 2
      // Predicated region
      $region81: #{tpu_custom_call.1} parent=5 // pred_check
        %p531 = pneg %p530
      $region82: #{tpu_custom_call.1} parent=5 // pred_check_branch
        %533 = sbr.rel (%p531) target = $region84
      $region83: #{tpu_custom_call.1} parent=5 // pred_region
        // Predicated region
        $region85: #{tpu_custom_call.1} parent=83 // pred_check
          %p534 = pneg %p49
        $region86: #{tpu_custom_call.1} parent=83 // pred_check_branch
          %536 = sbr.rel (%p534) target = $region88
        $region87: #{tpu_custom_call.1} parent=83 // pred_region
          %p537 = scmp.lt.s32.totalorder %s29, 1
          %s538 = scalar_select %p537, %s29, 1
          %s539 = smul.addr %s538, 8
          %s540 = smul.addr %s539, 8
          %s541 = scalar_lea.vmem %s0, %s540
        $region88: #{tpu_custom_call.1} parent=83 // pred_fallthru
          _
        // Predicated region
        $region89: #{tpu_custom_call.1} parent=83 // pred_check
          %p542 = pneg %p75
        $region90: #{tpu_custom_call.1} parent=83 // pred_check_branch
          %544 = sbr.rel (%p542) target = $region92
        $region91: #{tpu_custom_call.1} parent=83 // pred_region
          %p545 = scmp.lt.s32.totalorder %s29, 1
          %s546 = scalar_select %p545, %s29, 1
          %s547 = smul.addr %s546, 8
          %s548 = smul.addr %s547, 8
          %s549 = scalar_lea.vmem %s1, %s548
        $region92: #{tpu_custom_call.1} parent=83 // pred_fallthru
          _
      $region84: #{tpu_custom_call.1} parent=5 // pred_fallthru
        _
      %p550 = scmp.le.s32.totalorder 1, %s29
      %p551 = scmp.lt.s32.totalorder %s29, 3
      %p552 = pnand %p550, %p551
      %p553 = pneg %p552
      // Predicated region
      $region93: #{tpu_custom_call.1} parent=5 // pred_check
        _
      $region94: #{tpu_custom_call.1} parent=5 // pred_check_branch
        %555 = sbr.rel (%p552) target = $region96
      $region95: #{tpu_custom_call.1} parent=5 // pred_region
        %s556 = ssub.s32 %s29, 1
        %p557 = scmp.lt.s32.totalorder %s34, 1
        %s558 = scalar_select %p557, %s34, 1
        %s559 = smul.addr %s558, 8
        %s560 = smul.addr %s559, 8
        %s561 = scalar_lea.vmem %s0, %s560
        %p562 = pneg %p55
        %p563 = pneg %p52
        %p564 = scmp.lt.s32.totalorder %s34, 1
        %s565 = scalar_select %p564, %s34, 1
        %s566 = smul.addr %s565, 8
        %s567 = smul.addr %s566, 8
        %s568 = scalar_lea.vmem %s1, %s567
        %p569 = pneg %p81
        %p570 = pneg %p78
        %p571 = pneg %p102
        %p572 = pneg %p99
        %p573 = pneg %p123
        %p574 = pneg %p120
        %p575 = pneg %p144
        %p576 = pneg %p141
        %p577 = pneg %p165
        %p578 = pneg %p162
        %p579 = pneg %p186
        %p580 = pneg %p183
        %p581 = pneg %p207
        %p582 = pneg %p204
        %p583 = pneg %p228
        %p584 = pneg %p225
        %p585 = pneg %p249
        %p586 = pneg %p246
        %p587 = pneg %p270
        %p588 = pneg %p267
        %p589 = pneg %p291
        %p590 = pneg %p288
        %p591 = pneg %p312
        %p592 = pneg %p309
        %p593 = pneg %p333
        %p594 = pneg %p330
        %p595 = pneg %p354
        %p596 = pneg %p351
        %p597 = pneg %p375
        %p598 = pneg %p372
        %p599 = pneg %p396
        %p600 = pneg %p393
        %p601 = pneg %p417
        %p602 = pneg %p414
        %p603 = pneg %p438
        %p604 = pneg %p435
        %p605 = pneg %p464
        %p606 = pneg %p461
        %s607 = sand.u32 %s451, 1
        %s608 = scalar_lea.sflag [#allocation6], %s607
        %s609 = sand.u32 %s451, 1
        %s610 = smul.addr %s609, 64
        %s611 = scalar_lea.vmem [#allocation5], %s610
        %p612 = scmp.lt.s32.totalorder %s34, 1
        %s613 = scalar_select %p612, %s34, 1
        %s614 = smul.addr %s613, 8
        %s615 = smul.addr %s614, 8
        %s616 = scalar_lea.vmem %s0, %s615
        %p617 = scmp.lt.s32.totalorder %s34, 1
        %s618 = scalar_select %p617, %s34, 1
        %s619 = smul.addr %s618, 8
        %s620 = smul.addr %s619, 8
        %s621 = scalar_lea.vmem %s1, %s620
        %vm623 = vcmask 523264
        %624 = vst.msk [vmem:[#allocation2] sm:$0xff] %vm623, 0.0
        %vm625 = vcmask 517120
        %626 = vst.msk [vmem:[#allocation2 + $0x8] sm:$0x3] %vm625, 0.0
        %s627 = scalar_lea.vmem [#allocation2], 144
        %628 = vst.msk [vmem:[%s627] sm:$0xff] %vm623, 0.0
        %629 = vst.msk [vmem:[%s627 + $0x8] sm:$0x3] %vm625, 0.0
        %vm630 = vcmask 516096
        %631 = vst.msk [vmem:[#allocation2] sm:$0x1] %vm630, 0.0
        %632 = vst.msk [vmem:[#allocation2 + $0x10] sm:$0x1] %vm630, 0.0
        %633 = vst.msk [vmem:[#allocation2 + $0x20] sm:$0x1] %vm630, 0.0
        %634 = vst.msk [vmem:[#allocation2 + $0x30] sm:$0x1] %vm630, 0.0
        %635 = vst.msk [vmem:[#allocation2 + $0x40] sm:$0x1] %vm630, 0.0
        %636 = vst.msk [vmem:[#allocation2 + $0x50] sm:$0x1] %vm630, 0.0
        %637 = vst.msk [vmem:[#allocation2 + $0x60] sm:$0x1] %vm630, 0.0
        %638 = vst.msk [vmem:[#allocation2 + $0x70] sm:$0x1] %vm630, 0.0
        %639 = vst.msk [vmem:[#allocation2 + $0x80] sm:$0x1] %vm630, 0.0
        %640 = vst.msk [vmem:[#allocation2 + $0x90] sm:$0x1] %vm630, 0.0
        %641 = vst.msk [vmem:[#allocation2 + $0x9] sm:$0x1] %vm630, 0.0
        %642 = vst.msk [vmem:[#allocation2 + $0x19] sm:$0x1] %vm630, 0.0
        %643 = vst.msk [vmem:[#allocation2 + $0x29] sm:$0x1] %vm630, 0.0
        %644 = vst.msk [vmem:[#allocation2 + $0x39] sm:$0x1] %vm630, 0.0
        %645 = vst.msk [vmem:[#allocation2 + $0x49] sm:$0x1] %vm630, 0.0
        %646 = vst.msk [vmem:[#allocation2 + $0x59] sm:$0x1] %vm630, 0.0
        %647 = vst.msk [vmem:[#allocation2 + $0x69] sm:$0x1] %vm630, 0.0
        %648 = vst.msk [vmem:[#allocation2 + $0x79] sm:$0x1] %vm630, 0.0
        %649 = vst.msk [vmem:[#allocation2 + $0x89] sm:$0x1] %vm630, 0.0
        %650 = vst.msk [vmem:[#allocation2 + $0x99] sm:$0x1] %vm630, 0.0
        %v651 = vld [vmem:[%s616] sm:$0xff]
        %v652 = vld [vmem:[%s616 + $0x8] sm:$0xff]
        %v653 = vld [vmem:[%s616 + $0x10] sm:$0xff]
        %v654 = vld [vmem:[%s616 + $0x18] sm:$0xff]
        %v655 = vld [vmem:[%s616 + $0x20] sm:$0xff]
        %v656 = vld [vmem:[%s616 + $0x28] sm:$0xff]
        %v657 = vld [vmem:[%s616 + $0x30] sm:$0xff]
        %v658 = vld [vmem:[%s616 + $0x38] sm:$0xff]
        %v659 = vld [vmem:[%s621] sm:$0xff]
        %v660 = vld [vmem:[%s621 + $0x8] sm:$0xff]
        %v661 = vld [vmem:[%s621 + $0x10] sm:$0xff]
        %v662 = vld [vmem:[%s621 + $0x18] sm:$0xff]
        %v663 = vld [vmem:[%s621 + $0x20] sm:$0xff]
        %v664 = vld [vmem:[%s621 + $0x28] sm:$0xff]
        %v665 = vld [vmem:[%s621 + $0x30] sm:$0xff]
        %v666 = vld [vmem:[%s621 + $0x38] sm:$0xff]
        %v667 = vld [vmem:[%s3] sm:$0x1]
        %v668 = vld [vmem:[%s4] sm:$0x1]
        %vm669 = vcmask 261120
        %v670 = vsel %vm669, %v651, 0.0
        %v671 = vsel %vm669, %v652, 0.0
        %v672 = vadd.f32 %v670, %v671
        %v673 = vsel %vm669, %v653, 0.0
        %v674 = vadd.f32 %v672, %v673
        %v675 = vsel %vm669, %v654, 0.0
        %v676 = vadd.f32 %v674, %v675
        %v677 = vsel %vm669, %v655, 0.0
        %v678 = vadd.f32 %v676, %v677
        %v679 = vsel %vm669, %v656, 0.0
        %v680 = vadd.f32 %v678, %v679
        %v681 = vsel %vm669, %v657, 0.0
        %v682 = vadd.f32 %v680, %v681
        %v683 = vsel %vm669, %v658, 0.0
        %v684 = vadd.f32 %v682, %v683
        %v685 = vrot.slane %v684, 4
        %v686 = vadd.f32 %v684, %v685
        %v687 = vrot.slane %v686, 2
        %v688 = vadd.f32 %v686, %v687
        %v689 = vrot.slane %v688, 1
        %v690 = vadd.f32 %v688, %v689
        %v691 = vsel %vm669, %v659, 0.0
        %v692 = vsel %vm669, %v660, 0.0
        %v693 = vadd.f32 %v691, %v692
        %v694 = vsel %vm669, %v661, 0.0
        %v695 = vadd.f32 %v693, %v694
        %v696 = vsel %vm669, %v662, 0.0
        %v697 = vadd.f32 %v695, %v696
        %v698 = vsel %vm669, %v663, 0.0
        %v699 = vadd.f32 %v697, %v698
        %v700 = vsel %vm669, %v664, 0.0
        %v701 = vadd.f32 %v699, %v700
        %v702 = vsel %vm669, %v665, 0.0
        %v703 = vadd.f32 %v701, %v702
        %v704 = vsel %vm669, %v666, 0.0
        %v705 = vadd.f32 %v703, %v704
        %v706 = vrot.slane %v705, 4
        %v707 = vadd.f32 %v705, %v706
        %v708 = vrot.slane %v707, 2
        %v709 = vadd.f32 %v707, %v708
        %v710 = vrot.slane %v709, 1
        %v711 = vadd.f32 %v709, %v710
        %vm712 = vcmask 1040384
        %v713 = vsel %vm712, %v690, %v711
        %v714 = vld [vmem:[%s5] sm:$0xff]
        %v715 = vld [vmem:[%s5 + $0x8] sm:$0xff]
        %v716 = vld [vmem:[%s5 + $0x10] sm:$0xff]
        %v717 = vld [vmem:[%s5 + $0x18] sm:$0xff]
        %v719 = vsel %vm669, %v713, 0
        %721 = vmatpush.msra.mxu0 0.0
        %722 = vmatpush.msra.mxu0 0.0
        %723 = vmatpush.msra.mxu0 0.0
        %724 = vmatpush.msra.mxu0 0.0
        %725 = vmatpush.msra.mxu0 0.0
        %726 = vmatpush.msra.mxu0 0.0
        %727 = vmatpush.msra.mxu0 0.0
        %728 = vmatpush.msra.mxu0 0.0
        %729 = vmatpush.msra.mxu0 0.0
        %730 = vmatpush.msra.mxu0 0.0
        %731 = vmatpush.msra.mxu0 0.0
        %732 = vmatpush.msra.mxu0 0.0
        %733 = vmatpush.msra.mxu0 %v717
        %734 = vmatpush.msra.mxu0 %v716
        %735 = vmatpush.msra.mxu0 %v715
        %736 = vmatpush.msra.mxu0 %v714
        %737 = vmatmul.f32.gmra.mxu0 %v719
        %v738 = vpop.f32.mrf.mxu0
        %v739 = vadd.f32 0.0, %v738
        %740 = vdwg.mxu0
        %v741 = vmul.f32 %v739, 0.0078125
        %v742 = vperm.slane %v741, 0
        %v743 = vsub.f32 %v651, %v742
        %v744 = vsub.f32 %v652, %v742
        %v745 = vsub.f32 %v653, %v742
        %v746 = vsub.f32 %v654, %v742
        %v747 = vsub.f32 %v655, %v742
        %v748 = vsub.f32 %v656, %v742
        %v749 = vsub.f32 %v657, %v742
        %v750 = vsub.f32 %v658, %v742
        %v751 = vperm.slane %v741, 1
        %v752 = vsub.f32 %v659, %v751
        %v753 = vsub.f32 %v660, %v751
        %v754 = vsub.f32 %v661, %v751
        %v755 = vsub.f32 %v662, %v751
        %v756 = vsub.f32 %v663, %v751
        %v757 = vsub.f32 %v664, %v751
        %v758 = vsub.f32 %v665, %v751
        %v759 = vsub.f32 %v666, %v751
        %v760 = vmul.f32 %v743, %v743
        %v761 = vmul.f32 %v744, %v744
        %v762 = vmul.f32 %v745, %v745
        %v763 = vmul.f32 %v746, %v746
        %v764 = vmul.f32 %v747, %v747
        %v765 = vmul.f32 %v748, %v748
        %v766 = vmul.f32 %v749, %v749
        %v767 = vmul.f32 %v750, %v750
        %v768 = vsel %vm669, %v760, 0.0
        %v769 = vsel %vm669, %v761, 0.0
        %v770 = vadd.f32 %v768, %v769
        %v771 = vsel %vm669, %v762, 0.0
        %v772 = vadd.f32 %v770, %v771
        %v773 = vsel %vm669, %v763, 0.0
        %v774 = vadd.f32 %v772, %v773
        %v775 = vsel %vm669, %v764, 0.0
        %v776 = vadd.f32 %v774, %v775
        %v777 = vsel %vm669, %v765, 0.0
        %v778 = vadd.f32 %v776, %v777
        %v779 = vsel %vm669, %v766, 0.0
        %v780 = vadd.f32 %v778, %v779
        %v781 = vsel %vm669, %v767, 0.0
        %v782 = vadd.f32 %v780, %v781
        %v783 = vrot.slane %v782, 4
        %v784 = vadd.f32 %v782, %v783
        %v785 = vrot.slane %v784, 2
        %v786 = vadd.f32 %v784, %v785
        %v787 = vrot.slane %v786, 1
        %v788 = vadd.f32 %v786, %v787
        %v789 = vmul.f32 %v752, %v752
        %v790 = vmul.f32 %v753, %v753
        %v791 = vmul.f32 %v754, %v754
        %v792 = vmul.f32 %v755, %v755
        %v793 = vmul.f32 %v756, %v756
        %v794 = vmul.f32 %v757, %v757
        %v795 = vmul.f32 %v758, %v758
        %v796 = vmul.f32 %v759, %v759
        %v797 = vsel %vm669, %v789, 0.0
        %v798 = vsel %vm669, %v790, 0.0
        %v799 = vadd.f32 %v797, %v798
        %v800 = vsel %vm669, %v791, 0.0
        %v801 = vadd.f32 %v799, %v800
        %v802 = vsel %vm669, %v792, 0.0
        %v803 = vadd.f32 %v801, %v802
        %v804 = vsel %vm669, %v793, 0.0
        %v805 = vadd.f32 %v803, %v804
        %v806 = vsel %vm669, %v794, 0.0
        %v807 = vadd.f32 %v805, %v806
        %v808 = vsel %vm669, %v795, 0.0
        %v809 = vadd.f32 %v807, %v808
        %v810 = vsel %vm669, %v796, 0.0
        %v811 = vadd.f32 %v809, %v810
        %v812 = vrot.slane %v811, 4
        %v813 = vadd.f32 %v811, %v812
        %v814 = vrot.slane %v813, 2
        %v815 = vadd.f32 %v813, %v814
        %v816 = vrot.slane %v815, 1
        %v817 = vadd.f32 %v815, %v816
        %v818 = vsel %vm712, %v788, %v817
        %v820 = vsel %vm669, %v818, 0
        %822 = vmatpush.msra.mxu0 0.0
        %823 = vmatpush.msra.mxu0 0.0
        %824 = vmatpush.msra.mxu0 0.0
        %825 = vmatpush.msra.mxu0 0.0
        %826 = vmatpush.msra.mxu0 0.0
        %827 = vmatpush.msra.mxu0 0.0
        %828 = vmatpush.msra.mxu0 0.0
        %829 = vmatpush.msra.mxu0 0.0
        %830 = vmatpush.msra.mxu0 0.0
        %831 = vmatpush.msra.mxu0 0.0
        %832 = vmatpush.msra.mxu0 0.0
        %833 = vmatpush.msra.mxu0 0.0
        %834 = vmatpush.msra.mxu0 %v717
        %835 = vmatpush.msra.mxu0 %v716
        %836 = vmatpush.msra.mxu0 %v715
        %837 = vmatpush.msra.mxu0 %v714
        %838 = vmatmul.f32.gmra.mxu0 %v820
        %v839 = vpop.f32.mrf.mxu0
        %v840 = vadd.f32 0.0, %v839
        %841 = vdwg.mxu0
        %v842 = vmul.f32 %v840, 0.0078125
        %v843 = vadd.f32 %v842, 1e-06
        %v844 = vrsqrt.pop %v843
        %v845 = vmul.f32 %v844, %v843
        %v846 = vmul.f32 %v845, %v844
        %v847 = vmul.f32 0.5, %v846
        %v848 = vsub.f32 1.5, %v847
        %v849 = vmul.f32 %v844, %v848
        %vm850 = vweird.f32 %v843
        %vm851 = vweird.f32 %v844
        %vm852 = vmor %vm850, %vm851
        %v853 = vsel %vm852, %v844, %v849
        %v854 = vperm.slane %v853, 0
        %v855 = vmul.f32 %v743, %v854
        %v856 = vmul.f32 %v744, %v854
        %v857 = vmul.f32 %v745, %v854
        %v858 = vmul.f32 %v746, %v854
        %v859 = vmul.f32 %v747, %v854
        %v860 = vmul.f32 %v748, %v854
        %v861 = vmul.f32 %v749, %v854
        %v862 = vmul.f32 %v750, %v854
        %v864 = vperm.slane %v667, 0
        %v866 = vmul.f32 %v855, %v864
        %v867 = vmul.f32 %v856, %v864
        %v868 = vmul.f32 %v857, %v864
        %v869 = vmul.f32 %v858, %v864
        %v870 = vmul.f32 %v859, %v864
        %v871 = vmul.f32 %v860, %v864
        %v872 = vmul.f32 %v861, %v864
        %v873 = vmul.f32 %v862, %v864
        %v875 = vperm.slane %v668, 0
        %v877 = vadd.f32 %v866, %v875
        %v878 = vadd.f32 %v867, %v875
        %v879 = vadd.f32 %v868, %v875
        %v880 = vadd.f32 %v869, %v875
        %v881 = vadd.f32 %v870, %v875
        %v882 = vadd.f32 %v871, %v875
        %v883 = vadd.f32 %v872, %v875
        %v884 = vadd.f32 %v873, %v875
        %v885 = vxor.u32 %v877, 2147483648
        %v886 = vxor.u32 %v878, 2147483648
        %v887 = vxor.u32 %v879, 2147483648
        %v888 = vxor.u32 %v880, 2147483648
        %v889 = vxor.u32 %v881, 2147483648
        %v890 = vxor.u32 %v882, 2147483648
        %v891 = vxor.u32 %v883, 2147483648
        %v892 = vxor.u32 %v884, 2147483648
        %v893 = vmul.f32 %v885, 1.442695
        %v894 = vpow.pop %v893
        %v895 = vmul.f32 %v886, 1.442695
        %v896 = vpow.pop %v895
        %v897 = vmul.f32 %v887, 1.442695
        %v898 = vpow.pop %v897
        %v899 = vmul.f32 %v888, 1.442695
        %v900 = vpow.pop %v899
        %v901 = vmul.f32 %v889, 1.442695
        %v902 = vpow.pop %v901
        %v903 = vmul.f32 %v890, 1.442695
        %v904 = vpow.pop %v903
        %v905 = vmul.f32 %v891, 1.442695
        %v906 = vpow.pop %v905
        %v907 = vmul.f32 %v892, 1.442695
        %v908 = vpow.pop %v907
        %v909 = vadd.f32 %v894, 1.0
        %v910 = vadd.f32 %v896, 1.0
        %v911 = vadd.f32 %v898, 1.0
        %v912 = vadd.f32 %v900, 1.0
        %v913 = vadd.f32 %v902, 1.0
        %v914 = vadd.f32 %v904, 1.0
        %v915 = vadd.f32 %v906, 1.0
        %v916 = vadd.f32 %v908, 1.0
        %v917 = vrcp.pop %v909
        %v918 = vmul.f32 %v909, %v917
        %v919 = vsub.f32 1.0, %v918
        %v920 = vmul.f32 %v917, %v919
        %v921 = vadd.f32 %v917, %v920
        %vm922 = vweird.f32 %v909
        %vm923 = vweird.f32 %v917
        %vm924 = vmor %vm922, %vm923
        %v925 = vsel %vm924, %v917, %v921
        %v926 = vand.u32 2147483647, %v909
        %vm927 = vcmp.eq.f32.partialorder %v926, 8.507059e+37
        %v928 = vand.u32 %v909, 2147483648
        %v929 = vor.u32 1.1754944e-38, %v928
        %v930 = vsel %vm927, %v929, %v925
        %v931 = vmul.f32 1.0, %v930
        %v932 = vrcp.pop %v910
        %v933 = vmul.f32 %v910, %v932
        %v934 = vsub.f32 1.0, %v933
        %v935 = vmul.f32 %v932, %v934
        %v936 = vadd.f32 %v932, %v935
        %vm937 = vweird.f32 %v910
        %vm938 = vweird.f32 %v932
        %vm939 = vmor %vm937, %vm938
        %v940 = vsel %vm939, %v932, %v936
        %v941 = vand.u32 2147483647, %v910
        %vm942 = vcmp.eq.f32.partialorder %v941, 8.507059e+37
        %v943 = vand.u32 %v910, 2147483648
        %v944 = vor.u32 1.1754944e-38, %v943
        %v945 = vsel %vm942, %v944, %v940
        %v946 = vmul.f32 1.0, %v945
        %v947 = vrcp.pop %v911
        %v948 = vmul.f32 %v911, %v947
        %v949 = vsub.f32 1.0, %v948
        %v950 = vmul.f32 %v947, %v949
        %v951 = vadd.f32 %v947, %v950
        %vm952 = vweird.f32 %v911
        %vm953 = vweird.f32 %v947
        %vm954 = vmor %vm952, %vm953
        %v955 = vsel %vm954, %v947, %v951
        %v956 = vand.u32 2147483647, %v911
        %vm957 = vcmp.eq.f32.partialorder %v956, 8.507059e+37
        %v958 = vand.u32 %v911, 2147483648
        %v959 = vor.u32 1.1754944e-38, %v958
        %v960 = vsel %vm957, %v959, %v955
        %v961 = vmul.f32 1.0, %v960
        %v962 = vrcp.pop %v912
        %v963 = vmul.f32 %v912, %v962
        %v964 = vsub.f32 1.0, %v963
        %v965 = vmul.f32 %v962, %v964
        %v966 = vadd.f32 %v962, %v965
        %vm967 = vweird.f32 %v912
        %vm968 = vweird.f32 %v962
        %vm969 = vmor %vm967, %vm968
        %v970 = vsel %vm969, %v962, %v966
        %v971 = vand.u32 2147483647, %v912
        %vm972 = vcmp.eq.f32.partialorder %v971, 8.507059e+37
        %v973 = vand.u32 %v912, 2147483648
        %v974 = vor.u32 1.1754944e-38, %v973
        %v975 = vsel %vm972, %v974, %v970
        %v976 = vmul.f32 1.0, %v975
        %v977 = vrcp.pop %v913
        %v978 = vmul.f32 %v913, %v977
        %v979 = vsub.f32 1.0, %v978
        %v980 = vmul.f32 %v977, %v979
        %v981 = vadd.f32 %v977, %v980
        %vm982 = vweird.f32 %v913
        %vm983 = vweird.f32 %v977
        %vm984 = vmor %vm982, %vm983
        %v985 = vsel %vm984, %v977, %v981
        %v986 = vand.u32 2147483647, %v913
        %vm987 = vcmp.eq.f32.partialorder %v986, 8.507059e+37
        %v988 = vand.u32 %v913, 2147483648
        %v989 = vor.u32 1.1754944e-38, %v988
        %v990 = vsel %vm987, %v989, %v985
        %v991 = vmul.f32 1.0, %v990
        %v992 = vrcp.pop %v914
        %v993 = vmul.f32 %v914, %v992
        %v994 = vsub.f32 1.0, %v993
        %v995 = vmul.f32 %v992, %v994
        %v996 = vadd.f32 %v992, %v995
        %vm997 = vweird.f32 %v914
        %vm998 = vweird.f32 %v992
        %vm999 = vmor %vm997, %vm998
        %v1000 = vsel %vm999, %v992, %v996
        %v1001 = vand.u32 2147483647, %v914
        %vm1002 = vcmp.eq.f32.partialorder %v1001, 8.507059e+37
        %v1003 = vand.u32 %v914, 2147483648
        %v1004 = vor.u32 1.1754944e-38, %v1003
        %v1005 = vsel %vm1002, %v1004, %v1000
        %v1006 = vmul.f32 1.0, %v1005
        %v1007 = vrcp.pop %v915
        %v1008 = vmul.f32 %v915, %v1007
        %v1009 = vsub.f32 1.0, %v1008
        %v1010 = vmul.f32 %v1007, %v1009
        %v1011 = vadd.f32 %v1007, %v1010
        %vm1012 = vweird.f32 %v915
        %vm1013 = vweird.f32 %v1007
        %vm1014 = vmor %vm1012, %vm1013
        %v1015 = vsel %vm1014, %v1007, %v1011
        %v1016 = vand.u32 2147483647, %v915
        %vm1017 = vcmp.eq.f32.partialorder %v1016, 8.507059e+37
        %v1018 = vand.u32 %v915, 2147483648
        %v1019 = vor.u32 1.1754944e-38, %v1018
        %v1020 = vsel %vm1017, %v1019, %v1015
        %v1021 = vmul.f32 1.0, %v1020
        %v1022 = vrcp.pop %v916
        %v1023 = vmul.f32 %v916, %v1022
        %v1024 = vsub.f32 1.0, %v1023
        %v1025 = vmul.f32 %v1022, %v1024
        %v1026 = vadd.f32 %v1022, %v1025
        %vm1027 = vweird.f32 %v916
        %vm1028 = vweird.f32 %v1022
        %vm1029 = vmor %vm1027, %vm1028
        %v1030 = vsel %vm1029, %v1022, %v1026
        %v1031 = vand.u32 2147483647, %v916
        %vm1032 = vcmp.eq.f32.partialorder %v1031, 8.507059e+37
        %v1033 = vand.u32 %v916, 2147483648
        %v1034 = vor.u32 1.1754944e-38, %v1033
        %v1035 = vsel %vm1032, %v1034, %v1030
        %v1036 = vmul.f32 1.0, %v1035
        %v1037 = vmul.f32 %v877, %v931
        %v1038 = vmul.f32 %v878, %v946
        %v1039 = vmul.f32 %v879, %v961
        %v1040 = vmul.f32 %v880, %v976
        %v1041 = vmul.f32 %v881, %v991
        %v1042 = vmul.f32 %v882, %v1006
        %v1043 = vmul.f32 %v883, %v1021
        %v1044 = vmul.f32 %v884, %v1036
        %v1045 = vperm.slane %v853, 1
        %v1046 = vmul.f32 %v752, %v1045
        %v1047 = vmul.f32 %v753, %v1045
        %v1048 = vmul.f32 %v754, %v1045
        %v1049 = vmul.f32 %v755, %v1045
        %v1050 = vmul.f32 %v756, %v1045
        %v1051 = vmul.f32 %v757, %v1045
        %v1052 = vmul.f32 %v758, %v1045
        %v1053 = vmul.f32 %v759, %v1045
        %1054 = vrot.lane.b32.xlu0 %v864, 96
        %v1055 = vpop.permute.xlu0 %1054
        %v1057 = vmul.f32 %v1046, %v1055
        %v1058 = vmul.f32 %v1047, %v1055
        %v1059 = vmul.f32 %v1048, %v1055
        %v1060 = vmul.f32 %v1049, %v1055
        %v1061 = vmul.f32 %v1050, %v1055
        %v1062 = vmul.f32 %v1051, %v1055
        %v1063 = vmul.f32 %v1052, %v1055
        %v1064 = vmul.f32 %v1053, %v1055
        %1065 = vrot.lane.b32.xlu0 %v875, 96
        %v1066 = vpop.permute.xlu0 %1065
        %v1068 = vadd.f32 %v1057, %v1066
        %v1069 = vadd.f32 %v1058, %v1066
        %v1070 = vadd.f32 %v1059, %v1066
        %v1071 = vadd.f32 %v1060, %v1066
        %v1072 = vadd.f32 %v1061, %v1066
        %v1073 = vadd.f32 %v1062, %v1066
        %v1074 = vadd.f32 %v1063, %v1066
        %v1075 = vadd.f32 %v1064, %v1066
        %v1076 = vxor.u32 %v1068, 2147483648
        %v1077 = vxor.u32 %v1069, 2147483648
        %v1078 = vxor.u32 %v1070, 2147483648
        %v1079 = vxor.u32 %v1071, 2147483648
        %v1080 = vxor.u32 %v1072, 2147483648
        %v1081 = vxor.u32 %v1073, 2147483648
        %v1082 = vxor.u32 %v1074, 2147483648
        %v1083 = vxor.u32 %v1075, 2147483648
        %v1084 = vmul.f32 %v1076, 1.442695
        %v1085 = vpow.pop %v1084
        %v1086 = vmul.f32 %v1077, 1.442695
        %v1087 = vpow.pop %v1086
        %v1088 = vmul.f32 %v1078, 1.442695
        %v1089 = vpow.pop %v1088
        %v1090 = vmul.f32 %v1079, 1.442695
        %v1091 = vpow.pop %v1090
        %v1092 = vmul.f32 %v1080, 1.442695
        %v1093 = vpow.pop %v1092
        %v1094 = vmul.f32 %v1081, 1.442695
        %v1095 = vpow.pop %v1094
        %v1096 = vmul.f32 %v1082, 1.442695
        %v1097 = vpow.pop %v1096
        %v1098 = vmul.f32 %v1083, 1.442695
        %v1099 = vpow.pop %v1098
        %v1100 = vadd.f32 %v1085, 1.0
        %v1101 = vadd.f32 %v1087, 1.0
        %v1102 = vadd.f32 %v1089, 1.0
        %v1103 = vadd.f32 %v1091, 1.0
        %v1104 = vadd.f32 %v1093, 1.0
        %v1105 = vadd.f32 %v1095, 1.0
        %v1106 = vadd.f32 %v1097, 1.0
        %v1107 = vadd.f32 %v1099, 1.0
        %v1108 = vrcp.pop %v1100
        %v1109 = vmul.f32 %v1100, %v1108
        %v1110 = vsub.f32 1.0, %v1109
        %v1111 = vmul.f32 %v1108, %v1110
        %v1112 = vadd.f32 %v1108, %v1111
        %vm1113 = vweird.f32 %v1100
        %vm1114 = vweird.f32 %v1108
        %vm1115 = vmor %vm1113, %vm1114
        %v1116 = vsel %vm1115, %v1108, %v1112
        %v1117 = vand.u32 2147483647, %v1100
        %vm1118 = vcmp.eq.f32.partialorder %v1117, 8.507059e+37
        %v1119 = vand.u32 %v1100, 2147483648
        %v1120 = vor.u32 1.1754944e-38, %v1119
        %v1121 = vsel %vm1118, %v1120, %v1116
        %v1122 = vmul.f32 1.0, %v1121
        %v1123 = vrcp.pop %v1101
        %v1124 = vmul.f32 %v1101, %v1123
        %v1125 = vsub.f32 1.0, %v1124
        %v1126 = vmul.f32 %v1123, %v1125
        %v1127 = vadd.f32 %v1123, %v1126
        %vm1128 = vweird.f32 %v1101
        %vm1129 = vweird.f32 %v1123
        %vm1130 = vmor %vm1128, %vm1129
        %v1131 = vsel %vm1130, %v1123, %v1127
        %v1132 = vand.u32 2147483647, %v1101
        %vm1133 = vcmp.eq.f32.partialorder %v1132, 8.507059e+37
        %v1134 = vand.u32 %v1101, 2147483648
        %v1135 = vor.u32 1.1754944e-38, %v1134
        %v1136 = vsel %vm1133, %v1135, %v1131
        %v1137 = vmul.f32 1.0, %v1136
        %v1138 = vrcp.pop %v1102
        %v1139 = vmul.f32 %v1102, %v1138
        %v1140 = vsub.f32 1.0, %v1139
        %v1141 = vmul.f32 %v1138, %v1140
        %v1142 = vadd.f32 %v1138, %v1141
        %vm1143 = vweird.f32 %v1102
        %vm1144 = vweird.f32 %v1138
        %vm1145 = vmor %vm1143, %vm1144
        %v1146 = vsel %vm1145, %v1138, %v1142
        %v1147 = vand.u32 2147483647, %v1102
        %vm1148 = vcmp.eq.f32.partialorder %v1147, 8.507059e+37
        %v1149 = vand.u32 %v1102, 2147483648
        %v1150 = vor.u32 1.1754944e-38, %v1149
        %v1151 = vsel %vm1148, %v1150, %v1146
        %v1152 = vmul.f32 1.0, %v1151
        %v1153 = vrcp.pop %v1103
        %v1154 = vmul.f32 %v1103, %v1153
        %v1155 = vsub.f32 1.0, %v1154
        %v1156 = vmul.f32 %v1153, %v1155
        %v1157 = vadd.f32 %v1153, %v1156
        %vm1158 = vweird.f32 %v1103
        %vm1159 = vweird.f32 %v1153
        %vm1160 = vmor %vm1158, %vm1159
        %v1161 = vsel %vm1160, %v1153, %v1157
        %v1162 = vand.u32 2147483647, %v1103
        %vm1163 = vcmp.eq.f32.partialorder %v1162, 8.507059e+37
        %v1164 = vand.u32 %v1103, 2147483648
        %v1165 = vor.u32 1.1754944e-38, %v1164
        %v1166 = vsel %vm1163, %v1165, %v1161
        %v1167 = vmul.f32 1.0, %v1166
        %v1168 = vrcp.pop %v1104
        %v1169 = vmul.f32 %v1104, %v1168
        %v1170 = vsub.f32 1.0, %v1169
        %v1171 = vmul.f32 %v1168, %v1170
        %v1172 = vadd.f32 %v1168, %v1171
        %vm1173 = vweird.f32 %v1104
        %vm1174 = vweird.f32 %v1168
        %vm1175 = vmor %vm1173, %vm1174
        %v1176 = vsel %vm1175, %v1168, %v1172
        %v1177 = vand.u32 2147483647, %v1104
        %vm1178 = vcmp.eq.f32.partialorder %v1177, 8.507059e+37
        %v1179 = vand.u32 %v1104, 2147483648
        %v1180 = vor.u32 1.1754944e-38, %v1179
        %v1181 = vsel %vm1178, %v1180, %v1176
        %v1182 = vmul.f32 1.0, %v1181
        %v1183 = vrcp.pop %v1105
        %v1184 = vmul.f32 %v1105, %v1183
        %v1185 = vsub.f32 1.0, %v1184
        %v1186 = vmul.f32 %v1183, %v1185
        %v1187 = vadd.f32 %v1183, %v1186
        %vm1188 = vweird.f32 %v1105
        %vm1189 = vweird.f32 %v1183
        %vm1190 = vmor %vm1188, %vm1189
        %v1191 = vsel %vm1190, %v1183, %v1187
        %v1192 = vand.u32 2147483647, %v1105
        %vm1193 = vcmp.eq.f32.partialorder %v1192, 8.507059e+37
        %v1194 = vand.u32 %v1105, 2147483648
        %v1195 = vor.u32 1.1754944e-38, %v1194
        %v1196 = vsel %vm1193, %v1195, %v1191
        %v1197 = vmul.f32 1.0, %v1196
        %v1198 = vrcp.pop %v1106
        %v1199 = vmul.f32 %v1106, %v1198
        %v1200 = vsub.f32 1.0, %v1199
        %v1201 = vmul.f32 %v1198, %v1200
        %v1202 = vadd.f32 %v1198, %v1201
        %vm1203 = vweird.f32 %v1106
        %vm1204 = vweird.f32 %v1198
        %vm1205 = vmor %vm1203, %vm1204
        %v1206 = vsel %vm1205, %v1198, %v1202
        %v1207 = vand.u32 2147483647, %v1106
        %vm1208 = vcmp.eq.f32.partialorder %v1207, 8.507059e+37
        %v1209 = vand.u32 %v1106, 2147483648
        %v1210 = vor.u32 1.1754944e-38, %v1209
        %v1211 = vsel %vm1208, %v1210, %v1206
        %v1212 = vmul.f32 1.0, %v1211
        %v1213 = vrcp.pop %v1107
        %v1214 = vmul.f32 %v1107, %v1213
        %v1215 = vsub.f32 1.0, %v1214
        %v1216 = vmul.f32 %v1213, %v1215
        %v1217 = vadd.f32 %v1213, %v1216
        %vm1218 = vweird.f32 %v1107
        %vm1219 = vweird.f32 %v1213
        %vm1220 = vmor %vm1218, %vm1219
        %v1221 = vsel %vm1220, %v1213, %v1217
        %v1222 = vand.u32 2147483647, %v1107
        %vm1223 = vcmp.eq.f32.partialorder %v1222, 8.507059e+37
        %v1224 = vand.u32 %v1107, 2147483648
        %v1225 = vor.u32 1.1754944e-38, %v1224
        %v1226 = vsel %vm1223, %v1225, %v1221
        %v1227 = vmul.f32 1.0, %v1226
        %v1228 = vmul.f32 %v1068, %v1122
        %v1229 = vmul.f32 %v1069, %v1137
        %v1230 = vmul.f32 %v1070, %v1152
        %v1231 = vmul.f32 %v1071, %v1167
        %v1232 = vmul.f32 %v1072, %v1182
        %v1233 = vmul.f32 %v1073, %v1197
        %v1234 = vmul.f32 %v1074, %v1212
        %v1235 = vmul.f32 %v1075, %v1227
        %s1236 = scalar_lea.vmem [#allocation2], 16
        %1237 = vst.msk [vmem:[%s1236 + $0x1] sm:$0xff] %vm669, %v1037
        %1238 = vst.msk [vmem:[%s1236 + $0x11] sm:$0xff] %vm669, %v1038
        %1239 = vst.msk [vmem:[%s1236 + $0x21] sm:$0xff] %vm669, %v1039
        %1240 = vst.msk [vmem:[%s1236 + $0x31] sm:$0xff] %vm669, %v1040
        %1241 = vst.msk [vmem:[%s1236 + $0x41] sm:$0xff] %vm669, %v1041
        %1242 = vst.msk [vmem:[%s1236 + $0x51] sm:$0xff] %vm669, %v1042
        %1243 = vst.msk [vmem:[%s1236 + $0x61] sm:$0xff] %vm669, %v1043
        %1244 = vst.msk [vmem:[%s1236 + $0x71] sm:$0xff] %vm669, %v1044
        %1253 = vrot.lane.b32.xlu0 %v1228, 32
        %v1254 = vpop.permute.xlu0 %1253
        %1255 = vrot.lane.b32.xlu0 %v1229, 32
        %v1256 = vpop.permute.xlu0 %1255
        %1257 = vrot.lane.b32.xlu0 %v1230, 32
        %v1258 = vpop.permute.xlu0 %1257
        %1259 = vrot.lane.b32.xlu0 %v1231, 32
        %v1260 = vpop.permute.xlu0 %1259
        %1261 = vrot.lane.b32.xlu0 %v1232, 32
        %v1262 = vpop.permute.xlu0 %1261
        %1263 = vrot.lane.b32.xlu0 %v1233, 32
        %v1264 = vpop.permute.xlu0 %1263
        %1265 = vrot.lane.b32.xlu0 %v1234, 32
        %v1266 = vpop.permute.xlu0 %1265
        %1267 = vrot.lane.b32.xlu0 %v1235, 32
        %v1268 = vpop.permute.xlu0 %1267
        %vm1277 = vcmask 523520
        %1278 = vst.msk [vmem:[%s1236 + $0x1] sm:$0xff] %vm1277, %v1254
        %1279 = vst.msk [vmem:[%s1236 + $0x11] sm:$0xff] %vm1277, %v1256
        %1280 = vst.msk [vmem:[%s1236 + $0x21] sm:$0xff] %vm1277, %v1258
        %1281 = vst.msk [vmem:[%s1236 + $0x31] sm:$0xff] %vm1277, %v1260
        %1282 = vst.msk [vmem:[%s1236 + $0x41] sm:$0xff] %vm1277, %v1262
        %1283 = vst.msk [vmem:[%s1236 + $0x51] sm:$0xff] %vm1277, %v1264
        %1284 = vst.msk [vmem:[%s1236 + $0x61] sm:$0xff] %vm1277, %v1266
        %1285 = vst.msk [vmem:[%s1236 + $0x71] sm:$0xff] %vm1277, %v1268
        %v1286 = vld [vmem:[#allocation2] sm:$0xff]
        %v1287 = vld [vmem:[#allocation2 + $0x10] sm:$0xff]
        %v1288 = vld [vmem:[#allocation2 + $0x20] sm:$0xff]
        %v1289 = vld [vmem:[#allocation2 + $0x30] sm:$0xff]
        %v1290 = vld [vmem:[#allocation2 + $0x40] sm:$0xff]
        %v1291 = vld [vmem:[#allocation2 + $0x50] sm:$0xff]
        %v1292 = vld [vmem:[#allocation2 + $0x60] sm:$0xff]
        %v1293 = vld [vmem:[#allocation2 + $0x70] sm:$0xff]
        %v1294 = vpack.c.bf16 %v1286, %v1286
        %v1295 = vpack.c.bf16 %v1287, %v1287
        %v1296 = vpack.c.bf16 %v1288, %v1288
        %v1297 = vpack.c.bf16 %v1289, %v1289
        %v1298 = vpack.c.bf16 %v1290, %v1290
        %v1299 = vpack.c.bf16 %v1291, %v1291
        %v1300 = vpack.c.bf16 %v1292, %v1292
        %v1301 = vpack.c.bf16 %v1293, %v1293
        %vm1302 = vcmask 519168
        %1303 = vst.msk [vmem:[#allocation3] sm:$0xf] %vm1302, %v1294
        %1304 = vst.msk [vmem:[#allocation3 + $0x14] sm:$0xf] %vm1302, %v1295
        %1305 = vst.msk [vmem:[#allocation3 + $0x28] sm:$0xf] %vm1302, %v1296
        %1306 = vst.msk [vmem:[#allocation3 + $0x3c] sm:$0xf] %vm1302, %v1297
        %1307 = vst.msk [vmem:[#allocation3 + $0x50] sm:$0xf] %vm1302, %v1298
        %1308 = vst.msk [vmem:[#allocation3 + $0x64] sm:$0xf] %vm1302, %v1299
        %1309 = vst.msk [vmem:[#allocation3 + $0x78] sm:$0xf] %vm1302, %v1300
        %1310 = vst.msk [vmem:[#allocation3 + $0x8c] sm:$0xf] %vm1302, %v1301
        %v1311 = vld [vmem:[#allocation2 + $0x1] sm:$0xff]
        %v1312 = vld [vmem:[#allocation2 + $0x11] sm:$0xff]
        %v1313 = vld [vmem:[#allocation2 + $0x21] sm:$0xff]
        %v1314 = vld [vmem:[#allocation2 + $0x31] sm:$0xff]
        %v1315 = vld [vmem:[#allocation2 + $0x41] sm:$0xff]
        %v1316 = vld [vmem:[#allocation2 + $0x51] sm:$0xff]
        %v1317 = vld [vmem:[#allocation2 + $0x61] sm:$0xff]
        %v1318 = vld [vmem:[#allocation2 + $0x71] sm:$0xff]
        %v1319 = vpack.c.bf16 %v1311, %v1311
        %v1320 = vpack.c.bf16 %v1312, %v1312
        %v1321 = vpack.c.bf16 %v1313, %v1313
        %v1322 = vpack.c.bf16 %v1314, %v1314
        %v1323 = vpack.c.bf16 %v1315, %v1315
        %v1324 = vpack.c.bf16 %v1316, %v1316
        %v1325 = vpack.c.bf16 %v1317, %v1317
        %v1326 = vpack.c.bf16 %v1318, %v1318
        %1335 = vrot.lane.b32.xlu0 %v1319, 64
        %v1336 = vpop.permute.xlu0 %1335
        %1337 = vrot.lane.b32.xlu0 %v1320, 64
        %v1338 = vpop.permute.xlu0 %1337
        %1339 = vrot.lane.b32.xlu0 %v1321, 64
        %v1340 = vpop.permute.xlu0 %1339
        %1341 = vrot.lane.b32.xlu0 %v1322, 64
        %v1342 = vpop.permute.xlu0 %1341
        %1343 = vrot.lane.b32.xlu0 %v1323, 64
        %v1344 = vpop.permute.xlu0 %1343
        %1345 = vrot.lane.b32.xlu0 %v1324, 64
        %v1346 = vpop.permute.xlu0 %1345
        %1347 = vrot.lane.b32.xlu0 %v1325, 64
        %v1348 = vpop.permute.xlu0 %1347
        %1349 = vrot.lane.b32.xlu0 %v1326, 64
        %v1350 = vpop.permute.xlu0 %1349
        %vm1359 = vcmask 1043968
        %1360 = vst.msk [vmem:[#allocation3] sm:$0xf] %vm1359, %v1336
        %1361 = vst.msk [vmem:[#allocation3 + $0x14] sm:$0xf] %vm1359, %v1338
        %1362 = vst.msk [vmem:[#allocation3 + $0x28] sm:$0xf] %vm1359, %v1340
        %1363 = vst.msk [vmem:[#allocation3 + $0x3c] sm:$0xf] %vm1359, %v1342
        %1364 = vst.msk [vmem:[#allocation3 + $0x50] sm:$0xf] %vm1359, %v1344
        %1365 = vst.msk [vmem:[#allocation3 + $0x64] sm:$0xf] %vm1359, %v1346
        %1366 = vst.msk [vmem:[#allocation3 + $0x78] sm:$0xf] %vm1359, %v1348
        %1367 = vst.msk [vmem:[#allocation3 + $0x8c] sm:$0xf] %vm1359, %v1350
        %v1368 = vld [vmem:[#allocation2 + $0x2] sm:$0xff]
        %v1369 = vld [vmem:[#allocation2 + $0x12] sm:$0xff]
        %v1370 = vld [vmem:[#allocation2 + $0x22] sm:$0xff]
        %v1371 = vld [vmem:[#allocation2 + $0x32] sm:$0xff]
        %v1372 = vld [vmem:[#allocation2 + $0x42] sm:$0xff]
        %v1373 = vld [vmem:[#allocation2 + $0x52] sm:$0xff]
        %v1374 = vld [vmem:[#allocation2 + $0x62] sm:$0xff]
        %v1375 = vld [vmem:[#allocation2 + $0x72] sm:$0xff]
        %v1376 = vpack.c.bf16 %v1368, %v1368
        %v1377 = vpack.c.bf16 %v1369, %v1369
        %v1378 = vpack.c.bf16 %v1370, %v1370
        %v1379 = vpack.c.bf16 %v1371, %v1371
        %v1380 = vpack.c.bf16 %v1372, %v1372
        %v1381 = vpack.c.bf16 %v1373, %v1373
        %v1382 = vpack.c.bf16 %v1374, %v1374
        %v1383 = vpack.c.bf16 %v1375, %v1375
        %1384 = vst.msk [vmem:[#allocation3 + $0x4] sm:$0xf] %vm1302, %v1376
        %1385 = vst.msk [vmem:[#allocation3 + $0x18] sm:$0xf] %vm1302, %v1377
        %1386 = vst.msk [vmem:[#allocation3 + $0x2c] sm:$0xf] %vm1302, %v1378
        %1387 = vst.msk [vmem:[#allocation3 + $0x40] sm:$0xf] %vm1302, %v1379
        %1388 = vst.msk [vmem:[#allocation3 + $0x54] sm:$0xf] %vm1302, %v1380
        %1389 = vst.msk [vmem:[#allocation3 + $0x68] sm:$0xf] %vm1302, %v1381
        %1390 = vst.msk [vmem:[#allocation3 + $0x7c] sm:$0xf] %vm1302, %v1382
        %1391 = vst.msk [vmem:[#allocation3 + $0x90] sm:$0xf] %vm1302, %v1383
        %v1392 = vld [vmem:[%s1236] sm:$0xff]
        %v1393 = vld [vmem:[%s1236 + $0x10] sm:$0xff]
        %v1394 = vld [vmem:[%s1236 + $0x20] sm:$0xff]
        %v1395 = vld [vmem:[%s1236 + $0x30] sm:$0xff]
        %v1396 = vld [vmem:[%s1236 + $0x40] sm:$0xff]
        %v1397 = vld [vmem:[%s1236 + $0x50] sm:$0xff]
        %v1398 = vld [vmem:[%s1236 + $0x60] sm:$0xff]
        %v1399 = vld [vmem:[%s1236 + $0x70] sm:$0xff]
        %v1400 = vpack.c.bf16 %v1392, %v1392
        %v1401 = vpack.c.bf16 %v1393, %v1393
        %v1402 = vpack.c.bf16 %v1394, %v1394
        %v1403 = vpack.c.bf16 %v1395, %v1395
        %v1404 = vpack.c.bf16 %v1396, %v1396
        %v1405 = vpack.c.bf16 %v1397, %v1397
        %v1406 = vpack.c.bf16 %v1398, %v1398
        %v1407 = vpack.c.bf16 %v1399, %v1399
        %1416 = vrot.lane.b32.xlu0 %v1400, 64
        %v1417 = vpop.permute.xlu0 %1416
        %1418 = vrot.lane.b32.xlu0 %v1401, 64
        %v1419 = vpop.permute.xlu0 %1418
        %1420 = vrot.lane.b32.xlu0 %v1402, 64
        %v1421 = vpop.permute.xlu0 %1420
        %1422 = vrot.lane.b32.xlu0 %v1403, 64
        %v1423 = vpop.permute.xlu0 %1422
        %1424 = vrot.lane.b32.xlu0 %v1404, 64
        %v1425 = vpop.permute.xlu0 %1424
        %1426 = vrot.lane.b32.xlu0 %v1405, 64
        %v1427 = vpop.permute.xlu0 %1426
        %1428 = vrot.lane.b32.xlu0 %v1406, 64
        %v1429 = vpop.permute.xlu0 %1428
        %1430 = vrot.lane.b32.xlu0 %v1407, 64
        %v1431 = vpop.permute.xlu0 %1430
        %1440 = vst.msk [vmem:[#allocation3 + $0x4] sm:$0xf] %vm1359, %v1417
        %1441 = vst.msk [vmem:[#allocation3 + $0x18] sm:$0xf] %vm1359, %v1419
        %1442 = vst.msk [vmem:[#allocation3 + $0x2c] sm:$0xf] %vm1359, %v1421
        %1443 = vst.msk [vmem:[#allocation3 + $0x40] sm:$0xf] %vm1359, %v1423
        %1444 = vst.msk [vmem:[#allocation3 + $0x54] sm:$0xf] %vm1359, %v1425
        %1445 = vst.msk [vmem:[#allocation3 + $0x68] sm:$0xf] %vm1359, %v1427
        %1446 = vst.msk [vmem:[#allocation3 + $0x7c] sm:$0xf] %vm1359, %v1429
        %1447 = vst.msk [vmem:[#allocation3 + $0x90] sm:$0xf] %vm1359, %v1431
        %v1448 = vld [vmem:[%s1236 + $0x1] sm:$0xff]
        %v1449 = vld [vmem:[%s1236 + $0x11] sm:$0xff]
        %v1450 = vld [vmem:[%s1236 + $0x21] sm:$0xff]
        %v1451 = vld [vmem:[%s1236 + $0x31] sm:$0xff]
        %v1452 = vld [vmem:[%s1236 + $0x41] sm:$0xff]
        %v1453 = vld [vmem:[%s1236 + $0x51] sm:$0xff]
        %v1454 = vld [vmem:[%s1236 + $0x61] sm:$0xff]
        %v1455 = vld [vmem:[%s1236 + $0x71] sm:$0xff]
        %v1456 = vpack.c.bf16 %v1448, %v1448
        %v1457 = vpack.c.bf16 %v1449, %v1449
        %v1458 = vpack.c.bf16 %v1450, %v1450
        %v1459 = vpack.c.bf16 %v1451, %v1451
        %v1460 = vpack.c.bf16 %v1452, %v1452
        %v1461 = vpack.c.bf16 %v1453, %v1453
        %v1462 = vpack.c.bf16 %v1454, %v1454
        %v1463 = vpack.c.bf16 %v1455, %v1455
        %1464 = vst.msk [vmem:[#allocation3 + $0x8] sm:$0xf] %vm1302, %v1456
        %1465 = vst.msk [vmem:[#allocation3 + $0x1c] sm:$0xf] %vm1302, %v1457
        %1466 = vst.msk [vmem:[#allocation3 + $0x30] sm:$0xf] %vm1302, %v1458
        %1467 = vst.msk [vmem:[#allocation3 + $0x44] sm:$0xf] %vm1302, %v1459
        %1468 = vst.msk [vmem:[#allocation3 + $0x58] sm:$0xf] %vm1302, %v1460
        %1469 = vst.msk [vmem:[#allocation3 + $0x6c] sm:$0xf] %vm1302, %v1461
        %1470 = vst.msk [vmem:[#allocation3 + $0x80] sm:$0xf] %vm1302, %v1462
        %1471 = vst.msk [vmem:[#allocation3 + $0x94] sm:$0xf] %vm1302, %v1463
        %v1472 = vld [vmem:[%s1236 + $0x2] sm:$0xff]
        %v1473 = vld [vmem:[%s1236 + $0x12] sm:$0xff]
        %v1474 = vld [vmem:[%s1236 + $0x22] sm:$0xff]
        %v1475 = vld [vmem:[%s1236 + $0x32] sm:$0xff]
        %v1476 = vld [vmem:[%s1236 + $0x42] sm:$0xff]
        %v1477 = vld [vmem:[%s1236 + $0x52] sm:$0xff]
        %v1478 = vld [vmem:[%s1236 + $0x62] sm:$0xff]
        %v1479 = vld [vmem:[%s1236 + $0x72] sm:$0xff]
        %v1480 = vpack.c.bf16 %v1472, %v1472
        %v1481 = vpack.c.bf16 %v1473, %v1473
        %v1482 = vpack.c.bf16 %v1474, %v1474
        %v1483 = vpack.c.bf16 %v1475, %v1475
        %v1484 = vpack.c.bf16 %v1476, %v1476
        %v1485 = vpack.c.bf16 %v1477, %v1477
        %v1486 = vpack.c.bf16 %v1478, %v1478
        %v1487 = vpack.c.bf16 %v1479, %v1479
        %1496 = vrot.lane.b32.xlu0 %v1480, 64
        %v1497 = vpop.permute.xlu0 %1496
        %1498 = vrot.lane.b32.xlu0 %v1481, 64
        %v1499 = vpop.permute.xlu0 %1498
        %1500 = vrot.lane.b32.xlu0 %v1482, 64
        %v1501 = vpop.permute.xlu0 %1500
        %1502 = vrot.lane.b32.xlu0 %v1483, 64
        %v1503 = vpop.permute.xlu0 %1502
        %1504 = vrot.lane.b32.xlu0 %v1484, 64
        %v1505 = vpop.permute.xlu0 %1504
        %1506 = vrot.lane.b32.xlu0 %v1485, 64
        %v1507 = vpop.permute.xlu0 %1506
        %1508 = vrot.lane.b32.xlu0 %v1486, 64
        %v1509 = vpop.permute.xlu0 %1508
        %1510 = vrot.lane.b32.xlu0 %v1487, 64
        %v1511 = vpop.permute.xlu0 %1510
        %1520 = vst.msk [vmem:[#allocation3 + $0x8] sm:$0xf] %vm1359, %v1497
        %1521 = vst.msk [vmem:[#allocation3 + $0x1c] sm:$0xf] %vm1359, %v1499
        %1522 = vst.msk [vmem:[#allocation3 + $0x30] sm:$0xf] %vm1359, %v1501
        %1523 = vst.msk [vmem:[#allocation3 + $0x44] sm:$0xf] %vm1359, %v1503
        %1524 = vst.msk [vmem:[#allocation3 + $0x58] sm:$0xf] %vm1359, %v1505
        %1525 = vst.msk [vmem:[#allocation3 + $0x6c] sm:$0xf] %vm1359, %v1507
        %1526 = vst.msk [vmem:[#allocation3 + $0x80] sm:$0xf] %vm1359, %v1509
        %1527 = vst.msk [vmem:[#allocation3 + $0x94] sm:$0xf] %vm1359, %v1511
        %s1528 = scalar_lea.vmem [#allocation2], 32
        %v1529 = vld [vmem:[%s1528] sm:$0xff]
        %v1530 = vld [vmem:[%s1528 + $0x10] sm:$0xff]
        %v1531 = vld [vmem:[%s1528 + $0x20] sm:$0xff]
        %v1532 = vld [vmem:[%s1528 + $0x30] sm:$0xff]
        %v1533 = vld [vmem:[%s1528 + $0x40] sm:$0xff]
        %v1534 = vld [vmem:[%s1528 + $0x50] sm:$0xff]
        %v1535 = vld [vmem:[%s1528 + $0x60] sm:$0xff]
        %v1536 = vld [vmem:[%s1528 + $0x70] sm:$0xff]
        %v1537 = vpack.c.bf16 %v1529, %v1529
        %v1538 = vpack.c.bf16 %v1530, %v1530
        %v1539 = vpack.c.bf16 %v1531, %v1531
        %v1540 = vpack.c.bf16 %v1532, %v1532
        %v1541 = vpack.c.bf16 %v1533, %v1533
        %v1542 = vpack.c.bf16 %v1534, %v1534
        %v1543 = vpack.c.bf16 %v1535, %v1535
        %v1544 = vpack.c.bf16 %v1536, %v1536
        %1545 = vst.msk [vmem:[#allocation3 + $0xc] sm:$0xf] %vm1302, %v1537
        %1546 = vst.msk [vmem:[#allocation3 + $0x20] sm:$0xf] %vm1302, %v1538
        %1547 = vst.msk [vmem:[#allocation3 + $0x34] sm:$0xf] %vm1302, %v1539
        %1548 = vst.msk [vmem:[#allocation3 + $0x48] sm:$0xf] %vm1302, %v1540
        %1549 = vst.msk [vmem:[#allocation3 + $0x5c] sm:$0xf] %vm1302, %v1541
        %1550 = vst.msk [vmem:[#allocation3 + $0x70] sm:$0xf] %vm1302, %v1542
        %1551 = vst.msk [vmem:[#allocation3 + $0x84] sm:$0xf] %vm1302, %v1543
        %1552 = vst.msk [vmem:[#allocation3 + $0x98] sm:$0xf] %vm1302, %v1544
        %v1553 = vld [vmem:[%s1528 + $0x1] sm:$0xff]
        %v1554 = vld [vmem:[%s1528 + $0x11] sm:$0xff]
        %v1555 = vld [vmem:[%s1528 + $0x21] sm:$0xff]
        %v1556 = vld [vmem:[%s1528 + $0x31] sm:$0xff]
        %v1557 = vld [vmem:[%s1528 + $0x41] sm:$0xff]
        %v1558 = vld [vmem:[%s1528 + $0x51] sm:$0xff]
        %v1559 = vld [vmem:[%s1528 + $0x61] sm:$0xff]
        %v1560 = vld [vmem:[%s1528 + $0x71] sm:$0xff]
        %v1561 = vpack.c.bf16 %v1553, %v1553
        %v1562 = vpack.c.bf16 %v1554, %v1554
        %v1563 = vpack.c.bf16 %v1555, %v1555
        %v1564 = vpack.c.bf16 %v1556, %v1556
        %v1565 = vpack.c.bf16 %v1557, %v1557
        %v1566 = vpack.c.bf16 %v1558, %v1558
        %v1567 = vpack.c.bf16 %v1559, %v1559
        %v1568 = vpack.c.bf16 %v1560, %v1560
        %1577 = vrot.lane.b32.xlu0 %v1561, 64
        %v1578 = vpop.permute.xlu0 %1577
        %1579 = vrot.lane.b32.xlu0 %v1562, 64
        %v1580 = vpop.permute.xlu0 %1579
        %1581 = vrot.lane.b32.xlu0 %v1563, 64
        %v1582 = vpop.permute.xlu0 %1581
        %1583 = vrot.lane.b32.xlu0 %v1564, 64
        %v1584 = vpop.permute.xlu0 %1583
        %1585 = vrot.lane.b32.xlu0 %v1565, 64
        %v1586 = vpop.permute.xlu0 %1585
        %1587 = vrot.lane.b32.xlu0 %v1566, 64
        %v1588 = vpop.permute.xlu0 %1587
        %1589 = vrot.lane.b32.xlu0 %v1567, 64
        %v1590 = vpop.permute.xlu0 %1589
        %1591 = vrot.lane.b32.xlu0 %v1568, 64
        %v1592 = vpop.permute.xlu0 %1591
        %1601 = vst.msk [vmem:[#allocation3 + $0xc] sm:$0xf] %vm1359, %v1578
        %1602 = vst.msk [vmem:[#allocation3 + $0x20] sm:$0xf] %vm1359, %v1580
        %1603 = vst.msk [vmem:[#allocation3 + $0x34] sm:$0xf] %vm1359, %v1582
        %1604 = vst.msk [vmem:[#allocation3 + $0x48] sm:$0xf] %vm1359, %v1584
        %1605 = vst.msk [vmem:[#allocation3 + $0x5c] sm:$0xf] %vm1359, %v1586
        %1606 = vst.msk [vmem:[#allocation3 + $0x70] sm:$0xf] %vm1359, %v1588
        %1607 = vst.msk [vmem:[#allocation3 + $0x84] sm:$0xf] %vm1359, %v1590
        %1608 = vst.msk [vmem:[#allocation3 + $0x98] sm:$0xf] %vm1359, %v1592
        %v1609 = vld [vmem:[%s1528 + $0x2] sm:$0xff]
        %v1610 = vld [vmem:[%s1528 + $0x12] sm:$0xff]
        %v1611 = vld [vmem:[%s1528 + $0x22] sm:$0xff]
        %v1612 = vld [vmem:[%s1528 + $0x32] sm:$0xff]
        %v1613 = vld [vmem:[%s1528 + $0x42] sm:$0xff]
        %v1614 = vld [vmem:[%s1528 + $0x52] sm:$0xff]
        %v1615 = vld [vmem:[%s1528 + $0x62] sm:$0xff]
        %v1616 = vld [vmem:[%s1528 + $0x72] sm:$0xff]
        %v1617 = vpack.c.bf16 %v1609, %v1609
        %v1618 = vpack.c.bf16 %v1610, %v1610
        %v1619 = vpack.c.bf16 %v1611, %v1611
        %v1620 = vpack.c.bf16 %v1612, %v1612
        %v1621 = vpack.c.bf16 %v1613, %v1613
        %v1622 = vpack.c.bf16 %v1614, %v1614
        %v1623 = vpack.c.bf16 %v1615, %v1615
        %v1624 = vpack.c.bf16 %v1616, %v1616
        %1625 = vst.msk [vmem:[#allocation3 + $0x10] sm:$0xf] %vm1302, %v1617
        %1626 = vst.msk [vmem:[#allocation3 + $0x24] sm:$0xf] %vm1302, %v1618
        %1627 = vst.msk [vmem:[#allocation3 + $0x38] sm:$0xf] %vm1302, %v1619
        %1628 = vst.msk [vmem:[#allocation3 + $0x4c] sm:$0xf] %vm1302, %v1620
        %1629 = vst.msk [vmem:[#allocation3 + $0x60] sm:$0xf] %vm1302, %v1621
        %1630 = vst.msk [vmem:[#allocation3 + $0x74] sm:$0xf] %vm1302, %v1622
        %1631 = vst.msk [vmem:[#allocation3 + $0x88] sm:$0xf] %vm1302, %v1623
        %1632 = vst.msk [vmem:[#allocation3 + $0x9c] sm:$0xf] %vm1302, %v1624
        %v1633 = vld [vmem:[#allocation3] sm:$0xff]
        %v1634 = vld [vmem:[#allocation3 + $0x8] sm:$0xff]
        %v1635 = vld [vmem:[#allocation3 + $0x10] sm:$0xf]
        %v1636 = vld [vmem:[#allocation3 + $0x14] sm:$0xff]
        %v1637 = vld [vmem:[#allocation3 + $0x1c] sm:$0xff]
        %v1638 = vld [vmem:[#allocation3 + $0x24] sm:$0xf]
        %v1639 = vld [vmem:[#allocation3 + $0x28] sm:$0xff]
        %v1640 = vld [vmem:[#allocation3 + $0x30] sm:$0xff]
        %v1641 = vld [vmem:[#allocation3 + $0x38] sm:$0xf]
        %v1642 = vld [vmem:[#allocation3 + $0x3c] sm:$0xff]
        %v1643 = vld [vmem:[#allocation3 + $0x44] sm:$0xff]
        %v1644 = vld [vmem:[#allocation3 + $0x4c] sm:$0xf]
        %v1645 = vld [vmem:[#allocation3 + $0x50] sm:$0xff]
        %v1646 = vld [vmem:[#allocation3 + $0x58] sm:$0xff]
        %v1647 = vld [vmem:[#allocation3 + $0x60] sm:$0xf]
        %v1648 = vld [vmem:[#allocation3 + $0x64] sm:$0xff]
        %v1649 = vld [vmem:[#allocation3 + $0x6c] sm:$0xff]
        %v1650 = vld [vmem:[#allocation3 + $0x74] sm:$0xf]
        %v1651 = vld [vmem:[#allocation3 + $0x78] sm:$0xff]
        %v1652 = vld [vmem:[#allocation3 + $0x80] sm:$0xff]
        %v1653 = vld [vmem:[#allocation3 + $0x88] sm:$0xf]
        %v1654 = vld [vmem:[#allocation3 + $0x8c] sm:$0xff]
        %v1655 = vld [vmem:[#allocation3 + $0x94] sm:$0xff]
        %v1656 = vld [vmem:[#allocation3 + $0x9c] sm:$0xf]
        %v1657 = vld [vmem:[%s6] sm:$0xf]
        %v1658 = vld [vmem:[%s6 + $0x4] sm:$0xf]
        %v1659 = vld [vmem:[%s6 + $0x8] sm:$0xf]
        %v1660 = vld [vmem:[%s6 + $0xc] sm:$0xf]
        %v1661 = vld [vmem:[%s6 + $0x10] sm:$0xf]
        %v1662 = vld [vmem:[%s6 + $0x14] sm:$0xf]
        %v1663 = vld [vmem:[%s6 + $0x18] sm:$0xf]
        %v1664 = vld [vmem:[%s6 + $0x1c] sm:$0xf]
        %v1665 = vld [vmem:[%s6 + $0x20] sm:$0xf]
        %v1666 = vld [vmem:[%s6 + $0x24] sm:$0xf]
        %v1667 = vld [vmem:[%s6 + $0x28] sm:$0xf]
        %v1668 = vld [vmem:[%s6 + $0x2c] sm:$0xf]
        %v1669 = vld [vmem:[%s6 + $0x30] sm:$0xf]
        %v1670 = vld [vmem:[%s6 + $0x34] sm:$0xf]
        %v1671 = vld [vmem:[%s6 + $0x38] sm:$0xf]
        %v1672 = vld [vmem:[%s6 + $0x3c] sm:$0xf]
        %v1673 = vld [vmem:[%s6 + $0x40] sm:$0xf]
        %v1674 = vld [vmem:[%s6 + $0x44] sm:$0xf]
        %v1675 = vld [vmem:[%s6 + $0x48] sm:$0xf]
        %v1676 = vld [vmem:[%s6 + $0x4c] sm:$0xf]
        %v1677 = vld [vmem:[%s6 + $0x50] sm:$0xf]
        %v1678 = vld [vmem:[%s6 + $0x54] sm:$0xf]
        %v1679 = vld [vmem:[%s6 + $0x58] sm:$0xf]
        %v1680 = vld [vmem:[%s6 + $0x5c] sm:$0xf]
        %v1681 = vld [vmem:[%s6 + $0x60] sm:$0xf]
        %v1682 = vld [vmem:[%s6 + $0x64] sm:$0xf]
        %v1683 = vld [vmem:[%s6 + $0x68] sm:$0xf]
        %v1684 = vld [vmem:[%s6 + $0x6c] sm:$0xf]
        %v1685 = vld [vmem:[%s6 + $0x70] sm:$0xf]
        %v1686 = vld [vmem:[%s6 + $0x74] sm:$0xf]
        %v1687 = vld [vmem:[%s6 + $0x78] sm:$0xf]
        %v1688 = vld [vmem:[%s6 + $0x7c] sm:$0xf]
        %v1689 = vld [vmem:[%s6 + $0x80] sm:$0xf]
        %v1690 = vld [vmem:[%s6 + $0x84] sm:$0xf]
        %v1691 = vld [vmem:[%s6 + $0x88] sm:$0xf]
        %v1692 = vld [vmem:[%s6 + $0x8c] sm:$0xf]
        %v1693 = vld [vmem:[%s6 + $0x90] sm:$0xf]
        %v1694 = vld [vmem:[%s6 + $0x94] sm:$0xf]
        %v1695 = vld [vmem:[%s6 + $0x98] sm:$0xf]
        %v1696 = vld [vmem:[%s6 + $0x9c] sm:$0xf]
        %v1697 = vld [vmem:[%s6 + $0xa0] sm:$0xf]
        %v1698 = vld [vmem:[%s6 + $0xa4] sm:$0xf]
        %v1699 = vld [vmem:[%s6 + $0xa8] sm:$0xf]
        %v1700 = vld [vmem:[%s6 + $0xac] sm:$0xf]
        %v1701 = vld [vmem:[%s6 + $0xb0] sm:$0xf]
        %v1702 = vld [vmem:[%s6 + $0xb4] sm:$0xf]
        %v1703 = vld [vmem:[%s6 + $0xb8] sm:$0xf]
        %v1704 = vld [vmem:[%s6 + $0xbc] sm:$0xf]
        %v1705 = vld [vmem:[%s6 + $0xc0] sm:$0xf]
        %v1706 = vld [vmem:[%s6 + $0xc4] sm:$0xf]
        %v1707 = vld [vmem:[%s6 + $0xc8] sm:$0xf]
        %v1708 = vld [vmem:[%s6 + $0xcc] sm:$0xf]
        %v1709 = vld [vmem:[%s6 + $0xd0] sm:$0xf]
        %v1710 = vld [vmem:[%s6 + $0xd4] sm:$0xf]
        %v1711 = vld [vmem:[%s6 + $0xd8] sm:$0xf]
        %v1712 = vld [vmem:[%s6 + $0xdc] sm:$0xf]
        %v1713 = vld [vmem:[%s6 + $0xe0] sm:$0xf]
        %v1714 = vld [vmem:[%s6 + $0xe4] sm:$0xf]
        %v1715 = vld [vmem:[%s6 + $0xe8] sm:$0xf]
        %v1716 = vld [vmem:[%s6 + $0xec] sm:$0xf]
        %v1717 = vld [vmem:[%s6 + $0xf0] sm:$0xf]
        %v1718 = vld [vmem:[%s6 + $0xf4] sm:$0xf]
        %v1719 = vld [vmem:[%s6 + $0xf8] sm:$0xf]
        %v1720 = vld [vmem:[%s6 + $0xfc] sm:$0xf]
        %v1721 = vld [vmem:[%s6 + $0x100] sm:$0xf]
        %v1722 = vld [vmem:[%s6 + $0x104] sm:$0xf]
        %v1723 = vld [vmem:[%s6 + $0x108] sm:$0xf]
        %v1724 = vld [vmem:[%s6 + $0x10c] sm:$0xf]
        %v1725 = vld [vmem:[%s6 + $0x110] sm:$0xf]
        %v1726 = vld [vmem:[%s6 + $0x114] sm:$0xf]
        %v1727 = vld [vmem:[%s6 + $0x118] sm:$0xf]
        %v1728 = vld [vmem:[%s6 + $0x11c] sm:$0xf]
        %v1729 = vld [vmem:[%s7] sm:$0x1]
        %v1731 = vperm.slane %v1729, 0
        %v1757 = vunpack.c.l.b16 %v1633
        %v1758 = vunpack.c.h.b16 %v1633
        %v1759 = vunpack.c.l.b16 %v1634
        %v1760 = vunpack.c.h.b16 %v1634
        %v1761 = vunpack.c.l.b16 %v1635
        %v1762 = vunpack.c.l.b16 %v1636
        %v1763 = vunpack.c.h.b16 %v1636
        %v1764 = vunpack.c.l.b16 %v1637
        %v1765 = vunpack.c.h.b16 %v1637
        %v1766 = vunpack.c.l.b16 %v1638
        %v1767 = vunpack.c.l.b16 %v1639
        %v1768 = vunpack.c.h.b16 %v1639
        %v1769 = vunpack.c.l.b16 %v1640
        %v1770 = vunpack.c.h.b16 %v1640
        %v1771 = vunpack.c.l.b16 %v1641
        %v1772 = vunpack.c.l.b16 %v1642
        %v1773 = vunpack.c.h.b16 %v1642
        %v1774 = vunpack.c.l.b16 %v1643
        %v1775 = vunpack.c.h.b16 %v1643
        %v1776 = vunpack.c.l.b16 %v1644
        %v1777 = vunpack.c.l.b16 %v1645
        %v1778 = vunpack.c.h.b16 %v1645
        %v1779 = vunpack.c.l.b16 %v1646
        %v1780 = vunpack.c.h.b16 %v1646
        %v1781 = vunpack.c.l.b16 %v1647
        %v1782 = vunpack.c.l.b16 %v1648
        %v1783 = vunpack.c.h.b16 %v1648
        %v1784 = vunpack.c.l.b16 %v1649
        %v1785 = vunpack.c.h.b16 %v1649
        %v1786 = vunpack.c.l.b16 %v1650
        %v1787 = vunpack.c.l.b16 %v1651
        %v1788 = vunpack.c.h.b16 %v1651
        %v1789 = vunpack.c.l.b16 %v1652
        %v1790 = vunpack.c.h.b16 %v1652
        %v1791 = vunpack.c.l.b16 %v1653
        %v1792 = vunpack.c.l.b16 %v1654
        %v1793 = vunpack.c.h.b16 %v1654
        %v1794 = vunpack.c.l.b16 %v1655
        %v1795 = vunpack.c.h.b16 %v1655
        %v1796 = vunpack.c.l.b16 %v1656
        %v1797 = vpack.c.b16 %v1762, %v1757
        %v1798 = vpack.c.b16 %v1763, %v1758
        %v1799 = vpack.c.b16 %v1764, %v1759
        %v1800 = vpack.c.b16 %v1765, %v1760
        %v1801 = vpack.c.b16 %v1766, %v1761
        %v1802 = vpack.c.b16 %v1772, %v1767
        %v1803 = vpack.c.b16 %v1773, %v1768
        %v1804 = vpack.c.b16 %v1774, %v1769
        %v1805 = vpack.c.b16 %v1775, %v1770
        %v1806 = vpack.c.b16 %v1776, %v1771
        %v1807 = vpack.c.b16 %v1782, %v1777
        %v1808 = vpack.c.b16 %v1783, %v1778
        %v1809 = vpack.c.b16 %v1784, %v1779
        %v1810 = vpack.c.b16 %v1785, %v1780
        %v1811 = vpack.c.b16 %v1786, %v1781
        %v1812 = vpack.c.b16 %v1792, %v1787
        %v1813 = vpack.c.b16 %v1793, %v1788
        %v1814 = vpack.c.b16 %v1794, %v1789
        %v1815 = vpack.c.b16 %v1795, %v1790
        %v1816 = vpack.c.b16 %v1796, %v1791
        %v1905 = vunpack.c.l.b16 %v1657
        %v1906 = vunpack.c.l.b16 %v1658
        %v1907 = vunpack.c.l.b16 %v1659
        %v1908 = vunpack.c.l.b16 %v1660
        %v1909 = vunpack.c.l.b16 %v1661
        %v1910 = vunpack.c.l.b16 %v1662
        %v1911 = vunpack.c.l.b16 %v1663
        %v1912 = vunpack.c.l.b16 %v1664
        %v1913 = vunpack.c.l.b16 %v1665
        %v1914 = vunpack.c.l.b16 %v1666
        %v1915 = vunpack.c.l.b16 %v1667
        %v1916 = vunpack.c.l.b16 %v1668
        %v1917 = vunpack.c.l.b16 %v1669
        %v1918 = vunpack.c.l.b16 %v1670
        %v1919 = vunpack.c.l.b16 %v1671
        %v1920 = vunpack.c.l.b16 %v1672
        %v1921 = vunpack.c.l.b16 %v1673
        %v1922 = vunpack.c.l.b16 %v1674
        %v1923 = vunpack.c.l.b16 %v1675
        %v1924 = vunpack.c.l.b16 %v1676
        %v1925 = vunpack.c.l.b16 %v1677
        %v1926 = vunpack.c.l.b16 %v1678
        %v1927 = vunpack.c.l.b16 %v1679
        %v1928 = vunpack.c.l.b16 %v1680
        %v1929 = vunpack.c.l.b16 %v1681
        %v1930 = vunpack.c.l.b16 %v1682
        %v1931 = vunpack.c.l.b16 %v1683
        %v1932 = vunpack.c.l.b16 %v1684
        %v1933 = vunpack.c.l.b16 %v1685
        %v1934 = vunpack.c.l.b16 %v1686
        %v1935 = vunpack.c.l.b16 %v1687
        %v1936 = vunpack.c.l.b16 %v1688
        %v1937 = vunpack.c.l.b16 %v1689
        %v1938 = vunpack.c.l.b16 %v1690
        %v1939 = vunpack.c.l.b16 %v1691
        %v1940 = vunpack.c.l.b16 %v1692
        %v1941 = vunpack.c.l.b16 %v1693
        %v1942 = vunpack.c.l.b16 %v1694
        %v1943 = vunpack.c.l.b16 %v1695
        %v1944 = vunpack.c.l.b16 %v1696
        %v1945 = vunpack.c.l.b16 %v1697
        %v1946 = vunpack.c.l.b16 %v1698
        %v1947 = vunpack.c.l.b16 %v1699
        %v1948 = vunpack.c.l.b16 %v1700
        %v1949 = vunpack.c.l.b16 %v1701
        %v1950 = vunpack.c.l.b16 %v1702
        %v1951 = vunpack.c.l.b16 %v1703
        %v1952 = vunpack.c.l.b16 %v1704
        %v1953 = vunpack.c.l.b16 %v1705
        %v1954 = vunpack.c.l.b16 %v1706
        %v1955 = vunpack.c.l.b16 %v1707
        %v1956 = vunpack.c.l.b16 %v1708
        %v1957 = vunpack.c.l.b16 %v1709
        %v1958 = vunpack.c.l.b16 %v1710
        %v1959 = vunpack.c.l.b16 %v1711
        %v1960 = vunpack.c.l.b16 %v1712
        %v1961 = vunpack.c.l.b16 %v1713
        %v1962 = vunpack.c.l.b16 %v1714
        %v1963 = vunpack.c.l.b16 %v1715
        %v1964 = vunpack.c.l.b16 %v1716
        %v1965 = vunpack.c.l.b16 %v1717
        %v1966 = vunpack.c.l.b16 %v1718
        %v1967 = vunpack.c.l.b16 %v1719
        %v1968 = vunpack.c.l.b16 %v1720
        %v1969 = vunpack.c.l.b16 %v1721
        %v1970 = vunpack.c.l.b16 %v1722
        %v1971 = vunpack.c.l.b16 %v1723
        %v1972 = vunpack.c.l.b16 %v1724
        %v1973 = vunpack.c.l.b16 %v1725
        %v1974 = vunpack.c.l.b16 %v1726
        %v1975 = vunpack.c.l.b16 %v1727
        %v1976 = vunpack.c.l.b16 %v1728
        %v1977 = vpack.c.b16 %v1906, %v1905
        %v1978 = vpack.c.b16 %v1908, %v1907
        %v1979 = vpack.c.b16 %v1910, %v1909
        %v1980 = vpack.c.b16 %v1912, %v1911
        %v1981 = vpack.c.b16 %v1914, %v1913
        %v1982 = vpack.c.b16 %v1916, %v1915
        %v1983 = vpack.c.b16 %v1918, %v1917
        %v1984 = vpack.c.b16 %v1920, %v1919
        %v1985 = vpack.c.b16 %v1922, %v1921
        %v1986 = vpack.c.b16 %v1924, %v1923
        %v1987 = vpack.c.b16 %v1926, %v1925
        %v1988 = vpack.c.b16 %v1928, %v1927
        %v1989 = vpack.c.b16 %v1930, %v1929
        %v1990 = vpack.c.b16 %v1932, %v1931
        %v1991 = vpack.c.b16 %v1934, %v1933
        %v1992 = vpack.c.b16 %v1936, %v1935
        %v1993 = vpack.c.b16 %v1938, %v1937
        %v1994 = vpack.c.b16 %v1940, %v1939
        %v1995 = vpack.c.b16 %v1942, %v1941
        %v1996 = vpack.c.b16 %v1944, %v1943
        %v1997 = vpack.c.b16 %v1946, %v1945
        %v1998 = vpack.c.b16 %v1948, %v1947
        %v1999 = vpack.c.b16 %v1950, %v1949
        %v2000 = vpack.c.b16 %v1952, %v1951
        %v2001 = vpack.c.b16 %v1954, %v1953
        %v2002 = vpack.c.b16 %v1956, %v1955
        %v2003 = vpack.c.b16 %v1958, %v1957
        %v2004 = vpack.c.b16 %v1960, %v1959
        %v2005 = vpack.c.b16 %v1962, %v1961
        %v2006 = vpack.c.b16 %v1964, %v1963
        %v2007 = vpack.c.b16 %v1966, %v1965
        %v2008 = vpack.c.b16 %v1968, %v1967
        %v2009 = vpack.c.b16 %v1970, %v1969
        %v2010 = vpack.c.b16 %v1972, %v1971
        %v2011 = vpack.c.b16 %v1974, %v1973
        %v2012 = vpack.c.b16 %v1976, %v1975
        %v2050 = vsel %vm623, %v1801, 0
        %v2053 = vsel %vm623, %v1806, 0
        %v2056 = vsel %vm623, %v1811, 0
        %v2059 = vsel %vm623, %v1816, 0
        %2061 = vmatpush.bf16.msra.mxu0 %v1984
        %2062 = vmatpush.bf16.msra.mxu0 %v1983
        %2063 = vmatpush.bf16.msra.mxu0 %v1982
        %2064 = vmatpush.bf16.msra.mxu0 %v1981
        %2065 = vmatpush.bf16.msra.mxu0 %v1980
        %2066 = vmatpush.bf16.msra.mxu0 %v1979
        %2067 = vmatpush.bf16.msra.mxu0 %v1978
        %2068 = vmatpush.bf16.msra.mxu0 %v1977
        %2069 = vmatmul.bf16.gmra.mxu0 %v1797
        %v2070 = vpop.f32.mrf.mxu0
        %v2071 = vadd.f32 %v1731, %v2070
        %v2072 = vpop.f32.mrf.mxu0
        %v2073 = vadd.f32 %v1731, %v2072
        %2074 = vmatmul.bf16.gmra.mxu0 %v1802
        %v2075 = vpop.f32.mrf.mxu0
        %v2076 = vadd.f32 %v1731, %v2075
        %v2077 = vpop.f32.mrf.mxu0
        %v2078 = vadd.f32 %v1731, %v2077
        %2079 = vmatmul.bf16.gmra.mxu0 %v1807
        %v2080 = vpop.f32.mrf.mxu0
        %v2081 = vadd.f32 %v1731, %v2080
        %v2082 = vpop.f32.mrf.mxu0
        %v2083 = vadd.f32 %v1731, %v2082
        %2084 = vmatmul.bf16.gmra.mxu0 %v1812
        %v2085 = vpop.f32.mrf.mxu0
        %v2086 = vadd.f32 %v1731, %v2085
        %v2087 = vpop.f32.mrf.mxu0
        %v2088 = vadd.f32 %v1731, %v2087
        %2089 = vdwg.mxu0
        %2090 = vmatpush.bf16.msra.mxu0 %v1992
        %2091 = vmatpush.bf16.msra.mxu0 %v1991
        %2092 = vmatpush.bf16.msra.mxu0 %v1990
        %2093 = vmatpush.bf16.msra.mxu0 %v1989
        %2094 = vmatpush.bf16.msra.mxu0 %v1988
        %2095 = vmatpush.bf16.msra.mxu0 %v1987
        %2096 = vmatpush.bf16.msra.mxu0 %v1986
        %2097 = vmatpush.bf16.msra.mxu0 %v1985
        %2098 = vmatmul.bf16.gmra.mxu0 %v1798
        %v2099 = vpop.f32.mrf.mxu0
        %v2100 = vadd.f32 %v2071, %v2099
        %v2101 = vpop.f32.mrf.mxu0
        %v2102 = vadd.f32 %v2073, %v2101
        %2103 = vmatmul.bf16.gmra.mxu0 %v1803
        %v2104 = vpop.f32.mrf.mxu0
        %v2105 = vadd.f32 %v2076, %v2104
        %v2106 = vpop.f32.mrf.mxu0
        %v2107 = vadd.f32 %v2078, %v2106
        %2108 = vmatmul.bf16.gmra.mxu0 %v1808
        %v2109 = vpop.f32.mrf.mxu0
        %v2110 = vadd.f32 %v2081, %v2109
        %v2111 = vpop.f32.mrf.mxu0
        %v2112 = vadd.f32 %v2083, %v2111
        %2113 = vmatmul.bf16.gmra.mxu0 %v1813
        %v2114 = vpop.f32.mrf.mxu0
        %v2115 = vadd.f32 %v2086, %v2114
        %v2116 = vpop.f32.mrf.mxu0
        %v2117 = vadd.f32 %v2088, %v2116
        %2118 = vdwg.mxu0
        %2119 = vmatpush.bf16.msra.mxu0 %v2000
        %2120 = vmatpush.bf16.msra.mxu0 %v1999
        %2121 = vmatpush.bf16.msra.mxu0 %v1998
        %2122 = vmatpush.bf16.msra.mxu0 %v1997
        %2123 = vmatpush.bf16.msra.mxu0 %v1996
        %2124 = vmatpush.bf16.msra.mxu0 %v1995
        %2125 = vmatpush.bf16.msra.mxu0 %v1994
        %2126 = vmatpush.bf16.msra.mxu0 %v1993
        %2127 = vmatmul.bf16.gmra.mxu0 %v1799
        %v2128 = vpop.f32.mrf.mxu0
        %v2129 = vadd.f32 %v2100, %v2128
        %v2130 = vpop.f32.mrf.mxu0
        %v2131 = vadd.f32 %v2102, %v2130
        %2132 = vmatmul.bf16.gmra.mxu0 %v1804
        %v2133 = vpop.f32.mrf.mxu0
        %v2134 = vadd.f32 %v2105, %v2133
        %v2135 = vpop.f32.mrf.mxu0
        %v2136 = vadd.f32 %v2107, %v2135
        %2137 = vmatmul.bf16.gmra.mxu0 %v1809
        %v2138 = vpop.f32.mrf.mxu0
        %v2139 = vadd.f32 %v2110, %v2138
        %v2140 = vpop.f32.mrf.mxu0
        %v2141 = vadd.f32 %v2112, %v2140
        %2142 = vmatmul.bf16.gmra.mxu0 %v1814
        %v2143 = vpop.f32.mrf.mxu0
        %v2144 = vadd.f32 %v2115, %v2143
        %v2145 = vpop.f32.mrf.mxu0
        %v2146 = vadd.f32 %v2117, %v2145
        %2147 = vdwg.mxu0
        %2148 = vmatpush.bf16.msra.mxu0 %v2008
        %2149 = vmatpush.bf16.msra.mxu0 %v2007
        %2150 = vmatpush.bf16.msra.mxu0 %v2006
        %2151 = vmatpush.bf16.msra.mxu0 %v2005
        %2152 = vmatpush.bf16.msra.mxu0 %v2004
        %2153 = vmatpush.bf16.msra.mxu0 %v2003
        %2154 = vmatpush.bf16.msra.mxu0 %v2002
        %2155 = vmatpush.bf16.msra.mxu0 %v2001
        %2156 = vmatmul.bf16.gmra.mxu0 %v1800
        %v2157 = vpop.f32.mrf.mxu0
        %v2158 = vadd.f32 %v2129, %v2157
        %v2159 = vpop.f32.mrf.mxu0
        %v2160 = vadd.f32 %v2131, %v2159
        %2161 = vmatmul.bf16.gmra.mxu0 %v1805
        %v2162 = vpop.f32.mrf.mxu0
        %v2163 = vadd.f32 %v2134, %v2162
        %v2164 = vpop.f32.mrf.mxu0
        %v2165 = vadd.f32 %v2136, %v2164
        %2166 = vmatmul.bf16.gmra.mxu0 %v1810
        %v2167 = vpop.f32.mrf.mxu0
        %v2168 = vadd.f32 %v2139, %v2167
        %v2169 = vpop.f32.mrf.mxu0
        %v2170 = vadd.f32 %v2141, %v2169
        %2171 = vmatmul.bf16.gmra.mxu0 %v1815
        %v2172 = vpop.f32.mrf.mxu0
        %v2173 = vadd.f32 %v2144, %v2172
        %v2174 = vpop.f32.mrf.mxu0
        %v2175 = vadd.f32 %v2146, %v2174
        %2176 = vdwg.mxu0
        %2177 = vmatpush.bf16.msra.mxu0 0
        %2178 = vmatpush.bf16.msra.mxu0 0
        %2179 = vmatpush.bf16.msra.mxu0 0
        %2180 = vmatpush.bf16.msra.mxu0 0
        %2181 = vmatpush.bf16.msra.mxu0 %v2012
        %2182 = vmatpush.bf16.msra.mxu0 %v2011
        %2183 = vmatpush.bf16.msra.mxu0 %v2010
        %2184 = vmatpush.bf16.msra.mxu0 %v2009
        %2185 = vmatmul.bf16.gmra.mxu0 %v2050
        %v2186 = vpop.f32.mrf.mxu0
        %v2187 = vadd.f32 %v2158, %v2186
        %v2188 = vpop.f32.mrf.mxu0
        %v2189 = vadd.f32 %v2160, %v2188
        %2190 = vmatmul.bf16.gmra.mxu0 %v2053
        %v2191 = vpop.f32.mrf.mxu0
        %v2192 = vadd.f32 %v2163, %v2191
        %v2193 = vpop.f32.mrf.mxu0
        %v2194 = vadd.f32 %v2165, %v2193
        %2195 = vmatmul.bf16.gmra.mxu0 %v2056
        %v2196 = vpop.f32.mrf.mxu0
        %v2197 = vadd.f32 %v2168, %v2196
        %v2198 = vpop.f32.mrf.mxu0
        %v2199 = vadd.f32 %v2170, %v2198
        %2200 = vmatmul.bf16.gmra.mxu0 %v2059
        %v2201 = vpop.f32.mrf.mxu0
        %v2202 = vadd.f32 %v2173, %v2201
        %v2203 = vpop.f32.mrf.mxu0
        %v2204 = vadd.f32 %v2175, %v2203
        %2205 = vdwg.mxu0
        %v2206 = vld [vmem:[%s8] sm:$0x1]
        %v2207 = vld [vmem:[%s9] sm:$0x1]
        %v2208 = vsel %vm669, %v2187, 0.0
        %v2209 = vsel %vm669, %v2189, 0.0
        %v2210 = vadd.f32 %v2208, %v2209
        %v2211 = vsel %vm669, %v2192, 0.0
        %v2212 = vadd.f32 %v2210, %v2211
        %v2213 = vsel %vm669, %v2194, 0.0
        %v2214 = vadd.f32 %v2212, %v2213
        %v2215 = vsel %vm669, %v2197, 0.0
        %v2216 = vadd.f32 %v2214, %v2215
        %v2217 = vsel %vm669, %v2199, 0.0
        %v2218 = vadd.f32 %v2216, %v2217
        %v2219 = vsel %vm669, %v2202, 0.0
        %v2220 = vadd.f32 %v2218, %v2219
        %v2221 = vsel %vm669, %v2204, 0.0
        %v2222 = vadd.f32 %v2220, %v2221
        %v2223 = vrot.slane %v2222, 4
        %v2224 = vadd.f32 %v2222, %v2223
        %v2225 = vrot.slane %v2224, 2
        %v2226 = vadd.f32 %v2224, %v2225
        %v2227 = vrot.slane %v2226, 1
        %v2228 = vadd.f32 %v2226, %v2227
        %v2229 = vmul.f32 %v2228, 0.015625
        %v2230 = vsub.f32 %v2187, %v2229
        %v2231 = vsub.f32 %v2189, %v2229
        %v2232 = vsub.f32 %v2192, %v2229
        %v2233 = vsub.f32 %v2194, %v2229
        %v2234 = vsub.f32 %v2197, %v2229
        %v2235 = vsub.f32 %v2199, %v2229
        %v2236 = vsub.f32 %v2202, %v2229
        %v2237 = vsub.f32 %v2204, %v2229
        %v2238 = vmul.f32 %v2230, %v2230
        %v2239 = vmul.f32 %v2231, %v2231
        %v2240 = vmul.f32 %v2232, %v2232
        %v2241 = vmul.f32 %v2233, %v2233
        %v2242 = vmul.f32 %v2234, %v2234
        %v2243 = vmul.f32 %v2235, %v2235
        %v2244 = vmul.f32 %v2236, %v2236
        %v2245 = vmul.f32 %v2237, %v2237
        %v2246 = vsel %vm669, %v2238, 0.0
        %v2247 = vsel %vm669, %v2239, 0.0
        %v2248 = vadd.f32 %v2246, %v2247
        %v2249 = vsel %vm669, %v2240, 0.0
        %v2250 = vadd.f32 %v2248, %v2249
        %v2251 = vsel %vm669, %v2241, 0.0
        %v2252 = vadd.f32 %v2250, %v2251
        %v2253 = vsel %vm669, %v2242, 0.0
        %v2254 = vadd.f32 %v2252, %v2253
        %v2255 = vsel %vm669, %v2243, 0.0
        %v2256 = vadd.f32 %v2254, %v2255
        %v2257 = vsel %vm669, %v2244, 0.0
        %v2258 = vadd.f32 %v2256, %v2257
        %v2259 = vsel %vm669, %v2245, 0.0
        %v2260 = vadd.f32 %v2258, %v2259
        %v2261 = vrot.slane %v2260, 4
        %v2262 = vadd.f32 %v2260, %v2261
        %v2263 = vrot.slane %v2262, 2
        %v2264 = vadd.f32 %v2262, %v2263
        %v2265 = vrot.slane %v2264, 1
        %v2266 = vadd.f32 %v2264, %v2265
        %v2267 = vmul.f32 %v2266, 0.015625
        %v2268 = vadd.f32 %v2267, 1e-06
        %v2269 = vrsqrt.pop %v2268
        %v2270 = vmul.f32 %v2269, %v2268
        %v2271 = vmul.f32 %v2270, %v2269
        %v2272 = vmul.f32 0.5, %v2271
        %v2273 = vsub.f32 1.5, %v2272
        %v2274 = vmul.f32 %v2269, %v2273
        %vm2275 = vweird.f32 %v2268
        %vm2276 = vweird.f32 %v2269
        %vm2277 = vmor %vm2275, %vm2276
        %v2278 = vsel %vm2277, %v2269, %v2274
        %v2279 = vmul.f32 %v2230, %v2278
        %v2280 = vmul.f32 %v2231, %v2278
        %v2281 = vmul.f32 %v2232, %v2278
        %v2282 = vmul.f32 %v2233, %v2278
        %v2283 = vmul.f32 %v2234, %v2278
        %v2284 = vmul.f32 %v2235, %v2278
        %v2285 = vmul.f32 %v2236, %v2278
        %v2286 = vmul.f32 %v2237, %v2278
        %v2288 = vperm.slane %v2206, 0
        %v2290 = vmul.f32 %v2279, %v2288
        %v2291 = vmul.f32 %v2280, %v2288
        %v2292 = vmul.f32 %v2281, %v2288
        %v2293 = vmul.f32 %v2282, %v2288
        %v2294 = vmul.f32 %v2283, %v2288
        %v2295 = vmul.f32 %v2284, %v2288
        %v2296 = vmul.f32 %v2285, %v2288
        %v2297 = vmul.f32 %v2286, %v2288
        %v2299 = vperm.slane %v2207, 0
        %v2301 = vadd.f32 %v2290, %v2299
        %v2302 = vadd.f32 %v2291, %v2299
        %v2303 = vadd.f32 %v2292, %v2299
        %v2304 = vadd.f32 %v2293, %v2299
        %v2305 = vadd.f32 %v2294, %v2299
        %v2306 = vadd.f32 %v2295, %v2299
        %v2307 = vadd.f32 %v2296, %v2299
        %v2308 = vadd.f32 %v2297, %v2299
        %v2309 = vxor.u32 %v2301, 2147483648
        %v2310 = vxor.u32 %v2302, 2147483648
        %v2311 = vxor.u32 %v2303, 2147483648
        %v2312 = vxor.u32 %v2304, 2147483648
        %v2313 = vxor.u32 %v2305, 2147483648
        %v2314 = vxor.u32 %v2306, 2147483648
        %v2315 = vxor.u32 %v2307, 2147483648
        %v2316 = vxor.u32 %v2308, 2147483648
        %v2317 = vmul.f32 %v2309, 1.442695
        %v2318 = vpow.pop %v2317
        %v2319 = vmul.f32 %v2310, 1.442695
        %v2320 = vpow.pop %v2319
        %v2321 = vmul.f32 %v2311, 1.442695
        %v2322 = vpow.pop %v2321
        %v2323 = vmul.f32 %v2312, 1.442695
        %v2324 = vpow.pop %v2323
        %v2325 = vmul.f32 %v2313, 1.442695
        %v2326 = vpow.pop %v2325
        %v2327 = vmul.f32 %v2314, 1.442695
        %v2328 = vpow.pop %v2327
        %v2329 = vmul.f32 %v2315, 1.442695
        %v2330 = vpow.pop %v2329
        %v2331 = vmul.f32 %v2316, 1.442695
        %v2332 = vpow.pop %v2331
        %v2333 = vadd.f32 %v2318, 1.0
        %v2334 = vadd.f32 %v2320, 1.0
        %v2335 = vadd.f32 %v2322, 1.0
        %v2336 = vadd.f32 %v2324, 1.0
        %v2337 = vadd.f32 %v2326, 1.0
        %v2338 = vadd.f32 %v2328, 1.0
        %v2339 = vadd.f32 %v2330, 1.0
        %v2340 = vadd.f32 %v2332, 1.0
        %v2341 = vrcp.pop %v2333
        %v2342 = vmul.f32 %v2333, %v2341
        %v2343 = vsub.f32 1.0, %v2342
        %v2344 = vmul.f32 %v2341, %v2343
        %v2345 = vadd.f32 %v2341, %v2344
        %vm2346 = vweird.f32 %v2333
        %vm2347 = vweird.f32 %v2341
        %vm2348 = vmor %vm2346, %vm2347
        %v2349 = vsel %vm2348, %v2341, %v2345
        %v2350 = vand.u32 2147483647, %v2333
        %vm2351 = vcmp.eq.f32.partialorder %v2350, 8.507059e+37
        %v2352 = vand.u32 %v2333, 2147483648
        %v2353 = vor.u32 1.1754944e-38, %v2352
        %v2354 = vsel %vm2351, %v2353, %v2349
        %v2355 = vmul.f32 1.0, %v2354
        %v2356 = vrcp.pop %v2334
        %v2357 = vmul.f32 %v2334, %v2356
        %v2358 = vsub.f32 1.0, %v2357
        %v2359 = vmul.f32 %v2356, %v2358
        %v2360 = vadd.f32 %v2356, %v2359
        %vm2361 = vweird.f32 %v2334
        %vm2362 = vweird.f32 %v2356
        %vm2363 = vmor %vm2361, %vm2362
        %v2364 = vsel %vm2363, %v2356, %v2360
        %v2365 = vand.u32 2147483647, %v2334
        %vm2366 = vcmp.eq.f32.partialorder %v2365, 8.507059e+37
        %v2367 = vand.u32 %v2334, 2147483648
        %v2368 = vor.u32 1.1754944e-38, %v2367
        %v2369 = vsel %vm2366, %v2368, %v2364
        %v2370 = vmul.f32 1.0, %v2369
        %v2371 = vrcp.pop %v2335
        %v2372 = vmul.f32 %v2335, %v2371
        %v2373 = vsub.f32 1.0, %v2372
        %v2374 = vmul.f32 %v2371, %v2373
        %v2375 = vadd.f32 %v2371, %v2374
        %vm2376 = vweird.f32 %v2335
        %vm2377 = vweird.f32 %v2371
        %vm2378 = vmor %vm2376, %vm2377
        %v2379 = vsel %vm2378, %v2371, %v2375
        %v2380 = vand.u32 2147483647, %v2335
        %vm2381 = vcmp.eq.f32.partialorder %v2380, 8.507059e+37
        %v2382 = vand.u32 %v2335, 2147483648
        %v2383 = vor.u32 1.1754944e-38, %v2382
        %v2384 = vsel %vm2381, %v2383, %v2379
        %v2385 = vmul.f32 1.0, %v2384
        %v2386 = vrcp.pop %v2336
        %v2387 = vmul.f32 %v2336, %v2386
        %v2388 = vsub.f32 1.0, %v2387
        %v2389 = vmul.f32 %v2386, %v2388
        %v2390 = vadd.f32 %v2386, %v2389
        %vm2391 = vweird.f32 %v2336
        %vm2392 = vweird.f32 %v2386
        %vm2393 = vmor %vm2391, %vm2392
        %v2394 = vsel %vm2393, %v2386, %v2390
        %v2395 = vand.u32 2147483647, %v2336
        %vm2396 = vcmp.eq.f32.partialorder %v2395, 8.507059e+37
        %v2397 = vand.u32 %v2336, 2147483648
        %v2398 = vor.u32 1.1754944e-38, %v2397
        %v2399 = vsel %vm2396, %v2398, %v2394
        %v2400 = vmul.f32 1.0, %v2399
        %v2401 = vrcp.pop %v2337
        %v2402 = vmul.f32 %v2337, %v2401
        %v2403 = vsub.f32 1.0, %v2402
        %v2404 = vmul.f32 %v2401, %v2403
        %v2405 = vadd.f32 %v2401, %v2404
        %vm2406 = vweird.f32 %v2337
        %vm2407 = vweird.f32 %v2401
        %vm2408 = vmor %vm2406, %vm2407
        %v2409 = vsel %vm2408, %v2401, %v2405
        %v2410 = vand.u32 2147483647, %v2337
        %vm2411 = vcmp.eq.f32.partialorder %v2410, 8.507059e+37
        %v2412 = vand.u32 %v2337, 2147483648
        %v2413 = vor.u32 1.1754944e-38, %v2412
        %v2414 = vsel %vm2411, %v2413, %v2409
        %v2415 = vmul.f32 1.0, %v2414
        %v2416 = vrcp.pop %v2338
        %v2417 = vmul.f32 %v2338, %v2416
        %v2418 = vsub.f32 1.0, %v2417
        %v2419 = vmul.f32 %v2416, %v2418
        %v2420 = vadd.f32 %v2416, %v2419
        %vm2421 = vweird.f32 %v2338
        %vm2422 = vweird.f32 %v2416
        %vm2423 = vmor %vm2421, %vm2422
        %v2424 = vsel %vm2423, %v2416, %v2420
        %v2425 = vand.u32 2147483647, %v2338
        %vm2426 = vcmp.eq.f32.partialorder %v2425, 8.507059e+37
        %v2427 = vand.u32 %v2338, 2147483648
        %v2428 = vor.u32 1.1754944e-38, %v2427
        %v2429 = vsel %vm2426, %v2428, %v2424
        %v2430 = vmul.f32 1.0, %v2429
        %v2431 = vrcp.pop %v2339
        %v2432 = vmul.f32 %v2339, %v2431
        %v2433 = vsub.f32 1.0, %v2432
        %v2434 = vmul.f32 %v2431, %v2433
        %v2435 = vadd.f32 %v2431, %v2434
        %vm2436 = vweird.f32 %v2339
        %vm2437 = vweird.f32 %v2431
        %vm2438 = vmor %vm2436, %vm2437
        %v2439 = vsel %vm2438, %v2431, %v2435
        %v2440 = vand.u32 2147483647, %v2339
        %vm2441 = vcmp.eq.f32.partialorder %v2440, 8.507059e+37
        %v2442 = vand.u32 %v2339, 2147483648
        %v2443 = vor.u32 1.1754944e-38, %v2442
        %v2444 = vsel %vm2441, %v2443, %v2439
        %v2445 = vmul.f32 1.0, %v2444
        %v2446 = vrcp.pop %v2340
        %v2447 = vmul.f32 %v2340, %v2446
        %v2448 = vsub.f32 1.0, %v2447
        %v2449 = vmul.f32 %v2446, %v2448
        %v2450 = vadd.f32 %v2446, %v2449
        %vm2451 = vweird.f32 %v2340
        %vm2452 = vweird.f32 %v2446
        %vm2453 = vmor %vm2451, %vm2452
        %v2454 = vsel %vm2453, %v2446, %v2450
        %v2455 = vand.u32 2147483647, %v2340
        %vm2456 = vcmp.eq.f32.partialorder %v2455, 8.507059e+37
        %v2457 = vand.u32 %v2340, 2147483648
        %v2458 = vor.u32 1.1754944e-38, %v2457
        %v2459 = vsel %vm2456, %v2458, %v2454
        %v2460 = vmul.f32 1.0, %v2459
        %v2461 = vmul.f32 %v2301, %v2355
        %v2462 = vmul.f32 %v2302, %v2370
        %v2463 = vmul.f32 %v2303, %v2385
        %v2464 = vmul.f32 %v2304, %v2400
        %v2465 = vmul.f32 %v2305, %v2415
        %v2466 = vmul.f32 %v2306, %v2430
        %v2467 = vmul.f32 %v2307, %v2445
        %v2468 = vmul.f32 %v2308, %v2460
        %2469 = vst.msk [vmem:[%s1236 + $0x1] sm:$0xff] %vm669, %v2461
        %2470 = vst.msk [vmem:[%s1236 + $0x11] sm:$0xff] %vm669, %v2462
        %2471 = vst.msk [vmem:[%s1236 + $0x21] sm:$0xff] %vm669, %v2463
        %2472 = vst.msk [vmem:[%s1236 + $0x31] sm:$0xff] %vm669, %v2464
        %2473 = vst.msk [vmem:[%s1236 + $0x41] sm:$0xff] %vm669, %v2465
        %2474 = vst.msk [vmem:[%s1236 + $0x51] sm:$0xff] %vm669, %v2466
        %2475 = vst.msk [vmem:[%s1236 + $0x61] sm:$0xff] %vm669, %v2467
        %2476 = vst.msk [vmem:[%s1236 + $0x71] sm:$0xff] %vm669, %v2468
        %v2477 = vld [vmem:[#allocation2] sm:$0xff]
        %v2478 = vld [vmem:[#allocation2 + $0x10] sm:$0xff]
        %v2479 = vld [vmem:[#allocation2 + $0x20] sm:$0xff]
        %v2480 = vld [vmem:[#allocation2 + $0x30] sm:$0xff]
        %v2481 = vld [vmem:[#allocation2 + $0x40] sm:$0xff]
        %v2482 = vld [vmem:[#allocation2 + $0x50] sm:$0xff]
        %v2483 = vld [vmem:[#allocation2 + $0x60] sm:$0xff]
        %v2484 = vld [vmem:[#allocation2 + $0x70] sm:$0xff]
        %v2485 = vpack.c.bf16 %v2477, %v2477
        %v2486 = vpack.c.bf16 %v2478, %v2478
        %v2487 = vpack.c.bf16 %v2479, %v2479
        %v2488 = vpack.c.bf16 %v2480, %v2480
        %v2489 = vpack.c.bf16 %v2481, %v2481
        %v2490 = vpack.c.bf16 %v2482, %v2482
        %v2491 = vpack.c.bf16 %v2483, %v2483
        %v2492 = vpack.c.bf16 %v2484, %v2484
        %vm2493 = vcmask 257024
        %2494 = vst.msk [vmem:[#allocation3] sm:$0xf] %vm2493, %v2485
        %2495 = vst.msk [vmem:[#allocation3 + $0x14] sm:$0xf] %vm2493, %v2486
        %2496 = vst.msk [vmem:[#allocation3 + $0x28] sm:$0xf] %vm2493, %v2487
        %2497 = vst.msk [vmem:[#allocation3 + $0x3c] sm:$0xf] %vm2493, %v2488
        %2498 = vst.msk [vmem:[#allocation3 + $0x50] sm:$0xf] %vm2493, %v2489
        %2499 = vst.msk [vmem:[#allocation3 + $0x64] sm:$0xf] %vm2493, %v2490
        %2500 = vst.msk [vmem:[#allocation3 + $0x78] sm:$0xf] %vm2493, %v2491
        %2501 = vst.msk [vmem:[#allocation3 + $0x8c] sm:$0xf] %vm2493, %v2492
        %v2502 = vld [vmem:[#allocation2 + $0x1] sm:$0xff]
        %v2503 = vld [vmem:[#allocation2 + $0x11] sm:$0xff]
        %v2504 = vld [vmem:[#allocation2 + $0x21] sm:$0xff]
        %v2505 = vld [vmem:[#allocation2 + $0x31] sm:$0xff]
        %v2506 = vld [vmem:[#allocation2 + $0x41] sm:$0xff]
        %v2507 = vld [vmem:[#allocation2 + $0x51] sm:$0xff]
        %v2508 = vld [vmem:[#allocation2 + $0x61] sm:$0xff]
        %v2509 = vld [vmem:[#allocation2 + $0x71] sm:$0xff]
        %v2510 = vpack.c.bf16 %v2502, %v2502
        %v2511 = vpack.c.bf16 %v2503, %v2503
        %v2512 = vpack.c.bf16 %v2504, %v2504
        %v2513 = vpack.c.bf16 %v2505, %v2505
        %v2514 = vpack.c.bf16 %v2506, %v2506
        %v2515 = vpack.c.bf16 %v2507, %v2507
        %v2516 = vpack.c.bf16 %v2508, %v2508
        %v2517 = vpack.c.bf16 %v2509, %v2509
        %2526 = vrot.lane.b32.xlu0 %v2510, 32
        %v2527 = vpop.permute.xlu0 %2526
        %2528 = vrot.lane.b32.xlu0 %v2511, 32
        %v2529 = vpop.permute.xlu0 %2528
        %2530 = vrot.lane.b32.xlu0 %v2512, 32
        %v2531 = vpop.permute.xlu0 %2530
        %2532 = vrot.lane.b32.xlu0 %v2513, 32
        %v2533 = vpop.permute.xlu0 %2532
        %2534 = vrot.lane.b32.xlu0 %v2514, 32
        %v2535 = vpop.permute.xlu0 %2534
        %2536 = vrot.lane.b32.xlu0 %v2515, 32
        %v2537 = vpop.permute.xlu0 %2536
        %2538 = vrot.lane.b32.xlu0 %v2516, 32
        %v2539 = vpop.permute.xlu0 %2538
        %2540 = vrot.lane.b32.xlu0 %v2517, 32
        %v2541 = vpop.permute.xlu0 %2540
        %vm2550 = vcmask 519424
        %2551 = vst.msk [vmem:[#allocation3] sm:$0xf] %vm2550, %v2527
        %2552 = vst.msk [vmem:[#allocation3 + $0x14] sm:$0xf] %vm2550, %v2529
        %2553 = vst.msk [vmem:[#allocation3 + $0x28] sm:$0xf] %vm2550, %v2531
        %2554 = vst.msk [vmem:[#allocation3 + $0x3c] sm:$0xf] %vm2550, %v2533
        %2555 = vst.msk [vmem:[#allocation3 + $0x50] sm:$0xf] %vm2550, %v2535
        %2556 = vst.msk [vmem:[#allocation3 + $0x64] sm:$0xf] %vm2550, %v2537
        %2557 = vst.msk [vmem:[#allocation3 + $0x78] sm:$0xf] %vm2550, %v2539
        %2558 = vst.msk [vmem:[#allocation3 + $0x8c] sm:$0xf] %vm2550, %v2541
        %v2559 = vld [vmem:[#allocation2 + $0x2] sm:$0xff]
        %v2560 = vld [vmem:[#allocation2 + $0x12] sm:$0xff]
        %v2561 = vld [vmem:[#allocation2 + $0x22] sm:$0xff]
        %v2562 = vld [vmem:[#allocation2 + $0x32] sm:$0xff]
        %v2563 = vld [vmem:[#allocation2 + $0x42] sm:$0xff]
        %v2564 = vld [vmem:[#allocation2 + $0x52] sm:$0xff]
        %v2565 = vld [vmem:[#allocation2 + $0x62] sm:$0xff]
        %v2566 = vld [vmem:[#allocation2 + $0x72] sm:$0xff]
        %v2567 = vpack.c.bf16 %v2559, %v2559
        %v2568 = vpack.c.bf16 %v2560, %v2560
        %v2569 = vpack.c.bf16 %v2561, %v2561
        %v2570 = vpack.c.bf16 %v2562, %v2562
        %v2571 = vpack.c.bf16 %v2563, %v2563
        %v2572 = vpack.c.bf16 %v2564, %v2564
        %v2573 = vpack.c.bf16 %v2565, %v2565
        %v2574 = vpack.c.bf16 %v2566, %v2566
        %2583 = vrot.lane.b32.xlu0 %v2567, 64
        %v2584 = vpop.permute.xlu0 %2583
        %2585 = vrot.lane.b32.xlu0 %v2568, 64
        %v2586 = vpop.permute.xlu0 %2585
        %2587 = vrot.lane.b32.xlu0 %v2569, 64
        %v2588 = vpop.permute.xlu0 %2587
        %2589 = vrot.lane.b32.xlu0 %v2570, 64
        %v2590 = vpop.permute.xlu0 %2589
        %2591 = vrot.lane.b32.xlu0 %v2571, 64
        %v2592 = vpop.permute.xlu0 %2591
        %2593 = vrot.lane.b32.xlu0 %v2572, 64
        %v2594 = vpop.permute.xlu0 %2593
        %2595 = vrot.lane.b32.xlu0 %v2573, 64
        %v2596 = vpop.permute.xlu0 %2595
        %2597 = vrot.lane.b32.xlu0 %v2574, 64
        %v2598 = vpop.permute.xlu0 %2597
        %vm2607 = vcmask 781824
        %2608 = vst.msk [vmem:[#allocation3] sm:$0xf] %vm2607, %v2584
        %2609 = vst.msk [vmem:[#allocation3 + $0x14] sm:$0xf] %vm2607, %v2586
        %2610 = vst.msk [vmem:[#allocation3 + $0x28] sm:$0xf] %vm2607, %v2588
        %2611 = vst.msk [vmem:[#allocation3 + $0x3c] sm:$0xf] %vm2607, %v2590
        %2612 = vst.msk [vmem:[#allocation3 + $0x50] sm:$0xf] %vm2607, %v2592
        %2613 = vst.msk [vmem:[#allocation3 + $0x64] sm:$0xf] %vm2607, %v2594
        %2614 = vst.msk [vmem:[#allocation3 + $0x78] sm:$0xf] %vm2607, %v2596
        %2615 = vst.msk [vmem:[#allocation3 + $0x8c] sm:$0xf] %vm2607, %v2598
        %v2616 = vld [vmem:[%s1236] sm:$0xff]
        %v2617 = vld [vmem:[%s1236 + $0x10] sm:$0xff]
        %v2618 = vld [vmem:[%s1236 + $0x20] sm:$0xff]
        %v2619 = vld [vmem:[%s1236 + $0x30] sm:$0xff]
        %v2620 = vld [vmem:[%s1236 + $0x40] sm:$0xff]
        %v2621 = vld [vmem:[%s1236 + $0x50] sm:$0xff]
        %v2622 = vld [vmem:[%s1236 + $0x60] sm:$0xff]
        %v2623 = vld [vmem:[%s1236 + $0x70] sm:$0xff]
        %v2624 = vpack.c.bf16 %v2616, %v2616
        %v2625 = vpack.c.bf16 %v2617, %v2617
        %v2626 = vpack.c.bf16 %v2618, %v2618
        %v2627 = vpack.c.bf16 %v2619, %v2619
        %v2628 = vpack.c.bf16 %v2620, %v2620
        %v2629 = vpack.c.bf16 %v2621, %v2621
        %v2630 = vpack.c.bf16 %v2622, %v2622
        %v2631 = vpack.c.bf16 %v2623, %v2623
        %2640 = vrot.lane.b32.xlu0 %v2624, 96
        %v2641 = vpop.permute.xlu0 %2640
        %2642 = vrot.lane.b32.xlu0 %v2625, 96
        %v2643 = vpop.permute.xlu0 %2642
        %2644 = vrot.lane.b32.xlu0 %v2626, 96
        %v2645 = vpop.permute.xlu0 %2644
        %2646 = vrot.lane.b32.xlu0 %v2627, 96
        %v2647 = vpop.permute.xlu0 %2646
        %2648 = vrot.lane.b32.xlu0 %v2628, 96
        %v2649 = vpop.permute.xlu0 %2648
        %2650 = vrot.lane.b32.xlu0 %v2629, 96
        %v2651 = vpop.permute.xlu0 %2650
        %2652 = vrot.lane.b32.xlu0 %v2630, 96
        %v2653 = vpop.permute.xlu0 %2652
        %2654 = vrot.lane.b32.xlu0 %v2631, 96
        %v2655 = vpop.permute.xlu0 %2654
        %vm2664 = vcmask 1044224
        %2665 = vst.msk [vmem:[#allocation3] sm:$0xf] %vm2664, %v2641
        %2666 = vst.msk [vmem:[#allocation3 + $0x14] sm:$0xf] %vm2664, %v2643
        %2667 = vst.msk [vmem:[#allocation3 + $0x28] sm:$0xf] %vm2664, %v2645
        %2668 = vst.msk [vmem:[#allocation3 + $0x3c] sm:$0xf] %vm2664, %v2647
        %2669 = vst.msk [vmem:[#allocation3 + $0x50] sm:$0xf] %vm2664, %v2649
        %2670 = vst.msk [vmem:[#allocation3 + $0x64] sm:$0xf] %vm2664, %v2651
        %2671 = vst.msk [vmem:[#allocation3 + $0x78] sm:$0xf] %vm2664, %v2653
        %2672 = vst.msk [vmem:[#allocation3 + $0x8c] sm:$0xf] %vm2664, %v2655
        %v2673 = vld [vmem:[%s1236 + $0x1] sm:$0xff]
        %v2674 = vld [vmem:[%s1236 + $0x11] sm:$0xff]
        %v2675 = vld [vmem:[%s1236 + $0x21] sm:$0xff]
        %v2676 = vld [vmem:[%s1236 + $0x31] sm:$0xff]
        %v2677 = vld [vmem:[%s1236 + $0x41] sm:$0xff]
        %v2678 = vld [vmem:[%s1236 + $0x51] sm:$0xff]
        %v2679 = vld [vmem:[%s1236 + $0x61] sm:$0xff]
        %v2680 = vld [vmem:[%s1236 + $0x71] sm:$0xff]
        %v2681 = vpack.c.bf16 %v2673, %v2673
        %v2682 = vpack.c.bf16 %v2674, %v2674
        %v2683 = vpack.c.bf16 %v2675, %v2675
        %v2684 = vpack.c.bf16 %v2676, %v2676
        %v2685 = vpack.c.bf16 %v2677, %v2677
        %v2686 = vpack.c.bf16 %v2678, %v2678
        %v2687 = vpack.c.bf16 %v2679, %v2679
        %v2688 = vpack.c.bf16 %v2680, %v2680
        %2689 = vst.msk [vmem:[#allocation3 + $0x4] sm:$0xf] %vm2493, %v2681
        %2690 = vst.msk [vmem:[#allocation3 + $0x18] sm:$0xf] %vm2493, %v2682
        %2691 = vst.msk [vmem:[#allocation3 + $0x2c] sm:$0xf] %vm2493, %v2683
        %2692 = vst.msk [vmem:[#allocation3 + $0x40] sm:$0xf] %vm2493, %v2684
        %2693 = vst.msk [vmem:[#allocation3 + $0x54] sm:$0xf] %vm2493, %v2685
        %2694 = vst.msk [vmem:[#allocation3 + $0x68] sm:$0xf] %vm2493, %v2686
        %2695 = vst.msk [vmem:[#allocation3 + $0x7c] sm:$0xf] %vm2493, %v2687
        %2696 = vst.msk [vmem:[#allocation3 + $0x90] sm:$0xf] %vm2493, %v2688
        %v2697 = vld [vmem:[%s1236 + $0x2] sm:$0xff]
        %v2698 = vld [vmem:[%s1236 + $0x12] sm:$0xff]
        %v2699 = vld [vmem:[%s1236 + $0x22] sm:$0xff]
        %v2700 = vld [vmem:[%s1236 + $0x32] sm:$0xff]
        %v2701 = vld [vmem:[%s1236 + $0x42] sm:$0xff]
        %v2702 = vld [vmem:[%s1236 + $0x52] sm:$0xff]
        %v2703 = vld [vmem:[%s1236 + $0x62] sm:$0xff]
        %v2704 = vld [vmem:[%s1236 + $0x72] sm:$0xff]
        %v2705 = vpack.c.bf16 %v2697, %v2697
        %v2706 = vpack.c.bf16 %v2698, %v2698
        %v2707 = vpack.c.bf16 %v2699, %v2699
        %v2708 = vpack.c.bf16 %v2700, %v2700
        %v2709 = vpack.c.bf16 %v2701, %v2701
        %v2710 = vpack.c.bf16 %v2702, %v2702
        %v2711 = vpack.c.bf16 %v2703, %v2703
        %v2712 = vpack.c.bf16 %v2704, %v2704
        %2721 = vrot.lane.b32.xlu0 %v2705, 32
        %v2722 = vpop.permute.xlu0 %2721
        %2723 = vrot.lane.b32.xlu0 %v2706, 32
        %v2724 = vpop.permute.xlu0 %2723
        %2725 = vrot.lane.b32.xlu0 %v2707, 32
        %v2726 = vpop.permute.xlu0 %2725
        %2727 = vrot.lane.b32.xlu0 %v2708, 32
        %v2728 = vpop.permute.xlu0 %2727
        %2729 = vrot.lane.b32.xlu0 %v2709, 32
        %v2730 = vpop.permute.xlu0 %2729
        %2731 = vrot.lane.b32.xlu0 %v2710, 32
        %v2732 = vpop.permute.xlu0 %2731
        %2733 = vrot.lane.b32.xlu0 %v2711, 32
        %v2734 = vpop.permute.xlu0 %2733
        %2735 = vrot.lane.b32.xlu0 %v2712, 32
        %v2736 = vpop.permute.xlu0 %2735
        %2745 = vst.msk [vmem:[#allocation3 + $0x4] sm:$0xf] %vm2550, %v2722
        %2746 = vst.msk [vmem:[#allocation3 + $0x18] sm:$0xf] %vm2550, %v2724
        %2747 = vst.msk [vmem:[#allocation3 + $0x2c] sm:$0xf] %vm2550, %v2726
        %2748 = vst.msk [vmem:[#allocation3 + $0x40] sm:$0xf] %vm2550, %v2728
        %2749 = vst.msk [vmem:[#allocation3 + $0x54] sm:$0xf] %vm2550, %v2730
        %2750 = vst.msk [vmem:[#allocation3 + $0x68] sm:$0xf] %vm2550, %v2732
        %2751 = vst.msk [vmem:[#allocation3 + $0x7c] sm:$0xf] %vm2550, %v2734
        %2752 = vst.msk [vmem:[#allocation3 + $0x90] sm:$0xf] %vm2550, %v2736
        %v2753 = vld [vmem:[%s1528] sm:$0xff]
        %v2754 = vld [vmem:[%s1528 + $0x10] sm:$0xff]
        %v2755 = vld [vmem:[%s1528 + $0x20] sm:$0xff]
        %v2756 = vld [vmem:[%s1528 + $0x30] sm:$0xff]
        %v2757 = vld [vmem:[%s1528 + $0x40] sm:$0xff]
        %v2758 = vld [vmem:[%s1528 + $0x50] sm:$0xff]
        %v2759 = vld [vmem:[%s1528 + $0x60] sm:$0xff]
        %v2760 = vld [vmem:[%s1528 + $0x70] sm:$0xff]
        %v2761 = vpack.c.bf16 %v2753, %v2753
        %v2762 = vpack.c.bf16 %v2754, %v2754
        %v2763 = vpack.c.bf16 %v2755, %v2755
        %v2764 = vpack.c.bf16 %v2756, %v2756
        %v2765 = vpack.c.bf16 %v2757, %v2757
        %v2766 = vpack.c.bf16 %v2758, %v2758
        %v2767 = vpack.c.bf16 %v2759, %v2759
        %v2768 = vpack.c.bf16 %v2760, %v2760
        %2777 = vrot.lane.b32.xlu0 %v2761, 64
        %v2778 = vpop.permute.xlu0 %2777
        %2779 = vrot.lane.b32.xlu0 %v2762, 64
        %v2780 = vpop.permute.xlu0 %2779
        %2781 = vrot.lane.b32.xlu0 %v2763, 64
        %v2782 = vpop.permute.xlu0 %2781
        %2783 = vrot.lane.b32.xlu0 %v2764, 64
        %v2784 = vpop.permute.xlu0 %2783
        %2785 = vrot.lane.b32.xlu0 %v2765, 64
        %v2786 = vpop.permute.xlu0 %2785
        %2787 = vrot.lane.b32.xlu0 %v2766, 64
        %v2788 = vpop.permute.xlu0 %2787
        %2789 = vrot.lane.b32.xlu0 %v2767, 64
        %v2790 = vpop.permute.xlu0 %2789
        %2791 = vrot.lane.b32.xlu0 %v2768, 64
        %v2792 = vpop.permute.xlu0 %2791
        %2801 = vst.msk [vmem:[#allocation3 + $0x4] sm:$0xf] %vm2607, %v2778
        %2802 = vst.msk [vmem:[#allocation3 + $0x18] sm:$0xf] %vm2607, %v2780
        %2803 = vst.msk [vmem:[#allocation3 + $0x2c] sm:$0xf] %vm2607, %v2782
        %2804 = vst.msk [vmem:[#allocation3 + $0x40] sm:$0xf] %vm2607, %v2784
        %2805 = vst.msk [vmem:[#allocation3 + $0x54] sm:$0xf] %vm2607, %v2786
        %2806 = vst.msk [vmem:[#allocation3 + $0x68] sm:$0xf] %vm2607, %v2788
        %2807 = vst.msk [vmem:[#allocation3 + $0x7c] sm:$0xf] %vm2607, %v2790
        %2808 = vst.msk [vmem:[#allocation3 + $0x90] sm:$0xf] %vm2607, %v2792
        %v2809 = vld [vmem:[%s1528 + $0x1] sm:$0xff]
        %v2810 = vld [vmem:[%s1528 + $0x11] sm:$0xff]
        %v2811 = vld [vmem:[%s1528 + $0x21] sm:$0xff]
        %v2812 = vld [vmem:[%s1528 + $0x31] sm:$0xff]
        %v2813 = vld [vmem:[%s1528 + $0x41] sm:$0xff]
        %v2814 = vld [vmem:[%s1528 + $0x51] sm:$0xff]
        %v2815 = vld [vmem:[%s1528 + $0x61] sm:$0xff]
        %v2816 = vld [vmem:[%s1528 + $0x71] sm:$0xff]
        %v2817 = vpack.c.bf16 %v2809, %v2809
        %v2818 = vpack.c.bf16 %v2810, %v2810
        %v2819 = vpack.c.bf16 %v2811, %v2811
        %v2820 = vpack.c.bf16 %v2812, %v2812
        %v2821 = vpack.c.bf16 %v2813, %v2813
        %v2822 = vpack.c.bf16 %v2814, %v2814
        %v2823 = vpack.c.bf16 %v2815, %v2815
        %v2824 = vpack.c.bf16 %v2816, %v2816
        %2833 = vrot.lane.b32.xlu0 %v2817, 96
        %v2834 = vpop.permute.xlu0 %2833
        %2835 = vrot.lane.b32.xlu0 %v2818, 96
        %v2836 = vpop.permute.xlu0 %2835
        %2837 = vrot.lane.b32.xlu0 %v2819, 96
        %v2838 = vpop.permute.xlu0 %2837
        %2839 = vrot.lane.b32.xlu0 %v2820, 96
        %v2840 = vpop.permute.xlu0 %2839
        %2841 = vrot.lane.b32.xlu0 %v2821, 96
        %v2842 = vpop.permute.xlu0 %2841
        %2843 = vrot.lane.b32.xlu0 %v2822, 96
        %v2844 = vpop.permute.xlu0 %2843
        %2845 = vrot.lane.b32.xlu0 %v2823, 96
        %v2846 = vpop.permute.xlu0 %2845
        %2847 = vrot.lane.b32.xlu0 %v2824, 96
        %v2848 = vpop.permute.xlu0 %2847
        %2857 = vst.msk [vmem:[#allocation3 + $0x4] sm:$0xf] %vm2664, %v2834
        %2858 = vst.msk [vmem:[#allocation3 + $0x18] sm:$0xf] %vm2664, %v2836
        %2859 = vst.msk [vmem:[#allocation3 + $0x2c] sm:$0xf] %vm2664, %v2838
        %2860 = vst.msk [vmem:[#allocation3 + $0x40] sm:$0xf] %vm2664, %v2840
        %2861 = vst.msk [vmem:[#allocation3 + $0x54] sm:$0xf] %vm2664, %v2842
        %2862 = vst.msk [vmem:[#allocation3 + $0x68] sm:$0xf] %vm2664, %v2844
        %2863 = vst.msk [vmem:[#allocation3 + $0x7c] sm:$0xf] %vm2664, %v2846
        %2864 = vst.msk [vmem:[#allocation3 + $0x90] sm:$0xf] %vm2664, %v2848
        %v2865 = vld [vmem:[%s1528 + $0x2] sm:$0xff]
        %v2866 = vld [vmem:[%s1528 + $0x12] sm:$0xff]
        %v2867 = vld [vmem:[%s1528 + $0x22] sm:$0xff]
        %v2868 = vld [vmem:[%s1528 + $0x32] sm:$0xff]
        %v2869 = vld [vmem:[%s1528 + $0x42] sm:$0xff]
        %v2870 = vld [vmem:[%s1528 + $0x52] sm:$0xff]
        %v2871 = vld [vmem:[%s1528 + $0x62] sm:$0xff]
        %v2872 = vld [vmem:[%s1528 + $0x72] sm:$0xff]
        %v2873 = vpack.c.bf16 %v2865, %v2865
        %v2874 = vpack.c.bf16 %v2866, %v2866
        %v2875 = vpack.c.bf16 %v2867, %v2867
        %v2876 = vpack.c.bf16 %v2868, %v2868
        %v2877 = vpack.c.bf16 %v2869, %v2869
        %v2878 = vpack.c.bf16 %v2870, %v2870
        %v2879 = vpack.c.bf16 %v2871, %v2871
        %v2880 = vpack.c.bf16 %v2872, %v2872
        %2881 = vst.msk [vmem:[#allocation3 + $0x8] sm:$0xf] %vm2493, %v2873
        %2882 = vst.msk [vmem:[#allocation3 + $0x1c] sm:$0xf] %vm2493, %v2874
        %2883 = vst.msk [vmem:[#allocation3 + $0x30] sm:$0xf] %vm2493, %v2875
        %2884 = vst.msk [vmem:[#allocation3 + $0x44] sm:$0xf] %vm2493, %v2876
        %2885 = vst.msk [vmem:[#allocation3 + $0x58] sm:$0xf] %vm2493, %v2877
        %2886 = vst.msk [vmem:[#allocation3 + $0x6c] sm:$0xf] %vm2493, %v2878
        %2887 = vst.msk [vmem:[#allocation3 + $0x80] sm:$0xf] %vm2493, %v2879
        %2888 = vst.msk [vmem:[#allocation3 + $0x94] sm:$0xf] %vm2493, %v2880
        %v2889 = vpack.c.bf16 %v651, %v651
        %v2890 = vpack.c.bf16 %v652, %v652
        %v2891 = vpack.c.bf16 %v653, %v653
        %v2892 = vpack.c.bf16 %v654, %v654
        %v2893 = vpack.c.bf16 %v655, %v655
        %v2894 = vpack.c.bf16 %v656, %v656
        %v2895 = vpack.c.bf16 %v657, %v657
        %v2896 = vpack.c.bf16 %v658, %v658
        %2905 = vrot.lane.b32.xlu0 %v2889, 32
        %v2906 = vpop.permute.xlu0 %2905
        %2907 = vrot.lane.b32.xlu0 %v2890, 32
        %v2908 = vpop.permute.xlu0 %2907
        %2909 = vrot.lane.b32.xlu0 %v2891, 32
        %v2910 = vpop.permute.xlu0 %2909
        %2911 = vrot.lane.b32.xlu0 %v2892, 32
        %v2912 = vpop.permute.xlu0 %2911
        %2913 = vrot.lane.b32.xlu0 %v2893, 32
        %v2914 = vpop.permute.xlu0 %2913
        %2915 = vrot.lane.b32.xlu0 %v2894, 32
        %v2916 = vpop.permute.xlu0 %2915
        %2917 = vrot.lane.b32.xlu0 %v2895, 32
        %v2918 = vpop.permute.xlu0 %2917
        %2919 = vrot.lane.b32.xlu0 %v2896, 32
        %v2920 = vpop.permute.xlu0 %2919
        %2929 = vst.msk [vmem:[#allocation3 + $0x8] sm:$0xf] %vm2550, %v2906
        %2930 = vst.msk [vmem:[#allocation3 + $0x1c] sm:$0xf] %vm2550, %v2908
        %2931 = vst.msk [vmem:[#allocation3 + $0x30] sm:$0xf] %vm2550, %v2910
        %2932 = vst.msk [vmem:[#allocation3 + $0x44] sm:$0xf] %vm2550, %v2912
        %2933 = vst.msk [vmem:[#allocation3 + $0x58] sm:$0xf] %vm2550, %v2914
        %2934 = vst.msk [vmem:[#allocation3 + $0x6c] sm:$0xf] %vm2550, %v2916
        %2935 = vst.msk [vmem:[#allocation3 + $0x80] sm:$0xf] %vm2550, %v2918
        %2936 = vst.msk [vmem:[#allocation3 + $0x94] sm:$0xf] %vm2550, %v2920
        %v2937 = vpack.c.bf16 %v659, %v659
        %v2938 = vpack.c.bf16 %v660, %v660
        %v2939 = vpack.c.bf16 %v661, %v661
        %v2940 = vpack.c.bf16 %v662, %v662
        %v2941 = vpack.c.bf16 %v663, %v663
        %v2942 = vpack.c.bf16 %v664, %v664
        %v2943 = vpack.c.bf16 %v665, %v665
        %v2944 = vpack.c.bf16 %v666, %v666
        %2953 = vrot.lane.b32.xlu0 %v2937, 64
        %v2954 = vpop.permute.xlu0 %2953
        %2955 = vrot.lane.b32.xlu0 %v2938, 64
        %v2956 = vpop.permute.xlu0 %2955
        %2957 = vrot.lane.b32.xlu0 %v2939, 64
        %v2958 = vpop.permute.xlu0 %2957
        %2959 = vrot.lane.b32.xlu0 %v2940, 64
        %v2960 = vpop.permute.xlu0 %2959
        %2961 = vrot.lane.b32.xlu0 %v2941, 64
        %v2962 = vpop.permute.xlu0 %2961
        %2963 = vrot.lane.b32.xlu0 %v2942, 64
        %v2964 = vpop.permute.xlu0 %2963
        %2965 = vrot.lane.b32.xlu0 %v2943, 64
        %v2966 = vpop.permute.xlu0 %2965
        %2967 = vrot.lane.b32.xlu0 %v2944, 64
        %v2968 = vpop.permute.xlu0 %2967
        %2977 = vst.msk [vmem:[#allocation3 + $0x8] sm:$0xf] %vm2607, %v2954
        %2978 = vst.msk [vmem:[#allocation3 + $0x1c] sm:$0xf] %vm2607, %v2956
        %2979 = vst.msk [vmem:[#allocation3 + $0x30] sm:$0xf] %vm2607, %v2958
        %2980 = vst.msk [vmem:[#allocation3 + $0x44] sm:$0xf] %vm2607, %v2960
        %2981 = vst.msk [vmem:[#allocation3 + $0x58] sm:$0xf] %vm2607, %v2962
        %2982 = vst.msk [vmem:[#allocation3 + $0x6c] sm:$0xf] %vm2607, %v2964
        %2983 = vst.msk [vmem:[#allocation3 + $0x80] sm:$0xf] %vm2607, %v2966
        %2984 = vst.msk [vmem:[#allocation3 + $0x94] sm:$0xf] %vm2607, %v2968
        %v2985 = vld [vmem:[#allocation3] sm:$0xff]
        %v2986 = vld [vmem:[#allocation3 + $0x8] sm:$0xf]
        %v2987 = vld [vmem:[#allocation3 + $0x14] sm:$0xff]
        %v2988 = vld [vmem:[#allocation3 + $0x1c] sm:$0xf]
        %v2989 = vld [vmem:[#allocation3 + $0x28] sm:$0xff]
        %v2990 = vld [vmem:[#allocation3 + $0x30] sm:$0xf]
        %v2991 = vld [vmem:[#allocation3 + $0x3c] sm:$0xff]
        %v2992 = vld [vmem:[#allocation3 + $0x44] sm:$0xf]
        %v2993 = vld [vmem:[#allocation3 + $0x50] sm:$0xff]
        %v2994 = vld [vmem:[#allocation3 + $0x58] sm:$0xf]
        %v2995 = vld [vmem:[#allocation3 + $0x64] sm:$0xff]
        %v2996 = vld [vmem:[#allocation3 + $0x6c] sm:$0xf]
        %v2997 = vld [vmem:[#allocation3 + $0x78] sm:$0xff]
        %v2998 = vld [vmem:[#allocation3 + $0x80] sm:$0xf]
        %v2999 = vld [vmem:[#allocation3 + $0x8c] sm:$0xff]
        %v3000 = vld [vmem:[#allocation3 + $0x94] sm:$0xf]
        %v3001 = vld [vmem:[%s11] sm:$0xf]
        %v3002 = vld [vmem:[%s11 + $0x4] sm:$0xf]
        %v3003 = vld [vmem:[%s11 + $0x8] sm:$0xf]
        %v3004 = vld [vmem:[%s11 + $0xc] sm:$0xf]
        %v3005 = vld [vmem:[%s11 + $0x10] sm:$0xf]
        %v3006 = vld [vmem:[%s11 + $0x14] sm:$0xf]
        %v3007 = vld [vmem:[%s11 + $0x18] sm:$0xf]
        %v3008 = vld [vmem:[%s11 + $0x1c] sm:$0xf]
        %v3009 = vld [vmem:[%s11 + $0x20] sm:$0xf]
        %v3010 = vld [vmem:[%s11 + $0x24] sm:$0xf]
        %v3011 = vld [vmem:[%s11 + $0x28] sm:$0xf]
        %v3012 = vld [vmem:[%s11 + $0x2c] sm:$0xf]
        %v3013 = vld [vmem:[%s11 + $0x30] sm:$0xf]
        %v3014 = vld [vmem:[%s11 + $0x34] sm:$0xf]
        %v3015 = vld [vmem:[%s11 + $0x38] sm:$0xf]
        %v3016 = vld [vmem:[%s11 + $0x3c] sm:$0xf]
        %v3017 = vld [vmem:[%s11 + $0x40] sm:$0xf]
        %v3018 = vld [vmem:[%s11 + $0x44] sm:$0xf]
        %v3019 = vld [vmem:[%s11 + $0x48] sm:$0xf]
        %v3020 = vld [vmem:[%s11 + $0x4c] sm:$0xf]
        %v3021 = vld [vmem:[%s11 + $0x50] sm:$0xf]
        %v3022 = vld [vmem:[%s11 + $0x54] sm:$0xf]
        %v3023 = vld [vmem:[%s11 + $0x58] sm:$0xf]
        %v3024 = vld [vmem:[%s11 + $0x5c] sm:$0xf]
        %v3025 = vld [vmem:[%s11 + $0x60] sm:$0xf]
        %v3026 = vld [vmem:[%s11 + $0x64] sm:$0xf]
        %v3027 = vld [vmem:[%s11 + $0x68] sm:$0xf]
        %v3028 = vld [vmem:[%s11 + $0x6c] sm:$0xf]
        %v3029 = vld [vmem:[%s11 + $0x70] sm:$0xf]
        %v3030 = vld [vmem:[%s11 + $0x74] sm:$0xf]
        %v3031 = vld [vmem:[%s11 + $0x78] sm:$0xf]
        %v3032 = vld [vmem:[%s11 + $0x7c] sm:$0xf]
        %v3033 = vld [vmem:[%s11 + $0x80] sm:$0xf]
        %v3034 = vld [vmem:[%s11 + $0x84] sm:$0xf]
        %v3035 = vld [vmem:[%s11 + $0x88] sm:$0xf]
        %v3036 = vld [vmem:[%s11 + $0x8c] sm:$0xf]
        %v3037 = vld [vmem:[%s11 + $0x90] sm:$0xf]
        %v3038 = vld [vmem:[%s11 + $0x94] sm:$0xf]
        %v3039 = vld [vmem:[%s11 + $0x98] sm:$0xf]
        %v3040 = vld [vmem:[%s11 + $0x9c] sm:$0xf]
        %v3041 = vld [vmem:[%s11 + $0xa0] sm:$0xf]
        %v3042 = vld [vmem:[%s11 + $0xa4] sm:$0xf]
        %v3043 = vld [vmem:[%s11 + $0xa8] sm:$0xf]
        %v3044 = vld [vmem:[%s11 + $0xac] sm:$0xf]
        %v3045 = vld [vmem:[%s12] sm:$0x1]
        %v3047 = vperm.slane %v3045, 0
        %v3065 = vunpack.c.l.b16 %v2985
        %v3066 = vunpack.c.h.b16 %v2985
        %v3067 = vunpack.c.l.b16 %v2986
        %v3068 = vunpack.c.l.b16 %v2987
        %v3069 = vunpack.c.h.b16 %v2987
        %v3070 = vunpack.c.l.b16 %v2988
        %v3071 = vunpack.c.l.b16 %v2989
        %v3072 = vunpack.c.h.b16 %v2989
        %v3073 = vunpack.c.l.b16 %v2990
        %v3074 = vunpack.c.l.b16 %v2991
        %v3075 = vunpack.c.h.b16 %v2991
        %v3076 = vunpack.c.l.b16 %v2992
        %v3077 = vunpack.c.l.b16 %v2993
        %v3078 = vunpack.c.h.b16 %v2993
        %v3079 = vunpack.c.l.b16 %v2994
        %v3080 = vunpack.c.l.b16 %v2995
        %v3081 = vunpack.c.h.b16 %v2995
        %v3082 = vunpack.c.l.b16 %v2996
        %v3083 = vunpack.c.l.b16 %v2997
        %v3084 = vunpack.c.h.b16 %v2997
        %v3085 = vunpack.c.l.b16 %v2998
        %v3086 = vunpack.c.l.b16 %v2999
        %v3087 = vunpack.c.h.b16 %v2999
        %v3088 = vunpack.c.l.b16 %v3000
        %v3089 = vpack.c.b16 %v3068, %v3065
        %v3090 = vpack.c.b16 %v3069, %v3066
        %v3091 = vpack.c.b16 %v3070, %v3067
        %v3092 = vpack.c.b16 %v3074, %v3071
        %v3093 = vpack.c.b16 %v3075, %v3072
        %v3094 = vpack.c.b16 %v3076, %v3073
        %v3095 = vpack.c.b16 %v3080, %v3077
        %v3096 = vpack.c.b16 %v3081, %v3078
        %v3097 = vpack.c.b16 %v3082, %v3079
        %v3098 = vpack.c.b16 %v3086, %v3083
        %v3099 = vpack.c.b16 %v3087, %v3084
        %v3100 = vpack.c.b16 %v3088, %v3085
        %v3153 = vunpack.c.l.b16 %v3001
        %v3154 = vunpack.c.l.b16 %v3002
        %v3155 = vunpack.c.l.b16 %v3003
        %v3156 = vunpack.c.l.b16 %v3004
        %v3157 = vunpack.c.l.b16 %v3005
        %v3158 = vunpack.c.l.b16 %v3006
        %v3159 = vunpack.c.l.b16 %v3007
        %v3160 = vunpack.c.l.b16 %v3008
        %v3161 = vunpack.c.l.b16 %v3009
        %v3162 = vunpack.c.l.b16 %v3010
        %v3163 = vunpack.c.l.b16 %v3011
        %v3164 = vunpack.c.l.b16 %v3012
        %v3165 = vunpack.c.l.b16 %v3013
        %v3166 = vunpack.c.l.b16 %v3014
        %v3167 = vunpack.c.l.b16 %v3015
        %v3168 = vunpack.c.l.b16 %v3016
        %v3169 = vunpack.c.l.b16 %v3017
        %v3170 = vunpack.c.l.b16 %v3018
        %v3171 = vunpack.c.l.b16 %v3019
        %v3172 = vunpack.c.l.b16 %v3020
        %v3173 = vunpack.c.l.b16 %v3021
        %v3174 = vunpack.c.l.b16 %v3022
        %v3175 = vunpack.c.l.b16 %v3023
        %v3176 = vunpack.c.l.b16 %v3024
        %v3177 = vunpack.c.l.b16 %v3025
        %v3178 = vunpack.c.l.b16 %v3026
        %v3179 = vunpack.c.l.b16 %v3027
        %v3180 = vunpack.c.l.b16 %v3028
        %v3181 = vunpack.c.l.b16 %v3029
        %v3182 = vunpack.c.l.b16 %v3030
        %v3183 = vunpack.c.l.b16 %v3031
        %v3184 = vunpack.c.l.b16 %v3032
        %v3185 = vunpack.c.l.b16 %v3033
        %v3186 = vunpack.c.l.b16 %v3034
        %v3187 = vunpack.c.l.b16 %v3035
        %v3188 = vunpack.c.l.b16 %v3036
        %v3189 = vunpack.c.l.b16 %v3037
        %v3190 = vunpack.c.l.b16 %v3038
        %v3191 = vunpack.c.l.b16 %v3039
        %v3192 = vunpack.c.l.b16 %v3040
        %v3193 = vunpack.c.l.b16 %v3041
        %v3194 = vunpack.c.l.b16 %v3042
        %v3195 = vunpack.c.l.b16 %v3043
        %v3196 = vunpack.c.l.b16 %v3044
        %v3197 = vpack.c.b16 %v3154, %v3153
        %v3198 = vpack.c.b16 %v3156, %v3155
        %v3199 = vpack.c.b16 %v3158, %v3157
        %v3200 = vpack.c.b16 %v3160, %v3159
        %v3201 = vpack.c.b16 %v3162, %v3161
        %v3202 = vpack.c.b16 %v3164, %v3163
        %v3203 = vpack.c.b16 %v3166, %v3165
        %v3204 = vpack.c.b16 %v3168, %v3167
        %v3205 = vpack.c.b16 %v3170, %v3169
        %v3206 = vpack.c.b16 %v3172, %v3171
        %v3207 = vpack.c.b16 %v3174, %v3173
        %v3208 = vpack.c.b16 %v3176, %v3175
        %v3209 = vpack.c.b16 %v3178, %v3177
        %v3210 = vpack.c.b16 %v3180, %v3179
        %v3211 = vpack.c.b16 %v3182, %v3181
        %v3212 = vpack.c.b16 %v3184, %v3183
        %v3213 = vpack.c.b16 %v3186, %v3185
        %v3214 = vpack.c.b16 %v3188, %v3187
        %v3215 = vpack.c.b16 %v3190, %v3189
        %v3216 = vpack.c.b16 %v3192, %v3191
        %v3217 = vpack.c.b16 %v3194, %v3193
        %v3218 = vpack.c.b16 %v3196, %v3195
        %vm3241 = vcmask 785408
        %v3243 = vsel %vm3241, %v3091, 0
        %v3246 = vsel %vm3241, %v3094, 0
        %v3249 = vsel %vm3241, %v3097, 0
        %v3252 = vsel %vm3241, %v3100, 0
        %3254 = vmatpush.bf16.msra.mxu0 %v3204
        %3255 = vmatpush.bf16.msra.mxu0 %v3203
        %3256 = vmatpush.bf16.msra.mxu0 %v3202
        %3257 = vmatpush.bf16.msra.mxu0 %v3201
        %3258 = vmatpush.bf16.msra.mxu0 %v3200
        %3259 = vmatpush.bf16.msra.mxu0 %v3199
        %3260 = vmatpush.bf16.msra.mxu0 %v3198
        %3261 = vmatpush.bf16.msra.mxu0 %v3197
        %3262 = vmatmul.bf16.gmra.mxu0 %v3089
        %v3263 = vpop.f32.mrf.mxu0
        %v3264 = vadd.f32 %v3047, %v3263
        %v3265 = vpop.f32.mrf.mxu0
        %v3266 = vadd.f32 %v3047, %v3265
        %3267 = vmatmul.bf16.gmra.mxu0 %v3092
        %v3268 = vpop.f32.mrf.mxu0
        %v3269 = vadd.f32 %v3047, %v3268
        %v3270 = vpop.f32.mrf.mxu0
        %v3271 = vadd.f32 %v3047, %v3270
        %3272 = vmatmul.bf16.gmra.mxu0 %v3095
        %v3273 = vpop.f32.mrf.mxu0
        %v3274 = vadd.f32 %v3047, %v3273
        %v3275 = vpop.f32.mrf.mxu0
        %v3276 = vadd.f32 %v3047, %v3275
        %3277 = vmatmul.bf16.gmra.mxu0 %v3098
        %v3278 = vpop.f32.mrf.mxu0
        %v3279 = vadd.f32 %v3047, %v3278
        %v3280 = vpop.f32.mrf.mxu0
        %v3281 = vadd.f32 %v3047, %v3280
        %3282 = vdwg.mxu0
        %3283 = vmatpush.bf16.msra.mxu0 %v3212
        %3284 = vmatpush.bf16.msra.mxu0 %v3211
        %3285 = vmatpush.bf16.msra.mxu0 %v3210
        %3286 = vmatpush.bf16.msra.mxu0 %v3209
        %3287 = vmatpush.bf16.msra.mxu0 %v3208
        %3288 = vmatpush.bf16.msra.mxu0 %v3207
        %3289 = vmatpush.bf16.msra.mxu0 %v3206
        %3290 = vmatpush.bf16.msra.mxu0 %v3205
        %3291 = vmatmul.bf16.gmra.mxu0 %v3090
        %v3292 = vpop.f32.mrf.mxu0
        %v3293 = vadd.f32 %v3264, %v3292
        %v3294 = vpop.f32.mrf.mxu0
        %v3295 = vadd.f32 %v3266, %v3294
        %3296 = vmatmul.bf16.gmra.mxu0 %v3093
        %v3297 = vpop.f32.mrf.mxu0
        %v3298 = vadd.f32 %v3269, %v3297
        %v3299 = vpop.f32.mrf.mxu0
        %v3300 = vadd.f32 %v3271, %v3299
        %3301 = vmatmul.bf16.gmra.mxu0 %v3096
        %v3302 = vpop.f32.mrf.mxu0
        %v3303 = vadd.f32 %v3274, %v3302
        %v3304 = vpop.f32.mrf.mxu0
        %v3305 = vadd.f32 %v3276, %v3304
        %3306 = vmatmul.bf16.gmra.mxu0 %v3099
        %v3307 = vpop.f32.mrf.mxu0
        %v3308 = vadd.f32 %v3279, %v3307
        %v3309 = vpop.f32.mrf.mxu0
        %v3310 = vadd.f32 %v3281, %v3309
        %3311 = vdwg.mxu0
        %3312 = vmatpush.bf16.msra.mxu0 0
        %3313 = vmatpush.bf16.msra.mxu0 0
        %3314 = vmatpush.bf16.msra.mxu0 %v3218
        %3315 = vmatpush.bf16.msra.mxu0 %v3217
        %3316 = vmatpush.bf16.msra.mxu0 %v3216
        %3317 = vmatpush.bf16.msra.mxu0 %v3215
        %3318 = vmatpush.bf16.msra.mxu0 %v3214
        %3319 = vmatpush.bf16.msra.mxu0 %v3213
        %3320 = vmatmul.bf16.gmra.mxu0 %v3243
        %v3321 = vpop.f32.mrf.mxu0
        %v3322 = vadd.f32 %v3293, %v3321
        %v3323 = vpop.f32.mrf.mxu0
        %v3324 = vadd.f32 %v3295, %v3323
        %3325 = vmatmul.bf16.gmra.mxu0 %v3246
        %v3326 = vpop.f32.mrf.mxu0
        %v3327 = vadd.f32 %v3298, %v3326
        %v3328 = vpop.f32.mrf.mxu0
        %v3329 = vadd.f32 %v3300, %v3328
        %3330 = vmatmul.bf16.gmra.mxu0 %v3249
        %v3331 = vpop.f32.mrf.mxu0
        %v3332 = vadd.f32 %v3303, %v3331
        %v3333 = vpop.f32.mrf.mxu0
        %v3334 = vadd.f32 %v3305, %v3333
        %3335 = vmatmul.bf16.gmra.mxu0 %v3252
        %v3336 = vpop.f32.mrf.mxu0
        %v3337 = vadd.f32 %v3308, %v3336
        %v3338 = vpop.f32.mrf.mxu0
        %v3339 = vadd.f32 %v3310, %v3338
        %3340 = vdwg.mxu0
        %3341 = vst.msk [vmem:[%s1236 + $0x1] sm:$0xff] %vm669, %v3322
        %3342 = vst.msk [vmem:[%s1236 + $0x11] sm:$0xff] %vm669, %v3324
        %3343 = vst.msk [vmem:[%s1236 + $0x21] sm:$0xff] %vm669, %v3327
        %3344 = vst.msk [vmem:[%s1236 + $0x31] sm:$0xff] %vm669, %v3329
        %3345 = vst.msk [vmem:[%s1236 + $0x41] sm:$0xff] %vm669, %v3332
        %3346 = vst.msk [vmem:[%s1236 + $0x51] sm:$0xff] %vm669, %v3334
        %3347 = vst.msk [vmem:[%s1236 + $0x61] sm:$0xff] %vm669, %v3337
        %3348 = vst.msk [vmem:[%s1236 + $0x71] sm:$0xff] %vm669, %v3339
        %v3349 = vld [vmem:[#allocation2] sm:$0xff]
        %v3350 = vld [vmem:[#allocation2 + $0x10] sm:$0xff]
        %v3351 = vld [vmem:[#allocation2 + $0x20] sm:$0xff]
        %v3352 = vld [vmem:[#allocation2 + $0x30] sm:$0xff]
        %v3353 = vld [vmem:[#allocation2 + $0x40] sm:$0xff]
        %v3354 = vld [vmem:[#allocation2 + $0x50] sm:$0xff]
        %v3355 = vld [vmem:[#allocation2 + $0x60] sm:$0xff]
        %v3356 = vld [vmem:[#allocation2 + $0x70] sm:$0xff]
        %v3357 = vpack.c.bf16 %v3349, %v3349
        %v3358 = vpack.c.bf16 %v3350, %v3350
        %v3359 = vpack.c.bf16 %v3351, %v3351
        %v3360 = vpack.c.bf16 %v3352, %v3352
        %v3361 = vpack.c.bf16 %v3353, %v3353
        %v3362 = vpack.c.bf16 %v3354, %v3354
        %v3363 = vpack.c.bf16 %v3355, %v3355
        %v3364 = vpack.c.bf16 %v3356, %v3356
        %3365 = vst.msk [vmem:[#allocation3] sm:$0xf] %vm2493, %v3357
        %3366 = vst.msk [vmem:[#allocation3 + $0x14] sm:$0xf] %vm2493, %v3358
        %3367 = vst.msk [vmem:[#allocation3 + $0x28] sm:$0xf] %vm2493, %v3359
        %3368 = vst.msk [vmem:[#allocation3 + $0x3c] sm:$0xf] %vm2493, %v3360
        %3369 = vst.msk [vmem:[#allocation3 + $0x50] sm:$0xf] %vm2493, %v3361
        %3370 = vst.msk [vmem:[#allocation3 + $0x64] sm:$0xf] %vm2493, %v3362
        %3371 = vst.msk [vmem:[#allocation3 + $0x78] sm:$0xf] %vm2493, %v3363
        %3372 = vst.msk [vmem:[#allocation3 + $0x8c] sm:$0xf] %vm2493, %v3364
        %v3373 = vld [vmem:[#allocation2 + $0x1] sm:$0xff]
        %v3374 = vld [vmem:[#allocation2 + $0x11] sm:$0xff]
        %v3375 = vld [vmem:[#allocation2 + $0x21] sm:$0xff]
        %v3376 = vld [vmem:[#allocation2 + $0x31] sm:$0xff]
        %v3377 = vld [vmem:[#allocation2 + $0x41] sm:$0xff]
        %v3378 = vld [vmem:[#allocation2 + $0x51] sm:$0xff]
        %v3379 = vld [vmem:[#allocation2 + $0x61] sm:$0xff]
        %v3380 = vld [vmem:[#allocation2 + $0x71] sm:$0xff]
        %v3381 = vpack.c.bf16 %v3373, %v3373
        %v3382 = vpack.c.bf16 %v3374, %v3374
        %v3383 = vpack.c.bf16 %v3375, %v3375
        %v3384 = vpack.c.bf16 %v3376, %v3376
        %v3385 = vpack.c.bf16 %v3377, %v3377
        %v3386 = vpack.c.bf16 %v3378, %v3378
        %v3387 = vpack.c.bf16 %v3379, %v3379
        %v3388 = vpack.c.bf16 %v3380, %v3380
        %3397 = vrot.lane.b32.xlu0 %v3381, 32
        %v3398 = vpop.permute.xlu0 %3397
        %3399 = vrot.lane.b32.xlu0 %v3382, 32
        %v3400 = vpop.permute.xlu0 %3399
        %3401 = vrot.lane.b32.xlu0 %v3383, 32
        %v3402 = vpop.permute.xlu0 %3401
        %3403 = vrot.lane.b32.xlu0 %v3384, 32
        %v3404 = vpop.permute.xlu0 %3403
        %3405 = vrot.lane.b32.xlu0 %v3385, 32
        %v3406 = vpop.permute.xlu0 %3405
        %3407 = vrot.lane.b32.xlu0 %v3386, 32
        %v3408 = vpop.permute.xlu0 %3407
        %3409 = vrot.lane.b32.xlu0 %v3387, 32
        %v3410 = vpop.permute.xlu0 %3409
        %3411 = vrot.lane.b32.xlu0 %v3388, 32
        %v3412 = vpop.permute.xlu0 %3411
        %3421 = vst.msk [vmem:[#allocation3] sm:$0xf] %vm2550, %v3398
        %3422 = vst.msk [vmem:[#allocation3 + $0x14] sm:$0xf] %vm2550, %v3400
        %3423 = vst.msk [vmem:[#allocation3 + $0x28] sm:$0xf] %vm2550, %v3402
        %3424 = vst.msk [vmem:[#allocation3 + $0x3c] sm:$0xf] %vm2550, %v3404
        %3425 = vst.msk [vmem:[#allocation3 + $0x50] sm:$0xf] %vm2550, %v3406
        %3426 = vst.msk [vmem:[#allocation3 + $0x64] sm:$0xf] %vm2550, %v3408
        %3427 = vst.msk [vmem:[#allocation3 + $0x78] sm:$0xf] %vm2550, %v3410
        %3428 = vst.msk [vmem:[#allocation3 + $0x8c] sm:$0xf] %vm2550, %v3412
        %v3429 = vld [vmem:[#allocation2 + $0x2] sm:$0xff]
        %v3430 = vld [vmem:[#allocation2 + $0x12] sm:$0xff]
        %v3431 = vld [vmem:[#allocation2 + $0x22] sm:$0xff]
        %v3432 = vld [vmem:[#allocation2 + $0x32] sm:$0xff]
        %v3433 = vld [vmem:[#allocation2 + $0x42] sm:$0xff]
        %v3434 = vld [vmem:[#allocation2 + $0x52] sm:$0xff]
        %v3435 = vld [vmem:[#allocation2 + $0x62] sm:$0xff]
        %v3436 = vld [vmem:[#allocation2 + $0x72] sm:$0xff]
        %v3437 = vpack.c.bf16 %v3429, %v3429
        %v3438 = vpack.c.bf16 %v3430, %v3430
        %v3439 = vpack.c.bf16 %v3431, %v3431
        %v3440 = vpack.c.bf16 %v3432, %v3432
        %v3441 = vpack.c.bf16 %v3433, %v3433
        %v3442 = vpack.c.bf16 %v3434, %v3434
        %v3443 = vpack.c.bf16 %v3435, %v3435
        %v3444 = vpack.c.bf16 %v3436, %v3436
        %3453 = vrot.lane.b32.xlu0 %v3437, 64
        %v3454 = vpop.permute.xlu0 %3453
        %3455 = vrot.lane.b32.xlu0 %v3438, 64
        %v3456 = vpop.permute.xlu0 %3455
        %3457 = vrot.lane.b32.xlu0 %v3439, 64
        %v3458 = vpop.permute.xlu0 %3457
        %3459 = vrot.lane.b32.xlu0 %v3440, 64
        %v3460 = vpop.permute.xlu0 %3459
        %3461 = vrot.lane.b32.xlu0 %v3441, 64
        %v3462 = vpop.permute.xlu0 %3461
        %3463 = vrot.lane.b32.xlu0 %v3442, 64
        %v3464 = vpop.permute.xlu0 %3463
        %3465 = vrot.lane.b32.xlu0 %v3443, 64
        %v3466 = vpop.permute.xlu0 %3465
        %3467 = vrot.lane.b32.xlu0 %v3444, 64
        %v3468 = vpop.permute.xlu0 %3467
        %3477 = vst.msk [vmem:[#allocation3] sm:$0xf] %vm2607, %v3454
        %3478 = vst.msk [vmem:[#allocation3 + $0x14] sm:$0xf] %vm2607, %v3456
        %3479 = vst.msk [vmem:[#allocation3 + $0x28] sm:$0xf] %vm2607, %v3458
        %3480 = vst.msk [vmem:[#allocation3 + $0x3c] sm:$0xf] %vm2607, %v3460
        %3481 = vst.msk [vmem:[#allocation3 + $0x50] sm:$0xf] %vm2607, %v3462
        %3482 = vst.msk [vmem:[#allocation3 + $0x64] sm:$0xf] %vm2607, %v3464
        %3483 = vst.msk [vmem:[#allocation3 + $0x78] sm:$0xf] %vm2607, %v3466
        %3484 = vst.msk [vmem:[#allocation3 + $0x8c] sm:$0xf] %vm2607, %v3468
        %v3485 = vld [vmem:[%s1236] sm:$0xff]
        %v3486 = vld [vmem:[%s1236 + $0x10] sm:$0xff]
        %v3487 = vld [vmem:[%s1236 + $0x20] sm:$0xff]
        %v3488 = vld [vmem:[%s1236 + $0x30] sm:$0xff]
        %v3489 = vld [vmem:[%s1236 + $0x40] sm:$0xff]
        %v3490 = vld [vmem:[%s1236 + $0x50] sm:$0xff]
        %v3491 = vld [vmem:[%s1236 + $0x60] sm:$0xff]
        %v3492 = vld [vmem:[%s1236 + $0x70] sm:$0xff]
        %v3493 = vpack.c.bf16 %v3485, %v3485
        %v3494 = vpack.c.bf16 %v3486, %v3486
        %v3495 = vpack.c.bf16 %v3487, %v3487
        %v3496 = vpack.c.bf16 %v3488, %v3488
        %v3497 = vpack.c.bf16 %v3489, %v3489
        %v3498 = vpack.c.bf16 %v3490, %v3490
        %v3499 = vpack.c.bf16 %v3491, %v3491
        %v3500 = vpack.c.bf16 %v3492, %v3492
        %3509 = vrot.lane.b32.xlu0 %v3493, 96
        %v3510 = vpop.permute.xlu0 %3509
        %3511 = vrot.lane.b32.xlu0 %v3494, 96
        %v3512 = vpop.permute.xlu0 %3511
        %3513 = vrot.lane.b32.xlu0 %v3495, 96
        %v3514 = vpop.permute.xlu0 %3513
        %3515 = vrot.lane.b32.xlu0 %v3496, 96
        %v3516 = vpop.permute.xlu0 %3515
        %3517 = vrot.lane.b32.xlu0 %v3497, 96
        %v3518 = vpop.permute.xlu0 %3517
        %3519 = vrot.lane.b32.xlu0 %v3498, 96
        %v3520 = vpop.permute.xlu0 %3519
        %3521 = vrot.lane.b32.xlu0 %v3499, 96
        %v3522 = vpop.permute.xlu0 %3521
        %3523 = vrot.lane.b32.xlu0 %v3500, 96
        %v3524 = vpop.permute.xlu0 %3523
        %3533 = vst.msk [vmem:[#allocation3] sm:$0xf] %vm2664, %v3510
        %3534 = vst.msk [vmem:[#allocation3 + $0x14] sm:$0xf] %vm2664, %v3512
        %3535 = vst.msk [vmem:[#allocation3 + $0x28] sm:$0xf] %vm2664, %v3514
        %3536 = vst.msk [vmem:[#allocation3 + $0x3c] sm:$0xf] %vm2664, %v3516
        %3537 = vst.msk [vmem:[#allocation3 + $0x50] sm:$0xf] %vm2664, %v3518
        %3538 = vst.msk [vmem:[#allocation3 + $0x64] sm:$0xf] %vm2664, %v3520
        %3539 = vst.msk [vmem:[#allocation3 + $0x78] sm:$0xf] %vm2664, %v3522
        %3540 = vst.msk [vmem:[#allocation3 + $0x8c] sm:$0xf] %vm2664, %v3524
        %v3541 = vld [vmem:[%s1236 + $0x1] sm:$0xff]
        %v3542 = vld [vmem:[%s1236 + $0x11] sm:$0xff]
        %v3543 = vld [vmem:[%s1236 + $0x21] sm:$0xff]
        %v3544 = vld [vmem:[%s1236 + $0x31] sm:$0xff]
        %v3545 = vld [vmem:[%s1236 + $0x41] sm:$0xff]
        %v3546 = vld [vmem:[%s1236 + $0x51] sm:$0xff]
        %v3547 = vld [vmem:[%s1236 + $0x61] sm:$0xff]
        %v3548 = vld [vmem:[%s1236 + $0x71] sm:$0xff]
        %v3549 = vpack.c.bf16 %v3541, %v3541
        %v3550 = vpack.c.bf16 %v3542, %v3542
        %v3551 = vpack.c.bf16 %v3543, %v3543
        %v3552 = vpack.c.bf16 %v3544, %v3544
        %v3553 = vpack.c.bf16 %v3545, %v3545
        %v3554 = vpack.c.bf16 %v3546, %v3546
        %v3555 = vpack.c.bf16 %v3547, %v3547
        %v3556 = vpack.c.bf16 %v3548, %v3548
        %3557 = vst.msk [vmem:[#allocation3 + $0x4] sm:$0xf] %vm2493, %v3549
        %3558 = vst.msk [vmem:[#allocation3 + $0x18] sm:$0xf] %vm2493, %v3550
        %3559 = vst.msk [vmem:[#allocation3 + $0x2c] sm:$0xf] %vm2493, %v3551
        %3560 = vst.msk [vmem:[#allocation3 + $0x40] sm:$0xf] %vm2493, %v3552
        %3561 = vst.msk [vmem:[#allocation3 + $0x54] sm:$0xf] %vm2493, %v3553
        %3562 = vst.msk [vmem:[#allocation3 + $0x68] sm:$0xf] %vm2493, %v3554
        %3563 = vst.msk [vmem:[#allocation3 + $0x7c] sm:$0xf] %vm2493, %v3555
        %3564 = vst.msk [vmem:[#allocation3 + $0x90] sm:$0xf] %vm2493, %v3556
        %v3565 = vld [vmem:[%s1236 + $0x2] sm:$0xff]
        %v3566 = vld [vmem:[%s1236 + $0x12] sm:$0xff]
        %v3567 = vld [vmem:[%s1236 + $0x22] sm:$0xff]
        %v3568 = vld [vmem:[%s1236 + $0x32] sm:$0xff]
        %v3569 = vld [vmem:[%s1236 + $0x42] sm:$0xff]
        %v3570 = vld [vmem:[%s1236 + $0x52] sm:$0xff]
        %v3571 = vld [vmem:[%s1236 + $0x62] sm:$0xff]
        %v3572 = vld [vmem:[%s1236 + $0x72] sm:$0xff]
        %v3573 = vpack.c.bf16 %v3565, %v3565
        %v3574 = vpack.c.bf16 %v3566, %v3566
        %v3575 = vpack.c.bf16 %v3567, %v3567
        %v3576 = vpack.c.bf16 %v3568, %v3568
        %v3577 = vpack.c.bf16 %v3569, %v3569
        %v3578 = vpack.c.bf16 %v3570, %v3570
        %v3579 = vpack.c.bf16 %v3571, %v3571
        %v3580 = vpack.c.bf16 %v3572, %v3572
        %3589 = vrot.lane.b32.xlu0 %v3573, 32
        %v3590 = vpop.permute.xlu0 %3589
        %3591 = vrot.lane.b32.xlu0 %v3574, 32
        %v3592 = vpop.permute.xlu0 %3591
        %3593 = vrot.lane.b32.xlu0 %v3575, 32
        %v3594 = vpop.permute.xlu0 %3593
        %3595 = vrot.lane.b32.xlu0 %v3576, 32
        %v3596 = vpop.permute.xlu0 %3595
        %3597 = vrot.lane.b32.xlu0 %v3577, 32
        %v3598 = vpop.permute.xlu0 %3597
        %3599 = vrot.lane.b32.xlu0 %v3578, 32
        %v3600 = vpop.permute.xlu0 %3599
        %3601 = vrot.lane.b32.xlu0 %v3579, 32
        %v3602 = vpop.permute.xlu0 %3601
        %3603 = vrot.lane.b32.xlu0 %v3580, 32
        %v3604 = vpop.permute.xlu0 %3603
        %3613 = vst.msk [vmem:[#allocation3 + $0x4] sm:$0xf] %vm2550, %v3590
        %3614 = vst.msk [vmem:[#allocation3 + $0x18] sm:$0xf] %vm2550, %v3592
        %3615 = vst.msk [vmem:[#allocation3 + $0x2c] sm:$0xf] %vm2550, %v3594
        %3616 = vst.msk [vmem:[#allocation3 + $0x40] sm:$0xf] %vm2550, %v3596
        %3617 = vst.msk [vmem:[#allocation3 + $0x54] sm:$0xf] %vm2550, %v3598
        %3618 = vst.msk [vmem:[#allocation3 + $0x68] sm:$0xf] %vm2550, %v3600
        %3619 = vst.msk [vmem:[#allocation3 + $0x7c] sm:$0xf] %vm2550, %v3602
        %3620 = vst.msk [vmem:[#allocation3 + $0x90] sm:$0xf] %vm2550, %v3604
        %v3621 = vld [vmem:[%s1528] sm:$0xff]
        %v3622 = vld [vmem:[%s1528 + $0x10] sm:$0xff]
        %v3623 = vld [vmem:[%s1528 + $0x20] sm:$0xff]
        %v3624 = vld [vmem:[%s1528 + $0x30] sm:$0xff]
        %v3625 = vld [vmem:[%s1528 + $0x40] sm:$0xff]
        %v3626 = vld [vmem:[%s1528 + $0x50] sm:$0xff]
        %v3627 = vld [vmem:[%s1528 + $0x60] sm:$0xff]
        %v3628 = vld [vmem:[%s1528 + $0x70] sm:$0xff]
        %v3629 = vpack.c.bf16 %v3621, %v3621
        %v3630 = vpack.c.bf16 %v3622, %v3622
        %v3631 = vpack.c.bf16 %v3623, %v3623
        %v3632 = vpack.c.bf16 %v3624, %v3624
        %v3633 = vpack.c.bf16 %v3625, %v3625
        %v3634 = vpack.c.bf16 %v3626, %v3626
        %v3635 = vpack.c.bf16 %v3627, %v3627
        %v3636 = vpack.c.bf16 %v3628, %v3628
        %3645 = vrot.lane.b32.xlu0 %v3629, 64
        %v3646 = vpop.permute.xlu0 %3645
        %3647 = vrot.lane.b32.xlu0 %v3630, 64
        %v3648 = vpop.permute.xlu0 %3647
        %3649 = vrot.lane.b32.xlu0 %v3631, 64
        %v3650 = vpop.permute.xlu0 %3649
        %3651 = vrot.lane.b32.xlu0 %v3632, 64
        %v3652 = vpop.permute.xlu0 %3651
        %3653 = vrot.lane.b32.xlu0 %v3633, 64
        %v3654 = vpop.permute.xlu0 %3653
        %3655 = vrot.lane.b32.xlu0 %v3634, 64
        %v3656 = vpop.permute.xlu0 %3655
        %3657 = vrot.lane.b32.xlu0 %v3635, 64
        %v3658 = vpop.permute.xlu0 %3657
        %3659 = vrot.lane.b32.xlu0 %v3636, 64
        %v3660 = vpop.permute.xlu0 %3659
        %3669 = vst.msk [vmem:[#allocation3 + $0x4] sm:$0xf] %vm2607, %v3646
        %3670 = vst.msk [vmem:[#allocation3 + $0x18] sm:$0xf] %vm2607, %v3648
        %3671 = vst.msk [vmem:[#allocation3 + $0x2c] sm:$0xf] %vm2607, %v3650
        %3672 = vst.msk [vmem:[#allocation3 + $0x40] sm:$0xf] %vm2607, %v3652
        %3673 = vst.msk [vmem:[#allocation3 + $0x54] sm:$0xf] %vm2607, %v3654
        %3674 = vst.msk [vmem:[#allocation3 + $0x68] sm:$0xf] %vm2607, %v3656
        %3675 = vst.msk [vmem:[#allocation3 + $0x7c] sm:$0xf] %vm2607, %v3658
        %3676 = vst.msk [vmem:[#allocation3 + $0x90] sm:$0xf] %vm2607, %v3660
        %v3677 = vld [vmem:[%s1528 + $0x1] sm:$0xff]
        %v3678 = vld [vmem:[%s1528 + $0x11] sm:$0xff]
        %v3679 = vld [vmem:[%s1528 + $0x21] sm:$0xff]
        %v3680 = vld [vmem:[%s1528 + $0x31] sm:$0xff]
        %v3681 = vld [vmem:[%s1528 + $0x41] sm:$0xff]
        %v3682 = vld [vmem:[%s1528 + $0x51] sm:$0xff]
        %v3683 = vld [vmem:[%s1528 + $0x61] sm:$0xff]
        %v3684 = vld [vmem:[%s1528 + $0x71] sm:$0xff]
        %v3685 = vpack.c.bf16 %v3677, %v3677
        %v3686 = vpack.c.bf16 %v3678, %v3678
        %v3687 = vpack.c.bf16 %v3679, %v3679
        %v3688 = vpack.c.bf16 %v3680, %v3680
        %v3689 = vpack.c.bf16 %v3681, %v3681
        %v3690 = vpack.c.bf16 %v3682, %v3682
        %v3691 = vpack.c.bf16 %v3683, %v3683
        %v3692 = vpack.c.bf16 %v3684, %v3684
        %3701 = vrot.lane.b32.xlu0 %v3685, 96
        %v3702 = vpop.permute.xlu0 %3701
        %3703 = vrot.lane.b32.xlu0 %v3686, 96
        %v3704 = vpop.permute.xlu0 %3703
        %3705 = vrot.lane.b32.xlu0 %v3687, 96
        %v3706 = vpop.permute.xlu0 %3705
        %3707 = vrot.lane.b32.xlu0 %v3688, 96
        %v3708 = vpop.permute.xlu0 %3707
        %3709 = vrot.lane.b32.xlu0 %v3689, 96
        %v3710 = vpop.permute.xlu0 %3709
        %3711 = vrot.lane.b32.xlu0 %v3690, 96
        %v3712 = vpop.permute.xlu0 %3711
        %3713 = vrot.lane.b32.xlu0 %v3691, 96
        %v3714 = vpop.permute.xlu0 %3713
        %3715 = vrot.lane.b32.xlu0 %v3692, 96
        %v3716 = vpop.permute.xlu0 %3715
        %3725 = vst.msk [vmem:[#allocation3 + $0x4] sm:$0xf] %vm2664, %v3702
        %3726 = vst.msk [vmem:[#allocation3 + $0x18] sm:$0xf] %vm2664, %v3704
        %3727 = vst.msk [vmem:[#allocation3 + $0x2c] sm:$0xf] %vm2664, %v3706
        %3728 = vst.msk [vmem:[#allocation3 + $0x40] sm:$0xf] %vm2664, %v3708
        %3729 = vst.msk [vmem:[#allocation3 + $0x54] sm:$0xf] %vm2664, %v3710
        %3730 = vst.msk [vmem:[#allocation3 + $0x68] sm:$0xf] %vm2664, %v3712
        %3731 = vst.msk [vmem:[#allocation3 + $0x7c] sm:$0xf] %vm2664, %v3714
        %3732 = vst.msk [vmem:[#allocation3 + $0x90] sm:$0xf] %vm2664, %v3716
        %v3733 = vld [vmem:[%s1528 + $0x2] sm:$0xff]
        %v3734 = vld [vmem:[%s1528 + $0x12] sm:$0xff]
        %v3735 = vld [vmem:[%s1528 + $0x22] sm:$0xff]
        %v3736 = vld [vmem:[%s1528 + $0x32] sm:$0xff]
        %v3737 = vld [vmem:[%s1528 + $0x42] sm:$0xff]
        %v3738 = vld [vmem:[%s1528 + $0x52] sm:$0xff]
        %v3739 = vld [vmem:[%s1528 + $0x62] sm:$0xff]
        %v3740 = vld [vmem:[%s1528 + $0x72] sm:$0xff]
        %v3741 = vpack.c.bf16 %v3733, %v3733
        %v3742 = vpack.c.bf16 %v3734, %v3734
        %v3743 = vpack.c.bf16 %v3735, %v3735
        %v3744 = vpack.c.bf16 %v3736, %v3736
        %v3745 = vpack.c.bf16 %v3737, %v3737
        %v3746 = vpack.c.bf16 %v3738, %v3738
        %v3747 = vpack.c.bf16 %v3739, %v3739
        %v3748 = vpack.c.bf16 %v3740, %v3740
        %3749 = vst.msk [vmem:[#allocation3 + $0x8] sm:$0xf] %vm2493, %v3741
        %3750 = vst.msk [vmem:[#allocation3 + $0x1c] sm:$0xf] %vm2493, %v3742
        %3751 = vst.msk [vmem:[#allocation3 + $0x30] sm:$0xf] %vm2493, %v3743
        %3752 = vst.msk [vmem:[#allocation3 + $0x44] sm:$0xf] %vm2493, %v3744
        %3753 = vst.msk [vmem:[#allocation3 + $0x58] sm:$0xf] %vm2493, %v3745
        %3754 = vst.msk [vmem:[#allocation3 + $0x6c] sm:$0xf] %vm2493, %v3746
        %3755 = vst.msk [vmem:[#allocation3 + $0x80] sm:$0xf] %vm2493, %v3747
        %3756 = vst.msk [vmem:[#allocation3 + $0x94] sm:$0xf] %vm2493, %v3748
        %v3757 = vld [vmem:[#allocation3] sm:$0xff]
        %v3758 = vld [vmem:[#allocation3 + $0x8] sm:$0xf]
        %v3759 = vld [vmem:[#allocation3 + $0x14] sm:$0xff]
        %v3760 = vld [vmem:[#allocation3 + $0x1c] sm:$0xf]
        %v3761 = vld [vmem:[#allocation3 + $0x28] sm:$0xff]
        %v3762 = vld [vmem:[#allocation3 + $0x30] sm:$0xf]
        %v3763 = vld [vmem:[#allocation3 + $0x3c] sm:$0xff]
        %v3764 = vld [vmem:[#allocation3 + $0x44] sm:$0xf]
        %v3765 = vld [vmem:[#allocation3 + $0x50] sm:$0xff]
        %v3766 = vld [vmem:[#allocation3 + $0x58] sm:$0xf]
        %v3767 = vld [vmem:[#allocation3 + $0x64] sm:$0xff]
        %v3768 = vld [vmem:[#allocation3 + $0x6c] sm:$0xf]
        %v3769 = vld [vmem:[#allocation3 + $0x78] sm:$0xff]
        %v3770 = vld [vmem:[#allocation3 + $0x80] sm:$0xf]
        %v3771 = vld [vmem:[#allocation3 + $0x8c] sm:$0xff]
        %v3772 = vld [vmem:[#allocation3 + $0x94] sm:$0xf]
        %v3773 = vld [vmem:[%s13] sm:$0xf]
        %v3774 = vld [vmem:[%s13 + $0x4] sm:$0xf]
        %v3775 = vld [vmem:[%s13 + $0x8] sm:$0xf]
        %v3776 = vld [vmem:[%s13 + $0xc] sm:$0xf]
        %v3777 = vld [vmem:[%s13 + $0x10] sm:$0xf]
        %v3778 = vld [vmem:[%s13 + $0x14] sm:$0xf]
        %v3779 = vld [vmem:[%s13 + $0x18] sm:$0xf]
        %v3780 = vld [vmem:[%s13 + $0x1c] sm:$0xf]
        %v3781 = vld [vmem:[%s13 + $0x20] sm:$0xf]
        %v3782 = vld [vmem:[%s13 + $0x24] sm:$0xf]
        %v3783 = vld [vmem:[%s13 + $0x28] sm:$0xf]
        %v3784 = vld [vmem:[%s13 + $0x2c] sm:$0xf]
        %v3785 = vld [vmem:[%s13 + $0x30] sm:$0xf]
        %v3786 = vld [vmem:[%s13 + $0x34] sm:$0xf]
        %v3787 = vld [vmem:[%s13 + $0x38] sm:$0xf]
        %v3788 = vld [vmem:[%s13 + $0x3c] sm:$0xf]
        %v3789 = vld [vmem:[%s13 + $0x40] sm:$0xf]
        %v3790 = vld [vmem:[%s13 + $0x44] sm:$0xf]
        %v3791 = vld [vmem:[%s13 + $0x48] sm:$0xf]
        %v3792 = vld [vmem:[%s13 + $0x4c] sm:$0xf]
        %v3793 = vld [vmem:[%s13 + $0x50] sm:$0xf]
        %v3794 = vld [vmem:[%s13 + $0x54] sm:$0xf]
        %v3795 = vld [vmem:[%s13 + $0x58] sm:$0xf]
        %v3796 = vld [vmem:[%s13 + $0x5c] sm:$0xf]
        %v3797 = vld [vmem:[%s13 + $0x60] sm:$0xf]
        %v3798 = vld [vmem:[%s13 + $0x64] sm:$0xf]
        %v3799 = vld [vmem:[%s13 + $0x68] sm:$0xf]
        %v3800 = vld [vmem:[%s13 + $0x6c] sm:$0xf]
        %v3801 = vld [vmem:[%s13 + $0x70] sm:$0xf]
        %v3802 = vld [vmem:[%s13 + $0x74] sm:$0xf]
        %v3803 = vld [vmem:[%s13 + $0x78] sm:$0xf]
        %v3804 = vld [vmem:[%s13 + $0x7c] sm:$0xf]
        %v3805 = vld [vmem:[%s13 + $0x80] sm:$0xf]
        %v3806 = vld [vmem:[%s13 + $0x84] sm:$0xf]
        %v3807 = vld [vmem:[%s13 + $0x88] sm:$0xf]
        %v3808 = vld [vmem:[%s13 + $0x8c] sm:$0xf]
        %v3809 = vld [vmem:[%s14] sm:$0x1]
        %v3811 = vperm.slane %v3809, 0
        %v3829 = vunpack.c.l.b16 %v3757
        %v3830 = vunpack.c.h.b16 %v3757
        %v3831 = vunpack.c.l.b16 %v3758
        %v3832 = vunpack.c.l.b16 %v3759
        %v3833 = vunpack.c.h.b16 %v3759
        %v3834 = vunpack.c.l.b16 %v3760
        %v3835 = vunpack.c.l.b16 %v3761
        %v3836 = vunpack.c.h.b16 %v3761
        %v3837 = vunpack.c.l.b16 %v3762
        %v3838 = vunpack.c.l.b16 %v3763
        %v3839 = vunpack.c.h.b16 %v3763
        %v3840 = vunpack.c.l.b16 %v3764
        %v3841 = vunpack.c.l.b16 %v3765
        %v3842 = vunpack.c.h.b16 %v3765
        %v3843 = vunpack.c.l.b16 %v3766
        %v3844 = vunpack.c.l.b16 %v3767
        %v3845 = vunpack.c.h.b16 %v3767
        %v3846 = vunpack.c.l.b16 %v3768
        %v3847 = vunpack.c.l.b16 %v3769
        %v3848 = vunpack.c.h.b16 %v3769
        %v3849 = vunpack.c.l.b16 %v3770
        %v3850 = vunpack.c.l.b16 %v3771
        %v3851 = vunpack.c.h.b16 %v3771
        %v3852 = vunpack.c.l.b16 %v3772
        %v3853 = vpack.c.b16 %v3832, %v3829
        %v3854 = vpack.c.b16 %v3833, %v3830
        %v3855 = vpack.c.b16 %v3834, %v3831
        %v3856 = vpack.c.b16 %v3838, %v3835
        %v3857 = vpack.c.b16 %v3839, %v3836
        %v3858 = vpack.c.b16 %v3840, %v3837
        %v3859 = vpack.c.b16 %v3844, %v3841
        %v3860 = vpack.c.b16 %v3845, %v3842
        %v3861 = vpack.c.b16 %v3846, %v3843
        %v3862 = vpack.c.b16 %v3850, %v3847
        %v3863 = vpack.c.b16 %v3851, %v3848
        %v3864 = vpack.c.b16 %v3852, %v3849
        %v3909 = vunpack.c.l.b16 %v3773
        %v3910 = vunpack.c.l.b16 %v3774
        %v3911 = vunpack.c.l.b16 %v3775
        %v3912 = vunpack.c.l.b16 %v3776
        %v3913 = vunpack.c.l.b16 %v3777
        %v3914 = vunpack.c.l.b16 %v3778
        %v3915 = vunpack.c.l.b16 %v3779
        %v3916 = vunpack.c.l.b16 %v3780
        %v3917 = vunpack.c.l.b16 %v3781
        %v3918 = vunpack.c.l.b16 %v3782
        %v3919 = vunpack.c.l.b16 %v3783
        %v3920 = vunpack.c.l.b16 %v3784
        %v3921 = vunpack.c.l.b16 %v3785
        %v3922 = vunpack.c.l.b16 %v3786
        %v3923 = vunpack.c.l.b16 %v3787
        %v3924 = vunpack.c.l.b16 %v3788
        %v3925 = vunpack.c.l.b16 %v3789
        %v3926 = vunpack.c.l.b16 %v3790
        %v3927 = vunpack.c.l.b16 %v3791
        %v3928 = vunpack.c.l.b16 %v3792
        %v3929 = vunpack.c.l.b16 %v3793
        %v3930 = vunpack.c.l.b16 %v3794
        %v3931 = vunpack.c.l.b16 %v3795
        %v3932 = vunpack.c.l.b16 %v3796
        %v3933 = vunpack.c.l.b16 %v3797
        %v3934 = vunpack.c.l.b16 %v3798
        %v3935 = vunpack.c.l.b16 %v3799
        %v3936 = vunpack.c.l.b16 %v3800
        %v3937 = vunpack.c.l.b16 %v3801
        %v3938 = vunpack.c.l.b16 %v3802
        %v3939 = vunpack.c.l.b16 %v3803
        %v3940 = vunpack.c.l.b16 %v3804
        %v3941 = vunpack.c.l.b16 %v3805
        %v3942 = vunpack.c.l.b16 %v3806
        %v3943 = vunpack.c.l.b16 %v3807
        %v3944 = vunpack.c.l.b16 %v3808
        %v3945 = vpack.c.b16 %v3910, %v3909
        %v3946 = vpack.c.b16 %v3912, %v3911
        %v3947 = vpack.c.b16 %v3914, %v3913
        %v3948 = vpack.c.b16 %v3916, %v3915
        %v3949 = vpack.c.b16 %v3918, %v3917
        %v3950 = vpack.c.b16 %v3920, %v3919
        %v3951 = vpack.c.b16 %v3922, %v3921
        %v3952 = vpack.c.b16 %v3924, %v3923
        %v3953 = vpack.c.b16 %v3926, %v3925
        %v3954 = vpack.c.b16 %v3928, %v3927
        %v3955 = vpack.c.b16 %v3930, %v3929
        %v3956 = vpack.c.b16 %v3932, %v3931
        %v3957 = vpack.c.b16 %v3934, %v3933
        %v3958 = vpack.c.b16 %v3936, %v3935
        %v3959 = vpack.c.b16 %v3938, %v3937
        %v3960 = vpack.c.b16 %v3940, %v3939
        %v3961 = vpack.c.b16 %v3942, %v3941
        %v3962 = vpack.c.b16 %v3944, %v3943
        %v3982 = vsel %vm669, %v3855, 0
        %v3985 = vsel %vm669, %v3858, 0
        %v3988 = vsel %vm669, %v3861, 0
        %v3991 = vsel %vm669, %v3864, 0
        %3993 = vmatpush.bf16.msra.mxu0 %v3952
        %3994 = vmatpush.bf16.msra.mxu0 %v3951
        %3995 = vmatpush.bf16.msra.mxu0 %v3950
        %3996 = vmatpush.bf16.msra.mxu0 %v3949
        %3997 = vmatpush.bf16.msra.mxu0 %v3948
        %3998 = vmatpush.bf16.msra.mxu0 %v3947
        %3999 = vmatpush.bf16.msra.mxu0 %v3946
        %4000 = vmatpush.bf16.msra.mxu0 %v3945
        %4001 = vmatmul.bf16.gmra.mxu0 %v3853
        %v4002 = vpop.f32.mrf.mxu0
        %v4003 = vadd.f32 %v3811, %v4002
        %v4004 = vpop.f32.mrf.mxu0
        %v4005 = vadd.f32 %v3811, %v4004
        %4006 = vmatmul.bf16.gmra.mxu0 %v3856
        %v4007 = vpop.f32.mrf.mxu0
        %v4008 = vadd.f32 %v3811, %v4007
        %v4009 = vpop.f32.mrf.mxu0
        %v4010 = vadd.f32 %v3811, %v4009
        %4011 = vmatmul.bf16.gmra.mxu0 %v3859
        %v4012 = vpop.f32.mrf.mxu0
        %v4013 = vadd.f32 %v3811, %v4012
        %v4014 = vpop.f32.mrf.mxu0
        %v4015 = vadd.f32 %v3811, %v4014
        %4016 = vmatmul.bf16.gmra.mxu0 %v3862
        %v4017 = vpop.f32.mrf.mxu0
        %v4018 = vadd.f32 %v3811, %v4017
        %v4019 = vpop.f32.mrf.mxu0
        %v4020 = vadd.f32 %v3811, %v4019
        %4021 = vdwg.mxu0
        %4022 = vmatpush.bf16.msra.mxu0 %v3960
        %4023 = vmatpush.bf16.msra.mxu0 %v3959
        %4024 = vmatpush.bf16.msra.mxu0 %v3958
        %4025 = vmatpush.bf16.msra.mxu0 %v3957
        %4026 = vmatpush.bf16.msra.mxu0 %v3956
        %4027 = vmatpush.bf16.msra.mxu0 %v3955
        %4028 = vmatpush.bf16.msra.mxu0 %v3954
        %4029 = vmatpush.bf16.msra.mxu0 %v3953
        %4030 = vmatmul.bf16.gmra.mxu0 %v3854
        %v4031 = vpop.f32.mrf.mxu0
        %v4032 = vadd.f32 %v4003, %v4031
        %v4033 = vpop.f32.mrf.mxu0
        %v4034 = vadd.f32 %v4005, %v4033
        %4035 = vmatmul.bf16.gmra.mxu0 %v3857
        %v4036 = vpop.f32.mrf.mxu0
        %v4037 = vadd.f32 %v4008, %v4036
        %v4038 = vpop.f32.mrf.mxu0
        %v4039 = vadd.f32 %v4010, %v4038
        %4040 = vmatmul.bf16.gmra.mxu0 %v3860
        %v4041 = vpop.f32.mrf.mxu0
        %v4042 = vadd.f32 %v4013, %v4041
        %v4043 = vpop.f32.mrf.mxu0
        %v4044 = vadd.f32 %v4015, %v4043
        %4045 = vmatmul.bf16.gmra.mxu0 %v3863
        %v4046 = vpop.f32.mrf.mxu0
        %v4047 = vadd.f32 %v4018, %v4046
        %v4048 = vpop.f32.mrf.mxu0
        %v4049 = vadd.f32 %v4020, %v4048
        %4050 = vdwg.mxu0
        %4051 = vmatpush.bf16.msra.mxu0 0
        %4052 = vmatpush.bf16.msra.mxu0 0
        %4053 = vmatpush.bf16.msra.mxu0 0
        %4054 = vmatpush.bf16.msra.mxu0 0
        %4055 = vmatpush.bf16.msra.mxu0 0
        %4056 = vmatpush.bf16.msra.mxu0 0
        %4057 = vmatpush.bf16.msra.mxu0 %v3962
        %4058 = vmatpush.bf16.msra.mxu0 %v3961
        %4059 = vmatmul.bf16.gmra.mxu0 %v3982
        %v4060 = vpop.f32.mrf.mxu0
        %v4061 = vadd.f32 %v4032, %v4060
        %v4062 = vpop.f32.mrf.mxu0
        %v4063 = vadd.f32 %v4034, %v4062
        %4064 = vmatmul.bf16.gmra.mxu0 %v3985
        %v4065 = vpop.f32.mrf.mxu0
        %v4066 = vadd.f32 %v4037, %v4065
        %v4067 = vpop.f32.mrf.mxu0
        %v4068 = vadd.f32 %v4039, %v4067
        %4069 = vmatmul.bf16.gmra.mxu0 %v3988
        %v4070 = vpop.f32.mrf.mxu0
        %v4071 = vadd.f32 %v4042, %v4070
        %v4072 = vpop.f32.mrf.mxu0
        %v4073 = vadd.f32 %v4044, %v4072
        %4074 = vmatmul.bf16.gmra.mxu0 %v3991
        %v4075 = vpop.f32.mrf.mxu0
        %v4076 = vadd.f32 %v4047, %v4075
        %v4077 = vpop.f32.mrf.mxu0
        %v4078 = vadd.f32 %v4049, %v4077
        %4079 = vdwg.mxu0
        %vm4080 = vcmp.ge.f32.partialorder %v4061, 0.0
        %vm4081 = vcmp.ge.f32.partialorder %v4063, 0.0
        %vm4082 = vcmp.ge.f32.partialorder %v4066, 0.0
        %vm4083 = vcmp.ge.f32.partialorder %v4068, 0.0
        %vm4084 = vcmp.ge.f32.partialorder %v4071, 0.0
        %vm4085 = vcmp.ge.f32.partialorder %v4073, 0.0
        %vm4086 = vcmp.ge.f32.partialorder %v4076, 0.0
        %vm4087 = vcmp.ge.f32.partialorder %v4078, 0.0
        %v4088 = vmul.f32 %v4061, 0.2
        %v4089 = vmul.f32 %v4063, 0.2
        %v4090 = vmul.f32 %v4066, 0.2
        %v4091 = vmul.f32 %v4068, 0.2
        %v4092 = vmul.f32 %v4071, 0.2
        %v4093 = vmul.f32 %v4073, 0.2
        %v4094 = vmul.f32 %v4076, 0.2
        %v4095 = vmul.f32 %v4078, 0.2
        %v4096 = vsel %vm4080, %v4061, %v4088
        %v4097 = vsel %vm4081, %v4063, %v4089
        %v4098 = vsel %vm4082, %v4066, %v4090
        %v4099 = vsel %vm4083, %v4068, %v4091
        %v4100 = vsel %vm4084, %v4071, %v4092
        %v4101 = vsel %vm4085, %v4073, %v4093
        %v4102 = vsel %vm4086, %v4076, %v4094
        %v4103 = vsel %vm4087, %v4078, %v4095
        %4104 = vst.msk [vmem:[%s1236 + $0x1] sm:$0xff] %vm623, %v4096
        %4105 = vst.msk [vmem:[%s1236 + $0x11] sm:$0xff] %vm623, %v4097
        %4106 = vst.msk [vmem:[%s1236 + $0x21] sm:$0xff] %vm623, %v4098
        %4107 = vst.msk [vmem:[%s1236 + $0x31] sm:$0xff] %vm623, %v4099
        %4108 = vst.msk [vmem:[%s1236 + $0x41] sm:$0xff] %vm623, %v4100
        %4109 = vst.msk [vmem:[%s1236 + $0x51] sm:$0xff] %vm623, %v4101
        %4110 = vst.msk [vmem:[%s1236 + $0x61] sm:$0xff] %vm623, %v4102
        %4111 = vst.msk [vmem:[%s1236 + $0x71] sm:$0xff] %vm623, %v4103
        %v4112 = vld [vmem:[#allocation2] sm:$0xff]
        %v4113 = vld [vmem:[#allocation2 + $0x10] sm:$0xff]
        %v4114 = vld [vmem:[#allocation2 + $0x20] sm:$0xff]
        %v4115 = vld [vmem:[#allocation2 + $0x30] sm:$0xff]
        %v4116 = vld [vmem:[#allocation2 + $0x40] sm:$0xff]
        %v4117 = vld [vmem:[#allocation2 + $0x50] sm:$0xff]
        %v4118 = vld [vmem:[#allocation2 + $0x60] sm:$0xff]
        %v4119 = vld [vmem:[#allocation2 + $0x70] sm:$0xff]
        %v4120 = vpack.c.bf16 %v4112, %v4112
        %v4121 = vpack.c.bf16 %v4113, %v4113
        %v4122 = vpack.c.bf16 %v4114, %v4114
        %v4123 = vpack.c.bf16 %v4115, %v4115
        %v4124 = vpack.c.bf16 %v4116, %v4116
        %v4125 = vpack.c.bf16 %v4117, %v4117
        %v4126 = vpack.c.bf16 %v4118, %v4118
        %v4127 = vpack.c.bf16 %v4119, %v4119
        %4128 = vst.msk [vmem:[#allocation3] sm:$0xf] %vm2493, %v4120
        %4129 = vst.msk [vmem:[#allocation3 + $0x14] sm:$0xf] %vm2493, %v4121
        %4130 = vst.msk [vmem:[#allocation3 + $0x28] sm:$0xf] %vm2493, %v4122
        %4131 = vst.msk [vmem:[#allocation3 + $0x3c] sm:$0xf] %vm2493, %v4123
        %4132 = vst.msk [vmem:[#allocation3 + $0x50] sm:$0xf] %vm2493, %v4124
        %4133 = vst.msk [vmem:[#allocation3 + $0x64] sm:$0xf] %vm2493, %v4125
        %4134 = vst.msk [vmem:[#allocation3 + $0x78] sm:$0xf] %vm2493, %v4126
        %4135 = vst.msk [vmem:[#allocation3 + $0x8c] sm:$0xf] %vm2493, %v4127
        %v4136 = vld [vmem:[#allocation2 + $0x1] sm:$0xff]
        %v4137 = vld [vmem:[#allocation2 + $0x11] sm:$0xff]
        %v4138 = vld [vmem:[#allocation2 + $0x21] sm:$0xff]
        %v4139 = vld [vmem:[#allocation2 + $0x31] sm:$0xff]
        %v4140 = vld [vmem:[#allocation2 + $0x41] sm:$0xff]
        %v4141 = vld [vmem:[#allocation2 + $0x51] sm:$0xff]
        %v4142 = vld [vmem:[#allocation2 + $0x61] sm:$0xff]
        %v4143 = vld [vmem:[#allocation2 + $0x71] sm:$0xff]
        %v4144 = vpack.c.bf16 %v4136, %v4136
        %v4145 = vpack.c.bf16 %v4137, %v4137
        %v4146 = vpack.c.bf16 %v4138, %v4138
        %v4147 = vpack.c.bf16 %v4139, %v4139
        %v4148 = vpack.c.bf16 %v4140, %v4140
        %v4149 = vpack.c.bf16 %v4141, %v4141
        %v4150 = vpack.c.bf16 %v4142, %v4142
        %v4151 = vpack.c.bf16 %v4143, %v4143
        %4160 = vrot.lane.b32.xlu0 %v4144, 32
        %v4161 = vpop.permute.xlu0 %4160
        %4162 = vrot.lane.b32.xlu0 %v4145, 32
        %v4163 = vpop.permute.xlu0 %4162
        %4164 = vrot.lane.b32.xlu0 %v4146, 32
        %v4165 = vpop.permute.xlu0 %4164
        %4166 = vrot.lane.b32.xlu0 %v4147, 32
        %v4167 = vpop.permute.xlu0 %4166
        %4168 = vrot.lane.b32.xlu0 %v4148, 32
        %v4169 = vpop.permute.xlu0 %4168
        %4170 = vrot.lane.b32.xlu0 %v4149, 32
        %v4171 = vpop.permute.xlu0 %4170
        %4172 = vrot.lane.b32.xlu0 %v4150, 32
        %v4173 = vpop.permute.xlu0 %4172
        %4174 = vrot.lane.b32.xlu0 %v4151, 32
        %v4175 = vpop.permute.xlu0 %4174
        %4184 = vst.msk [vmem:[#allocation3] sm:$0xf] %vm2550, %v4161
        %4185 = vst.msk [vmem:[#allocation3 + $0x14] sm:$0xf] %vm2550, %v4163
        %4186 = vst.msk [vmem:[#allocation3 + $0x28] sm:$0xf] %vm2550, %v4165
        %4187 = vst.msk [vmem:[#allocation3 + $0x3c] sm:$0xf] %vm2550, %v4167
        %4188 = vst.msk [vmem:[#allocation3 + $0x50] sm:$0xf] %vm2550, %v4169
        %4189 = vst.msk [vmem:[#allocation3 + $0x64] sm:$0xf] %vm2550, %v4171
        %4190 = vst.msk [vmem:[#allocation3 + $0x78] sm:$0xf] %vm2550, %v4173
        %4191 = vst.msk [vmem:[#allocation3 + $0x8c] sm:$0xf] %vm2550, %v4175
        %v4192 = vld [vmem:[#allocation2 + $0x2] sm:$0xff]
        %v4193 = vld [vmem:[#allocation2 + $0x12] sm:$0xff]
        %v4194 = vld [vmem:[#allocation2 + $0x22] sm:$0xff]
        %v4195 = vld [vmem:[#allocation2 + $0x32] sm:$0xff]
        %v4196 = vld [vmem:[#allocation2 + $0x42] sm:$0xff]
        %v4197 = vld [vmem:[#allocation2 + $0x52] sm:$0xff]
        %v4198 = vld [vmem:[#allocation2 + $0x62] sm:$0xff]
        %v4199 = vld [vmem:[#allocation2 + $0x72] sm:$0xff]
        %v4200 = vpack.c.bf16 %v4192, %v4192
        %v4201 = vpack.c.bf16 %v4193, %v4193
        %v4202 = vpack.c.bf16 %v4194, %v4194
        %v4203 = vpack.c.bf16 %v4195, %v4195
        %v4204 = vpack.c.bf16 %v4196, %v4196
        %v4205 = vpack.c.bf16 %v4197, %v4197
        %v4206 = vpack.c.bf16 %v4198, %v4198
        %v4207 = vpack.c.bf16 %v4199, %v4199
        %4216 = vrot.lane.b32.xlu0 %v4200, 64
        %v4217 = vpop.permute.xlu0 %4216
        %4218 = vrot.lane.b32.xlu0 %v4201, 64
        %v4219 = vpop.permute.xlu0 %4218
        %4220 = vrot.lane.b32.xlu0 %v4202, 64
        %v4221 = vpop.permute.xlu0 %4220
        %4222 = vrot.lane.b32.xlu0 %v4203, 64
        %v4223 = vpop.permute.xlu0 %4222
        %4224 = vrot.lane.b32.xlu0 %v4204, 64
        %v4225 = vpop.permute.xlu0 %4224
        %4226 = vrot.lane.b32.xlu0 %v4205, 64
        %v4227 = vpop.permute.xlu0 %4226
        %4228 = vrot.lane.b32.xlu0 %v4206, 64
        %v4229 = vpop.permute.xlu0 %4228
        %4230 = vrot.lane.b32.xlu0 %v4207, 64
        %v4231 = vpop.permute.xlu0 %4230
        %4240 = vst.msk [vmem:[#allocation3] sm:$0xf] %vm2607, %v4217
        %4241 = vst.msk [vmem:[#allocation3 + $0x14] sm:$0xf] %vm2607, %v4219
        %4242 = vst.msk [vmem:[#allocation3 + $0x28] sm:$0xf] %vm2607, %v4221
        %4243 = vst.msk [vmem:[#allocation3 + $0x3c] sm:$0xf] %vm2607, %v4223
        %4244 = vst.msk [vmem:[#allocation3 + $0x50] sm:$0xf] %vm2607, %v4225
        %4245 = vst.msk [vmem:[#allocation3 + $0x64] sm:$0xf] %vm2607, %v4227
        %4246 = vst.msk [vmem:[#allocation3 + $0x78] sm:$0xf] %vm2607, %v4229
        %4247 = vst.msk [vmem:[#allocation3 + $0x8c] sm:$0xf] %vm2607, %v4231
        %v4248 = vld [vmem:[%s1236] sm:$0xff]
        %v4249 = vld [vmem:[%s1236 + $0x10] sm:$0xff]
        %v4250 = vld [vmem:[%s1236 + $0x20] sm:$0xff]
        %v4251 = vld [vmem:[%s1236 + $0x30] sm:$0xff]
        %v4252 = vld [vmem:[%s1236 + $0x40] sm:$0xff]
        %v4253 = vld [vmem:[%s1236 + $0x50] sm:$0xff]
        %v4254 = vld [vmem:[%s1236 + $0x60] sm:$0xff]
        %v4255 = vld [vmem:[%s1236 + $0x70] sm:$0xff]
        %v4256 = vpack.c.bf16 %v4248, %v4248
        %v4257 = vpack.c.bf16 %v4249, %v4249
        %v4258 = vpack.c.bf16 %v4250, %v4250
        %v4259 = vpack.c.bf16 %v4251, %v4251
        %v4260 = vpack.c.bf16 %v4252, %v4252
        %v4261 = vpack.c.bf16 %v4253, %v4253
        %v4262 = vpack.c.bf16 %v4254, %v4254
        %v4263 = vpack.c.bf16 %v4255, %v4255
        %4272 = vrot.lane.b32.xlu0 %v4256, 96
        %v4273 = vpop.permute.xlu0 %4272
        %4274 = vrot.lane.b32.xlu0 %v4257, 96
        %v4275 = vpop.permute.xlu0 %4274
        %4276 = vrot.lane.b32.xlu0 %v4258, 96
        %v4277 = vpop.permute.xlu0 %4276
        %4278 = vrot.lane.b32.xlu0 %v4259, 96
        %v4279 = vpop.permute.xlu0 %4278
        %4280 = vrot.lane.b32.xlu0 %v4260, 96
        %v4281 = vpop.permute.xlu0 %4280
        %4282 = vrot.lane.b32.xlu0 %v4261, 96
        %v4283 = vpop.permute.xlu0 %4282
        %4284 = vrot.lane.b32.xlu0 %v4262, 96
        %v4285 = vpop.permute.xlu0 %4284
        %4286 = vrot.lane.b32.xlu0 %v4263, 96
        %v4287 = vpop.permute.xlu0 %4286
        %4296 = vst.msk [vmem:[#allocation3] sm:$0xf] %vm2664, %v4273
        %4297 = vst.msk [vmem:[#allocation3 + $0x14] sm:$0xf] %vm2664, %v4275
        %4298 = vst.msk [vmem:[#allocation3 + $0x28] sm:$0xf] %vm2664, %v4277
        %4299 = vst.msk [vmem:[#allocation3 + $0x3c] sm:$0xf] %vm2664, %v4279
        %4300 = vst.msk [vmem:[#allocation3 + $0x50] sm:$0xf] %vm2664, %v4281
        %4301 = vst.msk [vmem:[#allocation3 + $0x64] sm:$0xf] %vm2664, %v4283
        %4302 = vst.msk [vmem:[#allocation3 + $0x78] sm:$0xf] %vm2664, %v4285
        %4303 = vst.msk [vmem:[#allocation3 + $0x8c] sm:$0xf] %vm2664, %v4287
        %v4304 = vld [vmem:[%s1236 + $0x1] sm:$0xff]
        %v4305 = vld [vmem:[%s1236 + $0x11] sm:$0xff]
        %v4306 = vld [vmem:[%s1236 + $0x21] sm:$0xff]
        %v4307 = vld [vmem:[%s1236 + $0x31] sm:$0xff]
        %v4308 = vld [vmem:[%s1236 + $0x41] sm:$0xff]
        %v4309 = vld [vmem:[%s1236 + $0x51] sm:$0xff]
        %v4310 = vld [vmem:[%s1236 + $0x61] sm:$0xff]
        %v4311 = vld [vmem:[%s1236 + $0x71] sm:$0xff]
        %v4312 = vpack.c.bf16 %v4304, %v4304
        %v4313 = vpack.c.bf16 %v4305, %v4305
        %v4314 = vpack.c.bf16 %v4306, %v4306
        %v4315 = vpack.c.bf16 %v4307, %v4307
        %v4316 = vpack.c.bf16 %v4308, %v4308
        %v4317 = vpack.c.bf16 %v4309, %v4309
        %v4318 = vpack.c.bf16 %v4310, %v4310
        %v4319 = vpack.c.bf16 %v4311, %v4311
        %4320 = vst.msk [vmem:[#allocation3 + $0x4] sm:$0xf] %vm2493, %v4312
        %4321 = vst.msk [vmem:[#allocation3 + $0x18] sm:$0xf] %vm2493, %v4313
        %4322 = vst.msk [vmem:[#allocation3 + $0x2c] sm:$0xf] %vm2493, %v4314
        %4323 = vst.msk [vmem:[#allocation3 + $0x40] sm:$0xf] %vm2493, %v4315
        %4324 = vst.msk [vmem:[#allocation3 + $0x54] sm:$0xf] %vm2493, %v4316
        %4325 = vst.msk [vmem:[#allocation3 + $0x68] sm:$0xf] %vm2493, %v4317
        %4326 = vst.msk [vmem:[#allocation3 + $0x7c] sm:$0xf] %vm2493, %v4318
        %4327 = vst.msk [vmem:[#allocation3 + $0x90] sm:$0xf] %vm2493, %v4319
        %v4328 = vld [vmem:[%s1236 + $0x2] sm:$0xff]
        %v4329 = vld [vmem:[%s1236 + $0x12] sm:$0xff]
        %v4330 = vld [vmem:[%s1236 + $0x22] sm:$0xff]
        %v4331 = vld [vmem:[%s1236 + $0x32] sm:$0xff]
        %v4332 = vld [vmem:[%s1236 + $0x42] sm:$0xff]
        %v4333 = vld [vmem:[%s1236 + $0x52] sm:$0xff]
        %v4334 = vld [vmem:[%s1236 + $0x62] sm:$0xff]
        %v4335 = vld [vmem:[%s1236 + $0x72] sm:$0xff]
        %v4336 = vpack.c.bf16 %v4328, %v4328
        %v4337 = vpack.c.bf16 %v4329, %v4329
        %v4338 = vpack.c.bf16 %v4330, %v4330
        %v4339 = vpack.c.bf16 %v4331, %v4331
        %v4340 = vpack.c.bf16 %v4332, %v4332
        %v4341 = vpack.c.bf16 %v4333, %v4333
        %v4342 = vpack.c.bf16 %v4334, %v4334
        %v4343 = vpack.c.bf16 %v4335, %v4335
        %4352 = vrot.lane.b32.xlu0 %v4336, 32
        %v4353 = vpop.permute.xlu0 %4352
        %4354 = vrot.lane.b32.xlu0 %v4337, 32
        %v4355 = vpop.permute.xlu0 %4354
        %4356 = vrot.lane.b32.xlu0 %v4338, 32
        %v4357 = vpop.permute.xlu0 %4356
        %4358 = vrot.lane.b32.xlu0 %v4339, 32
        %v4359 = vpop.permute.xlu0 %4358
        %4360 = vrot.lane.b32.xlu0 %v4340, 32
        %v4361 = vpop.permute.xlu0 %4360
        %4362 = vrot.lane.b32.xlu0 %v4341, 32
        %v4363 = vpop.permute.xlu0 %4362
        %4364 = vrot.lane.b32.xlu0 %v4342, 32
        %v4365 = vpop.permute.xlu0 %4364
        %4366 = vrot.lane.b32.xlu0 %v4343, 32
        %v4367 = vpop.permute.xlu0 %4366
        %4376 = vst.msk [vmem:[#allocation3 + $0x4] sm:$0xf] %vm2550, %v4353
        %4377 = vst.msk [vmem:[#allocation3 + $0x18] sm:$0xf] %vm2550, %v4355
        %4378 = vst.msk [vmem:[#allocation3 + $0x2c] sm:$0xf] %vm2550, %v4357
        %4379 = vst.msk [vmem:[#allocation3 + $0x40] sm:$0xf] %vm2550, %v4359
        %4380 = vst.msk [vmem:[#allocation3 + $0x54] sm:$0xf] %vm2550, %v4361
        %4381 = vst.msk [vmem:[#allocation3 + $0x68] sm:$0xf] %vm2550, %v4363
        %4382 = vst.msk [vmem:[#allocation3 + $0x7c] sm:$0xf] %vm2550, %v4365
        %4383 = vst.msk [vmem:[#allocation3 + $0x90] sm:$0xf] %vm2550, %v4367
        %v4384 = vld [vmem:[%s1528] sm:$0xff]
        %v4385 = vld [vmem:[%s1528 + $0x10] sm:$0xff]
        %v4386 = vld [vmem:[%s1528 + $0x20] sm:$0xff]
        %v4387 = vld [vmem:[%s1528 + $0x30] sm:$0xff]
        %v4388 = vld [vmem:[%s1528 + $0x40] sm:$0xff]
        %v4389 = vld [vmem:[%s1528 + $0x50] sm:$0xff]
        %v4390 = vld [vmem:[%s1528 + $0x60] sm:$0xff]
        %v4391 = vld [vmem:[%s1528 + $0x70] sm:$0xff]
        %v4392 = vpack.c.bf16 %v4384, %v4384
        %v4393 = vpack.c.bf16 %v4385, %v4385
        %v4394 = vpack.c.bf16 %v4386, %v4386
        %v4395 = vpack.c.bf16 %v4387, %v4387
        %v4396 = vpack.c.bf16 %v4388, %v4388
        %v4397 = vpack.c.bf16 %v4389, %v4389
        %v4398 = vpack.c.bf16 %v4390, %v4390
        %v4399 = vpack.c.bf16 %v4391, %v4391
        %4408 = vrot.lane.b32.xlu0 %v4392, 64
        %v4409 = vpop.permute.xlu0 %4408
        %4410 = vrot.lane.b32.xlu0 %v4393, 64
        %v4411 = vpop.permute.xlu0 %4410
        %4412 = vrot.lane.b32.xlu0 %v4394, 64
        %v4413 = vpop.permute.xlu0 %4412
        %4414 = vrot.lane.b32.xlu0 %v4395, 64
        %v4415 = vpop.permute.xlu0 %4414
        %4416 = vrot.lane.b32.xlu0 %v4396, 64
        %v4417 = vpop.permute.xlu0 %4416
        %4418 = vrot.lane.b32.xlu0 %v4397, 64
        %v4419 = vpop.permute.xlu0 %4418
        %4420 = vrot.lane.b32.xlu0 %v4398, 64
        %v4421 = vpop.permute.xlu0 %4420
        %4422 = vrot.lane.b32.xlu0 %v4399, 64
        %v4423 = vpop.permute.xlu0 %4422
        %4432 = vst.msk [vmem:[#allocation3 + $0x4] sm:$0xf] %vm2607, %v4409
        %4433 = vst.msk [vmem:[#allocation3 + $0x18] sm:$0xf] %vm2607, %v4411
        %4434 = vst.msk [vmem:[#allocation3 + $0x2c] sm:$0xf] %vm2607, %v4413
        %4435 = vst.msk [vmem:[#allocation3 + $0x40] sm:$0xf] %vm2607, %v4415
        %4436 = vst.msk [vmem:[#allocation3 + $0x54] sm:$0xf] %vm2607, %v4417
        %4437 = vst.msk [vmem:[#allocation3 + $0x68] sm:$0xf] %vm2607, %v4419
        %4438 = vst.msk [vmem:[#allocation3 + $0x7c] sm:$0xf] %vm2607, %v4421
        %4439 = vst.msk [vmem:[#allocation3 + $0x90] sm:$0xf] %vm2607, %v4423
        %v4440 = vld [vmem:[%s1528 + $0x1] sm:$0xff]
        %v4441 = vld [vmem:[%s1528 + $0x11] sm:$0xff]
        %v4442 = vld [vmem:[%s1528 + $0x21] sm:$0xff]
        %v4443 = vld [vmem:[%s1528 + $0x31] sm:$0xff]
        %v4444 = vld [vmem:[%s1528 + $0x41] sm:$0xff]
        %v4445 = vld [vmem:[%s1528 + $0x51] sm:$0xff]
        %v4446 = vld [vmem:[%s1528 + $0x61] sm:$0xff]
        %v4447 = vld [vmem:[%s1528 + $0x71] sm:$0xff]
        %v4448 = vpack.c.bf16 %v4440, %v4440
        %v4449 = vpack.c.bf16 %v4441, %v4441
        %v4450 = vpack.c.bf16 %v4442, %v4442
        %v4451 = vpack.c.bf16 %v4443, %v4443
        %v4452 = vpack.c.bf16 %v4444, %v4444
        %v4453 = vpack.c.bf16 %v4445, %v4445
        %v4454 = vpack.c.bf16 %v4446, %v4446
        %v4455 = vpack.c.bf16 %v4447, %v4447
        %4464 = vrot.lane.b32.xlu0 %v4448, 96
        %v4465 = vpop.permute.xlu0 %4464
        %4466 = vrot.lane.b32.xlu0 %v4449, 96
        %v4467 = vpop.permute.xlu0 %4466
        %4468 = vrot.lane.b32.xlu0 %v4450, 96
        %v4469 = vpop.permute.xlu0 %4468
        %4470 = vrot.lane.b32.xlu0 %v4451, 96
        %v4471 = vpop.permute.xlu0 %4470
        %4472 = vrot.lane.b32.xlu0 %v4452, 96
        %v4473 = vpop.permute.xlu0 %4472
        %4474 = vrot.lane.b32.xlu0 %v4453, 96
        %v4475 = vpop.permute.xlu0 %4474
        %4476 = vrot.lane.b32.xlu0 %v4454, 96
        %v4477 = vpop.permute.xlu0 %4476
        %4478 = vrot.lane.b32.xlu0 %v4455, 96
        %v4479 = vpop.permute.xlu0 %4478
        %4488 = vst.msk [vmem:[#allocation3 + $0x4] sm:$0xf] %vm2664, %v4465
        %4489 = vst.msk [vmem:[#allocation3 + $0x18] sm:$0xf] %vm2664, %v4467
        %4490 = vst.msk [vmem:[#allocation3 + $0x2c] sm:$0xf] %vm2664, %v4469
        %4491 = vst.msk [vmem:[#allocation3 + $0x40] sm:$0xf] %vm2664, %v4471
        %4492 = vst.msk [vmem:[#allocation3 + $0x54] sm:$0xf] %vm2664, %v4473
        %4493 = vst.msk [vmem:[#allocation3 + $0x68] sm:$0xf] %vm2664, %v4475
        %4494 = vst.msk [vmem:[#allocation3 + $0x7c] sm:$0xf] %vm2664, %v4477
        %4495 = vst.msk [vmem:[#allocation3 + $0x90] sm:$0xf] %vm2664, %v4479
        %v4496 = vld [vmem:[%s1528 + $0x2] sm:$0xff]
        %v4497 = vld [vmem:[%s1528 + $0x12] sm:$0xff]
        %v4498 = vld [vmem:[%s1528 + $0x22] sm:$0xff]
        %v4499 = vld [vmem:[%s1528 + $0x32] sm:$0xff]
        %v4500 = vld [vmem:[%s1528 + $0x42] sm:$0xff]
        %v4501 = vld [vmem:[%s1528 + $0x52] sm:$0xff]
        %v4502 = vld [vmem:[%s1528 + $0x62] sm:$0xff]
        %v4503 = vld [vmem:[%s1528 + $0x72] sm:$0xff]
        %v4504 = vpack.c.bf16 %v4496, %v4496
        %v4505 = vpack.c.bf16 %v4497, %v4497
        %v4506 = vpack.c.bf16 %v4498, %v4498
        %v4507 = vpack.c.bf16 %v4499, %v4499
        %v4508 = vpack.c.bf16 %v4500, %v4500
        %v4509 = vpack.c.bf16 %v4501, %v4501
        %v4510 = vpack.c.bf16 %v4502, %v4502
        %v4511 = vpack.c.bf16 %v4503, %v4503
        %4512 = vst.msk [vmem:[#allocation3 + $0x8] sm:$0xf] %vm2493, %v4504
        %4513 = vst.msk [vmem:[#allocation3 + $0x1c] sm:$0xf] %vm2493, %v4505
        %4514 = vst.msk [vmem:[#allocation3 + $0x30] sm:$0xf] %vm2493, %v4506
        %4515 = vst.msk [vmem:[#allocation3 + $0x44] sm:$0xf] %vm2493, %v4507
        %4516 = vst.msk [vmem:[#allocation3 + $0x58] sm:$0xf] %vm2493, %v4508
        %4517 = vst.msk [vmem:[#allocation3 + $0x6c] sm:$0xf] %vm2493, %v4509
        %4518 = vst.msk [vmem:[#allocation3 + $0x80] sm:$0xf] %vm2493, %v4510
        %4519 = vst.msk [vmem:[#allocation3 + $0x94] sm:$0xf] %vm2493, %v4511
        %v4520 = vld [vmem:[#allocation3] sm:$0xff]
        %v4521 = vld [vmem:[#allocation3 + $0x8] sm:$0xf]
        %v4522 = vld [vmem:[#allocation3 + $0x14] sm:$0xff]
        %v4523 = vld [vmem:[#allocation3 + $0x1c] sm:$0xf]
        %v4524 = vld [vmem:[#allocation3 + $0x28] sm:$0xff]
        %v4525 = vld [vmem:[#allocation3 + $0x30] sm:$0xf]
        %v4526 = vld [vmem:[#allocation3 + $0x3c] sm:$0xff]
        %v4527 = vld [vmem:[#allocation3 + $0x44] sm:$0xf]
        %v4528 = vld [vmem:[#allocation3 + $0x50] sm:$0xff]
        %v4529 = vld [vmem:[#allocation3 + $0x58] sm:$0xf]
        %v4530 = vld [vmem:[#allocation3 + $0x64] sm:$0xff]
        %v4531 = vld [vmem:[#allocation3 + $0x6c] sm:$0xf]
        %v4532 = vld [vmem:[#allocation3 + $0x78] sm:$0xff]
        %v4533 = vld [vmem:[#allocation3 + $0x80] sm:$0xf]
        %v4534 = vld [vmem:[#allocation3 + $0x8c] sm:$0xff]
        %v4535 = vld [vmem:[#allocation3 + $0x94] sm:$0xf]
        %v4536 = vld [vmem:[%s15] sm:$0xf]
        %v4537 = vld [vmem:[%s15 + $0x4] sm:$0xf]
        %v4538 = vld [vmem:[%s15 + $0x8] sm:$0xf]
        %v4539 = vld [vmem:[%s15 + $0xc] sm:$0xf]
        %v4540 = vld [vmem:[%s15 + $0x10] sm:$0xf]
        %v4541 = vld [vmem:[%s15 + $0x14] sm:$0xf]
        %v4542 = vld [vmem:[%s15 + $0x18] sm:$0xf]
        %v4543 = vld [vmem:[%s15 + $0x1c] sm:$0xf]
        %v4544 = vld [vmem:[%s15 + $0x20] sm:$0xf]
        %v4545 = vld [vmem:[%s15 + $0x24] sm:$0xf]
        %v4546 = vld [vmem:[%s15 + $0x28] sm:$0xf]
        %v4547 = vld [vmem:[%s15 + $0x2c] sm:$0xf]
        %v4548 = vld [vmem:[%s15 + $0x30] sm:$0xf]
        %v4549 = vld [vmem:[%s15 + $0x34] sm:$0xf]
        %v4550 = vld [vmem:[%s15 + $0x38] sm:$0xf]
        %v4551 = vld [vmem:[%s15 + $0x3c] sm:$0xf]
        %v4552 = vld [vmem:[%s15 + $0x40] sm:$0xf]
        %v4553 = vld [vmem:[%s15 + $0x44] sm:$0xf]
        %v4554 = vld [vmem:[%s15 + $0x48] sm:$0xf]
        %v4555 = vld [vmem:[%s15 + $0x4c] sm:$0xf]
        %v4556 = vld [vmem:[%s15 + $0x50] sm:$0xf]
        %v4557 = vld [vmem:[%s15 + $0x54] sm:$0xf]
        %v4558 = vld [vmem:[%s15 + $0x58] sm:$0xf]
        %v4559 = vld [vmem:[%s15 + $0x5c] sm:$0xf]
        %v4560 = vld [vmem:[%s15 + $0x60] sm:$0xf]
        %v4561 = vld [vmem:[%s15 + $0x64] sm:$0xf]
        %v4562 = vld [vmem:[%s15 + $0x68] sm:$0xf]
        %v4563 = vld [vmem:[%s15 + $0x6c] sm:$0xf]
        %v4564 = vld [vmem:[%s15 + $0x70] sm:$0xf]
        %v4565 = vld [vmem:[%s15 + $0x74] sm:$0xf]
        %v4566 = vld [vmem:[%s15 + $0x78] sm:$0xf]
        %v4567 = vld [vmem:[%s15 + $0x7c] sm:$0xf]
        %v4568 = vld [vmem:[%s15 + $0x80] sm:$0xf]
        %v4569 = vld [vmem:[%s15 + $0x84] sm:$0xf]
        %v4570 = vld [vmem:[%s15 + $0x88] sm:$0xf]
        %v4571 = vld [vmem:[%s15 + $0x8c] sm:$0xf]
        %v4572 = vld [vmem:[%s16] sm:$0x1]
        %v4574 = vperm.slane %v4572, 0
        %v4592 = vunpack.c.l.b16 %v4520
        %v4593 = vunpack.c.h.b16 %v4520
        %v4594 = vunpack.c.l.b16 %v4521
        %v4595 = vunpack.c.l.b16 %v4522
        %v4596 = vunpack.c.h.b16 %v4522
        %v4597 = vunpack.c.l.b16 %v4523
        %v4598 = vunpack.c.l.b16 %v4524
        %v4599 = vunpack.c.h.b16 %v4524
        %v4600 = vunpack.c.l.b16 %v4525
        %v4601 = vunpack.c.l.b16 %v4526
        %v4602 = vunpack.c.h.b16 %v4526
        %v4603 = vunpack.c.l.b16 %v4527
        %v4604 = vunpack.c.l.b16 %v4528
        %v4605 = vunpack.c.h.b16 %v4528
        %v4606 = vunpack.c.l.b16 %v4529
        %v4607 = vunpack.c.l.b16 %v4530
        %v4608 = vunpack.c.h.b16 %v4530
        %v4609 = vunpack.c.l.b16 %v4531
        %v4610 = vunpack.c.l.b16 %v4532
        %v4611 = vunpack.c.h.b16 %v4532
        %v4612 = vunpack.c.l.b16 %v4533
        %v4613 = vunpack.c.l.b16 %v4534
        %v4614 = vunpack.c.h.b16 %v4534
        %v4615 = vunpack.c.l.b16 %v4535
        %v4616 = vpack.c.b16 %v4595, %v4592
        %v4617 = vpack.c.b16 %v4596, %v4593
        %v4618 = vpack.c.b16 %v4597, %v4594
        %v4619 = vpack.c.b16 %v4601, %v4598
        %v4620 = vpack.c.b16 %v4602, %v4599
        %v4621 = vpack.c.b16 %v4603, %v4600
        %v4622 = vpack.c.b16 %v4607, %v4604
        %v4623 = vpack.c.b16 %v4608, %v4605
        %v4624 = vpack.c.b16 %v4609, %v4606
        %v4625 = vpack.c.b16 %v4613, %v4610
        %v4626 = vpack.c.b16 %v4614, %v4611
        %v4627 = vpack.c.b16 %v4615, %v4612
        %v4672 = vunpack.c.l.b16 %v4536
        %v4673 = vunpack.c.l.b16 %v4537
        %v4674 = vunpack.c.l.b16 %v4538
        %v4675 = vunpack.c.l.b16 %v4539
        %v4676 = vunpack.c.l.b16 %v4540
        %v4677 = vunpack.c.l.b16 %v4541
        %v4678 = vunpack.c.l.b16 %v4542
        %v4679 = vunpack.c.l.b16 %v4543
        %v4680 = vunpack.c.l.b16 %v4544
        %v4681 = vunpack.c.l.b16 %v4545
        %v4682 = vunpack.c.l.b16 %v4546
        %v4683 = vunpack.c.l.b16 %v4547
        %v4684 = vunpack.c.l.b16 %v4548
        %v4685 = vunpack.c.l.b16 %v4549
        %v4686 = vunpack.c.l.b16 %v4550
        %v4687 = vunpack.c.l.b16 %v4551
        %v4688 = vunpack.c.l.b16 %v4552
        %v4689 = vunpack.c.l.b16 %v4553
        %v4690 = vunpack.c.l.b16 %v4554
        %v4691 = vunpack.c.l.b16 %v4555
        %v4692 = vunpack.c.l.b16 %v4556
        %v4693 = vunpack.c.l.b16 %v4557
        %v4694 = vunpack.c.l.b16 %v4558
        %v4695 = vunpack.c.l.b16 %v4559
        %v4696 = vunpack.c.l.b16 %v4560
        %v4697 = vunpack.c.l.b16 %v4561
        %v4698 = vunpack.c.l.b16 %v4562
        %v4699 = vunpack.c.l.b16 %v4563
        %v4700 = vunpack.c.l.b16 %v4564
        %v4701 = vunpack.c.l.b16 %v4565
        %v4702 = vunpack.c.l.b16 %v4566
        %v4703 = vunpack.c.l.b16 %v4567
        %v4704 = vunpack.c.l.b16 %v4568
        %v4705 = vunpack.c.l.b16 %v4569
        %v4706 = vunpack.c.l.b16 %v4570
        %v4707 = vunpack.c.l.b16 %v4571
        %v4708 = vpack.c.b16 %v4673, %v4672
        %v4709 = vpack.c.b16 %v4675, %v4674
        %v4710 = vpack.c.b16 %v4677, %v4676
        %v4711 = vpack.c.b16 %v4679, %v4678
        %v4712 = vpack.c.b16 %v4681, %v4680
        %v4713 = vpack.c.b16 %v4683, %v4682
        %v4714 = vpack.c.b16 %v4685, %v4684
        %v4715 = vpack.c.b16 %v4687, %v4686
        %v4716 = vpack.c.b16 %v4689, %v4688
        %v4717 = vpack.c.b16 %v4691, %v4690
        %v4718 = vpack.c.b16 %v4693, %v4692
        %v4719 = vpack.c.b16 %v4695, %v4694
        %v4720 = vpack.c.b16 %v4697, %v4696
        %v4721 = vpack.c.b16 %v4699, %v4698
        %v4722 = vpack.c.b16 %v4701, %v4700
        %v4723 = vpack.c.b16 %v4703, %v4702
        %v4724 = vpack.c.b16 %v4705, %v4704
        %v4725 = vpack.c.b16 %v4707, %v4706
        %v4745 = vsel %vm669, %v4618, 0
        %v4748 = vsel %vm669, %v4621, 0
        %v4751 = vsel %vm669, %v4624, 0
        %v4754 = vsel %vm669, %v4627, 0
        %4756 = vmatpush.bf16.msra.mxu0 %v4715
        %4757 = vmatpush.bf16.msra.mxu0 %v4714
        %4758 = vmatpush.bf16.msra.mxu0 %v4713
        %4759 = vmatpush.bf16.msra.mxu0 %v4712
        %4760 = vmatpush.bf16.msra.mxu0 %v4711
        %4761 = vmatpush.bf16.msra.mxu0 %v4710
        %4762 = vmatpush.bf16.msra.mxu0 %v4709
        %4763 = vmatpush.bf16.msra.mxu0 %v4708
        %4764 = vmatmul.bf16.gmra.mxu0 %v4616
        %v4765 = vpop.f32.mrf.mxu0
        %v4766 = vadd.f32 %v4574, %v4765
        %v4767 = vpop.f32.mrf.mxu0
        %v4768 = vadd.f32 %v4574, %v4767
        %4769 = vmatmul.bf16.gmra.mxu0 %v4619
        %v4770 = vpop.f32.mrf.mxu0
        %v4771 = vadd.f32 %v4574, %v4770
        %v4772 = vpop.f32.mrf.mxu0
        %v4773 = vadd.f32 %v4574, %v4772
        %4774 = vmatmul.bf16.gmra.mxu0 %v4622
        %v4775 = vpop.f32.mrf.mxu0
        %v4776 = vadd.f32 %v4574, %v4775
        %v4777 = vpop.f32.mrf.mxu0
        %v4778 = vadd.f32 %v4574, %v4777
        %4779 = vmatmul.bf16.gmra.mxu0 %v4625
        %v4780 = vpop.f32.mrf.mxu0
        %v4781 = vadd.f32 %v4574, %v4780
        %v4782 = vpop.f32.mrf.mxu0
        %v4783 = vadd.f32 %v4574, %v4782
        %4784 = vdwg.mxu0
        %4785 = vmatpush.bf16.msra.mxu0 %v4723
        %4786 = vmatpush.bf16.msra.mxu0 %v4722
        %4787 = vmatpush.bf16.msra.mxu0 %v4721
        %4788 = vmatpush.bf16.msra.mxu0 %v4720
        %4789 = vmatpush.bf16.msra.mxu0 %v4719
        %4790 = vmatpush.bf16.msra.mxu0 %v4718
        %4791 = vmatpush.bf16.msra.mxu0 %v4717
        %4792 = vmatpush.bf16.msra.mxu0 %v4716
        %4793 = vmatmul.bf16.gmra.mxu0 %v4617
        %v4794 = vpop.f32.mrf.mxu0
        %v4795 = vadd.f32 %v4766, %v4794
        %v4796 = vpop.f32.mrf.mxu0
        %v4797 = vadd.f32 %v4768, %v4796
        %4798 = vmatmul.bf16.gmra.mxu0 %v4620
        %v4799 = vpop.f32.mrf.mxu0
        %v4800 = vadd.f32 %v4771, %v4799
        %v4801 = vpop.f32.mrf.mxu0
        %v4802 = vadd.f32 %v4773, %v4801
        %4803 = vmatmul.bf16.gmra.mxu0 %v4623
        %v4804 = vpop.f32.mrf.mxu0
        %v4805 = vadd.f32 %v4776, %v4804
        %v4806 = vpop.f32.mrf.mxu0
        %v4807 = vadd.f32 %v4778, %v4806
        %4808 = vmatmul.bf16.gmra.mxu0 %v4626
        %v4809 = vpop.f32.mrf.mxu0
        %v4810 = vadd.f32 %v4781, %v4809
        %v4811 = vpop.f32.mrf.mxu0
        %v4812 = vadd.f32 %v4783, %v4811
        %4813 = vdwg.mxu0
        %4814 = vmatpush.bf16.msra.mxu0 0
        %4815 = vmatpush.bf16.msra.mxu0 0
        %4816 = vmatpush.bf16.msra.mxu0 0
        %4817 = vmatpush.bf16.msra.mxu0 0
        %4818 = vmatpush.bf16.msra.mxu0 0
        %4819 = vmatpush.bf16.msra.mxu0 0
        %4820 = vmatpush.bf16.msra.mxu0 %v4725
        %4821 = vmatpush.bf16.msra.mxu0 %v4724
        %4822 = vmatmul.bf16.gmra.mxu0 %v4745
        %v4823 = vpop.f32.mrf.mxu0
        %v4824 = vadd.f32 %v4795, %v4823
        %v4825 = vpop.f32.mrf.mxu0
        %v4826 = vadd.f32 %v4797, %v4825
        %4827 = vmatmul.bf16.gmra.mxu0 %v4748
        %v4828 = vpop.f32.mrf.mxu0
        %v4829 = vadd.f32 %v4800, %v4828
        %v4830 = vpop.f32.mrf.mxu0
        %v4831 = vadd.f32 %v4802, %v4830
        %4832 = vmatmul.bf16.gmra.mxu0 %v4751
        %v4833 = vpop.f32.mrf.mxu0
        %v4834 = vadd.f32 %v4805, %v4833
        %v4835 = vpop.f32.mrf.mxu0
        %v4836 = vadd.f32 %v4807, %v4835
        %4837 = vmatmul.bf16.gmra.mxu0 %v4754
        %v4838 = vpop.f32.mrf.mxu0
        %v4839 = vadd.f32 %v4810, %v4838
        %v4840 = vpop.f32.mrf.mxu0
        %v4841 = vadd.f32 %v4812, %v4840
        %4842 = vdwg.mxu0
        %v4843 = vld [vmem:[#allocation2] sm:$0xff]
        %v4844 = vld [vmem:[#allocation2 + $0x10] sm:$0xff]
        %v4845 = vld [vmem:[#allocation2 + $0x20] sm:$0xff]
        %v4846 = vld [vmem:[#allocation2 + $0x30] sm:$0xff]
        %v4847 = vld [vmem:[#allocation2 + $0x40] sm:$0xff]
        %v4848 = vld [vmem:[#allocation2 + $0x50] sm:$0xff]
        %v4849 = vld [vmem:[#allocation2 + $0x60] sm:$0xff]
        %v4850 = vld [vmem:[#allocation2 + $0x70] sm:$0xff]
        %v4851 = vpack.c.bf16 %v4843, %v4843
        %v4852 = vpack.c.bf16 %v4844, %v4844
        %v4853 = vpack.c.bf16 %v4845, %v4845
        %v4854 = vpack.c.bf16 %v4846, %v4846
        %v4855 = vpack.c.bf16 %v4847, %v4847
        %v4856 = vpack.c.bf16 %v4848, %v4848
        %v4857 = vpack.c.bf16 %v4849, %v4849
        %v4858 = vpack.c.bf16 %v4850, %v4850
        %4867 = vrot.lane.b32.xlu0 %v4851, 96
        %v4868 = vpop.permute.xlu0 %4867
        %4869 = vrot.lane.b32.xlu0 %v4852, 96
        %v4870 = vpop.permute.xlu0 %4869
        %4871 = vrot.lane.b32.xlu0 %v4853, 96
        %v4872 = vpop.permute.xlu0 %4871
        %4873 = vrot.lane.b32.xlu0 %v4854, 96
        %v4874 = vpop.permute.xlu0 %4873
        %4875 = vrot.lane.b32.xlu0 %v4855, 96
        %v4876 = vpop.permute.xlu0 %4875
        %4877 = vrot.lane.b32.xlu0 %v4856, 96
        %v4878 = vpop.permute.xlu0 %4877
        %4879 = vrot.lane.b32.xlu0 %v4857, 96
        %v4880 = vpop.permute.xlu0 %4879
        %4881 = vrot.lane.b32.xlu0 %v4858, 96
        %v4882 = vpop.permute.xlu0 %4881
        %4891 = vst.msk [vmem:[#allocation3] sm:$0xf] %vm2493, %v4868
        %4892 = vst.msk [vmem:[#allocation3 + $0x14] sm:$0xf] %vm2493, %v4870
        %4893 = vst.msk [vmem:[#allocation3 + $0x28] sm:$0xf] %vm2493, %v4872
        %4894 = vst.msk [vmem:[#allocation3 + $0x3c] sm:$0xf] %vm2493, %v4874
        %4895 = vst.msk [vmem:[#allocation3 + $0x50] sm:$0xf] %vm2493, %v4876
        %4896 = vst.msk [vmem:[#allocation3 + $0x64] sm:$0xf] %vm2493, %v4878
        %4897 = vst.msk [vmem:[#allocation3 + $0x78] sm:$0xf] %vm2493, %v4880
        %4898 = vst.msk [vmem:[#allocation3 + $0x8c] sm:$0xf] %vm2493, %v4882
        %v4899 = vld [vmem:[#allocation2 + $0x1] sm:$0xff]
        %v4900 = vld [vmem:[#allocation2 + $0x11] sm:$0xff]
        %v4901 = vld [vmem:[#allocation2 + $0x21] sm:$0xff]
        %v4902 = vld [vmem:[#allocation2 + $0x31] sm:$0xff]
        %v4903 = vld [vmem:[#allocation2 + $0x41] sm:$0xff]
        %v4904 = vld [vmem:[#allocation2 + $0x51] sm:$0xff]
        %v4905 = vld [vmem:[#allocation2 + $0x61] sm:$0xff]
        %v4906 = vld [vmem:[#allocation2 + $0x71] sm:$0xff]
        %v4907 = vpack.c.bf16 %v4899, %v4899
        %v4908 = vpack.c.bf16 %v4900, %v4900
        %v4909 = vpack.c.bf16 %v4901, %v4901
        %v4910 = vpack.c.bf16 %v4902, %v4902
        %v4911 = vpack.c.bf16 %v4903, %v4903
        %v4912 = vpack.c.bf16 %v4904, %v4904
        %v4913 = vpack.c.bf16 %v4905, %v4905
        %v4914 = vpack.c.bf16 %v4906, %v4906
        %4915 = vst.msk [vmem:[#allocation3] sm:$0xf] %vm2550, %v4907
        %4916 = vst.msk [vmem:[#allocation3 + $0x14] sm:$0xf] %vm2550, %v4908
        %4917 = vst.msk [vmem:[#allocation3 + $0x28] sm:$0xf] %vm2550, %v4909
        %4918 = vst.msk [vmem:[#allocation3 + $0x3c] sm:$0xf] %vm2550, %v4910
        %4919 = vst.msk [vmem:[#allocation3 + $0x50] sm:$0xf] %vm2550, %v4911
        %4920 = vst.msk [vmem:[#allocation3 + $0x64] sm:$0xf] %vm2550, %v4912
        %4921 = vst.msk [vmem:[#allocation3 + $0x78] sm:$0xf] %vm2550, %v4913
        %4922 = vst.msk [vmem:[#allocation3 + $0x8c] sm:$0xf] %vm2550, %v4914
        %v4923 = vld [vmem:[#allocation2 + $0x2] sm:$0xff]
        %v4924 = vld [vmem:[#allocation2 + $0x12] sm:$0xff]
        %v4925 = vld [vmem:[#allocation2 + $0x22] sm:$0xff]
        %v4926 = vld [vmem:[#allocation2 + $0x32] sm:$0xff]
        %v4927 = vld [vmem:[#allocation2 + $0x42] sm:$0xff]
        %v4928 = vld [vmem:[#allocation2 + $0x52] sm:$0xff]
        %v4929 = vld [vmem:[#allocation2 + $0x62] sm:$0xff]
        %v4930 = vld [vmem:[#allocation2 + $0x72] sm:$0xff]
        %v4931 = vpack.c.bf16 %v4923, %v4923
        %v4932 = vpack.c.bf16 %v4924, %v4924
        %v4933 = vpack.c.bf16 %v4925, %v4925
        %v4934 = vpack.c.bf16 %v4926, %v4926
        %v4935 = vpack.c.bf16 %v4927, %v4927
        %v4936 = vpack.c.bf16 %v4928, %v4928
        %v4937 = vpack.c.bf16 %v4929, %v4929
        %v4938 = vpack.c.bf16 %v4930, %v4930
        %4947 = vrot.lane.b32.xlu0 %v4931, 32
        %v4948 = vpop.permute.xlu0 %4947
        %4949 = vrot.lane.b32.xlu0 %v4932, 32
        %v4950 = vpop.permute.xlu0 %4949
        %4951 = vrot.lane.b32.xlu0 %v4933, 32
        %v4952 = vpop.permute.xlu0 %4951
        %4953 = vrot.lane.b32.xlu0 %v4934, 32
        %v4954 = vpop.permute.xlu0 %4953
        %4955 = vrot.lane.b32.xlu0 %v4935, 32
        %v4956 = vpop.permute.xlu0 %4955
        %4957 = vrot.lane.b32.xlu0 %v4936, 32
        %v4958 = vpop.permute.xlu0 %4957
        %4959 = vrot.lane.b32.xlu0 %v4937, 32
        %v4960 = vpop.permute.xlu0 %4959
        %4961 = vrot.lane.b32.xlu0 %v4938, 32
        %v4962 = vpop.permute.xlu0 %4961
        %4971 = vst.msk [vmem:[#allocation3] sm:$0xf] %vm2607, %v4948
        %4972 = vst.msk [vmem:[#allocation3 + $0x14] sm:$0xf] %vm2607, %v4950
        %4973 = vst.msk [vmem:[#allocation3 + $0x28] sm:$0xf] %vm2607, %v4952
        %4974 = vst.msk [vmem:[#allocation3 + $0x3c] sm:$0xf] %vm2607, %v4954
        %4975 = vst.msk [vmem:[#allocation3 + $0x50] sm:$0xf] %vm2607, %v4956
        %4976 = vst.msk [vmem:[#allocation3 + $0x64] sm:$0xf] %vm2607, %v4958
        %4977 = vst.msk [vmem:[#allocation3 + $0x78] sm:$0xf] %vm2607, %v4960
        %4978 = vst.msk [vmem:[#allocation3 + $0x8c] sm:$0xf] %vm2607, %v4962
        %v4979 = vld [vmem:[%s1236] sm:$0xff]
        %v4980 = vld [vmem:[%s1236 + $0x10] sm:$0xff]
        %v4981 = vld [vmem:[%s1236 + $0x20] sm:$0xff]
        %v4982 = vld [vmem:[%s1236 + $0x30] sm:$0xff]
        %v4983 = vld [vmem:[%s1236 + $0x40] sm:$0xff]
        %v4984 = vld [vmem:[%s1236 + $0x50] sm:$0xff]
        %v4985 = vld [vmem:[%s1236 + $0x60] sm:$0xff]
        %v4986 = vld [vmem:[%s1236 + $0x70] sm:$0xff]
        %v4987 = vpack.c.bf16 %v4979, %v4979
        %v4988 = vpack.c.bf16 %v4980, %v4980
        %v4989 = vpack.c.bf16 %v4981, %v4981
        %v4990 = vpack.c.bf16 %v4982, %v4982
        %v4991 = vpack.c.bf16 %v4983, %v4983
        %v4992 = vpack.c.bf16 %v4984, %v4984
        %v4993 = vpack.c.bf16 %v4985, %v4985
        %v4994 = vpack.c.bf16 %v4986, %v4986
        %5003 = vrot.lane.b32.xlu0 %v4987, 64
        %v5004 = vpop.permute.xlu0 %5003
        %5005 = vrot.lane.b32.xlu0 %v4988, 64
        %v5006 = vpop.permute.xlu0 %5005
        %5007 = vrot.lane.b32.xlu0 %v4989, 64
        %v5008 = vpop.permute.xlu0 %5007
        %5009 = vrot.lane.b32.xlu0 %v4990, 64
        %v5010 = vpop.permute.xlu0 %5009
        %5011 = vrot.lane.b32.xlu0 %v4991, 64
        %v5012 = vpop.permute.xlu0 %5011
        %5013 = vrot.lane.b32.xlu0 %v4992, 64
        %v5014 = vpop.permute.xlu0 %5013
        %5015 = vrot.lane.b32.xlu0 %v4993, 64
        %v5016 = vpop.permute.xlu0 %5015
        %5017 = vrot.lane.b32.xlu0 %v4994, 64
        %v5018 = vpop.permute.xlu0 %5017
        %5027 = vst.msk [vmem:[#allocation3] sm:$0xf] %vm2664, %v5004
        %5028 = vst.msk [vmem:[#allocation3 + $0x14] sm:$0xf] %vm2664, %v5006
        %5029 = vst.msk [vmem:[#allocation3 + $0x28] sm:$0xf] %vm2664, %v5008
        %5030 = vst.msk [vmem:[#allocation3 + $0x3c] sm:$0xf] %vm2664, %v5010
        %5031 = vst.msk [vmem:[#allocation3 + $0x50] sm:$0xf] %vm2664, %v5012
        %5032 = vst.msk [vmem:[#allocation3 + $0x64] sm:$0xf] %vm2664, %v5014
        %5033 = vst.msk [vmem:[#allocation3 + $0x78] sm:$0xf] %vm2664, %v5016
        %5034 = vst.msk [vmem:[#allocation3 + $0x8c] sm:$0xf] %vm2664, %v5018
        %v5035 = vld [vmem:[%s1236 + $0x1] sm:$0xff]
        %v5036 = vld [vmem:[%s1236 + $0x11] sm:$0xff]
        %v5037 = vld [vmem:[%s1236 + $0x21] sm:$0xff]
        %v5038 = vld [vmem:[%s1236 + $0x31] sm:$0xff]
        %v5039 = vld [vmem:[%s1236 + $0x41] sm:$0xff]
        %v5040 = vld [vmem:[%s1236 + $0x51] sm:$0xff]
        %v5041 = vld [vmem:[%s1236 + $0x61] sm:$0xff]
        %v5042 = vld [vmem:[%s1236 + $0x71] sm:$0xff]
        %v5043 = vpack.c.bf16 %v5035, %v5035
        %v5044 = vpack.c.bf16 %v5036, %v5036
        %v5045 = vpack.c.bf16 %v5037, %v5037
        %v5046 = vpack.c.bf16 %v5038, %v5038
        %v5047 = vpack.c.bf16 %v5039, %v5039
        %v5048 = vpack.c.bf16 %v5040, %v5040
        %v5049 = vpack.c.bf16 %v5041, %v5041
        %v5050 = vpack.c.bf16 %v5042, %v5042
        %5059 = vrot.lane.b32.xlu0 %v5043, 96
        %v5060 = vpop.permute.xlu0 %5059
        %5061 = vrot.lane.b32.xlu0 %v5044, 96
        %v5062 = vpop.permute.xlu0 %5061
        %5063 = vrot.lane.b32.xlu0 %v5045, 96
        %v5064 = vpop.permute.xlu0 %5063
        %5065 = vrot.lane.b32.xlu0 %v5046, 96
        %v5066 = vpop.permute.xlu0 %5065
        %5067 = vrot.lane.b32.xlu0 %v5047, 96
        %v5068 = vpop.permute.xlu0 %5067
        %5069 = vrot.lane.b32.xlu0 %v5048, 96
        %v5070 = vpop.permute.xlu0 %5069
        %5071 = vrot.lane.b32.xlu0 %v5049, 96
        %v5072 = vpop.permute.xlu0 %5071
        %5073 = vrot.lane.b32.xlu0 %v5050, 96
        %v5074 = vpop.permute.xlu0 %5073
        %5083 = vst.msk [vmem:[#allocation3 + $0x4] sm:$0xf] %vm2493, %v5060
        %5084 = vst.msk [vmem:[#allocation3 + $0x18] sm:$0xf] %vm2493, %v5062
        %5085 = vst.msk [vmem:[#allocation3 + $0x2c] sm:$0xf] %vm2493, %v5064
        %5086 = vst.msk [vmem:[#allocation3 + $0x40] sm:$0xf] %vm2493, %v5066
        %5087 = vst.msk [vmem:[#allocation3 + $0x54] sm:$0xf] %vm2493, %v5068
        %5088 = vst.msk [vmem:[#allocation3 + $0x68] sm:$0xf] %vm2493, %v5070
        %5089 = vst.msk [vmem:[#allocation3 + $0x7c] sm:$0xf] %vm2493, %v5072
        %5090 = vst.msk [vmem:[#allocation3 + $0x90] sm:$0xf] %vm2493, %v5074
        %v5091 = vld [vmem:[%s1236 + $0x2] sm:$0xff]
        %v5092 = vld [vmem:[%s1236 + $0x12] sm:$0xff]
        %v5093 = vld [vmem:[%s1236 + $0x22] sm:$0xff]
        %v5094 = vld [vmem:[%s1236 + $0x32] sm:$0xff]
        %v5095 = vld [vmem:[%s1236 + $0x42] sm:$0xff]
        %v5096 = vld [vmem:[%s1236 + $0x52] sm:$0xff]
        %v5097 = vld [vmem:[%s1236 + $0x62] sm:$0xff]
        %v5098 = vld [vmem:[%s1236 + $0x72] sm:$0xff]
        %v5099 = vpack.c.bf16 %v5091, %v5091
        %v5100 = vpack.c.bf16 %v5092, %v5092
        %v5101 = vpack.c.bf16 %v5093, %v5093
        %v5102 = vpack.c.bf16 %v5094, %v5094
        %v5103 = vpack.c.bf16 %v5095, %v5095
        %v5104 = vpack.c.bf16 %v5096, %v5096
        %v5105 = vpack.c.bf16 %v5097, %v5097
        %v5106 = vpack.c.bf16 %v5098, %v5098
        %5107 = vst.msk [vmem:[#allocation3 + $0x4] sm:$0xf] %vm2550, %v5099
        %5108 = vst.msk [vmem:[#allocation3 + $0x18] sm:$0xf] %vm2550, %v5100
        %5109 = vst.msk [vmem:[#allocation3 + $0x2c] sm:$0xf] %vm2550, %v5101
        %5110 = vst.msk [vmem:[#allocation3 + $0x40] sm:$0xf] %vm2550, %v5102
        %5111 = vst.msk [vmem:[#allocation3 + $0x54] sm:$0xf] %vm2550, %v5103
        %5112 = vst.msk [vmem:[#allocation3 + $0x68] sm:$0xf] %vm2550, %v5104
        %5113 = vst.msk [vmem:[#allocation3 + $0x7c] sm:$0xf] %vm2550, %v5105
        %5114 = vst.msk [vmem:[#allocation3 + $0x90] sm:$0xf] %vm2550, %v5106
        %v5115 = vld [vmem:[%s1528] sm:$0xff]
        %v5116 = vld [vmem:[%s1528 + $0x10] sm:$0xff]
        %v5117 = vld [vmem:[%s1528 + $0x20] sm:$0xff]
        %v5118 = vld [vmem:[%s1528 + $0x30] sm:$0xff]
        %v5119 = vld [vmem:[%s1528 + $0x40] sm:$0xff]
        %v5120 = vld [vmem:[%s1528 + $0x50] sm:$0xff]
        %v5121 = vld [vmem:[%s1528 + $0x60] sm:$0xff]
        %v5122 = vld [vmem:[%s1528 + $0x70] sm:$0xff]
        %v5123 = vpack.c.bf16 %v5115, %v5115
        %v5124 = vpack.c.bf16 %v5116, %v5116
        %v5125 = vpack.c.bf16 %v5117, %v5117
        %v5126 = vpack.c.bf16 %v5118, %v5118
        %v5127 = vpack.c.bf16 %v5119, %v5119
        %v5128 = vpack.c.bf16 %v5120, %v5120
        %v5129 = vpack.c.bf16 %v5121, %v5121
        %v5130 = vpack.c.bf16 %v5122, %v5122
        %5139 = vrot.lane.b32.xlu0 %v5123, 32
        %v5140 = vpop.permute.xlu0 %5139
        %5141 = vrot.lane.b32.xlu0 %v5124, 32
        %v5142 = vpop.permute.xlu0 %5141
        %5143 = vrot.lane.b32.xlu0 %v5125, 32
        %v5144 = vpop.permute.xlu0 %5143
        %5145 = vrot.lane.b32.xlu0 %v5126, 32
        %v5146 = vpop.permute.xlu0 %5145
        %5147 = vrot.lane.b32.xlu0 %v5127, 32
        %v5148 = vpop.permute.xlu0 %5147
        %5149 = vrot.lane.b32.xlu0 %v5128, 32
        %v5150 = vpop.permute.xlu0 %5149
        %5151 = vrot.lane.b32.xlu0 %v5129, 32
        %v5152 = vpop.permute.xlu0 %5151
        %5153 = vrot.lane.b32.xlu0 %v5130, 32
        %v5154 = vpop.permute.xlu0 %5153
        %5163 = vst.msk [vmem:[#allocation3 + $0x4] sm:$0xf] %vm2607, %v5140
        %5164 = vst.msk [vmem:[#allocation3 + $0x18] sm:$0xf] %vm2607, %v5142
        %5165 = vst.msk [vmem:[#allocation3 + $0x2c] sm:$0xf] %vm2607, %v5144
        %5166 = vst.msk [vmem:[#allocation3 + $0x40] sm:$0xf] %vm2607, %v5146
        %5167 = vst.msk [vmem:[#allocation3 + $0x54] sm:$0xf] %vm2607, %v5148
        %5168 = vst.msk [vmem:[#allocation3 + $0x68] sm:$0xf] %vm2607, %v5150
        %5169 = vst.msk [vmem:[#allocation3 + $0x7c] sm:$0xf] %vm2607, %v5152
        %5170 = vst.msk [vmem:[#allocation3 + $0x90] sm:$0xf] %vm2607, %v5154
        %v5171 = vld [vmem:[%s1528 + $0x1] sm:$0xff]
        %v5172 = vld [vmem:[%s1528 + $0x11] sm:$0xff]
        %v5173 = vld [vmem:[%s1528 + $0x21] sm:$0xff]
        %v5174 = vld [vmem:[%s1528 + $0x31] sm:$0xff]
        %v5175 = vld [vmem:[%s1528 + $0x41] sm:$0xff]
        %v5176 = vld [vmem:[%s1528 + $0x51] sm:$0xff]
        %v5177 = vld [vmem:[%s1528 + $0x61] sm:$0xff]
        %v5178 = vld [vmem:[%s1528 + $0x71] sm:$0xff]
        %v5179 = vpack.c.bf16 %v5171, %v5171
        %v5180 = vpack.c.bf16 %v5172, %v5172
        %v5181 = vpack.c.bf16 %v5173, %v5173
        %v5182 = vpack.c.bf16 %v5174, %v5174
        %v5183 = vpack.c.bf16 %v5175, %v5175
        %v5184 = vpack.c.bf16 %v5176, %v5176
        %v5185 = vpack.c.bf16 %v5177, %v5177
        %v5186 = vpack.c.bf16 %v5178, %v5178
        %5195 = vrot.lane.b32.xlu0 %v5179, 64
        %v5196 = vpop.permute.xlu0 %5195
        %5197 = vrot.lane.b32.xlu0 %v5180, 64
        %v5198 = vpop.permute.xlu0 %5197
        %5199 = vrot.lane.b32.xlu0 %v5181, 64
        %v5200 = vpop.permute.xlu0 %5199
        %5201 = vrot.lane.b32.xlu0 %v5182, 64
        %v5202 = vpop.permute.xlu0 %5201
        %5203 = vrot.lane.b32.xlu0 %v5183, 64
        %v5204 = vpop.permute.xlu0 %5203
        %5205 = vrot.lane.b32.xlu0 %v5184, 64
        %v5206 = vpop.permute.xlu0 %5205
        %5207 = vrot.lane.b32.xlu0 %v5185, 64
        %v5208 = vpop.permute.xlu0 %5207
        %5209 = vrot.lane.b32.xlu0 %v5186, 64
        %v5210 = vpop.permute.xlu0 %5209
        %5219 = vst.msk [vmem:[#allocation3 + $0x4] sm:$0xf] %vm2664, %v5196
        %5220 = vst.msk [vmem:[#allocation3 + $0x18] sm:$0xf] %vm2664, %v5198
        %5221 = vst.msk [vmem:[#allocation3 + $0x2c] sm:$0xf] %vm2664, %v5200
        %5222 = vst.msk [vmem:[#allocation3 + $0x40] sm:$0xf] %vm2664, %v5202
        %5223 = vst.msk [vmem:[#allocation3 + $0x54] sm:$0xf] %vm2664, %v5204
        %5224 = vst.msk [vmem:[#allocation3 + $0x68] sm:$0xf] %vm2664, %v5206
        %5225 = vst.msk [vmem:[#allocation3 + $0x7c] sm:$0xf] %vm2664, %v5208
        %5226 = vst.msk [vmem:[#allocation3 + $0x90] sm:$0xf] %vm2664, %v5210
        %v5227 = vld [vmem:[%s1528 + $0x2] sm:$0xff]
        %v5228 = vld [vmem:[%s1528 + $0x12] sm:$0xff]
        %v5229 = vld [vmem:[%s1528 + $0x22] sm:$0xff]
        %v5230 = vld [vmem:[%s1528 + $0x32] sm:$0xff]
        %v5231 = vld [vmem:[%s1528 + $0x42] sm:$0xff]
        %v5232 = vld [vmem:[%s1528 + $0x52] sm:$0xff]
        %v5233 = vld [vmem:[%s1528 + $0x62] sm:$0xff]
        %v5234 = vld [vmem:[%s1528 + $0x72] sm:$0xff]
        %v5235 = vpack.c.bf16 %v5227, %v5227
        %v5236 = vpack.c.bf16 %v5228, %v5228
        %v5237 = vpack.c.bf16 %v5229, %v5229
        %v5238 = vpack.c.bf16 %v5230, %v5230
        %v5239 = vpack.c.bf16 %v5231, %v5231
        %v5240 = vpack.c.bf16 %v5232, %v5232
        %v5241 = vpack.c.bf16 %v5233, %v5233
        %v5242 = vpack.c.bf16 %v5234, %v5234
        %5251 = vrot.lane.b32.xlu0 %v5235, 96
        %v5252 = vpop.permute.xlu0 %5251
        %5253 = vrot.lane.b32.xlu0 %v5236, 96
        %v5254 = vpop.permute.xlu0 %5253
        %5255 = vrot.lane.b32.xlu0 %v5237, 96
        %v5256 = vpop.permute.xlu0 %5255
        %5257 = vrot.lane.b32.xlu0 %v5238, 96
        %v5258 = vpop.permute.xlu0 %5257
        %5259 = vrot.lane.b32.xlu0 %v5239, 96
        %v5260 = vpop.permute.xlu0 %5259
        %5261 = vrot.lane.b32.xlu0 %v5240, 96
        %v5262 = vpop.permute.xlu0 %5261
        %5263 = vrot.lane.b32.xlu0 %v5241, 96
        %v5264 = vpop.permute.xlu0 %5263
        %5265 = vrot.lane.b32.xlu0 %v5242, 96
        %v5266 = vpop.permute.xlu0 %5265
        %5275 = vst.msk [vmem:[#allocation3 + $0x8] sm:$0xf] %vm2493, %v5252
        %5276 = vst.msk [vmem:[#allocation3 + $0x1c] sm:$0xf] %vm2493, %v5254
        %5277 = vst.msk [vmem:[#allocation3 + $0x30] sm:$0xf] %vm2493, %v5256
        %5278 = vst.msk [vmem:[#allocation3 + $0x44] sm:$0xf] %vm2493, %v5258
        %5279 = vst.msk [vmem:[#allocation3 + $0x58] sm:$0xf] %vm2493, %v5260
        %5280 = vst.msk [vmem:[#allocation3 + $0x6c] sm:$0xf] %vm2493, %v5262
        %5281 = vst.msk [vmem:[#allocation3 + $0x80] sm:$0xf] %vm2493, %v5264
        %5282 = vst.msk [vmem:[#allocation3 + $0x94] sm:$0xf] %vm2493, %v5266
        %v5283 = vld [vmem:[#allocation3] sm:$0xff]
        %v5284 = vld [vmem:[#allocation3 + $0x8] sm:$0xf]
        %v5285 = vld [vmem:[#allocation3 + $0x14] sm:$0xff]
        %v5286 = vld [vmem:[#allocation3 + $0x1c] sm:$0xf]
        %v5287 = vld [vmem:[#allocation3 + $0x28] sm:$0xff]
        %v5288 = vld [vmem:[#allocation3 + $0x30] sm:$0xf]
        %v5289 = vld [vmem:[#allocation3 + $0x3c] sm:$0xff]
        %v5290 = vld [vmem:[#allocation3 + $0x44] sm:$0xf]
        %v5291 = vld [vmem:[#allocation3 + $0x50] sm:$0xff]
        %v5292 = vld [vmem:[#allocation3 + $0x58] sm:$0xf]
        %v5293 = vld [vmem:[#allocation3 + $0x64] sm:$0xff]
        %v5294 = vld [vmem:[#allocation3 + $0x6c] sm:$0xf]
        %v5295 = vld [vmem:[#allocation3 + $0x78] sm:$0xff]
        %v5296 = vld [vmem:[#allocation3 + $0x80] sm:$0xf]
        %v5297 = vld [vmem:[#allocation3 + $0x8c] sm:$0xff]
        %v5298 = vld [vmem:[#allocation3 + $0x94] sm:$0xf]
        %v5299 = vld [vmem:[%s17] sm:$0xf]
        %v5300 = vld [vmem:[%s17 + $0x4] sm:$0xf]
        %v5301 = vld [vmem:[%s17 + $0x8] sm:$0xf]
        %v5302 = vld [vmem:[%s17 + $0xc] sm:$0xf]
        %v5303 = vld [vmem:[%s17 + $0x10] sm:$0xf]
        %v5304 = vld [vmem:[%s17 + $0x14] sm:$0xf]
        %v5305 = vld [vmem:[%s17 + $0x18] sm:$0xf]
        %v5306 = vld [vmem:[%s17 + $0x1c] sm:$0xf]
        %v5307 = vld [vmem:[%s17 + $0x20] sm:$0xf]
        %v5308 = vld [vmem:[%s17 + $0x24] sm:$0xf]
        %v5309 = vld [vmem:[%s17 + $0x28] sm:$0xf]
        %v5310 = vld [vmem:[%s17 + $0x2c] sm:$0xf]
        %v5311 = vld [vmem:[%s17 + $0x30] sm:$0xf]
        %v5312 = vld [vmem:[%s17 + $0x34] sm:$0xf]
        %v5313 = vld [vmem:[%s17 + $0x38] sm:$0xf]
        %v5314 = vld [vmem:[%s17 + $0x3c] sm:$0xf]
        %v5315 = vld [vmem:[%s17 + $0x40] sm:$0xf]
        %v5316 = vld [vmem:[%s17 + $0x44] sm:$0xf]
        %v5317 = vld [vmem:[%s17 + $0x48] sm:$0xf]
        %v5318 = vld [vmem:[%s17 + $0x4c] sm:$0xf]
        %v5319 = vld [vmem:[%s17 + $0x50] sm:$0xf]
        %v5320 = vld [vmem:[%s17 + $0x54] sm:$0xf]
        %v5321 = vld [vmem:[%s17 + $0x58] sm:$0xf]
        %v5322 = vld [vmem:[%s17 + $0x5c] sm:$0xf]
        %v5323 = vld [vmem:[%s17 + $0x60] sm:$0xf]
        %v5324 = vld [vmem:[%s17 + $0x64] sm:$0xf]
        %v5325 = vld [vmem:[%s17 + $0x68] sm:$0xf]
        %v5326 = vld [vmem:[%s17 + $0x6c] sm:$0xf]
        %v5327 = vld [vmem:[%s17 + $0x70] sm:$0xf]
        %v5328 = vld [vmem:[%s17 + $0x74] sm:$0xf]
        %v5329 = vld [vmem:[%s17 + $0x78] sm:$0xf]
        %v5330 = vld [vmem:[%s17 + $0x7c] sm:$0xf]
        %v5331 = vld [vmem:[%s17 + $0x80] sm:$0xf]
        %v5332 = vld [vmem:[%s17 + $0x84] sm:$0xf]
        %v5333 = vld [vmem:[%s17 + $0x88] sm:$0xf]
        %v5334 = vld [vmem:[%s17 + $0x8c] sm:$0xf]
        %v5335 = vld [vmem:[%s18] sm:$0x1]
        %v5337 = vperm.slane %v5335, 0
        %v5355 = vunpack.c.l.b16 %v5283
        %v5356 = vunpack.c.h.b16 %v5283
        %v5357 = vunpack.c.l.b16 %v5284
        %v5358 = vunpack.c.l.b16 %v5285
        %v5359 = vunpack.c.h.b16 %v5285
        %v5360 = vunpack.c.l.b16 %v5286
        %v5361 = vunpack.c.l.b16 %v5287
        %v5362 = vunpack.c.h.b16 %v5287
        %v5363 = vunpack.c.l.b16 %v5288
        %v5364 = vunpack.c.l.b16 %v5289
        %v5365 = vunpack.c.h.b16 %v5289
        %v5366 = vunpack.c.l.b16 %v5290
        %v5367 = vunpack.c.l.b16 %v5291
        %v5368 = vunpack.c.h.b16 %v5291
        %v5369 = vunpack.c.l.b16 %v5292
        %v5370 = vunpack.c.l.b16 %v5293
        %v5371 = vunpack.c.h.b16 %v5293
        %v5372 = vunpack.c.l.b16 %v5294
        %v5373 = vunpack.c.l.b16 %v5295
        %v5374 = vunpack.c.h.b16 %v5295
        %v5375 = vunpack.c.l.b16 %v5296
        %v5376 = vunpack.c.l.b16 %v5297
        %v5377 = vunpack.c.h.b16 %v5297
        %v5378 = vunpack.c.l.b16 %v5298
        %v5379 = vpack.c.b16 %v5358, %v5355
        %v5380 = vpack.c.b16 %v5359, %v5356
        %v5381 = vpack.c.b16 %v5360, %v5357
        %v5382 = vpack.c.b16 %v5364, %v5361
        %v5383 = vpack.c.b16 %v5365, %v5362
        %v5384 = vpack.c.b16 %v5366, %v5363
        %v5385 = vpack.c.b16 %v5370, %v5367
        %v5386 = vpack.c.b16 %v5371, %v5368
        %v5387 = vpack.c.b16 %v5372, %v5369
        %v5388 = vpack.c.b16 %v5376, %v5373
        %v5389 = vpack.c.b16 %v5377, %v5374
        %v5390 = vpack.c.b16 %v5378, %v5375
        %v5435 = vunpack.c.l.b16 %v5299
        %v5436 = vunpack.c.l.b16 %v5300
        %v5437 = vunpack.c.l.b16 %v5301
        %v5438 = vunpack.c.l.b16 %v5302
        %v5439 = vunpack.c.l.b16 %v5303
        %v5440 = vunpack.c.l.b16 %v5304
        %v5441 = vunpack.c.l.b16 %v5305
        %v5442 = vunpack.c.l.b16 %v5306
        %v5443 = vunpack.c.l.b16 %v5307
        %v5444 = vunpack.c.l.b16 %v5308
        %v5445 = vunpack.c.l.b16 %v5309
        %v5446 = vunpack.c.l.b16 %v5310
        %v5447 = vunpack.c.l.b16 %v5311
        %v5448 = vunpack.c.l.b16 %v5312
        %v5449 = vunpack.c.l.b16 %v5313
        %v5450 = vunpack.c.l.b16 %v5314
        %v5451 = vunpack.c.l.b16 %v5315
        %v5452 = vunpack.c.l.b16 %v5316
        %v5453 = vunpack.c.l.b16 %v5317
        %v5454 = vunpack.c.l.b16 %v5318
        %v5455 = vunpack.c.l.b16 %v5319
        %v5456 = vunpack.c.l.b16 %v5320
        %v5457 = vunpack.c.l.b16 %v5321
        %v5458 = vunpack.c.l.b16 %v5322
        %v5459 = vunpack.c.l.b16 %v5323
        %v5460 = vunpack.c.l.b16 %v5324
        %v5461 = vunpack.c.l.b16 %v5325
        %v5462 = vunpack.c.l.b16 %v5326
        %v5463 = vunpack.c.l.b16 %v5327
        %v5464 = vunpack.c.l.b16 %v5328
        %v5465 = vunpack.c.l.b16 %v5329
        %v5466 = vunpack.c.l.b16 %v5330
        %v5467 = vunpack.c.l.b16 %v5331
        %v5468 = vunpack.c.l.b16 %v5332
        %v5469 = vunpack.c.l.b16 %v5333
        %v5470 = vunpack.c.l.b16 %v5334
        %v5471 = vpack.c.b16 %v5436, %v5435
        %v5472 = vpack.c.b16 %v5438, %v5437
        %v5473 = vpack.c.b16 %v5440, %v5439
        %v5474 = vpack.c.b16 %v5442, %v5441
        %v5475 = vpack.c.b16 %v5444, %v5443
        %v5476 = vpack.c.b16 %v5446, %v5445
        %v5477 = vpack.c.b16 %v5448, %v5447
        %v5478 = vpack.c.b16 %v5450, %v5449
        %v5479 = vpack.c.b16 %v5452, %v5451
        %v5480 = vpack.c.b16 %v5454, %v5453
        %v5481 = vpack.c.b16 %v5456, %v5455
        %v5482 = vpack.c.b16 %v5458, %v5457
        %v5483 = vpack.c.b16 %v5460, %v5459
        %v5484 = vpack.c.b16 %v5462, %v5461
        %v5485 = vpack.c.b16 %v5464, %v5463
        %v5486 = vpack.c.b16 %v5466, %v5465
        %v5487 = vpack.c.b16 %v5468, %v5467
        %v5488 = vpack.c.b16 %v5470, %v5469
        %v5508 = vsel %vm669, %v5381, 0
        %v5511 = vsel %vm669, %v5384, 0
        %v5514 = vsel %vm669, %v5387, 0
        %v5517 = vsel %vm669, %v5390, 0
        %5519 = vmatpush.bf16.msra.mxu0 %v5478
        %5520 = vmatpush.bf16.msra.mxu0 %v5477
        %5521 = vmatpush.bf16.msra.mxu0 %v5476
        %5522 = vmatpush.bf16.msra.mxu0 %v5475
        %5523 = vmatpush.bf16.msra.mxu0 %v5474
        %5524 = vmatpush.bf16.msra.mxu0 %v5473
        %5525 = vmatpush.bf16.msra.mxu0 %v5472
        %5526 = vmatpush.bf16.msra.mxu0 %v5471
        %5527 = vmatmul.bf16.gmra.mxu0 %v5379
        %v5528 = vpop.f32.mrf.mxu0
        %v5529 = vadd.f32 %v5337, %v5528
        %v5530 = vpop.f32.mrf.mxu0
        %v5531 = vadd.f32 %v5337, %v5530
        %5532 = vmatmul.bf16.gmra.mxu0 %v5382
        %v5533 = vpop.f32.mrf.mxu0
        %v5534 = vadd.f32 %v5337, %v5533
        %v5535 = vpop.f32.mrf.mxu0
        %v5536 = vadd.f32 %v5337, %v5535
        %5537 = vmatmul.bf16.gmra.mxu0 %v5385
        %v5538 = vpop.f32.mrf.mxu0
        %v5539 = vadd.f32 %v5337, %v5538
        %v5540 = vpop.f32.mrf.mxu0
        %v5541 = vadd.f32 %v5337, %v5540
        %5542 = vmatmul.bf16.gmra.mxu0 %v5388
        %v5543 = vpop.f32.mrf.mxu0
        %v5544 = vadd.f32 %v5337, %v5543
        %v5545 = vpop.f32.mrf.mxu0
        %v5546 = vadd.f32 %v5337, %v5545
        %5547 = vdwg.mxu0
        %5548 = vmatpush.bf16.msra.mxu0 %v5486
        %5549 = vmatpush.bf16.msra.mxu0 %v5485
        %5550 = vmatpush.bf16.msra.mxu0 %v5484
        %5551 = vmatpush.bf16.msra.mxu0 %v5483
        %5552 = vmatpush.bf16.msra.mxu0 %v5482
        %5553 = vmatpush.bf16.msra.mxu0 %v5481
        %5554 = vmatpush.bf16.msra.mxu0 %v5480
        %5555 = vmatpush.bf16.msra.mxu0 %v5479
        %5556 = vmatmul.bf16.gmra.mxu0 %v5380
        %v5557 = vpop.f32.mrf.mxu0
        %v5558 = vadd.f32 %v5529, %v5557
        %v5559 = vpop.f32.mrf.mxu0
        %v5560 = vadd.f32 %v5531, %v5559
        %5561 = vmatmul.bf16.gmra.mxu0 %v5383
        %v5562 = vpop.f32.mrf.mxu0
        %v5563 = vadd.f32 %v5534, %v5562
        %v5564 = vpop.f32.mrf.mxu0
        %v5565 = vadd.f32 %v5536, %v5564
        %5566 = vmatmul.bf16.gmra.mxu0 %v5386
        %v5567 = vpop.f32.mrf.mxu0
        %v5568 = vadd.f32 %v5539, %v5567
        %v5569 = vpop.f32.mrf.mxu0
        %v5570 = vadd.f32 %v5541, %v5569
        %5571 = vmatmul.bf16.gmra.mxu0 %v5389
        %v5572 = vpop.f32.mrf.mxu0
        %v5573 = vadd.f32 %v5544, %v5572
        %v5574 = vpop.f32.mrf.mxu0
        %v5575 = vadd.f32 %v5546, %v5574
        %5576 = vdwg.mxu0
        %5577 = vmatpush.bf16.msra.mxu0 0
        %5578 = vmatpush.bf16.msra.mxu0 0
        %5579 = vmatpush.bf16.msra.mxu0 0
        %5580 = vmatpush.bf16.msra.mxu0 0
        %5581 = vmatpush.bf16.msra.mxu0 0
        %5582 = vmatpush.bf16.msra.mxu0 0
        %5583 = vmatpush.bf16.msra.mxu0 %v5488
        %5584 = vmatpush.bf16.msra.mxu0 %v5487
        %5585 = vmatmul.bf16.gmra.mxu0 %v5508
        %v5586 = vpop.f32.mrf.mxu0
        %v5587 = vadd.f32 %v5558, %v5586
        %v5588 = vpop.f32.mrf.mxu0
        %v5589 = vadd.f32 %v5560, %v5588
        %5590 = vmatmul.bf16.gmra.mxu0 %v5511
        %v5591 = vpop.f32.mrf.mxu0
        %v5592 = vadd.f32 %v5563, %v5591
        %v5593 = vpop.f32.mrf.mxu0
        %v5594 = vadd.f32 %v5565, %v5593
        %5595 = vmatmul.bf16.gmra.mxu0 %v5514
        %v5596 = vpop.f32.mrf.mxu0
        %v5597 = vadd.f32 %v5568, %v5596
        %v5598 = vpop.f32.mrf.mxu0
        %v5599 = vadd.f32 %v5570, %v5598
        %5600 = vmatmul.bf16.gmra.mxu0 %v5517
        %v5601 = vpop.f32.mrf.mxu0
        %v5602 = vadd.f32 %v5573, %v5601
        %v5603 = vpop.f32.mrf.mxu0
        %v5604 = vadd.f32 %v5575, %v5603
        %5605 = vdwg.mxu0
        %s5606 = sld [smem:[#allocation4]]
        %v5607 = vmul.f32 %v659, %v4824
        %v5608 = vmul.f32 %v660, %v4826
        %v5609 = vmul.f32 %v661, %v4829
        %v5610 = vmul.f32 %v662, %v4831
        %v5611 = vmul.f32 %v663, %v4834
        %v5612 = vmul.f32 %v664, %v4836
        %v5613 = vmul.f32 %v665, %v4839
        %v5614 = vmul.f32 %v666, %v4841
        %v5615 = vadd.f32 %v5607, %v5587
        %v5616 = vadd.f32 %v5608, %v5589
        %v5617 = vadd.f32 %v5609, %v5592
        %v5618 = vadd.f32 %v5610, %v5594
        %v5619 = vadd.f32 %v5611, %v5597
        %v5620 = vadd.f32 %v5612, %v5599
        %v5621 = vadd.f32 %v5613, %v5602
        %v5622 = vadd.f32 %v5614, %v5604
        %v5623 = vstv %s5606
        %v5624 = vmul.f32 %v5623, %v5615
        %v5625 = vmul.f32 %v5623, %v5616
        %v5626 = vmul.f32 %v5623, %v5617
        %v5627 = vmul.f32 %v5623, %v5618
        %v5628 = vmul.f32 %v5623, %v5619
        %v5629 = vmul.f32 %v5623, %v5620
        %v5630 = vmul.f32 %v5623, %v5621
        %v5631 = vmul.f32 %v5623, %v5622
        %v5632 = vadd.f32 %v659, %v5624
        %v5633 = vadd.f32 %v660, %v5625
        %v5634 = vadd.f32 %v661, %v5626
        %v5635 = vadd.f32 %v662, %v5627
        %v5636 = vadd.f32 %v663, %v5628
        %v5637 = vadd.f32 %v664, %v5629
        %v5638 = vadd.f32 %v665, %v5630
        %v5639 = vadd.f32 %v666, %v5631
        %5640 = vst.msk [vmem:[%s611] sm:$0xff] %vm669, %v5632
        %5641 = vst.msk [vmem:[%s611 + $0x8] sm:$0xff] %vm669, %v5633
        %5642 = vst.msk [vmem:[%s611 + $0x10] sm:$0xff] %vm669, %v5634
        %5643 = vst.msk [vmem:[%s611 + $0x18] sm:$0xff] %vm669, %v5635
        %5644 = vst.msk [vmem:[%s611 + $0x20] sm:$0xff] %vm669, %v5636
        %5645 = vst.msk [vmem:[%s611 + $0x28] sm:$0xff] %vm669, %v5637
        %5646 = vst.msk [vmem:[%s611 + $0x30] sm:$0xff] %vm669, %v5638
        %5647 = vst.msk [vmem:[%s611 + $0x38] sm:$0xff] %vm669, %v5639
        %s5648 = sand.u32 %s451, 1
        %s5649 = scalar_lea.sflag [#allocation6], %s5648
        %s5650 = sand.u32 %s451, 1
        %s5651 = smul.addr %s5650, 64
        %s5652 = scalar_lea.vmem [#allocation5], %s5651
        // Predicated region
        $region97: #{tpu_custom_call.1} parent=95 // pred_check
          %p5653 = pneg %p461
        $region98: #{tpu_custom_call.1} parent=95 // pred_check_branch
          %5655 = sbr.rel (%p5653) target = $region100
        $region99: #{tpu_custom_call.1} parent=95 // pred_region
          %5657 = vsyncadd %s5649, 0
          %s5658 = smul.addr %s34, 8
          %s5659 = smul.addr %s5658, 8
          %s5660 = scalar_lea.hbm %s19, %s5659
          %s5661 = sshll.u32 %s5652, 4
          %s5662 = int_to_ptr.vmem [resolvable:$true] %s5661
          %s5663 = sshll.u32 %s5660, 4
          %s5664 = int_to_ptr.hbm [resolvable:$true] %s5663
          %5669 = dma.vmem_to_hbm [thread:$0]  %s5662, 1024, %s5664, %s5649, 128, 128, 8
        $region100: #{tpu_custom_call.1} parent=95 // pred_fallthru
          _
      $region96: #{tpu_custom_call.1} parent=5 // pred_fallthru
        _
      %p5670 = scmp.le.s32.totalorder 2, %s29
      // Predicated region
      $region101: #{tpu_custom_call.1} parent=5 // pred_check
        %p5671 = pneg %p5670
      $region102: #{tpu_custom_call.1} parent=5 // pred_check_branch
        %5673 = sbr.rel (%p5671) target = $region104
      $region103: #{tpu_custom_call.1} parent=5 // pred_region
        %s5674 = ssub.s32 %s29, 2
        // Predicated region
        $region105: #{tpu_custom_call.1} parent=103 // pred_check
          %p5675 = pneg %p467
        $region106: #{tpu_custom_call.1} parent=103 // pred_check_branch
          %5677 = sbr.rel (%p5675) target = $region108
        $region107: #{tpu_custom_call.1} parent=103 // pred_region
          %s5678 = sand.u32 %s452, 1
          %s5679 = scalar_lea.sflag [#allocation6], %s5678
          %s5680 = sand.u32 %s452, 1
          %s5681 = smul.addr %s5680, 64
          %s5682 = scalar_lea.vmem [#allocation5], %s5681
          %5684 = dma.done %s5679, 1024
        $region108: #{tpu_custom_call.1} parent=103 // pred_fallthru
          _
      $region104: #{tpu_custom_call.1} parent=5 // pred_fallthru
        _
    $region6: #{tpu_custom_call.1} parent=1 // loop_footer
      %s33 = sadd.s32 1, %s29
    $region7: #{tpu_custom_call.1} parent=1 // loop_footer_branch
      %28 = sbr.rel target = $region3
    $region8: #{tpu_custom_call.1} parent=1 // loop_exit
      _
    %5685 = vsyncpa [#allocation6], 1
    %s5686 = scalar_lea.sflag [#allocation6], 1
    %5687 = vsyncpa %s5686, 1

</llo_original>
